<compile_context>
chip_gen: v7x
topology: tpu7x:2x2x1
jax: 0.10.0
libtpu: 0.0.40
codegen_flags: <defaults>
</compile_context>

<pallas_src>
import jax
import jax.numpy as jnp
from jax.experimental import pallas as pl
from jax.experimental.pallas import tpu as pltpu

BN_EPS = 1e-5


# ---------------------------------------------------------------------------
# Static tiling helpers.
# ---------------------------------------------------------------------------

def _pick_tr(oh, ow, cap_rows=512):
    """Output rows per band: largest divisor `tr` of `oh` with tr*ow <= cap and
    tr*ow % 8 == 0 (sublane-aligned (1, tr*ow, Cout) output blocks).  Falls
    back to one full band, which is always a legal block shape."""
    for tr in range(oh, 0, -1):
        if oh % tr == 0 and tr * ow <= cap_rows and (tr * ow) % 8 == 0:
            return tr
    return oh  # TODO(synk): very skinny/odd shapes fall back to a single band.


def _row_block(rows, cap=1024):
    """Row block for the elementwise tail: largest multiple-of-8 divisor of
    `rows` not exceeding min(cap, rows // 2), so the 1-D grid has >= 2 steps
    (keeps both v7x TensorCores busy).  Falls back to a single full block."""
    best = 0
    for d in range(8, min(cap, rows // 2) + 1, 8):
        if rows % d == 0:
            best = d
    return best if best else rows


# ---------------------------------------------------------------------------
# Fused conv kernel: in-VMEM halo / pre-activation prep + im2col slab + ONE
# MXU matmul per row band + bias + per-band BN partial statistics
# (+ optionally the fused 1x1 stride-2 shortcut conv of the downsample path).
# ---------------------------------------------------------------------------

def _make_conv_kernel(*, k, pad, tr, ow, pre_act, with_sc):
    def kernel(*refs):
        it = iter(refs)
        x_ref = next(it)          # (1, H, W, Cin)  f32 or bf16, un-padded
        w_ref = next(it)          # (k*k*Cin, Cout) bf16 im2col weight
        b_ref = next(it)          # (1, Cout)       f32
        s_ref = t_ref = scw_ref = scb_ref = None
        if pre_act:
            s_ref = next(it)      # (1, Cin) f32  BN scale of the *input*
            t_ref = next(it)      # (1, Cin) f32  BN shift of the *input*
        if with_sc:
            scw_ref = next(it)    # (Cin//4, Cout) bf16  1x1 shortcut weight
            scb_ref = next(it)    # (1, Cout)      f32
        o_ref = next(it)          # (1, tr*ow, Cout) bf16
        st_ref = next(it)         # (1, 1, 2, Cout)  f32  [sum; sum_sq] pre-bias
        so_ref = sst_ref = None
        if with_sc:
            so_ref = next(it)     # (1, tr*ow, Cout) bf16
            sst_ref = next(it)    # (1, 1, 2, Cout)  f32
        xpad_ref = next(it)       # VMEM (H+2p, W+2p, Cin) bf16 padded image
        col_ref = next(it)        # VMEM (tr*ow, k*k*Cin)  bf16 im2col slab

        H, W, cin = x_ref.shape[1], x_ref.shape[2], x_ref.shape[3]
        ri = pl.program_id(1)

        # Once per image (row axis is "arbitrary", so ri == 0 runs first for
        # every batch element): build the zero-padded -- and, for conv2, the
        # BN1+ReLU pre-activated -- bf16 image in VMEM.  This replaces the
        # jnp.pad HBM round trip and the separate BN1 kernel.
        @pl.when(ri == 0)
        def _prep():
            xv = x_ref[0]
            if pre_act:
                xv = jnp.maximum(
                    xv.astype(jnp.float32) * s_ref[...].reshape(1, 1, cin)
                    + t_ref[...].reshape(1, 1, cin), 0.0)
            xv = xv.astype(jnp.bfloat16)
            if pad:
                xpad_ref[...] = jnp.zeros_like(xpad_ref)
                xpad_ref[pad:H + pad, pad:W + pad, :] = xv
            else:
                xpad_ref[...] = xv

        # im2col slab for this band -> one big matmul with K = k*k*Cin.
        r0 = pl.multiple_of(ri * tr, tr)
        for ki in range(k):
            for kj in range(k):
                tap = ki * k + kj
                xs = xpad_ref[pl.ds(r0 + ki, tr), pl.ds(kj, ow), :]
                col_ref[:, tap * cin:(tap + 1) * cin] = xs.reshape(tr * ow, cin)

        col = col_ref[...]
        acc = jnp.dot(col, w_ref[...], preferred_element_type=jnp.float32)
        # BN batch statistics on the PRE-bias accumulator (bias added back in
        # the O(C) finalization -> no E[x^2]-E[x]^2 cancellation on the mean).
        st_ref[0, 0, 0:1, :] = jnp.sum(acc, axis=0, keepdims=True)
        st_ref[0, 0, 1:2, :] = jnp.sum(acc * acc, axis=0, keepdims=True)
        o_ref[0] = (acc + b_ref[...]).astype(o_ref.dtype)

        if with_sc:
            # Fused 1x1 stride-2 shortcut conv: its input x[:, ::2, ::2, :] is
            # exactly the (pi=1, pj=1) channel group of tap (0, 0) of the
            # space-to-depth slab that is already sitting in VMEM.
            cg = cin // 4
            sacc = jnp.dot(col[:, 3 * cg:4 * cg], scw_ref[...],
                           preferred_element_type=jnp.float32)
            sst_ref[0, 0, 0:1, :] = jnp.sum(sacc, axis=0, keepdims=True)
            sst_ref[0, 0, 1:2, :] = jnp.sum(sacc * sacc, axis=0, keepdims=True)
            so_ref[0] = (sacc + scb_ref[...]).astype(so_ref.dtype)

    return kernel


def conv_band(x, w, b, *, k, pad, oh, ow, pre=None, shortcut=None):
    """Stride-1 k x k conv over row bands with fused halo / pre-activation.

    x       : (B, H, W, Cin) f32 or bf16, un-padded (`pad` handled in VMEM).
    w       : (k*k*Cin, Cout) bf16 im2col weight, tap-major (ki, kj, cin).
    b       : (Cout,) f32 bias.
    pre     : optional (scale, shift), shape (1, Cin) f32; the kernel applies
              relu(x*scale + shift) to the input (fuses the preceding BN+ReLU).
    shortcut: optional (sc_w (Cin//4, Cout) bf16, sc_b (Cout,) f32); emits the
              fused 1x1 stride-2 shortcut conv (downsample path; k=2, pad=0).

    Returns y (B, oh*ow, Cout) bf16 and stats (B, n_rt, 2, Cout) f32 holding
    [sum, sum_sq] of the pre-bias accumulator; plus (sc_y, sc_stats) when
    `shortcut` is given.
    """
    B, H, W, Cin = x.shape
    K2C, Cout = w.shape
    assert K2C == k * k * Cin
    assert H >= oh + k - 1 - 2 * pad and W >= ow + k - 1 - 2 * pad
    pre_act = pre is not None
    with_sc = shortcut is not None
    if with_sc:
        assert k == 2 and pad == 0 and Cin % 4 == 0

    tr = _pick_tr(oh, ow)
    n_rt = oh // tr
    Hp, Wp = H + 2 * pad, W + 2 * pad

    in_specs = [
        pl.BlockSpec((1, H, W, Cin), lambda bi, ri: (bi, 0, 0, 0)),
        pl.BlockSpec((K2C, Cout), lambda bi, ri: (0, 0)),
        pl.BlockSpec((1, Cout), lambda bi, ri: (0, 0)),
    ]
    args = [x, w, b.reshape(1, Cout)]
    if pre_act:
        s, t = pre
        in_specs += [pl.BlockSpec((1, Cin), lambda bi, ri: (0, 0)),
                     pl.BlockSpec((1, Cin), lambda bi, ri: (0, 0))]
        args += [s.reshape(1, Cin).astype(jnp.float32),
                 t.reshape(1, Cin).astype(jnp.float32)]
    if with_sc:
        sc_w, sc_b = shortcut
        in_specs += [pl.BlockSpec((Cin // 4, Cout), lambda bi, ri: (0, 0)),
                     pl.BlockSpec((1, Cout), lambda bi, ri: (0, 0))]
        args += [sc_w, sc_b.reshape(1, Cout)]

    out_shape = [jax.ShapeDtypeStruct((B, oh * ow, Cout), jnp.bfloat16),
                 jax.ShapeDtypeStruct((B, n_rt, 2, Cout), jnp.float32)]
    out_specs = [pl.BlockSpec((1, tr * ow, Cout), lambda bi, ri: (bi, ri, 0)),
                 pl.BlockSpec((1, 1, 2, Cout), lambda bi, ri: (bi, ri, 0, 0))]
    if with_sc:
        out_shape += [jax.ShapeDtypeStruct((B, oh * ow, Cout), jnp.bfloat16),
                      jax.ShapeDtypeStruct((B, n_rt, 2, Cout), jnp.float32)]
        out_specs += [pl.BlockSpec((1, tr * ow, Cout), lambda bi, ri: (bi, ri, 0)),
                      pl.BlockSpec((1, 1, 2, Cout), lambda bi, ri: (bi, ri, 0, 0))]

    # Explicit VMEM budget (v7x has 64 MiB physical / 32 MiB default scoped).
    n_out = 2 if with_sc else 1
    fp = (2 * H * W * Cin * x.dtype.itemsize             # double-buffered input
          + Hp * Wp * Cin * 2                             # padded bf16 image
          + tr * ow * K2C * 2                             # im2col slab
          + n_out * 2 * (tr * ow * Cout * 2 + 2 * Cout * 4)   # outputs
          + 2 * K2C * Cout * 2 + 16 * Cout * 4)           # weights/bias/scales
    vmem_limit = int(min(max(2 * fp + (4 << 20), 32 << 20), 120 << 20))
    # TODO(synk): for images where the full-image block no longer fits this
    # budget, switch x to memory_space=pl.ANY + manual (tr+k-1)-row halo DMA.

    return pl.pallas_call(
        _make_conv_kernel(k=k, pad=pad, tr=tr, ow=ow,
                          pre_act=pre_act, with_sc=with_sc),
        out_shape=tuple(out_shape),
        grid=(B, n_rt),
        in_specs=in_specs,
        out_specs=tuple(out_specs),
        scratch_shapes=[pltpu.VMEM((Hp, Wp, Cin), jnp.bfloat16),
                        pltpu.VMEM((tr * ow, K2C), jnp.bfloat16)],
        compiler_params=pltpu.CompilerParams(
            dimension_semantics=("parallel", "arbitrary"),
            vmem_limit_bytes=vmem_limit),
    )(*args)


# ---------------------------------------------------------------------------
# Fused, lane-dense elementwise tail: relu( relu(bn2(h)) + bn_sc(r) ).
# ---------------------------------------------------------------------------

def _tail_kernel(h_ref, r_ref, hs_ref, ht_ref, rs_ref, rt_ref, o_ref):
    main = jnp.maximum(h_ref[...].astype(jnp.float32) * hs_ref[...]
                       + ht_ref[...], 0.0)
    res = r_ref[...].astype(jnp.float32) * rs_ref[...] + rt_ref[...]
    o_ref[...] = jnp.maximum(main + res, 0.0)


def fused_tail(h, r, h_scale, h_shift, r_scale, r_shift):
    """relu(relu(h*hs+ht) + (r*rs+rt)); (N, C) tensors with C < 128 are viewed
    as (N/pack, C*pack) so every load/store is a full 128-lane vector op."""
    N, C = h.shape
    pack = 1
    if C < 128 and 128 % C == 0 and N % (128 // C) == 0:
        pack = 128 // C
    Cw = C * pack
    R = N // pack
    rb = _row_block(R)
    tile = lambda a: jnp.tile(a.astype(jnp.float32), (1, pack))
    row_spec = pl.BlockSpec((rb, Cw), lambda i: (i, 0))
    vec_spec = pl.BlockSpec((1, Cw), lambda i: (0, 0))
    out = pl.pallas_call(
        _tail_kernel,
        out_shape=jax.ShapeDtypeStruct((R, Cw), jnp.float32),
        grid=(R // rb,),
        in_specs=[row_spec, row_spec, vec_spec, vec_spec, vec_spec, vec_spec],
        out_specs=row_spec,
        compiler_params=pltpu.CompilerParams(
            dimension_semantics=("parallel",)),
    )(h.reshape(R, Cw), r.reshape(R, Cw),
      tile(h_scale), tile(h_shift), tile(r_scale), tile(r_shift))
    return out.reshape(N, C)


# ---------------------------------------------------------------------------
# BN finalization + layout helpers (cheap O(C) / metadata XLA glue).
# ---------------------------------------------------------------------------

def _bn_scale_shift(stats, bias, count, gamma, beta):
    """Training-mode BatchNorm: per-channel scale/shift from per-band
    [sum, sum_sq] of the PRE-bias conv accumulator (variance is bias-free)."""
    s = jnp.sum(stats[:, :, 0, :], axis=(0, 1))
    q = jnp.sum(stats[:, :, 1, :], axis=(0, 1))
    mu0 = s / count
    var = jnp.maximum(q / count - mu0 * mu0, 0.0)
    mean = mu0 + bias
    scale = gamma * jax.lax.rsqrt(var + BN_EPS)
    shift = beta - mean * scale
    return scale.reshape(1, -1), shift.reshape(1, -1)


def _space_to_depth2(x):
    B, H, W, C = x.shape
    x = x.reshape(B, H // 2, 2, W // 2, 2, C)
    x = x.transpose(0, 1, 3, 2, 4, 5)
    return x.reshape(B, H // 2, W // 2, 4 * C)


def _s2d_conv3x3_weight(w3):
    """(3,3,Cin,Cout) stride-2 weight -> (16*Cin, Cout) im2col weight of the
    equivalent stride-1 2x2 conv over the space-to-depth input (exact)."""
    _, _, cin, cout = w3.shape
    w2 = jnp.zeros((2, 2, 2, 2, cin, cout), w3.dtype)
    for di in range(2):
        for dj in range(2):
            for pi in range(2):
                for pj in range(2):
                    ki, kj = 2 * di + pi, 2 * dj + pj
                    if ki < 3 and kj < 3:
                        w2 = w2.at[di, dj, pi, pj].set(w3[ki, kj])
    return w2.reshape(4 * 4 * cin, cout)


# ---------------------------------------------------------------------------
# Parameters (deterministic synthetic init, torch-like layout/semantics).
# ---------------------------------------------------------------------------

def _init_conv(key, k, cin, cout):
    kw, kb = jax.random.split(key)
    fan_in = k * k * cin
    w = (jax.random.normal(kw, (k, k, cin, cout), jnp.float32)
         / jnp.sqrt(float(fan_in)))
    b = jax.random.normal(kb, (cout,), jnp.float32) * 0.01
    return w, b


def init_resblock(key, in_channels, out_channels, downsample):
    """Returns (packed params for the Pallas path, raw f32 params for the
    pure-JAX reference)."""
    k1, k2, k3 = jax.random.split(key, 3)
    w1, b1 = _init_conv(k1, 3, in_channels, out_channels)
    w2, b2 = _init_conv(k2, 3, out_channels, out_channels)
    ones = jnp.ones((out_channels,), jnp.float32)
    zeros = jnp.zeros((out_channels,), jnp.float32)
    p = {
        "conv2_w": w2.reshape(9 * out_channels, out_channels).astype(jnp.bfloat16),
        "conv2_b": b2,
        "bn1_gamma": ones, "bn1_beta": zeros,
        "bn2_gamma": ones, "bn2_beta": zeros,
    }
    raw = {"w1": w1, "b1": b1, "w2": w2, "b2": b2,
           "g1": ones, "be1": zeros, "g2": ones, "be2": zeros}
    if downsample:
        p["conv1_w"] = _s2d_conv3x3_weight(w1).astype(jnp.bfloat16)
        p["conv1_b"] = b1
        wsc, bsc = _init_conv(k3, 1, in_channels, out_channels)
        p["sc_w"] = wsc.reshape(in_channels, out_channels).astype(jnp.bfloat16)
        p["sc_b"] = bsc
        p["sc_gamma"] = ones
        p["sc_beta"] = zeros
        raw.update({"wsc": wsc, "bsc": bsc, "gsc": ones, "besc": zeros})
    else:
        p["conv1_w"] = w1.reshape(9 * in_channels, out_channels).astype(jnp.bfloat16)
        p["conv1_b"] = b1
    return p, raw


# ---------------------------------------------------------------------------
# ResBlock forward.
# ---------------------------------------------------------------------------

def resblock_nhwc(p, x):
    """x: (B, H, W, Cin) f32 NHWC -> (B, OH, OW, Cout) f32 NHWC."""
    B, H, W, Cin = x.shape
    Cout = p["conv1_b"].shape[0]
    downsample = "sc_w" in p          # static (pytree structure)

    if downsample:
        assert H % 2 == 0 and W % 2 == 0
        oh, ow = H // 2, W // 2
        # conv1 (3x3 stride-2 pad-1) == 2x2 stride-1 "valid" conv over the
        # space-to-depth of the padded image; the 1x1 stride-2 shortcut conv
        # is fused into the same kernel (channel group (1,1) of tap (0,0)).
        xs2d = _space_to_depth2(
            jnp.pad(x.astype(jnp.bfloat16), ((0, 0), (1, 1), (1, 1), (0, 0))))
        # TODO(synk): the pad + space-to-depth relayout stays in XLA (one bf16
        # pass); fusing it would need strided in-kernel loads.
        h1_raw, h1_st, sc_raw, sc_st = conv_band(
            xs2d, p["conv1_w"], p["conv1_b"], k=2, pad=0, oh=oh, ow=ow,
            shortcut=(p["sc_w"], p["sc_b"]))
        r_scale, r_shift = _bn_scale_shift(sc_st, p["sc_b"], B * oh * ow,
                                           p["sc_gamma"], p["sc_beta"])
        r_flat = sc_raw.reshape(B * oh * ow, Cout)
    else:
        assert Cin == Cout
        oh, ow = H, W
        h1_raw, h1_st = conv_band(x, p["conv1_w"], p["conv1_b"],
                                  k=3, pad=1, oh=oh, ow=ow)
        r_flat = x.reshape(B * oh * ow, Cout)          # identity shortcut
        r_scale = jnp.ones((1, Cout), jnp.float32)
        r_shift = jnp.zeros((1, Cout), jnp.float32)

    n = B * oh * ow
    s1, t1 = _bn_scale_shift(h1_st, p["conv1_b"], n,
                             p["bn1_gamma"], p["bn1_beta"])
    # conv2 with BN1 + ReLU fused into its input path (no separate BN pass,
    # no HBM pad round trip).
    h2_raw, h2_st = conv_band(h1_raw.reshape(B, oh, ow, Cout),
                              p["conv2_w"], p["conv2_b"], k=3, pad=1,
                              oh=oh, ow=ow, pre=(s1, t1))
    s2, t2 = _bn_scale_shift(h2_st, p["conv2_b"], n,
                             p["bn2_gamma"], p["bn2_beta"])

    out = fused_tail(h2_raw.reshape(n, Cout), r_flat, s2, t2, r_scale, r_shift)
    return out.reshape(B, oh, ow, Cout)


def resblock_forward(params, x_nchw):
    """Torch-compatible interface: NCHW f32 in -> NCHW f32 out."""
    x = jnp.transpose(x_nchw, (0, 2, 3, 1)).astype(jnp.float32)
    return jnp.transpose(resblock_nhwc(params, x), (0, 3, 1, 2))


# ---------------------------------------------------------------------------
# Pure-JAX f32 reference (torch ResBlock.forward semantics), for validation.
# ---------------------------------------------------------------------------

def _conv_ref(x, w, b, stride, pad):
    y = jax.lax.conv_general_dilated(
        x, w, window_strides=(stride, stride),
        padding=((pad, pad), (pad, pad)),
        dimension_numbers=("NHWC", "HWIO", "NHWC"))
    return y + b


def _bn_ref(x, gamma, beta):
    m = jnp.mean(x, axis=(0, 1, 2))
    v = jnp.var(x, axis=(0, 1, 2))
    return (x - m) * (gamma * jax.lax.rsqrt(v + BN_EPS)) + beta


def resblock_ref(raw, x):
    if "wsc" in raw:
        sc = _bn_ref(_conv_ref(x, raw["wsc"], raw["bsc"], 2, 0),
                     raw["gsc"], raw["besc"])
        stride = 2
    else:
        sc = x
        stride = 1
    h = jax.nn.relu(_bn_ref(_conv_ref(x, raw["w1"], raw["b1"], stride, 1),
                            raw["g1"], raw["be1"]))
    h = jax.nn.relu(_bn_ref(_conv_ref(h, raw["w2"], raw["b2"], 1, 1),
                            raw["g2"], raw["be2"]))
    return jax.nn.relu(h + sc)


# ---------------------------------------------------------------------------
# Demo.
# ---------------------------------------------------------------------------

if __name__ == "__main__":
    key = jax.random.PRNGKey(0)
    kx, kp1, kp2 = jax.random.split(key, 3)

    # ResBlock(32 -> 64, downsample=True) then ResBlock(64 -> 64, identity):
    # exercises both shortcut variants of the reference module.
    x = jax.random.normal(kx, (2, 32, 16, 16), jnp.float32)   # NCHW like torch
    p_down, raw_down = init_resblock(kp1, 32, 64, downsample=True)
    p_id, raw_id = init_resblock(kp2, 64, 64, downsample=False)

    @jax.jit
    def fwd(pd, pi, inp):
        # Stay NHWC between the blocks; NCHW only at the torch-like boundary.
        h = jnp.transpose(inp, (0, 2, 3, 1)).astype(jnp.float32)
        h = resblock_nhwc(pd, h)
        h = resblock_nhwc(pi, h)
        return jnp.transpose(h, (0, 3, 1, 2))

    out = fwd(p_down, p_id, x)
    jax.block_until_ready(out)
    assert out.shape == (2, 64, 8, 8), out.shape
    assert bool(jnp.all(jnp.isfinite(out)))

    # Validate against a pure-JAX f32 reference (loose tolerance: the Pallas
    # path uses bf16 MXU operands and bf16 inter-kernel activations).
    @jax.jit
    def ref_fwd(inp):
        h = jnp.transpose(inp, (0, 2, 3, 1))
        h = resblock_ref(raw_down, h)
        h = resblock_ref(raw_id, h)
        return jnp.transpose(h, (0, 3, 1, 2))

    ref = ref_fwd(x)
    diff = jnp.abs(out - ref)
    ok = bool(jnp.all(diff <= 0.06 * jnp.abs(ref) + 0.15))
    assert ok, f"mismatch vs f32 reference: max_abs={float(jnp.max(diff)):.4f}"
    print("KERNEL_OK")
</pallas_src>

<mosaic_0001>
module attributes {stable_mosaic.version = 11 : i64} {
  func.func @kernel(%arg0: i32, %arg1: i32, %arg2: memref<1x9x9x128xbf16, #tpu.memory_space<vmem>>, %arg3: memref<512x64xbf16, #tpu.memory_space<vmem>>, %arg4: memref<1x64xf32, #tpu.memory_space<vmem>>, %arg5: memref<32x64xbf16, #tpu.memory_space<vmem>>, %arg6: memref<1x64xf32, #tpu.memory_space<vmem>>, %arg7: memref<1x64x64xbf16, #tpu.memory_space<vmem>>, %arg8: memref<1x1x2x64xf32, #tpu.memory_space<vmem>>, %arg9: memref<1x64x64xbf16, #tpu.memory_space<vmem>>, %arg10: memref<1x1x2x64xf32, #tpu.memory_space<vmem>>, %arg11: memref<9x9x128xbf16, #tpu.memory_space<vmem>>, %arg12: memref<64x512xbf16, #tpu.memory_space<vmem>>) attributes {dimension_semantics = [#tpu.dimension_semantics<parallel>, #tpu.dimension_semantics<arbitrary>], iteration_bounds = array<i64: 2, 1>, scalar_prefetch = 0 : i64, scratch_operands = 2 : i64, tpu.core_type = #tpu.core_type<tc>, window_params = [{transform_indices = @transform_0, window_bounds = array<i64: 1, 9, 9, 128>}, {pipeline_mode = #tpu.pipeline_mode<synchronous>, transform_indices = @transform_1, window_bounds = array<i64: 512, 64>}, {pipeline_mode = #tpu.pipeline_mode<synchronous>, transform_indices = @transform_2, window_bounds = array<i64: 1, 64>}, {pipeline_mode = #tpu.pipeline_mode<synchronous>, transform_indices = @transform_3, window_bounds = array<i64: 32, 64>}, {pipeline_mode = #tpu.pipeline_mode<synchronous>, transform_indices = @transform_4, window_bounds = array<i64: 1, 64>}, {transform_indices = @transform_5, window_bounds = array<i64: 1, 64, 64>}, {transform_indices = @transform_6, window_bounds = array<i64: 1, 1, 2, 64>}, {transform_indices = @transform_7, window_bounds = array<i64: 1, 64, 64>}, {transform_indices = @transform_8, window_bounds = array<i64: 1, 1, 2, 64>}]} {
    %c0_i32 = arith.constant 0 : i32
    %0 = arith.cmpi eq, %arg1, %c0_i32 : i32
    %1 = arith.extui %0 : i1 to i32
    %c0_i32_0 = arith.constant 0 : i32
    %2 = arith.cmpi ne, %1, %c0_i32_0 : i32
    scf.if %2 {
      %c0_52 = arith.constant 0 : index
      %c0_53 = arith.constant 0 : index
      %c0_54 = arith.constant 0 : index
      %c0_55 = arith.constant 0 : index
      %67 = vector.load %arg2[%c0_52, %c0_53, %c0_54, %c0_55] : memref<1x9x9x128xbf16, #tpu.memory_space<vmem>>, vector<1x9x9x128xbf16>
      %68 = vector.shape_cast %67 : vector<1x9x9x128xbf16> to vector<9x9x128xbf16>
      %c0_56 = arith.constant 0 : index
      %c0_57 = arith.constant 0 : index
      %c0_58 = arith.constant 0 : index
      %69 = vector.load %arg11[%c0_56, %c0_57, %c0_58] : memref<9x9x128xbf16, #tpu.memory_space<vmem>>, vector<9x9x128xbf16>
      tpu.vector_store %arg11[%c0_56, %c0_57, %c0_58], %68 {strides = array<i32>} : memref<9x9x128xbf16, #tpu.memory_space<vmem>>, vector<9x9x128xbf16>,
    } else {
    }
    %c8_i32 = arith.constant 8 : i32
    %3 = arith.muli %arg1, %c8_i32 : i32
    %4 = tpu.assume_multiple %3, 8 : i32
    %c0_i32_1 = arith.constant 0 : i32
    %5 = arith.addi %4, %c0_i32_1 : i32
    %6 = arith.index_cast %5 : i32 to index
    %c0 = arith.constant 0 : index
    %c0_2 = arith.constant 0 : index
    %7 = vector.load %arg11[%6, %c0, %c0_2] : memref<9x9x128xbf16, #tpu.memory_space<vmem>>, vector<8x8x128xbf16>
    %8 = vector.shape_cast %7 : vector<8x8x128xbf16> to vector<64x128xbf16>
    %c0_3 = arith.constant 0 : index
    %c0_4 = arith.constant 0 : index
    %9 = vector.load %arg12[%c0_3, %c0_4] : memref<64x512xbf16, #tpu.memory_space<vmem>>, vector<64x128xbf16>
    tpu.vector_store %arg12[%c0_3, %c0_4], %8 {strides = array<i32>} : memref<64x512xbf16, #tpu.memory_space<vmem>>, vector<64x128xbf16>,
    %c0_i32_5 = arith.constant 0 : i32
    %10 = arith.addi %4, %c0_i32_5 : i32
    %11 = arith.index_cast %10 : i32 to index
    %c1 = arith.constant 1 : index
    %c0_6 = arith.constant 0 : index
    %12 = vector.load %arg11[%11, %c1, %c0_6] : memref<9x9x128xbf16, #tpu.memory_space<vmem>>, vector<8x8x128xbf16>
    %13 = vector.shape_cast %12 : vector<8x8x128xbf16> to vector<64x128xbf16>
    %c0_7 = arith.constant 0 : index
    %c128 = arith.constant 128 : index
    %14 = vector.load %arg12[%c0_7, %c128] : memref<64x512xbf16, #tpu.memory_space<vmem>>, vector<64x128xbf16>
    tpu.vector_store %arg12[%c0_7, %c128], %13 {strides = array<i32>} : memref<64x512xbf16, #tpu.memory_space<vmem>>, vector<64x128xbf16>,
    %c1_i32 = arith.constant 1 : i32
    %15 = arith.addi %4, %c1_i32 : i32
    %16 = arith.index_cast %15 : i32 to index
    %c0_8 = arith.constant 0 : index
    %c0_9 = arith.constant 0 : index
    %17 = vector.load %arg11[%16, %c0_8, %c0_9] : memref<9x9x128xbf16, #tpu.memory_space<vmem>>, vector<8x8x128xbf16>
    %18 = vector.shape_cast %17 : vector<8x8x128xbf16> to vector<64x128xbf16>
    %c0_10 = arith.constant 0 : index
    %c256 = arith.constant 256 : index
    %19 = vector.load %arg12[%c0_10, %c256] : memref<64x512xbf16, #tpu.memory_space<vmem>>, vector<64x128xbf16>
    tpu.vector_store %arg12[%c0_10, %c256], %18 {strides = array<i32>} : memref<64x512xbf16, #tpu.memory_space<vmem>>, vector<64x128xbf16>,
    %c1_i32_11 = arith.constant 1 : i32
    %20 = arith.addi %4, %c1_i32_11 : i32
    %21 = arith.index_cast %20 : i32 to index
    %c1_12 = arith.constant 1 : index
    %c0_13 = arith.constant 0 : index
    %22 = vector.load %arg11[%21, %c1_12, %c0_13] : memref<9x9x128xbf16, #tpu.memory_space<vmem>>, vector<8x8x128xbf16>
    %23 = vector.shape_cast %22 : vector<8x8x128xbf16> to vector<64x128xbf16>
    %c0_14 = arith.constant 0 : index
    %c384 = arith.constant 384 : index
    %24 = vector.load %arg12[%c0_14, %c384] : memref<64x512xbf16, #tpu.memory_space<vmem>>, vector<64x128xbf16>
    tpu.vector_store %arg12[%c0_14, %c384], %23 {strides = array<i32>} : memref<64x512xbf16, #tpu.memory_space<vmem>>, vector<64x128xbf16>,
    %c0_15 = arith.constant 0 : index
    %c0_16 = arith.constant 0 : index
    %25 = vector.load %arg12[%c0_15, %c0_16] : memref<64x512xbf16, #tpu.memory_space<vmem>>, vector<64x512xbf16>
    %c0_17 = arith.constant 0 : index
    %c0_18 = arith.constant 0 : index
    %26 = vector.load %arg3[%c0_17, %c0_18] : memref<512x64xbf16, #tpu.memory_space<vmem>>, vector<512x64xbf16>
    %cst = arith.constant dense<0.000000e+00> : vector<64x64xf32>
    %27 = tpu.matmul %25, %26, %cst {dimension_numbers = #tpu.dot_dimension_numbers<[1], [0], [0], [1], [0, 0, 1, 1], [], []>} : vector<64x512xbf16>, vector<512x64xbf16>, vector<64x64xf32> -> vector<64x64xf32>
    %cst_19 = arith.constant dense<0.000000e+00> : vector<64xf32>
    %28 = vector.multi_reduction <add>, %27, %cst_19 [0] : vector<64x64xf32> to vector<64xf32>
    %29 = vector.shape_cast %28 : vector<64xf32> to vector<1x64xf32>
    %c0_20 = arith.constant 0 : index
    %c0_21 = arith.constant 0 : index
    %c0_22 = arith.constant 0 : index
    %c0_23 = arith.constant 0 : index
    %30 = vector.load %arg8[%c0_20, %c0_21, %c0_22, %c0_23] : memref<1x1x2x64xf32, #tpu.memory_space<vmem>>, vector<1x1x1x64xf32>
    %31 = vector.shape_cast %30 : vector<1x1x1x64xf32> to vector<1x64xf32>
    %32 = vector.shape_cast %29 : vector<1x64xf32> to vector<1x1x1x64xf32>
    tpu.vector_store %arg8[%c0_20, %c0_21, %c0_22, %c0_23], %32 {strides = array<i32>} : memref<1x1x2x64xf32, #tpu.memory_space<vmem>>, vector<1x1x1x64xf32>,
    %33 = arith.mulf %27, %27 : vector<64x64xf32>
    %cst_24 = arith.constant dense<0.000000e+00> : vector<64xf32>
    %34 = vector.multi_reduction <add>, %33, %cst_24 [0] : vector<64x64xf32> to vector<64xf32>
    %35 = vector.shape_cast %34 : vector<64xf32> to vector<1x64xf32>
    %c0_25 = arith.constant 0 : index
    %c0_26 = arith.constant 0 : index
    %c1_27 = arith.constant 1 : index
    %c0_28 = arith.constant 0 : index
    %36 = vector.load %arg8[%c0_25, %c0_26, %c1_27, %c0_28] : memref<1x1x2x64xf32, #tpu.memory_space<vmem>>, vector<1x1x1x64xf32>
    %37 = vector.shape_cast %36 : vector<1x1x1x64xf32> to vector<1x64xf32>
    %38 = vector.shape_cast %35 : vector<1x64xf32> to vector<1x1x1x64xf32>
    tpu.vector_store %arg8[%c0_25, %c0_26, %c1_27, %c0_28], %38 {strides = array<i32>} : memref<1x1x2x64xf32, #tpu.memory_space<vmem>>, vector<1x1x1x64xf32>,
    %c0_29 = arith.constant 0 : index
    %c0_30 = arith.constant 0 : index
    %39 = vector.load %arg4[%c0_29, %c0_30] : memref<1x64xf32, #tpu.memory_space<vmem>>, vector<1x64xf32>
    %40 = vector.broadcast %39 : vector<1x64xf32> to vector<64x64xf32>
    %41 = arith.addf %27, %40 : vector<64x64xf32>
    %42 = arith.truncf %41 : vector<64x64xf32> to vector<64x64xbf16>
    %c0_31 = arith.constant 0 : index
    %c0_32 = arith.constant 0 : index
    %c0_33 = arith.constant 0 : index
    %43 = vector.load %arg7[%c0_31, %c0_32, %c0_33] : memref<1x64x64xbf16, #tpu.memory_space<vmem>>, vector<1x64x64xbf16>
    %44 = vector.shape_cast %43 : vector<1x64x64xbf16> to vector<64x64xbf16>
    %45 = vector.shape_cast %42 : vector<64x64xbf16> to vector<1x64x64xbf16>
    tpu.vector_store %arg7[%c0_31, %c0_32, %c0_33], %45 {strides = array<i32>} : memref<1x64x64xbf16, #tpu.memory_space<vmem>>, vector<1x64x64xbf16>,
    %46 = vector.extract_strided_slice %25 {offsets = [0, 96], sizes = [64, 32], strides = [1, 1]} : vector<64x512xbf16> to vector<64x32xbf16>
    %c0_34 = arith.constant 0 : index
    %c0_35 = arith.constant 0 : index
    %47 = vector.load %arg5[%c0_34, %c0_35] : memref<32x64xbf16, #tpu.memory_space<vmem>>, vector<32x64xbf16>
    %cst_36 = arith.constant dense<0.000000e+00> : vector<64x64xf32>
    %48 = tpu.matmul %46, %47, %cst_36 {dimension_numbers = #tpu.dot_dimension_numbers<[1], [0], [0], [1], [0, 0, 1, 1], [], []>} : vector<64x32xbf16>, vector<32x64xbf16>, vector<64x64xf32> -> vector<64x64xf32>
    %cst_37 = arith.constant dense<0.000000e+00> : vector<64xf32>
    %49 = vector.multi_reduction <add>, %48, %cst_37 [0] : vector<64x64xf32> to vector<64xf32>
    %50 = vector.shape_cast %49 : vector<64xf32> to vector<1x64xf32>
    %c0_38 = arith.constant 0 : index
    %c0_39 = arith.constant 0 : index
    %c0_40 = arith.constant 0 : index
    %c0_41 = arith.constant 0 : index
    %51 = vector.load %arg10[%c0_38, %c0_39, %c0_40, %c0_41] : memref<1x1x2x64xf32, #tpu.memory_space<vmem>>, vector<1x1x1x64xf32>
    %52 = vector.shape_cast %51 : vector<1x1x1x64xf32> to vector<1x64xf32>
    %53 = vector.shape_cast %50 : vector<1x64xf32> to vector<1x1x1x64xf32>
    tpu.vector_store %arg10[%c0_38, %c0_39, %c0_40, %c0_41], %53 {strides = array<i32>} : memref<1x1x2x64xf32, #tpu.memory_space<vmem>>, vector<1x1x1x64xf32>,
    %54 = arith.mulf %48, %48 : vector<64x64xf32>
    %cst_42 = arith.constant dense<0.000000e+00> : vector<64xf32>
    %55 = vector.multi_reduction <add>, %54, %cst_42 [0] : vector<64x64xf32> to vector<64xf32>
    %56 = vector.shape_cast %55 : vector<64xf32> to vector<1x64xf32>
    %c0_43 = arith.constant 0 : index
    %c0_44 = arith.constant 0 : index
    %c1_45 = arith.constant 1 : index
    %c0_46 = arith.constant 0 : index
    %57 = vector.load %arg10[%c0_43, %c0_44, %c1_45, %c0_46] : memref<1x1x2x64xf32, #tpu.memory_space<vmem>>, vector<1x1x1x64xf32>
    %58 = vector.shape_cast %57 : vector<1x1x1x64xf32> to vector<1x64xf32>
    %59 = vector.shape_cast %56 : vector<1x64xf32> to vector<1x1x1x64xf32>
    tpu.vector_store %arg10[%c0_43, %c0_44, %c1_45, %c0_46], %59 {strides = array<i32>} : memref<1x1x2x64xf32, #tpu.memory_space<vmem>>, vector<1x1x1x64xf32>,
    %c0_47 = arith.constant 0 : index
    %c0_48 = arith.constant 0 : index
    %60 = vector.load %arg6[%c0_47, %c0_48] : memref<1x64xf32, #tpu.memory_space<vmem>>, vector<1x64xf32>
    %61 = vector.broadcast %60 : vector<1x64xf32> to vector<64x64xf32>
    %62 = arith.addf %48, %61 : vector<64x64xf32>
    %63 = arith.truncf %62 : vector<64x64xf32> to vector<64x64xbf16>
    %c0_49 = arith.constant 0 : index
    %c0_50 = arith.constant 0 : index
    %c0_51 = arith.constant 0 : index
    %64 = vector.load %arg9[%c0_49, %c0_50, %c0_51] : memref<1x64x64xbf16, #tpu.memory_space<vmem>>, vector<1x64x64xbf16>
    %65 = vector.shape_cast %64 : vector<1x64x64xbf16> to vector<64x64xbf16>
    %66 = vector.shape_cast %63 : vector<64x64xbf16> to vector<1x64x64xbf16>
    tpu.vector_store %arg9[%c0_49, %c0_50, %c0_51], %66 {strides = array<i32>} : memref<1x64x64xbf16, #tpu.memory_space<vmem>>, vector<1x64x64xbf16>,
    return
  }
  func.func @transform_0(%arg0: i32, %arg1: i32) -> (i32, i32, i32, i32) {
    %c0_i32 = arith.constant 0 : i32
    %c0_i32_0 = arith.constant 0 : i32
    %c0_i32_1 = arith.constant 0 : i32
    %c0_i32_2 = arith.constant 0 : i32
    return %arg0, %c0_i32, %c0_i32_0, %c0_i32_1 : i32, i32, i32, i32
  }
  func.func @transform_1(%arg0: i32, %arg1: i32) -> (i32, i32) {
    %c0_i32 = arith.constant 0 : i32
    %c0_i32_0 = arith.constant 0 : i32
    %c0_i32_1 = arith.constant 0 : i32
    return %c0_i32, %c0_i32_0 : i32, i32
  }
  func.func @transform_2(%arg0: i32, %arg1: i32) -> (i32, i32) {
    %c0_i32 = arith.constant 0 : i32
    %c0_i32_0 = arith.constant 0 : i32
    %c0_i32_1 = arith.constant 0 : i32
    return %c0_i32, %c0_i32_0 : i32, i32
  }
  func.func @transform_3(%arg0: i32, %arg1: i32) -> (i32, i32) {
    %c0_i32 = arith.constant 0 : i32
    %c0_i32_0 = arith.constant 0 : i32
    %c0_i32_1 = arith.constant 0 : i32
    return %c0_i32, %c0_i32_0 : i32, i32
  }
  func.func @transform_4(%arg0: i32, %arg1: i32) -> (i32, i32) {
    %c0_i32 = arith.constant 0 : i32
    %c0_i32_0 = arith.constant 0 : i32
    %c0_i32_1 = arith.constant 0 : i32
    return %c0_i32, %c0_i32_0 : i32, i32
  }
  func.func @transform_5(%arg0: i32, %arg1: i32) -> (i32, i32, i32) {
    %c0_i32 = arith.constant 0 : i32
    %c0_i32_0 = arith.constant 0 : i32
    return %arg0, %arg1, %c0_i32 : i32, i32, i32
  }
  func.func @transform_6(%arg0: i32, %arg1: i32) -> (i32, i32, i32, i32) {
    %c0_i32 = arith.constant 0 : i32
    %c0_i32_0 = arith.constant 0 : i32
    %c0_i32_1 = arith.constant 0 : i32
    return %arg0, %arg1, %c0_i32, %c0_i32_0 : i32, i32, i32, i32
  }
  func.func @transform_7(%arg0: i32, %arg1: i32) -> (i32, i32, i32) {
    %c0_i32 = arith.constant 0 : i32
    %c0_i32_0 = arith.constant 0 : i32
    return %arg0, %arg1, %c0_i32 : i32, i32, i32
  }
  func.func @transform_8(%arg0: i32, %arg1: i32) -> (i32, i32, i32, i32) {
    %c0_i32 = arith.constant 0 : i32
    %c0_i32_0 = arith.constant 0 : i32
    %c0_i32_1 = arith.constant 0 : i32
    return %arg0, %arg1, %c0_i32, %c0_i32_0 : i32, i32, i32, i32
  }
}

module attributes {stable_mosaic.version = 11 : i64} {
  func.func @kernel(%arg0: i32, %arg1: i32, %arg2: memref<1x8x8x64xbf16, #tpu.memory_space<vmem>>, %arg3: memref<576x64xbf16, #tpu.memory_space<vmem>>, %arg4: memref<1x64xf32, #tpu.memory_space<vmem>>, %arg5: memref<1x64xf32, #tpu.memory_space<vmem>>, %arg6: memref<1x64xf32, #tpu.memory_space<vmem>>, %arg7: memref<1x64x64xbf16, #tpu.memory_space<vmem>>, %arg8: memref<1x1x2x64xf32, #tpu.memory_space<vmem>>, %arg9: memref<10x10x64xbf16, #tpu.memory_space<vmem>>, %arg10: memref<64x576xbf16, #tpu.memory_space<vmem>>) attributes {dimension_semantics = [#tpu.dimension_semantics<parallel>, #tpu.dimension_semantics<arbitrary>], iteration_bounds = array<i64: 2, 1>, scalar_prefetch = 0 : i64, scratch_operands = 2 : i64, tpu.core_type = #tpu.core_type<tc>, window_params = [{transform_indices = @transform_0, window_bounds = array<i64: 1, 8, 8, 64>}, {pipeline_mode = #tpu.pipeline_mode<synchronous>, transform_indices = @transform_1, window_bounds = array<i64: 576, 64>}, {pipeline_mode = #tpu.pipeline_mode<synchronous>, transform_indices = @transform_2, window_bounds = array<i64: 1, 64>}, {pipeline_mode = #tpu.pipeline_mode<synchronous>, transform_indices = @transform_3, window_bounds = array<i64: 1, 64>}, {pipeline_mode = #tpu.pipeline_mode<synchronous>, transform_indices = @transform_4, window_bounds = array<i64: 1, 64>}, {transform_indices = @transform_5, window_bounds = array<i64: 1, 64, 64>}, {transform_indices = @transform_6, window_bounds = array<i64: 1, 1, 2, 64>}]} {
    %c0_i32 = arith.constant 0 : i32
    %0 = arith.cmpi eq, %arg1, %c0_i32 : i32
    %1 = arith.extui %0 : i1 to i32
    %c0_i32_0 = arith.constant 0 : i32
    %2 = arith.cmpi ne, %1, %c0_i32_0 : i32
    scf.if %2 {
      %c0_52 = arith.constant 0 : index
      %c0_53 = arith.constant 0 : index
      %c0_54 = arith.constant 0 : index
      %c0_55 = arith.constant 0 : index
      %71 = vector.load %arg2[%c0_52, %c0_53, %c0_54, %c0_55] : memref<1x8x8x64xbf16, #tpu.memory_space<vmem>>, vector<1x8x8x64xbf16>
      %72 = vector.shape_cast %71 : vector<1x8x8x64xbf16> to vector<8x8x64xbf16>
      %73 = arith.extf %72 : vector<8x8x64xbf16> to vector<8x8x64xf32>
      %c0_56 = arith.constant 0 : index
      %c0_57 = arith.constant 0 : index
      %74 = vector.load %arg5[%c0_56, %c0_57] : memref<1x64xf32, #tpu.memory_space<vmem>>, vector<1x64xf32>
      %75 = vector.shape_cast %74 : vector<1x64xf32> to vector<1x1x64xf32>
      %76 = vector.broadcast %75 : vector<1x1x64xf32> to vector<8x8x64xf32>
      %77 = arith.mulf %73, %76 : vector<8x8x64xf32>
      %c0_58 = arith.constant 0 : index
      %c0_59 = arith.constant 0 : index
      %78 = vector.load %arg6[%c0_58, %c0_59] : memref<1x64xf32, #tpu.memory_space<vmem>>, vector<1x64xf32>
      %79 = vector.shape_cast %78 : vector<1x64xf32> to vector<1x1x64xf32>
      %80 = vector.broadcast %79 : vector<1x1x64xf32> to vector<8x8x64xf32>
      %81 = arith.addf %77, %80 : vector<8x8x64xf32>
      %cst_60 = arith.constant 0.000000e+00 : f32
      %82 = vector.broadcast %cst_60 : f32 to vector<8x8x64xf32>
      %83 = arith.maximumf %81, %82 : vector<8x8x64xf32>
      %84 = arith.truncf %83 : vector<8x8x64xf32> to vector<8x8x64xbf16>
      %cst_61 = arith.constant 0.000000e+00 : bf16
      %85 = vector.broadcast %cst_61 : bf16 to vector<10x10x64xbf16>
      %c0_62 = arith.constant 0 : index
      %c0_63 = arith.constant 0 : index
      %c0_64 = arith.constant 0 : index
      %86 = vector.load %arg9[%c0_62, %c0_63, %c0_64] : memref<10x10x64xbf16, #tpu.memory_space<vmem>>, vector<10x10x64xbf16>
      tpu.vector_store %arg9[%c0_62, %c0_63, %c0_64], %85 {strides = array<i32>} : memref<10x10x64xbf16, #tpu.memory_space<vmem>>, vector<10x10x64xbf16>,
      %c1_65 = arith.constant 1 : index
      %c1_66 = arith.constant 1 : index
      %c0_67 = arith.constant 0 : index
      %87 = vector.load %arg9[%c1_65, %c1_66, %c0_67] : memref<10x10x64xbf16, #tpu.memory_space<vmem>>, vector<8x8x64xbf16>
      tpu.vector_store %arg9[%c1_65, %c1_66, %c0_67], %84 {strides = array<i32>} : memref<10x10x64xbf16, #tpu.memory_space<vmem>>, vector<8x8x64xbf16>,
    } else {
    }
    %c8_i32 = arith.constant 8 : i32
    %3 = arith.muli %arg1, %c8_i32 : i32
    %4 = tpu.assume_multiple %3, 8 : i32
    %c0_i32_1 = arith.constant 0 : i32
    %5 = arith.addi %4, %c0_i32_1 : i32
    %6 = arith.index_cast %5 : i32 to index
    %c0 = arith.constant 0 : index
    %c0_2 = arith.constant 0 : index
    %7 = vector.load %arg9[%6, %c0, %c0_2] : memref<10x10x64xbf16, #tpu.memory_space<vmem>>, vector<8x8x64xbf16>
    %8 = vector.shape_cast %7 : vector<8x8x64xbf16> to vector<64x64xbf16>
    %c0_3 = arith.constant 0 : index
    %c0_4 = arith.constant 0 : index
    %9 = vector.load %arg10[%c0_3, %c0_4] : memref<64x576xbf16, #tpu.memory_space<vmem>>, vector<64x64xbf16>
    tpu.vector_store %arg10[%c0_3, %c0_4], %8 {strides = array<i32>} : memref<64x576xbf16, #tpu.memory_space<vmem>>, vector<64x64xbf16>,
    %c0_i32_5 = arith.constant 0 : i32
    %10 = arith.addi %4, %c0_i32_5 : i32
    %11 = arith.index_cast %10 : i32 to index
    %c1 = arith.constant 1 : index
    %c0_6 = arith.constant 0 : index
    %12 = vector.load %arg9[%11, %c1, %c0_6] : memref<10x10x64xbf16, #tpu.memory_space<vmem>>, vector<8x8x64xbf16>
    %13 = vector.shape_cast %12 : vector<8x8x64xbf16> to vector<64x64xbf16>
    %c0_7 = arith.constant 0 : index
    %c64 = arith.constant 64 : index
    %14 = vector.load %arg10[%c0_7, %c64] : memref<64x576xbf16, #tpu.memory_space<vmem>>, vector<64x64xbf16>
    tpu.vector_store %arg10[%c0_7, %c64], %13 {strides = array<i32>} : memref<64x576xbf16, #tpu.memory_space<vmem>>, vector<64x64xbf16>,
    %c0_i32_8 = arith.constant 0 : i32
    %15 = arith.addi %4, %c0_i32_8 : i32
    %16 = arith.index_cast %15 : i32 to index
    %c2 = arith.constant 2 : index
    %c0_9 = arith.constant 0 : index
    %17 = vector.load %arg9[%16, %c2, %c0_9] : memref<10x10x64xbf16, #tpu.memory_space<vmem>>, vector<8x8x64xbf16>
    %18 = vector.shape_cast %17 : vector<8x8x64xbf16> to vector<64x64xbf16>
    %c0_10 = arith.constant 0 : index
    %c128 = arith.constant 128 : index
    %19 = vector.load %arg10[%c0_10, %c128] : memref<64x576xbf16, #tpu.memory_space<vmem>>, vector<64x64xbf16>
    tpu.vector_store %arg10[%c0_10, %c128], %18 {strides = array<i32>} : memref<64x576xbf16, #tpu.memory_space<vmem>>, vector<64x64xbf16>,
    %c1_i32 = arith.constant 1 : i32
    %20 = arith.addi %4, %c1_i32 : i32
    %21 = arith.index_cast %20 : i32 to index
    %c0_11 = arith.constant 0 : index
    %c0_12 = arith.constant 0 : index
    %22 = vector.load %arg9[%21, %c0_11, %c0_12] : memref<10x10x64xbf16, #tpu.memory_space<vmem>>, vector<8x8x64xbf16>
    %23 = vector.shape_cast %22 : vector<8x8x64xbf16> to vector<64x64xbf16>
    %c0_13 = arith.constant 0 : index
    %c192 = arith.constant 192 : index
    %24 = vector.load %arg10[%c0_13, %c192] : memref<64x576xbf16, #tpu.memory_space<vmem>>, vector<64x64xbf16>
    tpu.vector_store %arg10[%c0_13, %c192], %23 {strides = array<i32>} : memref<64x576xbf16, #tpu.memory_space<vmem>>, vector<64x64xbf16>,
    %c1_i32_14 = arith.constant 1 : i32
    %25 = arith.addi %4, %c1_i32_14 : i32
    %26 = arith.index_cast %25 : i32 to index
    %c1_15 = arith.constant 1 : index
    %c0_16 = arith.constant 0 : index
    %27 = vector.load %arg9[%26, %c1_15, %c0_16] : memref<10x10x64xbf16, #tpu.memory_space<vmem>>, vector<8x8x64xbf16>
    %28 = vector.shape_cast %27 : vector<8x8x64xbf16> to vector<64x64xbf16>
    %c0_17 = arith.constant 0 : index
    %c256 = arith.constant 256 : index
    %29 = vector.load %arg10[%c0_17, %c256] : memref<64x576xbf16, #tpu.memory_space<vmem>>, vector<64x64xbf16>
    tpu.vector_store %arg10[%c0_17, %c256], %28 {strides = array<i32>} : memref<64x576xbf16, #tpu.memory_space<vmem>>, vector<64x64xbf16>,
    %c1_i32_18 = arith.constant 1 : i32
    %30 = arith.addi %4, %c1_i32_18 : i32
    %31 = arith.index_cast %30 : i32 to index
    %c2_19 = arith.constant 2 : index
    %c0_20 = arith.constant 0 : index
    %32 = vector.load %arg9[%31, %c2_19, %c0_20] : memref<10x10x64xbf16, #tpu.memory_space<vmem>>, vector<8x8x64xbf16>
    %33 = vector.shape_cast %32 : vector<8x8x64xbf16> to vector<64x64xbf16>
    %c0_21 = arith.constant 0 : index
    %c320 = arith.constant 320 : index
    %34 = vector.load %arg10[%c0_21, %c320] : memref<64x576xbf16, #tpu.memory_space<vmem>>, vector<64x64xbf16>
    tpu.vector_store %arg10[%c0_21, %c320], %33 {strides = array<i32>} : memref<64x576xbf16, #tpu.memory_space<vmem>>, vector<64x64xbf16>,
    %c2_i32 = arith.constant 2 : i32
    %35 = arith.addi %4, %c2_i32 : i32
    %36 = arith.index_cast %35 : i32 to index
    %c0_22 = arith.constant 0 : index
    %c0_23 = arith.constant 0 : index
    %37 = vector.load %arg9[%36, %c0_22, %c0_23] : memref<10x10x64xbf16, #tpu.memory_space<vmem>>, vector<8x8x64xbf16>
    %38 = vector.shape_cast %37 : vector<8x8x64xbf16> to vector<64x64xbf16>
    %c0_24 = arith.constant 0 : index
    %c384 = arith.constant 384 : index
    %39 = vector.load %arg10[%c0_24, %c384] : memref<64x576xbf16, #tpu.memory_space<vmem>>, vector<64x64xbf16>
    tpu.vector_store %arg10[%c0_24, %c384], %38 {strides = array<i32>} : memref<64x576xbf16, #tpu.memory_space<vmem>>, vector<64x64xbf16>,
    %c2_i32_25 = arith.constant 2 : i32
    %40 = arith.addi %4, %c2_i32_25 : i32
    %41 = arith.index_cast %40 : i32 to index
    %c1_26 = arith.constant 1 : index
    %c0_27 = arith.constant 0 : index
    %42 = vector.load %arg9[%41, %c1_26, %c0_27] : memref<10x10x64xbf16, #tpu.memory_space<vmem>>, vector<8x8x64xbf16>
    %43 = vector.shape_cast %42 : vector<8x8x64xbf16> to vector<64x64xbf16>
    %c0_28 = arith.constant 0 : index
    %c448 = arith.constant 448 : index
    %44 = vector.load %arg10[%c0_28, %c448] : memref<64x576xbf16, #tpu.memory_space<vmem>>, vector<64x64xbf16>
    tpu.vector_store %arg10[%c0_28, %c448], %43 {strides = array<i32>} : memref<64x576xbf16, #tpu.memory_space<vmem>>, vector<64x64xbf16>,
    %c2_i32_29 = arith.constant 2 : i32
    %45 = arith.addi %4, %c2_i32_29 : i32
    %46 = arith.index_cast %45 : i32 to index
    %c2_30 = arith.constant 2 : index
    %c0_31 = arith.constant 0 : index
    %47 = vector.load %arg9[%46, %c2_30, %c0_31] : memref<10x10x64xbf16, #tpu.memory_space<vmem>>, vector<8x8x64xbf16>
    %48 = vector.shape_cast %47 : vector<8x8x64xbf16> to vector<64x64xbf16>
    %c0_32 = arith.constant 0 : index
    %c512 = arith.constant 512 : index
    %49 = vector.load %arg10[%c0_32, %c512] : memref<64x576xbf16, #tpu.memory_space<vmem>>, vector<64x64xbf16>
    tpu.vector_store %arg10[%c0_32, %c512], %48 {strides = array<i32>} : memref<64x576xbf16, #tpu.memory_space<vmem>>, vector<64x64xbf16>,
    %c0_33 = arith.constant 0 : index
    %c0_34 = arith.constant 0 : index
    %50 = vector.load %arg10[%c0_33, %c0_34] : memref<64x576xbf16, #tpu.memory_space<vmem>>, vector<64x576xbf16>
    %c0_35 = arith.constant 0 : index
    %c0_36 = arith.constant 0 : index
    %51 = vector.load %arg3[%c0_35, %c0_36] : memref<576x64xbf16, #tpu.memory_space<vmem>>, vector<576x64xbf16>
    %cst = arith.constant dense<0.000000e+00> : vector<64x64xf32>
    %52 = tpu.matmul %50, %51, %cst {dimension_numbers = #tpu.dot_dimension_numbers<[1], [0], [0], [1], [0, 0, 1, 1], [], []>} : vector<64x576xbf16>, vector<576x64xbf16>, vector<64x64xf32> -> vector<64x64xf32>
    %cst_37 = arith.constant dense<0.000000e+00> : vector<64xf32>
    %53 = vector.multi_reduction <add>, %52, %cst_37 [0] : vector<64x64xf32> to vector<64xf32>
    %54 = vector.shape_cast %53 : vector<64xf32> to vector<1x64xf32>
    %c0_38 = arith.constant 0 : index
    %c0_39 = arith.constant 0 : index
    %c0_40 = arith.constant 0 : index
    %c0_41 = arith.constant 0 : index
    %55 = vector.load %arg8[%c0_38, %c0_39, %c0_40, %c0_41] : memref<1x1x2x64xf32, #tpu.memory_space<vmem>>, vector<1x1x1x64xf32>
    %56 = vector.shape_cast %55 : vector<1x1x1x64xf32> to vector<1x64xf32>
    %57 = vector.shape_cast %54 : vector<1x64xf32> to vector<1x1x1x64xf32>
    tpu.vector_store %arg8[%c0_38, %c0_39, %c0_40, %c0_41], %57 {strides = array<i32>} : memref<1x1x2x64xf32, #tpu.memory_space<vmem>>, vector<1x1x1x64xf32>,
    %58 = arith.mulf %52, %52 : vector<64x64xf32>
    %cst_42 = arith.constant dense<0.000000e+00> : vector<64xf32>
    %59 = vector.multi_reduction <add>, %58, %cst_42 [0] : vector<64x64xf32> to vector<64xf32>
    %60 = vector.shape_cast %59 : vector<64xf32> to vector<1x64xf32>
    %c0_43 = arith.constant 0 : index
    %c0_44 = arith.constant 0 : index
    %c1_45 = arith.constant 1 : index
    %c0_46 = arith.constant 0 : index
    %61 = vector.load %arg8[%c0_43, %c0_44, %c1_45, %c0_46] : memref<1x1x2x64xf32, #tpu.memory_space<vmem>>, vector<1x1x1x64xf32>
    %62 = vector.shape_cast %61 : vector<1x1x1x64xf32> to vector<1x64xf32>
    %63 = vector.shape_cast %60 : vector<1x64xf32> to vector<1x1x1x64xf32>
    tpu.vector_store %arg8[%c0_43, %c0_44, %c1_45, %c0_46], %63 {strides = array<i32>} : memref<1x1x2x64xf32, #tpu.memory_space<vmem>>, vector<1x1x1x64xf32>,
    %c0_47 = arith.constant 0 : index
    %c0_48 = arith.constant 0 : index
    %64 = vector.load %arg4[%c0_47, %c0_48] : memref<1x64xf32, #tpu.memory_space<vmem>>, vector<1x64xf32>
    %65 = vector.broadcast %64 : vector<1x64xf32> to vector<64x64xf32>
    %66 = arith.addf %52, %65 : vector<64x64xf32>
    %67 = arith.truncf %66 : vector<64x64xf32> to vector<64x64xbf16>
    %c0_49 = arith.constant 0 : index
    %c0_50 = arith.constant 0 : index
    %c0_51 = arith.constant 0 : index
    %68 = vector.load %arg7[%c0_49, %c0_50, %c0_51] : memref<1x64x64xbf16, #tpu.memory_space<vmem>>, vector<1x64x64xbf16>
    %69 = vector.shape_cast %68 : vector<1x64x64xbf16> to vector<64x64xbf16>
    %70 = vector.shape_cast %67 : vector<64x64xbf16> to vector<1x64x64xbf16>
    tpu.vector_store %arg7[%c0_49, %c0_50, %c0_51], %70 {strides = array<i32>} : memref<1x64x64xbf16, #tpu.memory_space<vmem>>, vector<1x64x64xbf16>,
    return
  }
  func.func @transform_0(%arg0: i32, %arg1: i32) -> (i32, i32, i32, i32) {
    %c0_i32 = arith.constant 0 : i32
    %c0_i32_0 = arith.constant 0 : i32
    %c0_i32_1 = arith.constant 0 : i32
    %c0_i32_2 = arith.constant 0 : i32
    return %arg0, %c0_i32, %c0_i32_0, %c0_i32_1 : i32, i32, i32, i32
  }
  func.func @transform_1(%arg0: i32, %arg1: i32) -> (i32, i32) {
    %c0_i32 = arith.constant 0 : i32
    %c0_i32_0 = arith.constant 0 : i32
    %c0_i32_1 = arith.constant 0 : i32
    return %c0_i32, %c0_i32_0 : i32, i32
  }
  func.func @transform_2(%arg0: i32, %arg1: i32) -> (i32, i32) {
    %c0_i32 = arith.constant 0 : i32
    %c0_i32_0 = arith.constant 0 : i32
    %c0_i32_1 = arith.constant 0 : i32
    return %c0_i32, %c0_i32_0 : i32, i32
  }
  func.func @transform_3(%arg0: i32, %arg1: i32) -> (i32, i32) {
    %c0_i32 = arith.constant 0 : i32
    %c0_i32_0 = arith.constant 0 : i32
    %c0_i32_1 = arith.constant 0 : i32
    return %c0_i32, %c0_i32_0 : i32, i32
  }
  func.func @transform_4(%arg0: i32, %arg1: i32) -> (i32, i32) {
    %c0_i32 = arith.constant 0 : i32
    %c0_i32_0 = arith.constant 0 : i32
    %c0_i32_1 = arith.constant 0 : i32
    return %c0_i32, %c0_i32_0 : i32, i32
  }
  func.func @transform_5(%arg0: i32, %arg1: i32) -> (i32, i32, i32) {
    %c0_i32 = arith.constant 0 : i32
    %c0_i32_0 = arith.constant 0 : i32
    return %arg0, %arg1, %c0_i32 : i32, i32, i32
  }
  func.func @transform_6(%arg0: i32, %arg1: i32) -> (i32, i32, i32, i32) {
    %c0_i32 = arith.constant 0 : i32
    %c0_i32_0 = arith.constant 0 : i32
    %c0_i32_1 = arith.constant 0 : i32
    return %arg0, %arg1, %c0_i32, %c0_i32_0 : i32, i32, i32, i32
  }
}

module attributes {stable_mosaic.version = 11 : i64} {
  func.func @_tail_kernel(%arg0: i32, %arg1: memref<32x128xbf16, #tpu.memory_space<vmem>>, %arg2: memref<32x128xbf16, #tpu.memory_space<vmem>>, %arg3: memref<1x128xf32, #tpu.memory_space<vmem>>, %arg4: memref<1x128xf32, #tpu.memory_space<vmem>>, %arg5: memref<1x128xf32, #tpu.memory_space<vmem>>, %arg6: memref<1x128xf32, #tpu.memory_space<vmem>>, %arg7: memref<32x128xf32, #tpu.memory_space<vmem>>) attributes {dimension_semantics = [#tpu.dimension_semantics<parallel>], iteration_bounds = array<i64: 2>, scalar_prefetch = 0 : i64, scratch_operands = 0 : i64, tpu.core_type = #tpu.core_type<tc>, window_params = [{transform_indices = @transform_0, window_bounds = array<i64: 32, 128>}, {transform_indices = @transform_1, window_bounds = array<i64: 32, 128>}, {pipeline_mode = #tpu.pipeline_mode<synchronous>, transform_indices = @transform_2, window_bounds = array<i64: 1, 128>}, {pipeline_mode = #tpu.pipeline_mode<synchronous>, transform_indices = @transform_3, window_bounds = array<i64: 1, 128>}, {pipeline_mode = #tpu.pipeline_mode<synchronous>, transform_indices = @transform_4, window_bounds = array<i64: 1, 128>}, {pipeline_mode = #tpu.pipeline_mode<synchronous>, transform_indices = @transform_5, window_bounds = array<i64: 1, 128>}, {transform_indices = @transform_6, window_bounds = array<i64: 32, 128>}]} {
    %c0 = arith.constant 0 : index
    %c0_0 = arith.constant 0 : index
    %0 = vector.load %arg1[%c0, %c0_0] : memref<32x128xbf16, #tpu.memory_space<vmem>>, vector<32x128xbf16>
    %1 = arith.extf %0 : vector<32x128xbf16> to vector<32x128xf32>
    %c0_1 = arith.constant 0 : index
    %c0_2 = arith.constant 0 : index
    %2 = vector.load %arg3[%c0_1, %c0_2] : memref<1x128xf32, #tpu.memory_space<vmem>>, vector<1x128xf32>
    %3 = vector.broadcast %2 : vector<1x128xf32> to vector<32x128xf32>
    %4 = arith.mulf %1, %3 : vector<32x128xf32>
    %c0_3 = arith.constant 0 : index
    %c0_4 = arith.constant 0 : index
    %5 = vector.load %arg4[%c0_3, %c0_4] : memref<1x128xf32, #tpu.memory_space<vmem>>, vector<1x128xf32>
    %6 = vector.broadcast %5 : vector<1x128xf32> to vector<32x128xf32>
    %7 = arith.addf %4, %6 : vector<32x128xf32>
    %cst = arith.constant 0.000000e+00 : f32
    %8 = vector.broadcast %cst : f32 to vector<32x128xf32>
    %9 = arith.maximumf %7, %8 : vector<32x128xf32>
    %c0_5 = arith.constant 0 : index
    %c0_6 = arith.constant 0 : index
    %10 = vector.load %arg2[%c0_5, %c0_6] : memref<32x128xbf16, #tpu.memory_space<vmem>>, vector<32x128xbf16>
    %11 = arith.extf %10 : vector<32x128xbf16> to vector<32x128xf32>
    %c0_7 = arith.constant 0 : index
    %c0_8 = arith.constant 0 : index
    %12 = vector.load %arg5[%c0_7, %c0_8] : memref<1x128xf32, #tpu.memory_space<vmem>>, vector<1x128xf32>
    %13 = vector.broadcast %12 : vector<1x128xf32> to vector<32x128xf32>
    %14 = arith.mulf %11, %13 : vector<32x128xf32>
    %c0_9 = arith.constant 0 : index
    %c0_10 = arith.constant 0 : index
    %15 = vector.load %arg6[%c0_9, %c0_10] : memref<1x128xf32, #tpu.memory_space<vmem>>, vector<1x128xf32>
    %16 = vector.broadcast %15 : vector<1x128xf32> to vector<32x128xf32>
    %17 = arith.addf %14, %16 : vector<32x128xf32>
    %18 = arith.addf %9, %17 : vector<32x128xf32>
    %cst_11 = arith.constant 0.000000e+00 : f32
    %19 = vector.broadcast %cst_11 : f32 to vector<32x128xf32>
    %20 = arith.maximumf %18, %19 : vector<32x128xf32>
    %c0_12 = arith.constant 0 : index
    %c0_13 = arith.constant 0 : index
    %21 = vector.load %arg7[%c0_12, %c0_13] : memref<32x128xf32, #tpu.memory_space<vmem>>, vector<32x128xf32>
    tpu.vector_store %arg7[%c0_12, %c0_13], %20 {strides = array<i32>} : memref<32x128xf32, #tpu.memory_space<vmem>>, vector<32x128xf32>,
    return
  }
  func.func @transform_0(%arg0: i32) -> (i32, i32) {
    %c0_i32 = arith.constant 0 : i32
    %c0_i32_0 = arith.constant 0 : i32
    return %arg0, %c0_i32 : i32, i32
  }
  func.func @transform_1(%arg0: i32) -> (i32, i32) {
    %c0_i32 = arith.constant 0 : i32
    %c0_i32_0 = arith.constant 0 : i32
    return %arg0, %c0_i32 : i32, i32
  }
  func.func @transform_2(%arg0: i32) -> (i32, i32) {
    %c0_i32 = arith.constant 0 : i32
    %c0_i32_0 = arith.constant 0 : i32
    %c0_i32_1 = arith.constant 0 : i32
    return %c0_i32, %c0_i32_0 : i32, i32
  }
  func.func @transform_3(%arg0: i32) -> (i32, i32) {
    %c0_i32 = arith.constant 0 : i32
    %c0_i32_0 = arith.constant 0 : i32
    %c0_i32_1 = arith.constant 0 : i32
    return %c0_i32, %c0_i32_0 : i32, i32
  }
  func.func @transform_4(%arg0: i32) -> (i32, i32) {
    %c0_i32 = arith.constant 0 : i32
    %c0_i32_0 = arith.constant 0 : i32
    %c0_i32_1 = arith.constant 0 : i32
    return %c0_i32, %c0_i32_0 : i32, i32
  }
  func.func @transform_5(%arg0: i32) -> (i32, i32) {
    %c0_i32 = arith.constant 0 : i32
    %c0_i32_0 = arith.constant 0 : i32
    %c0_i32_1 = arith.constant 0 : i32
    return %c0_i32, %c0_i32_0 : i32, i32
  }
  func.func @transform_6(%arg0: i32) -> (i32, i32) {
    %c0_i32 = arith.constant 0 : i32
    %c0_i32_0 = arith.constant 0 : i32
    return %arg0, %c0_i32 : i32, i32
  }
}

module attributes {stable_mosaic.version = 11 : i64} {
  func.func @_tail_kernel(%arg0: i32, %arg1: memref<32x128xbf16, #tpu.memory_space<vmem>>, %arg2: memref<32x128xf32, #tpu.memory_space<vmem>>, %arg3: memref<1x128xf32, #tpu.memory_space<vmem>>, %arg4: memref<1x128xf32, #tpu.memory_space<vmem>>, %arg5: memref<1x128xf32, #tpu.memory_space<vmem>>, %arg6: memref<1x128xf32, #tpu.memory_space<vmem>>, %arg7: memref<32x128xf32, #tpu.memory_space<vmem>>) attributes {dimension_semantics = [#tpu.dimension_semantics<parallel>], iteration_bounds = array<i64: 2>, scalar_prefetch = 0 : i64, scratch_operands = 0 : i64, tpu.core_type = #tpu.core_type<tc>, window_params = [{transform_indices = @transform_0, window_bounds = array<i64: 32, 128>}, {transform_indices = @transform_1, window_bounds = array<i64: 32, 128>}, {pipeline_mode = #tpu.pipeline_mode<synchronous>, transform_indices = @transform_2, window_bounds = array<i64: 1, 128>}, {pipeline_mode = #tpu.pipeline_mode<synchronous>, transform_indices = @transform_3, window_bounds = array<i64: 1, 128>}, {pipeline_mode = #tpu.pipeline_mode<synchronous>, transform_indices = @transform_4, window_bounds = array<i64: 1, 128>}, {pipeline_mode = #tpu.pipeline_mode<synchronous>, transform_indices = @transform_5, window_bounds = array<i64: 1, 128>}, {transform_indices = @transform_6, window_bounds = array<i64: 32, 128>}]} {
    %c0 = arith.constant 0 : index
    %c0_0 = arith.constant 0 : index
    %0 = vector.load %arg1[%c0, %c0_0] : memref<32x128xbf16, #tpu.memory_space<vmem>>, vector<32x128xbf16>
    %1 = arith.extf %0 : vector<32x128xbf16> to vector<32x128xf32>
    %c0_1 = arith.constant 0 : index
    %c0_2 = arith.constant 0 : index
    %2 = vector.load %arg3[%c0_1, %c0_2] : memref<1x128xf32, #tpu.memory_space<vmem>>, vector<1x128xf32>
    %3 = vector.broadcast %2 : vector<1x128xf32> to vector<32x128xf32>
    %4 = arith.mulf %1, %3 : vector<32x128xf32>
    %c0_3 = arith.constant 0 : index
    %c0_4 = arith.constant 0 : index
    %5 = vector.load %arg4[%c0_3, %c0_4] : memref<1x128xf32, #tpu.memory_space<vmem>>, vector<1x128xf32>
    %6 = vector.broadcast %5 : vector<1x128xf32> to vector<32x128xf32>
    %7 = arith.addf %4, %6 : vector<32x128xf32>
    %cst = arith.constant 0.000000e+00 : f32
    %8 = vector.broadcast %cst : f32 to vector<32x128xf32>
    %9 = arith.maximumf %7, %8 : vector<32x128xf32>
    %c0_5 = arith.constant 0 : index
    %c0_6 = arith.constant 0 : index
    %10 = vector.load %arg2[%c0_5, %c0_6] : memref<32x128xf32, #tpu.memory_space<vmem>>, vector<32x128xf32>
    %c0_7 = arith.constant 0 : index
    %c0_8 = arith.constant 0 : index
    %11 = vector.load %arg5[%c0_7, %c0_8] : memref<1x128xf32, #tpu.memory_space<vmem>>, vector<1x128xf32>
    %12 = vector.broadcast %11 : vector<1x128xf32> to vector<32x128xf32>
    %13 = arith.mulf %10, %12 : vector<32x128xf32>
    %c0_9 = arith.constant 0 : index
    %c0_10 = arith.constant 0 : index
    %14 = vector.load %arg6[%c0_9, %c0_10] : memref<1x128xf32, #tpu.memory_space<vmem>>, vector<1x128xf32>
    %15 = vector.broadcast %14 : vector<1x128xf32> to vector<32x128xf32>
    %16 = arith.addf %13, %15 : vector<32x128xf32>
    %17 = arith.addf %9, %16 : vector<32x128xf32>
    %cst_11 = arith.constant 0.000000e+00 : f32
    %18 = vector.broadcast %cst_11 : f32 to vector<32x128xf32>
    %19 = arith.maximumf %17, %18 : vector<32x128xf32>
    %c0_12 = arith.constant 0 : index
    %c0_13 = arith.constant 0 : index
    %20 = vector.load %arg7[%c0_12, %c0_13] : memref<32x128xf32, #tpu.memory_space<vmem>>, vector<32x128xf32>
    tpu.vector_store %arg7[%c0_12, %c0_13], %19 {strides = array<i32>} : memref<32x128xf32, #tpu.memory_space<vmem>>, vector<32x128xf32>,
    return
  }
  func.func @transform_0(%arg0: i32) -> (i32, i32) {
    %c0_i32 = arith.constant 0 : i32
    %c0_i32_0 = arith.constant 0 : i32
    return %arg0, %c0_i32 : i32, i32
  }
  func.func @transform_1(%arg0: i32) -> (i32, i32) {
    %c0_i32 = arith.constant 0 : i32
    %c0_i32_0 = arith.constant 0 : i32
    return %arg0, %c0_i32 : i32, i32
  }
  func.func @transform_2(%arg0: i32) -> (i32, i32) {
    %c0_i32 = arith.constant 0 : i32
    %c0_i32_0 = arith.constant 0 : i32
    %c0_i32_1 = arith.constant 0 : i32
    return %c0_i32, %c0_i32_0 : i32, i32
  }
  func.func @transform_3(%arg0: i32) -> (i32, i32) {
    %c0_i32 = arith.constant 0 : i32
    %c0_i32_0 = arith.constant 0 : i32
    %c0_i32_1 = arith.constant 0 : i32
    return %c0_i32, %c0_i32_0 : i32, i32
  }
  func.func @transform_4(%arg0: i32) -> (i32, i32) {
    %c0_i32 = arith.constant 0 : i32
    %c0_i32_0 = arith.constant 0 : i32
    %c0_i32_1 = arith.constant 0 : i32
    return %c0_i32, %c0_i32_0 : i32, i32
  }
  func.func @transform_5(%arg0: i32) -> (i32, i32) {
    %c0_i32 = arith.constant 0 : i32
    %c0_i32_0 = arith.constant 0 : i32
    %c0_i32_1 = arith.constant 0 : i32
    return %c0_i32, %c0_i32_0 : i32, i32
  }
  func.func @transform_6(%arg0: i32) -> (i32, i32) {
    %c0_i32 = arith.constant 0 : i32
    %c0_i32_0 = arith.constant 0 : i32
    return %arg0, %c0_i32 : i32, i32
  }
}

module attributes {stable_mosaic.version = 11 : i64} {
  func.func @kernel(%arg0: i32, %arg1: i32, %arg2: memref<1x8x8x64xf32, #tpu.memory_space<vmem>>, %arg3: memref<576x64xbf16, #tpu.memory_space<vmem>>, %arg4: memref<1x64xf32, #tpu.memory_space<vmem>>, %arg5: memref<1x64x64xbf16, #tpu.memory_space<vmem>>, %arg6: memref<1x1x2x64xf32, #tpu.memory_space<vmem>>, %arg7: memref<10x10x64xbf16, #tpu.memory_space<vmem>>, %arg8: memref<64x576xbf16, #tpu.memory_space<vmem>>) attributes {dimension_semantics = [#tpu.dimension_semantics<parallel>, #tpu.dimension_semantics<arbitrary>], iteration_bounds = array<i64: 2, 1>, scalar_prefetch = 0 : i64, scratch_operands = 2 : i64, tpu.core_type = #tpu.core_type<tc>, window_params = [{transform_indices = @transform_0, window_bounds = array<i64: 1, 8, 8, 64>}, {pipeline_mode = #tpu.pipeline_mode<synchronous>, transform_indices = @transform_1, window_bounds = array<i64: 576, 64>}, {pipeline_mode = #tpu.pipeline_mode<synchronous>, transform_indices = @transform_2, window_bounds = array<i64: 1, 64>}, {transform_indices = @transform_3, window_bounds = array<i64: 1, 64, 64>}, {transform_indices = @transform_4, window_bounds = array<i64: 1, 1, 2, 64>}]} {
    %c0_i32 = arith.constant 0 : i32
    %0 = arith.cmpi eq, %arg1, %c0_i32 : i32
    %1 = arith.extui %0 : i1 to i32
    %c0_i32_0 = arith.constant 0 : i32
    %2 = arith.cmpi ne, %1, %c0_i32_0 : i32
    scf.if %2 {
      %c0_52 = arith.constant 0 : index
      %c0_53 = arith.constant 0 : index
      %c0_54 = arith.constant 0 : index
      %c0_55 = arith.constant 0 : index
      %71 = vector.load %arg2[%c0_52, %c0_53, %c0_54, %c0_55] : memref<1x8x8x64xf32, #tpu.memory_space<vmem>>, vector<1x8x8x64xf32>
      %72 = vector.shape_cast %71 : vector<1x8x8x64xf32> to vector<8x8x64xf32>
      %73 = arith.truncf %72 : vector<8x8x64xf32> to vector<8x8x64xbf16>
      %cst_56 = arith.constant 0.000000e+00 : bf16
      %74 = vector.broadcast %cst_56 : bf16 to vector<10x10x64xbf16>
      %c0_57 = arith.constant 0 : index
      %c0_58 = arith.constant 0 : index
      %c0_59 = arith.constant 0 : index
      %75 = vector.load %arg7[%c0_57, %c0_58, %c0_59] : memref<10x10x64xbf16, #tpu.memory_space<vmem>>, vector<10x10x64xbf16>
      tpu.vector_store %arg7[%c0_57, %c0_58, %c0_59], %74 {strides = array<i32>} : memref<10x10x64xbf16, #tpu.memory_space<vmem>>, vector<10x10x64xbf16>,
      %c1_60 = arith.constant 1 : index
      %c1_61 = arith.constant 1 : index
      %c0_62 = arith.constant 0 : index
      %76 = vector.load %arg7[%c1_60, %c1_61, %c0_62] : memref<10x10x64xbf16, #tpu.memory_space<vmem>>, vector<8x8x64xbf16>
      tpu.vector_store %arg7[%c1_60, %c1_61, %c0_62], %73 {strides = array<i32>} : memref<10x10x64xbf16, #tpu.memory_space<vmem>>, vector<8x8x64xbf16>,
    } else {
    }
    %c8_i32 = arith.constant 8 : i32
    %3 = arith.muli %arg1, %c8_i32 : i32
    %4 = tpu.assume_multiple %3, 8 : i32
    %c0_i32_1 = arith.constant 0 : i32
    %5 = arith.addi %4, %c0_i32_1 : i32
    %6 = arith.index_cast %5 : i32 to index
    %c0 = arith.constant 0 : index
    %c0_2 = arith.constant 0 : index
    %7 = vector.load %arg7[%6, %c0, %c0_2] : memref<10x10x64xbf16, #tpu.memory_space<vmem>>, vector<8x8x64xbf16>
    %8 = vector.shape_cast %7 : vector<8x8x64xbf16> to vector<64x64xbf16>
    %c0_3 = arith.constant 0 : index
    %c0_4 = arith.constant 0 : index
    %9 = vector.load %arg8[%c0_3, %c0_4] : memref<64x576xbf16, #tpu.memory_space<vmem>>, vector<64x64xbf16>
    tpu.vector_store %arg8[%c0_3, %c0_4], %8 {strides = array<i32>} : memref<64x576xbf16, #tpu.memory_space<vmem>>, vector<64x64xbf16>,
    %c0_i32_5 = arith.constant 0 : i32
    %10 = arith.addi %4, %c0_i32_5 : i32
    %11 = arith.index_cast %10 : i32 to index
    %c1 = arith.constant 1 : index
    %c0_6 = arith.constant 0 : index
    %12 = vector.load %arg7[%11, %c1, %c0_6] : memref<10x10x64xbf16, #tpu.memory_space<vmem>>, vector<8x8x64xbf16>
    %13 = vector.shape_cast %12 : vector<8x8x64xbf16> to vector<64x64xbf16>
    %c0_7 = arith.constant 0 : index
    %c64 = arith.constant 64 : index
    %14 = vector.load %arg8[%c0_7, %c64] : memref<64x576xbf16, #tpu.memory_space<vmem>>, vector<64x64xbf16>
    tpu.vector_store %arg8[%c0_7, %c64], %13 {strides = array<i32>} : memref<64x576xbf16, #tpu.memory_space<vmem>>, vector<64x64xbf16>,
    %c0_i32_8 = arith.constant 0 : i32
    %15 = arith.addi %4, %c0_i32_8 : i32
    %16 = arith.index_cast %15 : i32 to index
    %c2 = arith.constant 2 : index
    %c0_9 = arith.constant 0 : index
    %17 = vector.load %arg7[%16, %c2, %c0_9] : memref<10x10x64xbf16, #tpu.memory_space<vmem>>, vector<8x8x64xbf16>
    %18 = vector.shape_cast %17 : vector<8x8x64xbf16> to vector<64x64xbf16>
    %c0_10 = arith.constant 0 : index
    %c128 = arith.constant 128 : index
    %19 = vector.load %arg8[%c0_10, %c128] : memref<64x576xbf16, #tpu.memory_space<vmem>>, vector<64x64xbf16>
    tpu.vector_store %arg8[%c0_10, %c128], %18 {strides = array<i32>} : memref<64x576xbf16, #tpu.memory_space<vmem>>, vector<64x64xbf16>,
    %c1_i32 = arith.constant 1 : i32
    %20 = arith.addi %4, %c1_i32 : i32
    %21 = arith.index_cast %20 : i32 to index
    %c0_11 = arith.constant 0 : index
    %c0_12 = arith.constant 0 : index
    %22 = vector.load %arg7[%21, %c0_11, %c0_12] : memref<10x10x64xbf16, #tpu.memory_space<vmem>>, vector<8x8x64xbf16>
    %23 = vector.shape_cast %22 : vector<8x8x64xbf16> to vector<64x64xbf16>
    %c0_13 = arith.constant 0 : index
    %c192 = arith.constant 192 : index
    %24 = vector.load %arg8[%c0_13, %c192] : memref<64x576xbf16, #tpu.memory_space<vmem>>, vector<64x64xbf16>
    tpu.vector_store %arg8[%c0_13, %c192], %23 {strides = array<i32>} : memref<64x576xbf16, #tpu.memory_space<vmem>>, vector<64x64xbf16>,
    %c1_i32_14 = arith.constant 1 : i32
    %25 = arith.addi %4, %c1_i32_14 : i32
    %26 = arith.index_cast %25 : i32 to index
    %c1_15 = arith.constant 1 : index
    %c0_16 = arith.constant 0 : index
    %27 = vector.load %arg7[%26, %c1_15, %c0_16] : memref<10x10x64xbf16, #tpu.memory_space<vmem>>, vector<8x8x64xbf16>
    %28 = vector.shape_cast %27 : vector<8x8x64xbf16> to vector<64x64xbf16>
    %c0_17 = arith.constant 0 : index
    %c256 = arith.constant 256 : index
    %29 = vector.load %arg8[%c0_17, %c256] : memref<64x576xbf16, #tpu.memory_space<vmem>>, vector<64x64xbf16>
    tpu.vector_store %arg8[%c0_17, %c256], %28 {strides = array<i32>} : memref<64x576xbf16, #tpu.memory_space<vmem>>, vector<64x64xbf16>,
    %c1_i32_18 = arith.constant 1 : i32
    %30 = arith.addi %4, %c1_i32_18 : i32
    %31 = arith.index_cast %30 : i32 to index
    %c2_19 = arith.constant 2 : index
    %c0_20 = arith.constant 0 : index
    %32 = vector.load %arg7[%31, %c2_19, %c0_20] : memref<10x10x64xbf16, #tpu.memory_space<vmem>>, vector<8x8x64xbf16>
    %33 = vector.shape_cast %32 : vector<8x8x64xbf16> to vector<64x64xbf16>
    %c0_21 = arith.constant 0 : index
    %c320 = arith.constant 320 : index
    %34 = vector.load %arg8[%c0_21, %c320] : memref<64x576xbf16, #tpu.memory_space<vmem>>, vector<64x64xbf16>
    tpu.vector_store %arg8[%c0_21, %c320], %33 {strides = array<i32>} : memref<64x576xbf16, #tpu.memory_space<vmem>>, vector<64x64xbf16>,
    %c2_i32 = arith.constant 2 : i32
    %35 = arith.addi %4, %c2_i32 : i32
    %36 = arith.index_cast %35 : i32 to index
    %c0_22 = arith.constant 0 : index
    %c0_23 = arith.constant 0 : index
    %37 = vector.load %arg7[%36, %c0_22, %c0_23] : memref<10x10x64xbf16, #tpu.memory_space<vmem>>, vector<8x8x64xbf16>
    %38 = vector.shape_cast %37 : vector<8x8x64xbf16> to vector<64x64xbf16>
    %c0_24 = arith.constant 0 : index
    %c384 = arith.constant 384 : index
    %39 = vector.load %arg8[%c0_24, %c384] : memref<64x576xbf16, #tpu.memory_space<vmem>>, vector<64x64xbf16>
    tpu.vector_store %arg8[%c0_24, %c384], %38 {strides = array<i32>} : memref<64x576xbf16, #tpu.memory_space<vmem>>, vector<64x64xbf16>,
    %c2_i32_25 = arith.constant 2 : i32
    %40 = arith.addi %4, %c2_i32_25 : i32
    %41 = arith.index_cast %40 : i32 to index
    %c1_26 = arith.constant 1 : index
    %c0_27 = arith.constant 0 : index
    %42 = vector.load %arg7[%41, %c1_26, %c0_27] : memref<10x10x64xbf16, #tpu.memory_space<vmem>>, vector<8x8x64xbf16>
    %43 = vector.shape_cast %42 : vector<8x8x64xbf16> to vector<64x64xbf16>
    %c0_28 = arith.constant 0 : index
    %c448 = arith.constant 448 : index
    %44 = vector.load %arg8[%c0_28, %c448] : memref<64x576xbf16, #tpu.memory_space<vmem>>, vector<64x64xbf16>
    tpu.vector_store %arg8[%c0_28, %c448], %43 {strides = array<i32>} : memref<64x576xbf16, #tpu.memory_space<vmem>>, vector<64x64xbf16>,
    %c2_i32_29 = arith.constant 2 : i32
    %45 = arith.addi %4, %c2_i32_29 : i32
    %46 = arith.index_cast %45 : i32 to index
    %c2_30 = arith.constant 2 : index
    %c0_31 = arith.constant 0 : index
    %47 = vector.load %arg7[%46, %c2_30, %c0_31] : memref<10x10x64xbf16, #tpu.memory_space<vmem>>, vector<8x8x64xbf16>
    %48 = vector.shape_cast %47 : vector<8x8x64xbf16> to vector<64x64xbf16>
    %c0_32 = arith.constant 0 : index
    %c512 = arith.constant 512 : index
    %49 = vector.load %arg8[%c0_32, %c512] : memref<64x576xbf16, #tpu.memory_space<vmem>>, vector<64x64xbf16>
    tpu.vector_store %arg8[%c0_32, %c512], %48 {strides = array<i32>} : memref<64x576xbf16, #tpu.memory_space<vmem>>, vector<64x64xbf16>,
    %c0_33 = arith.constant 0 : index
    %c0_34 = arith.constant 0 : index
    %50 = vector.load %arg8[%c0_33, %c0_34] : memref<64x576xbf16, #tpu.memory_space<vmem>>, vector<64x576xbf16>
    %c0_35 = arith.constant 0 : index
    %c0_36 = arith.constant 0 : index
    %51 = vector.load %arg3[%c0_35, %c0_36] : memref<576x64xbf16, #tpu.memory_space<vmem>>, vector<576x64xbf16>
    %cst = arith.constant dense<0.000000e+00> : vector<64x64xf32>
    %52 = tpu.matmul %50, %51, %cst {dimension_numbers = #tpu.dot_dimension_numbers<[1], [0], [0], [1], [0, 0, 1, 1], [], []>} : vector<64x576xbf16>, vector<576x64xbf16>, vector<64x64xf32> -> vector<64x64xf32>
    %cst_37 = arith.constant dense<0.000000e+00> : vector<64xf32>
    %53 = vector.multi_reduction <add>, %52, %cst_37 [0] : vector<64x64xf32> to vector<64xf32>
    %54 = vector.shape_cast %53 : vector<64xf32> to vector<1x64xf32>
    %c0_38 = arith.constant 0 : index
    %c0_39 = arith.constant 0 : index
    %c0_40 = arith.constant 0 : index
    %c0_41 = arith.constant 0 : index
    %55 = vector.load %arg6[%c0_38, %c0_39, %c0_40, %c0_41] : memref<1x1x2x64xf32, #tpu.memory_space<vmem>>, vector<1x1x1x64xf32>
    %56 = vector.shape_cast %55 : vector<1x1x1x64xf32> to vector<1x64xf32>
    %57 = vector.shape_cast %54 : vector<1x64xf32> to vector<1x1x1x64xf32>
    tpu.vector_store %arg6[%c0_38, %c0_39, %c0_40, %c0_41], %57 {strides = array<i32>} : memref<1x1x2x64xf32, #tpu.memory_space<vmem>>, vector<1x1x1x64xf32>,
    %58 = arith.mulf %52, %52 : vector<64x64xf32>
    %cst_42 = arith.constant dense<0.000000e+00> : vector<64xf32>
    %59 = vector.multi_reduction <add>, %58, %cst_42 [0] : vector<64x64xf32> to vector<64xf32>
    %60 = vector.shape_cast %59 : vector<64xf32> to vector<1x64xf32>
    %c0_43 = arith.constant 0 : index
    %c0_44 = arith.constant 0 : index
    %c1_45 = arith.constant 1 : index
    %c0_46 = arith.constant 0 : index
    %61 = vector.load %arg6[%c0_43, %c0_44, %c1_45, %c0_46] : memref<1x1x2x64xf32, #tpu.memory_space<vmem>>, vector<1x1x1x64xf32>
    %62 = vector.shape_cast %61 : vector<1x1x1x64xf32> to vector<1x64xf32>
    %63 = vector.shape_cast %60 : vector<1x64xf32> to vector<1x1x1x64xf32>
    tpu.vector_store %arg6[%c0_43, %c0_44, %c1_45, %c0_46], %63 {strides = array<i32>} : memref<1x1x2x64xf32, #tpu.memory_space<vmem>>, vector<1x1x1x64xf32>,
    %c0_47 = arith.constant 0 : index
    %c0_48 = arith.constant 0 : index
    %64 = vector.load %arg4[%c0_47, %c0_48] : memref<1x64xf32, #tpu.memory_space<vmem>>, vector<1x64xf32>
    %65 = vector.broadcast %64 : vector<1x64xf32> to vector<64x64xf32>
    %66 = arith.addf %52, %65 : vector<64x64xf32>
    %67 = arith.truncf %66 : vector<64x64xf32> to vector<64x64xbf16>
    %c0_49 = arith.constant 0 : index
    %c0_50 = arith.constant 0 : index
    %c0_51 = arith.constant 0 : index
    %68 = vector.load %arg5[%c0_49, %c0_50, %c0_51] : memref<1x64x64xbf16, #tpu.memory_space<vmem>>, vector<1x64x64xbf16>
    %69 = vector.shape_cast %68 : vector<1x64x64xbf16> to vector<64x64xbf16>
    %70 = vector.shape_cast %67 : vector<64x64xbf16> to vector<1x64x64xbf16>
    tpu.vector_store %arg5[%c0_49, %c0_50, %c0_51], %70 {strides = array<i32>} : memref<1x64x64xbf16, #tpu.memory_space<vmem>>, vector<1x64x64xbf16>,
    return
  }
  func.func @transform_0(%arg0: i32, %arg1: i32) -> (i32, i32, i32, i32) {
    %c0_i32 = arith.constant 0 : i32
    %c0_i32_0 = arith.constant 0 : i32
    %c0_i32_1 = arith.constant 0 : i32
    %c0_i32_2 = arith.constant 0 : i32
    return %arg0, %c0_i32, %c0_i32_0, %c0_i32_1 : i32, i32, i32, i32
  }
  func.func @transform_1(%arg0: i32, %arg1: i32) -> (i32, i32) {
    %c0_i32 = arith.constant 0 : i32
    %c0_i32_0 = arith.constant 0 : i32
    %c0_i32_1 = arith.constant 0 : i32
    return %c0_i32, %c0_i32_0 : i32, i32
  }
  func.func @transform_2(%arg0: i32, %arg1: i32) -> (i32, i32) {
    %c0_i32 = arith.constant 0 : i32
    %c0_i32_0 = arith.constant 0 : i32
    %c0_i32_1 = arith.constant 0 : i32
    return %c0_i32, %c0_i32_0 : i32, i32
  }
  func.func @transform_3(%arg0: i32, %arg1: i32) -> (i32, i32, i32) {
    %c0_i32 = arith.constant 0 : i32
    %c0_i32_0 = arith.constant 0 : i32
    return %arg0, %arg1, %c0_i32 : i32, i32, i32
  }
  func.func @transform_4(%arg0: i32, %arg1: i32) -> (i32, i32, i32, i32) {
    %c0_i32 = arith.constant 0 : i32
    %c0_i32_0 = arith.constant 0 : i32
    %c0_i32_1 = arith.constant 0 : i32
    return %arg0, %arg1, %c0_i32, %c0_i32_0 : i32, i32, i32, i32
  }
}

</mosaic_0001>

<llo_original>
// kernel: fwd.8
$region0: #{fwd.8}
  #allocation0 [shape = 'u32[]', space=smem, size = 0x4, offset = 0x4, fixed_abs, tag = 'smem constant byte address 0x4 - core index']
  #allocation1 [shape = 'u32[144,128]{1,0:T(1,128)}', space=vmem, size = 0x12000, scoped, tag = 'internal scratch']
  %s0 = inlined_call_operand.vmem [shape: bf16[64,128], index: 0, kind: input, shape index: {}]
  %s1 = inlined_call_operand.vmem [shape: bf16[64,128], index: 1, kind: input, shape index: {}]
  %s2 = inlined_call_operand.vmem [shape: f32[1,128], index: 2, kind: input, shape index: {}]
  %s3 = inlined_call_operand.vmem [shape: f32[1,128], index: 3, kind: input, shape index: {}]
  %s4 = inlined_call_operand.vmem [shape: f32[1,128], index: 4, kind: input, shape index: {}]
  %s5 = inlined_call_operand.vmem [shape: f32[1,128], index: 5, kind: input, shape index: {}]
  %s6 = inlined_call_operand.vmem [shape: f32[64,128], index: 6, kind: output, shape index: {}]
  %s7 = sld [smem:[#allocation0]]
  $region57: #{fwd.8} parent=0
    _
  %s9 = ssub.s32 1, %s7
  %s10 = scalar_select 0, %s9, %s7
  loop: start=0, step=1, limit=4
  $region2: #{fwd.8} parent=0 // loop_pre_header
    _
  $region3: #{fwd.8} parent=0 // loop_header
    %s12 = sphi 0, %s16
    %p13 = scmp.ge.s32.totalorder %s12, 4
    %s22 = sphi 0, %s24
    %s25 = sphi 0, %s22
    %s26 = sphi 0, %s25
    %s42 = sphi 0, %s26
    %s48 = sphi 0, %s50
    %s51 = sphi 0, %s48
    %s52 = sphi 0, %s51
    %s68 = sphi 0, %s52
    %s72 = sphi 0, %s72
    %s74 = sphi 0, %s72
    %s75 = sphi 0, %s74
    %s89 = sphi 0, %s75
    %s93 = sphi 0, %s93
    %s95 = sphi 0, %s93
    %s96 = sphi 0, %s95
    %s110 = sphi 0, %s96
    %s114 = sphi 0, %s114
    %s116 = sphi 0, %s114
    %s117 = sphi 0, %s116
    %s131 = sphi 0, %s117
    %s135 = sphi 0, %s135
    %s137 = sphi 0, %s135
    %s138 = sphi 0, %s137
    %s152 = sphi 0, %s138
    %s158 = sphi 0, %s160
    %s161 = sphi 0, %s158
    %s162 = sphi 0, %s161
    %s178 = sphi 0, %s162
  $region4: #{fwd.8} parent=0 // loop_header_branch
    %15 = sbr.rel (%p13) target = $region8
  $region5: #{fwd.8} parent=0 // loop_body
    %s17 = ssub.s32 %s12, 1
    %s18 = ssub.s32 %s12, 2
    %s19 = sadd.s32 %s12, 1
    %s20 = ssub.s32 %s12, %s19
    %p21 = scmp.eq.s32.totalorder %s20, 0
    %s23 = sadd.s32 %s22, 1
    %s24 = scalar_select %p21, %s22, %s23
    %p27 = pneg %p21
    %p28 = scmp.eq.s32.totalorder %s12, 1
    %p29 = por %p27, %p28
    %p30 = scmp.ne.s32.totalorder %s22, %s25
    %p31 = scmp.eq.s32.totalorder %s12, 0
    %p32 = por %p30, %p31
    %p33 = scmp.ne.s32.totalorder %s22, %s25
    %p34 = scmp.eq.s32.totalorder %s17, 1
    %p35 = por %p33, %p34
    %p36 = scmp.ne.s32.totalorder %s25, %s26
    %p37 = scmp.eq.s32.totalorder %s17, 0
    %p38 = por %p36, %p37
    %p39 = scmp.ne.s32.totalorder %s25, %s26
    %p40 = scmp.eq.s32.totalorder %s18, 1
    %p41 = por %p39, %p40
    %p43 = scmp.ne.s32.totalorder %s26, %s42
    %p44 = scmp.eq.s32.totalorder %s18, 0
    %p45 = por %p43, %p44
    %s46 = ssub.s32 %s12, %s19
    %p47 = scmp.eq.s32.totalorder %s46, 0
    %s49 = sadd.s32 %s48, 1
    %s50 = scalar_select %p47, %s48, %s49
    %p53 = pneg %p47
    %p54 = scmp.eq.s32.totalorder %s12, 1
    %p55 = por %p53, %p54
    %p56 = scmp.ne.s32.totalorder %s48, %s51
    %p57 = scmp.eq.s32.totalorder %s12, 0
    %p58 = por %p56, %p57
    %p59 = scmp.ne.s32.totalorder %s48, %s51
    %p60 = scmp.eq.s32.totalorder %s17, 1
    %p61 = por %p59, %p60
    %p62 = scmp.ne.s32.totalorder %s51, %s52
    %p63 = scmp.eq.s32.totalorder %s17, 0
    %p64 = por %p62, %p63
    %p65 = scmp.ne.s32.totalorder %s51, %s52
    %p66 = scmp.eq.s32.totalorder %s18, 1
    %p67 = por %p65, %p66
    %p69 = scmp.ne.s32.totalorder %s52, %s68
    %p70 = scmp.eq.s32.totalorder %s18, 0
    %p71 = por %p69, %p70
    %s73 = sadd.s32 %s72, 1
    %p76 = scmp.eq.s32.totalorder %s12, 1
    %p77 = scmp.ne.s32.totalorder %s72, %s74
    %p78 = scmp.eq.s32.totalorder %s12, 0
    %p79 = por %p77, %p78
    %p80 = scmp.ne.s32.totalorder %s72, %s74
    %p81 = scmp.eq.s32.totalorder %s17, 1
    %p82 = por %p80, %p81
    %p83 = scmp.ne.s32.totalorder %s74, %s75
    %p84 = scmp.eq.s32.totalorder %s17, 0
    %p85 = por %p83, %p84
    %p86 = scmp.ne.s32.totalorder %s74, %s75
    %p87 = scmp.eq.s32.totalorder %s18, 1
    %p88 = por %p86, %p87
    %p90 = scmp.ne.s32.totalorder %s75, %s89
    %p91 = scmp.eq.s32.totalorder %s18, 0
    %p92 = por %p90, %p91
    %s94 = sadd.s32 %s93, 1
    %p97 = scmp.eq.s32.totalorder %s12, 1
    %p98 = scmp.ne.s32.totalorder %s93, %s95
    %p99 = scmp.eq.s32.totalorder %s12, 0
    %p100 = por %p98, %p99
    %p101 = scmp.ne.s32.totalorder %s93, %s95
    %p102 = scmp.eq.s32.totalorder %s17, 1
    %p103 = por %p101, %p102
    %p104 = scmp.ne.s32.totalorder %s95, %s96
    %p105 = scmp.eq.s32.totalorder %s17, 0
    %p106 = por %p104, %p105
    %p107 = scmp.ne.s32.totalorder %s95, %s96
    %p108 = scmp.eq.s32.totalorder %s18, 1
    %p109 = por %p107, %p108
    %p111 = scmp.ne.s32.totalorder %s96, %s110
    %p112 = scmp.eq.s32.totalorder %s18, 0
    %p113 = por %p111, %p112
    %s115 = sadd.s32 %s114, 1
    %p118 = scmp.eq.s32.totalorder %s12, 1
    %p119 = scmp.ne.s32.totalorder %s114, %s116
    %p120 = scmp.eq.s32.totalorder %s12, 0
    %p121 = por %p119, %p120
    %p122 = scmp.ne.s32.totalorder %s114, %s116
    %p123 = scmp.eq.s32.totalorder %s17, 1
    %p124 = por %p122, %p123
    %p125 = scmp.ne.s32.totalorder %s116, %s117
    %p126 = scmp.eq.s32.totalorder %s17, 0
    %p127 = por %p125, %p126
    %p128 = scmp.ne.s32.totalorder %s116, %s117
    %p129 = scmp.eq.s32.totalorder %s18, 1
    %p130 = por %p128, %p129
    %p132 = scmp.ne.s32.totalorder %s117, %s131
    %p133 = scmp.eq.s32.totalorder %s18, 0
    %p134 = por %p132, %p133
    %s136 = sadd.s32 %s135, 1
    %p139 = scmp.eq.s32.totalorder %s12, 1
    %p140 = scmp.ne.s32.totalorder %s135, %s137
    %p141 = scmp.eq.s32.totalorder %s12, 0
    %p142 = por %p140, %p141
    %p143 = scmp.ne.s32.totalorder %s135, %s137
    %p144 = scmp.eq.s32.totalorder %s17, 1
    %p145 = por %p143, %p144
    %p146 = scmp.ne.s32.totalorder %s137, %s138
    %p147 = scmp.eq.s32.totalorder %s17, 0
    %p148 = por %p146, %p147
    %p149 = scmp.ne.s32.totalorder %s137, %s138
    %p150 = scmp.eq.s32.totalorder %s18, 1
    %p151 = por %p149, %p150
    %p153 = scmp.ne.s32.totalorder %s138, %s152
    %p154 = scmp.eq.s32.totalorder %s18, 0
    %p155 = por %p153, %p154
    %s156 = ssub.s32 %s12, %s19
    %p157 = scmp.eq.s32.totalorder %s156, 0
    %s159 = sadd.s32 %s158, 1
    %s160 = scalar_select %p157, %s158, %s159
    %p163 = pneg %p157
    %p164 = scmp.eq.s32.totalorder %s12, 1
    %p165 = por %p163, %p164
    %p166 = scmp.ne.s32.totalorder %s158, %s161
    %p167 = scmp.eq.s32.totalorder %s12, 0
    %p168 = por %p166, %p167
    %p169 = scmp.ne.s32.totalorder %s158, %s161
    %p170 = scmp.eq.s32.totalorder %s17, 1
    %p171 = por %p169, %p170
    %p172 = scmp.ne.s32.totalorder %s161, %s162
    %p173 = scmp.eq.s32.totalorder %s17, 0
    %p174 = por %p172, %p173
    %p175 = scmp.ne.s32.totalorder %s161, %s162
    %p176 = scmp.eq.s32.totalorder %s18, 1
    %p177 = por %p175, %p176
    %p179 = scmp.ne.s32.totalorder %s162, %s178
    %p180 = scmp.eq.s32.totalorder %s18, 0
    %p181 = por %p179, %p180
    %p182 = scmp.le.s32.totalorder 1, %s12
    %p183 = scmp.lt.s32.totalorder %s12, 3
    %p184 = pnand %p182, %p183
    %p185 = pneg %p184
    // Predicated region
    $region9: #{fwd.8} parent=5 // pred_check
      _
    $region10: #{fwd.8} parent=5 // pred_check_branch
      %187 = sbr.rel (%p184) target = $region12
    $region11: #{fwd.8} parent=5 // pred_region
      %s188 = ssub.s32 %s12, 1
      // Predicated region
      $region13: #{fwd.8} parent=11 // pred_check
        %p189 = pneg %p85
      $region14: #{fwd.8} parent=11 // pred_check_branch
        %191 = sbr.rel (%p189) target = $region16
      $region15: #{fwd.8} parent=11 // pred_region
        _
      $region16: #{fwd.8} parent=11 // pred_fallthru
        _
      // Predicated region
      $region17: #{fwd.8} parent=11 // pred_check
        %p192 = pneg %p106
      $region18: #{fwd.8} parent=11 // pred_check_branch
        %194 = sbr.rel (%p192) target = $region20
      $region19: #{fwd.8} parent=11 // pred_region
        _
      $region20: #{fwd.8} parent=11 // pred_fallthru
        _
      // Predicated region
      $region21: #{fwd.8} parent=11 // pred_check
        %p195 = pneg %p127
      $region22: #{fwd.8} parent=11 // pred_check_branch
        %197 = sbr.rel (%p195) target = $region24
      $region23: #{fwd.8} parent=11 // pred_region
        _
      $region24: #{fwd.8} parent=11 // pred_fallthru
        _
      // Predicated region
      $region25: #{fwd.8} parent=11 // pred_check
        %p198 = pneg %p148
      $region26: #{fwd.8} parent=11 // pred_check_branch
        %200 = sbr.rel (%p198) target = $region28
      $region27: #{fwd.8} parent=11 // pred_region
        _
      $region28: #{fwd.8} parent=11 // pred_fallthru
        _
    $region12: #{fwd.8} parent=5 // pred_fallthru
      _
    %p201 = scmp.lt.s32.totalorder %s12, 2
    // Predicated region
    $region29: #{fwd.8} parent=5 // pred_check
      %p202 = pneg %p201
    $region30: #{fwd.8} parent=5 // pred_check_branch
      %204 = sbr.rel (%p202) target = $region32
    $region31: #{fwd.8} parent=5 // pred_region
      // Predicated region
      $region33: #{fwd.8} parent=31 // pred_check
        %p205 = pneg %p32
      $region34: #{fwd.8} parent=31 // pred_check_branch
        %207 = sbr.rel (%p205) target = $region36
      $region35: #{fwd.8} parent=31 // pred_region
        %s208 = smul.u32 4, %s12
        %p209 = scmp.lt.s32.totalorder %s208, 7
        %s210 = scalar_select %p209, %s208, 7
        %s211 = smul.addr %s210, 4
        %s212 = scalar_lea.vmem %s0, %s211
        %s213 = smul.u32 4, %s12
      $region36: #{fwd.8} parent=31 // pred_fallthru
        _
      // Predicated region
      $region37: #{fwd.8} parent=31 // pred_check
        %p214 = pneg %p58
      $region38: #{fwd.8} parent=31 // pred_check_branch
        %216 = sbr.rel (%p214) target = $region40
      $region39: #{fwd.8} parent=31 // pred_region
        %s217 = smul.u32 4, %s12
        %p218 = scmp.lt.s32.totalorder %s217, 7
        %s219 = scalar_select %p218, %s217, 7
        %s220 = smul.addr %s219, 4
        %s221 = scalar_lea.vmem %s1, %s220
        %s222 = smul.u32 4, %s12
      $region40: #{fwd.8} parent=31 // pred_fallthru
        _
    $region32: #{fwd.8} parent=5 // pred_fallthru
      _
    %p223 = scmp.le.s32.totalorder 1, %s12
    %p224 = scmp.lt.s32.totalorder %s12, 3
    %p225 = pnand %p223, %p224
    %p226 = pneg %p225
    // Predicated region
    $region41: #{fwd.8} parent=5 // pred_check
      _
    $region42: #{fwd.8} parent=5 // pred_check_branch
      %228 = sbr.rel (%p225) target = $region44
    $region43: #{fwd.8} parent=5 // pred_region
      %s229 = ssub.s32 %s12, 1
      %s230 = smul.u32 4, %s17
      %p231 = scmp.lt.s32.totalorder %s230, 7
      %s232 = scalar_select %p231, %s230, 7
      %s233 = smul.addr %s232, 4
      %s234 = scalar_lea.vmem %s0, %s233
      %p235 = pneg %p38
      %p236 = pneg %p35
      %s237 = smul.u32 4, %s17
      %p238 = scmp.lt.s32.totalorder %s237, 7
      %s239 = scalar_select %p238, %s237, 7
      %s240 = smul.addr %s239, 4
      %s241 = scalar_lea.vmem %s1, %s240
      %p242 = pneg %p64
      %p243 = pneg %p61
      %p244 = pneg %p85
      %p245 = pneg %p82
      %p246 = pneg %p106
      %p247 = pneg %p103
      %p248 = pneg %p127
      %p249 = pneg %p124
      %p250 = pneg %p148
      %p251 = pneg %p145
      %p252 = pneg %p174
      %p253 = pneg %p171
      %s254 = smul.u32 4, %s17
      %p255 = scmp.lt.s32.totalorder %s254, 7
      %s256 = scalar_select %p255, %s254, 7
      %s257 = smul.addr %s256, 8
      %s258 = scalar_lea.vmem %s6, %s257
      %s259 = smul.u32 4, %s17
      %p260 = scmp.lt.s32.totalorder %s259, 7
      %s261 = scalar_select %p260, %s259, 7
      %s262 = smul.addr %s261, 4
      %s263 = scalar_lea.vmem %s0, %s262
      %s264 = smul.u32 4, %s17
      %s265 = smul.u32 4, %s17
      %p266 = scmp.lt.s32.totalorder %s265, 7
      %s267 = scalar_select %p266, %s265, 7
      %s268 = smul.addr %s267, 4
      %s269 = scalar_lea.vmem %s1, %s268
      %s270 = smul.u32 4, %s17
      %s271 = smul.u32 4, %s17
      %p272 = scmp.lt.s32.totalorder %s271, 7
      %s273 = scalar_select %p272, %s271, 7
      %s274 = smul.addr %s273, 8
      %s275 = scalar_lea.vmem %s6, %s274
      %s276 = smul.u32 4, %s17
      %v277 = vld [vmem:[%s263] sm:$0xf]
      %v278 = vld [vmem:[%s263 + $0x4] sm:$0xf]
      %v279 = vld [vmem:[%s263 + $0x8] sm:$0xf]
      %v280 = vld [vmem:[%s263 + $0xc] sm:$0xf]
      %v281 = vunpack.c.l.bf16 %v277
      %v282 = vunpack.c.l.bf16 %v278
      %v283 = vunpack.c.l.bf16 %v279
      %v284 = vunpack.c.l.bf16 %v280
      %v285 = vld [vmem:[%s2] sm:$0x1]
      %v287 = vlaneseq
      %v288 = vshrl.u32 %v287, 7
      %v289 = vsub.s32 0, %v288
      %v290 = vrot.slane %v285, %v289
      %v292 = vmul.f32 %v281, %v290
      %v293 = vmul.f32 %v282, %v290
      %v294 = vmul.f32 %v283, %v290
      %v295 = vmul.f32 %v284, %v290
      %v296 = vld [vmem:[%s3] sm:$0x1]
      %v298 = vlaneseq
      %v299 = vshrl.u32 %v298, 7
      %v300 = vsub.s32 0, %v299
      %v301 = vrot.slane %v296, %v300
      %v303 = vadd.f32 %v292, %v301
      %v304 = vadd.f32 %v293, %v301
      %v305 = vadd.f32 %v294, %v301
      %v306 = vadd.f32 %v295, %v301
      %v307 = vmax.f32 %v303, 0.0
      %v308 = vmax.f32 %v304, 0.0
      %v309 = vmax.f32 %v305, 0.0
      %v310 = vmax.f32 %v306, 0.0
      %v311 = vld [vmem:[%s269] sm:$0xf]
      %v312 = vld [vmem:[%s269 + $0x4] sm:$0xf]
      %v313 = vld [vmem:[%s269 + $0x8] sm:$0xf]
      %v314 = vld [vmem:[%s269 + $0xc] sm:$0xf]
      %v315 = vunpack.c.l.bf16 %v311
      %v316 = vunpack.c.l.bf16 %v312
      %v317 = vunpack.c.l.bf16 %v313
      %v318 = vunpack.c.l.bf16 %v314
      %v319 = vld [vmem:[%s4] sm:$0x1]
      %v321 = vlaneseq
      %v322 = vshrl.u32 %v321, 7
      %v323 = vsub.s32 0, %v322
      %v324 = vrot.slane %v319, %v323
      %v326 = vmul.f32 %v315, %v324
      %v327 = vmul.f32 %v316, %v324
      %v328 = vmul.f32 %v317, %v324
      %v329 = vmul.f32 %v318, %v324
      %v330 = vld [vmem:[%s5] sm:$0x1]
      %v332 = vlaneseq
      %v333 = vshrl.u32 %v332, 7
      %v334 = vsub.s32 0, %v333
      %v335 = vrot.slane %v330, %v334
      %v337 = vadd.f32 %v326, %v335
      %v338 = vadd.f32 %v327, %v335
      %v339 = vadd.f32 %v328, %v335
      %v340 = vadd.f32 %v329, %v335
      %v341 = vadd.f32 %v307, %v337
      %v342 = vadd.f32 %v308, %v338
      %v343 = vadd.f32 %v309, %v339
      %v344 = vadd.f32 %v310, %v340
      %v345 = vmax.f32 %v341, 0.0
      %v346 = vmax.f32 %v342, 0.0
      %v347 = vmax.f32 %v343, 0.0
      %v348 = vmax.f32 %v344, 0.0
      %349 = vst [vmem:[%s275] sm:$0xff] %v345
      %350 = vst [vmem:[%s275 + $0x8] sm:$0xff] %v346
      %351 = vst [vmem:[%s275 + $0x10] sm:$0xff] %v347
      %352 = vst [vmem:[%s275 + $0x18] sm:$0xff] %v348
      %s353 = smul.u32 4, %s17
      %p354 = scmp.lt.s32.totalorder %s353, 7
      %s355 = scalar_select %p354, %s353, 7
      %s356 = smul.addr %s355, 8
      %s357 = scalar_lea.vmem %s6, %s356
      // Predicated region
      $region45: #{fwd.8} parent=43 // pred_check
        %p358 = pneg %p171
      $region46: #{fwd.8} parent=43 // pred_check_branch
        %360 = sbr.rel (%p358) target = $region48
      $region47: #{fwd.8} parent=43 // pred_region
        %s361 = smul.u32 4, %s17
      $region48: #{fwd.8} parent=43 // pred_fallthru
        _
    $region44: #{fwd.8} parent=5 // pred_fallthru
      _
    %p362 = scmp.le.s32.totalorder 2, %s12
    // Predicated region
    $region49: #{fwd.8} parent=5 // pred_check
      %p363 = pneg %p362
    $region50: #{fwd.8} parent=5 // pred_check_branch
      %365 = sbr.rel (%p363) target = $region52
    $region51: #{fwd.8} parent=5 // pred_region
      %s366 = ssub.s32 %s12, 2
      // Predicated region
      $region53: #{fwd.8} parent=51 // pred_check
        %p367 = pneg %p177
      $region54: #{fwd.8} parent=51 // pred_check_branch
        %369 = sbr.rel (%p367) target = $region56
      $region55: #{fwd.8} parent=51 // pred_region
        %s370 = smul.u32 4, %s18
        %p371 = scmp.lt.s32.totalorder %s370, 7
        %s372 = scalar_select %p371, %s370, 7
        %s373 = smul.addr %s372, 8
        %s374 = scalar_lea.vmem %s6, %s373
      $region56: #{fwd.8} parent=51 // pred_fallthru
        _
    $region52: #{fwd.8} parent=5 // pred_fallthru
      _
  $region6: #{fwd.8} parent=0 // loop_footer
    %s16 = sadd.s32 1, %s12
  $region7: #{fwd.8} parent=0 // loop_footer_branch
    %11 = sbr.rel target = $region3
  $region8: #{fwd.8} parent=0 // loop_exit
    _

// kernel: tile.26
$region0: #{tile.26}
  #allocation0 [shape = 's32[1]{0}', space=sflag, size = 0x4, scoped, tag = 'scoped memory for tile.26']
  %s0 = inlined_call_operand.<no memory space> [shape: f32[], index: 0, kind: input, shape index: {}]
  %s1 = inlined_call_operand.vmem [shape: f32[1,128], index: 1, kind: output, shape index: {}]
  %v2 = vstv %s0
  %3 = vst [vmem:[%s1] sm:$0x1] %v2

// kernel: fwd.6
$region0: #{fwd.6}
  #allocation0 [shape = 'u32[]', space=smem, size = 0x4, offset = 0x4, fixed_abs, tag = 'smem constant byte address 0x4 - core index']
  #allocation1 [shape = 'u32[144,128]{1,0:T(1,128)}', space=vmem, size = 0x12000, scoped, tag = 'internal scratch']
  #allocation2 [shape = 'bf16[9,9,128]{2,1,0:T(8,128)(2,1)}', space=vmem, size = 0x9000, scoped, tag = 'scratch operand']
  #allocation3 [shape = 'bf16[64,512]{1,0:T(16,128)(2,1)}', space=vmem, size = 0x10000, scoped, tag = 'scratch operand']
  %s0 = inlined_call_operand.vmem [shape: bf16[2,9,9,128], index: 0, kind: input, shape index: {}]
  %s1 = inlined_call_operand.vmem [shape: bf16[512,64], index: 1, kind: input, shape index: {}]
  %s2 = inlined_call_operand.vmem [shape: f32[1,64], index: 2, kind: input, shape index: {}]
  %s3 = inlined_call_operand.vmem [shape: bf16[32,64], index: 3, kind: input, shape index: {}]
  %s4 = inlined_call_operand.vmem [shape: f32[1,64], index: 4, kind: input, shape index: {}]
  %s5 = inlined_call_operand.vmem [shape: bf16[2,64,64], index: 5, kind: output, shape index: {0}]
  %s6 = inlined_call_operand.vmem [shape: f32[2,1,2,64], index: 6, kind: output, shape index: {1}]
  %s7 = inlined_call_operand.vmem [shape: bf16[2,64,64], index: 7, kind: output, shape index: {2}]
  %s8 = inlined_call_operand.vmem [shape: f32[2,1,2,64], index: 8, kind: output, shape index: {3}]
  %9 = xla_tuple %s5, %s6, %s7, %s8
  %s10 = sld [smem:[#allocation0]]
  $region81: #{fwd.6} parent=0
    _
  %s12 = ssub.s32 1, %s10
  %s13 = scalar_select 0, %s12, %s10
  loop: start=0, step=1, limit=4
  $region2: #{fwd.6} parent=0 // loop_pre_header
    _
  $region3: #{fwd.6} parent=0 // loop_header
    %s15 = sphi 0, %s19
    %p16 = scmp.ge.s32.totalorder %s15, 4
    %s22 = sphi 0, %s34
    %s23 = sphi 0, %s30
    %s24 = sphi 0, %s22
    %s25 = sphi 0, %s23
    %s26 = sphi 0, %s24
    %s27 = sphi 0, %s25
    %s37 = sphi 0, %s39
    %s40 = sphi 0, %s37
    %s41 = sphi 0, %s40
    %s57 = sphi 0, %s41
    %s61 = sphi 0, %s61
    %s63 = sphi 0, %s61
    %s64 = sphi 0, %s63
    %s78 = sphi 0, %s64
    %s82 = sphi 0, %s82
    %s84 = sphi 0, %s82
    %s85 = sphi 0, %s84
    %s99 = sphi 0, %s85
    %s103 = sphi 0, %s103
    %s105 = sphi 0, %s103
    %s106 = sphi 0, %s105
    %s120 = sphi 0, %s106
    %s124 = sphi 0, %s124
    %s126 = sphi 0, %s124
    %s127 = sphi 0, %s126
    %s141 = sphi 0, %s127
    %s149 = sphi 0, %s151
    %s152 = sphi 0, %s149
    %s153 = sphi 0, %s152
    %s169 = sphi 0, %s153
    %s177 = sphi 0, %s179
    %s180 = sphi 0, %s177
    %s181 = sphi 0, %s180
    %s197 = sphi 0, %s181
    %s205 = sphi 0, %s207
    %s208 = sphi 0, %s205
    %s209 = sphi 0, %s208
    %s225 = sphi 0, %s209
    %s233 = sphi 0, %s235
    %s236 = sphi 0, %s233
    %s237 = sphi 0, %s236
    %s253 = sphi 0, %s237
  $region4: #{fwd.6} parent=0 // loop_header_branch
    %18 = sbr.rel (%p16) target = $region8
  $region5: #{fwd.6} parent=0 // loop_body
    %s20 = ssub.s32 %s15, 1
    %s21 = ssub.s32 %s15, 2
    %s28 = sadd.s32 1, %s23
    %p29 = scmp.ge.s32.totalorder %s28, 1
    %s30 = scalar_select %p29, 0, %s28
    %s31 = sadd.s32 1, %s22
    %s32 = scalar_select %p29, %s31, %s22
    %p33 = scmp.ge.s32.totalorder %s32, 2
    %s34 = scalar_select %p33, 0, %s32
    %s35 = ssub.s32 %s22, %s34
    %p36 = scmp.eq.s32.totalorder %s35, 0
    %s38 = sadd.s32 %s37, 1
    %s39 = scalar_select %p36, %s37, %s38
    %p42 = pneg %p36
    %p43 = scmp.eq.s32.totalorder %s15, 1
    %p44 = por %p42, %p43
    %p45 = scmp.ne.s32.totalorder %s37, %s40
    %p46 = scmp.eq.s32.totalorder %s15, 0
    %p47 = por %p45, %p46
    %p48 = scmp.ne.s32.totalorder %s37, %s40
    %p49 = scmp.eq.s32.totalorder %s20, 1
    %p50 = por %p48, %p49
    %p51 = scmp.ne.s32.totalorder %s40, %s41
    %p52 = scmp.eq.s32.totalorder %s20, 0
    %p53 = por %p51, %p52
    %p54 = scmp.ne.s32.totalorder %s40, %s41
    %p55 = scmp.eq.s32.totalorder %s21, 1
    %p56 = por %p54, %p55
    %p58 = scmp.ne.s32.totalorder %s41, %s57
    %p59 = scmp.eq.s32.totalorder %s21, 0
    %p60 = por %p58, %p59
    %s62 = sadd.s32 %s61, 1
    %p65 = scmp.eq.s32.totalorder %s15, 1
    %p66 = scmp.ne.s32.totalorder %s61, %s63
    %p67 = scmp.eq.s32.totalorder %s15, 0
    %p68 = por %p66, %p67
    %p69 = scmp.ne.s32.totalorder %s61, %s63
    %p70 = scmp.eq.s32.totalorder %s20, 1
    %p71 = por %p69, %p70
    %p72 = scmp.ne.s32.totalorder %s63, %s64
    %p73 = scmp.eq.s32.totalorder %s20, 0
    %p74 = por %p72, %p73
    %p75 = scmp.ne.s32.totalorder %s63, %s64
    %p76 = scmp.eq.s32.totalorder %s21, 1
    %p77 = por %p75, %p76
    %p79 = scmp.ne.s32.totalorder %s64, %s78
    %p80 = scmp.eq.s32.totalorder %s21, 0
    %p81 = por %p79, %p80
    %s83 = sadd.s32 %s82, 1
    %p86 = scmp.eq.s32.totalorder %s15, 1
    %p87 = scmp.ne.s32.totalorder %s82, %s84
    %p88 = scmp.eq.s32.totalorder %s15, 0
    %p89 = por %p87, %p88
    %p90 = scmp.ne.s32.totalorder %s82, %s84
    %p91 = scmp.eq.s32.totalorder %s20, 1
    %p92 = por %p90, %p91
    %p93 = scmp.ne.s32.totalorder %s84, %s85
    %p94 = scmp.eq.s32.totalorder %s20, 0
    %p95 = por %p93, %p94
    %p96 = scmp.ne.s32.totalorder %s84, %s85
    %p97 = scmp.eq.s32.totalorder %s21, 1
    %p98 = por %p96, %p97
    %p100 = scmp.ne.s32.totalorder %s85, %s99
    %p101 = scmp.eq.s32.totalorder %s21, 0
    %p102 = por %p100, %p101
    %s104 = sadd.s32 %s103, 1
    %p107 = scmp.eq.s32.totalorder %s15, 1
    %p108 = scmp.ne.s32.totalorder %s103, %s105
    %p109 = scmp.eq.s32.totalorder %s15, 0
    %p110 = por %p108, %p109
    %p111 = scmp.ne.s32.totalorder %s103, %s105
    %p112 = scmp.eq.s32.totalorder %s20, 1
    %p113 = por %p111, %p112
    %p114 = scmp.ne.s32.totalorder %s105, %s106
    %p115 = scmp.eq.s32.totalorder %s20, 0
    %p116 = por %p114, %p115
    %p117 = scmp.ne.s32.totalorder %s105, %s106
    %p118 = scmp.eq.s32.totalorder %s21, 1
    %p119 = por %p117, %p118
    %p121 = scmp.ne.s32.totalorder %s106, %s120
    %p122 = scmp.eq.s32.totalorder %s21, 0
    %p123 = por %p121, %p122
    %s125 = sadd.s32 %s124, 1
    %p128 = scmp.eq.s32.totalorder %s15, 1
    %p129 = scmp.ne.s32.totalorder %s124, %s126
    %p130 = scmp.eq.s32.totalorder %s15, 0
    %p131 = por %p129, %p130
    %p132 = scmp.ne.s32.totalorder %s124, %s126
    %p133 = scmp.eq.s32.totalorder %s20, 1
    %p134 = por %p132, %p133
    %p135 = scmp.ne.s32.totalorder %s126, %s127
    %p136 = scmp.eq.s32.totalorder %s20, 0
    %p137 = por %p135, %p136
    %p138 = scmp.ne.s32.totalorder %s126, %s127
    %p139 = scmp.eq.s32.totalorder %s21, 1
    %p140 = por %p138, %p139
    %p142 = scmp.ne.s32.totalorder %s127, %s141
    %p143 = scmp.eq.s32.totalorder %s21, 0
    %p144 = por %p142, %p143
    %s145 = ssub.s32 %s22, %s34
    %s146 = ssub.s32 %s23, %s30
    %s147 = sor.u32 %s145, %s146
    %p148 = scmp.eq.s32.totalorder %s147, 0
    %s150 = sadd.s32 %s149, 1
    %s151 = scalar_select %p148, %s149, %s150
    %p154 = pneg %p148
    %p155 = scmp.eq.s32.totalorder %s15, 1
    %p156 = por %p154, %p155
    %p157 = scmp.ne.s32.totalorder %s149, %s152
    %p158 = scmp.eq.s32.totalorder %s15, 0
    %p159 = por %p157, %p158
    %p160 = scmp.ne.s32.totalorder %s149, %s152
    %p161 = scmp.eq.s32.totalorder %s20, 1
    %p162 = por %p160, %p161
    %p163 = scmp.ne.s32.totalorder %s152, %s153
    %p164 = scmp.eq.s32.totalorder %s20, 0
    %p165 = por %p163, %p164
    %p166 = scmp.ne.s32.totalorder %s152, %s153
    %p167 = scmp.eq.s32.totalorder %s21, 1
    %p168 = por %p166, %p167
    %p170 = scmp.ne.s32.totalorder %s153, %s169
    %p171 = scmp.eq.s32.totalorder %s21, 0
    %p172 = por %p170, %p171
    %s173 = ssub.s32 %s22, %s34
    %s174 = ssub.s32 %s23, %s30
    %s175 = sor.u32 %s173, %s174
    %p176 = scmp.eq.s32.totalorder %s175, 0
    %s178 = sadd.s32 %s177, 1
    %s179 = scalar_select %p176, %s177, %s178
    %p182 = pneg %p176
    %p183 = scmp.eq.s32.totalorder %s15, 1
    %p184 = por %p182, %p183
    %p185 = scmp.ne.s32.totalorder %s177, %s180
    %p186 = scmp.eq.s32.totalorder %s15, 0
    %p187 = por %p185, %p186
    %p188 = scmp.ne.s32.totalorder %s177, %s180
    %p189 = scmp.eq.s32.totalorder %s20, 1
    %p190 = por %p188, %p189
    %p191 = scmp.ne.s32.totalorder %s180, %s181
    %p192 = scmp.eq.s32.totalorder %s20, 0
    %p193 = por %p191, %p192
    %p194 = scmp.ne.s32.totalorder %s180, %s181
    %p195 = scmp.eq.s32.totalorder %s21, 1
    %p196 = por %p194, %p195
    %p198 = scmp.ne.s32.totalorder %s181, %s197
    %p199 = scmp.eq.s32.totalorder %s21, 0
    %p200 = por %p198, %p199
    %s201 = ssub.s32 %s22, %s34
    %s202 = ssub.s32 %s23, %s30
    %s203 = sor.u32 %s201, %s202
    %p204 = scmp.eq.s32.totalorder %s203, 0
    %s206 = sadd.s32 %s205, 1
    %s207 = scalar_select %p204, %s205, %s206
    %p210 = pneg %p204
    %p211 = scmp.eq.s32.totalorder %s15, 1
    %p212 = por %p210, %p211
    %p213 = scmp.ne.s32.totalorder %s205, %s208
    %p214 = scmp.eq.s32.totalorder %s15, 0
    %p215 = por %p213, %p214
    %p216 = scmp.ne.s32.totalorder %s205, %s208
    %p217 = scmp.eq.s32.totalorder %s20, 1
    %p218 = por %p216, %p217
    %p219 = scmp.ne.s32.totalorder %s208, %s209
    %p220 = scmp.eq.s32.totalorder %s20, 0
    %p221 = por %p219, %p220
    %p222 = scmp.ne.s32.totalorder %s208, %s209
    %p223 = scmp.eq.s32.totalorder %s21, 1
    %p224 = por %p222, %p223
    %p226 = scmp.ne.s32.totalorder %s209, %s225
    %p227 = scmp.eq.s32.totalorder %s21, 0
    %p228 = por %p226, %p227
    %s229 = ssub.s32 %s22, %s34
    %s230 = ssub.s32 %s23, %s30
    %s231 = sor.u32 %s229, %s230
    %p232 = scmp.eq.s32.totalorder %s231, 0
    %s234 = sadd.s32 %s233, 1
    %s235 = scalar_select %p232, %s233, %s234
    %p238 = pneg %p232
    %p239 = scmp.eq.s32.totalorder %s15, 1
    %p240 = por %p238, %p239
    %p241 = scmp.ne.s32.totalorder %s233, %s236
    %p242 = scmp.eq.s32.totalorder %s15, 0
    %p243 = por %p241, %p242
    %p244 = scmp.ne.s32.totalorder %s233, %s236
    %p245 = scmp.eq.s32.totalorder %s20, 1
    %p246 = por %p244, %p245
    %p247 = scmp.ne.s32.totalorder %s236, %s237
    %p248 = scmp.eq.s32.totalorder %s20, 0
    %p249 = por %p247, %p248
    %p250 = scmp.ne.s32.totalorder %s236, %s237
    %p251 = scmp.eq.s32.totalorder %s21, 1
    %p252 = por %p250, %p251
    %p254 = scmp.ne.s32.totalorder %s237, %s253
    %p255 = scmp.eq.s32.totalorder %s21, 0
    %p256 = por %p254, %p255
    %p257 = scmp.le.s32.totalorder 1, %s15
    %p258 = scmp.lt.s32.totalorder %s15, 3
    %p259 = pnand %p257, %p258
    %p260 = pneg %p259
    // Predicated region
    $region9: #{fwd.6} parent=5 // pred_check
      _
    $region10: #{fwd.6} parent=5 // pred_check_branch
      %262 = sbr.rel (%p259) target = $region12
    $region11: #{fwd.6} parent=5 // pred_region
      %s263 = ssub.s32 %s15, 1
      // Predicated region
      $region13: #{fwd.6} parent=11 // pred_check
        %p264 = pneg %p74
      $region14: #{fwd.6} parent=11 // pred_check_branch
        %266 = sbr.rel (%p264) target = $region16
      $region15: #{fwd.6} parent=11 // pred_region
        _
      $region16: #{fwd.6} parent=11 // pred_fallthru
        _
      // Predicated region
      $region17: #{fwd.6} parent=11 // pred_check
        %p267 = pneg %p95
      $region18: #{fwd.6} parent=11 // pred_check_branch
        %269 = sbr.rel (%p267) target = $region20
      $region19: #{fwd.6} parent=11 // pred_region
        _
      $region20: #{fwd.6} parent=11 // pred_fallthru
        _
      // Predicated region
      $region21: #{fwd.6} parent=11 // pred_check
        %p270 = pneg %p116
      $region22: #{fwd.6} parent=11 // pred_check_branch
        %272 = sbr.rel (%p270) target = $region24
      $region23: #{fwd.6} parent=11 // pred_region
        _
      $region24: #{fwd.6} parent=11 // pred_fallthru
        _
      // Predicated region
      $region25: #{fwd.6} parent=11 // pred_check
        %p273 = pneg %p137
      $region26: #{fwd.6} parent=11 // pred_check_branch
        %275 = sbr.rel (%p273) target = $region28
      $region27: #{fwd.6} parent=11 // pred_region
        _
      $region28: #{fwd.6} parent=11 // pred_fallthru
        _
    $region12: #{fwd.6} parent=5 // pred_fallthru
      _
    %p276 = scmp.lt.s32.totalorder %s15, 2
    // Predicated region
    $region29: #{fwd.6} parent=5 // pred_check
      %p277 = pneg %p276
    $region30: #{fwd.6} parent=5 // pred_check_branch
      %279 = sbr.rel (%p277) target = $region32
    $region31: #{fwd.6} parent=5 // pred_region
      // Predicated region
      $region33: #{fwd.6} parent=31 // pred_check
        %p280 = pneg %p47
      $region34: #{fwd.6} parent=31 // pred_check_branch
        %282 = sbr.rel (%p280) target = $region36
      $region35: #{fwd.6} parent=31 // pred_region
        %p283 = scmp.lt.s32.totalorder %s22, 1
        %s284 = scalar_select %p283, %s22, 1
        %s285 = smul.addr %s284, 18
        %s286 = smul.addr %s285, 4
        %s287 = scalar_lea.vmem %s0, %s286
      $region36: #{fwd.6} parent=31 // pred_fallthru
        _
    $region32: #{fwd.6} parent=5 // pred_fallthru
      _
    %p288 = scmp.le.s32.totalorder 1, %s15
    %p289 = scmp.lt.s32.totalorder %s15, 3
    %p290 = pnand %p288, %p289
    %p291 = pneg %p290
    // Predicated region
    $region37: #{fwd.6} parent=5 // pred_check
      _
    $region38: #{fwd.6} parent=5 // pred_check_branch
      %293 = sbr.rel (%p290) target = $region40
    $region39: #{fwd.6} parent=5 // pred_region
      %s294 = ssub.s32 %s15, 1
      %p295 = scmp.lt.s32.totalorder %s24, 1
      %s296 = scalar_select %p295, %s24, 1
      %s297 = smul.addr %s296, 18
      %s298 = smul.addr %s297, 4
      %s299 = scalar_lea.vmem %s0, %s298
      %p300 = pneg %p53
      %p301 = pneg %p50
      %p302 = pneg %p74
      %p303 = pneg %p71
      %p304 = pneg %p95
      %p305 = pneg %p92
      %p306 = pneg %p116
      %p307 = pneg %p113
      %p308 = pneg %p137
      %p309 = pneg %p134
      %p310 = pneg %p165
      %p311 = pneg %p162
      %s312 = smul.u32 8, %s25
      %p313 = scmp.lt.s32.totalorder %s24, 1
      %s314 = scalar_select %p313, %s24, 1
      %p315 = scmp.lt.s32.totalorder %s312, 7
      %s316 = scalar_select %p315, %s312, 7
      %s317 = smul.addr %s314, 8
      %s318 = sadd.s32 %s316, %s317
      %s319 = smul.addr %s318, 4
      %s320 = scalar_lea.vmem %s5, %s319
      %p321 = pneg %p193
      %p322 = pneg %p190
      %p323 = scmp.lt.s32.totalorder %s24, 1
      %s324 = scalar_select %p323, %s24, 1
      %p325 = scmp.lt.s32.totalorder %s25, 0
      %s326 = scalar_select %p325, %s25, 0
      %s327 = sadd.s32 %s326, %s324
      %s328 = smul.addr %s327, 2
      %s329 = scalar_lea.vmem %s6, %s328
      %p330 = pneg %p221
      %p331 = pneg %p218
      %s332 = smul.u32 8, %s25
      %p333 = scmp.lt.s32.totalorder %s24, 1
      %s334 = scalar_select %p333, %s24, 1
      %p335 = scmp.lt.s32.totalorder %s332, 7
      %s336 = scalar_select %p335, %s332, 7
      %s337 = smul.addr %s334, 8
      %s338 = sadd.s32 %s336, %s337
      %s339 = smul.addr %s338, 4
      %s340 = scalar_lea.vmem %s7, %s339
      %p341 = pneg %p249
      %p342 = pneg %p246
      %p343 = scmp.lt.s32.totalorder %s24, 1
      %s344 = scalar_select %p343, %s24, 1
      %p345 = scmp.lt.s32.totalorder %s25, 0
      %s346 = scalar_select %p345, %s25, 0
      %s347 = sadd.s32 %s346, %s344
      %s348 = smul.addr %s347, 2
      %s349 = scalar_lea.vmem %s8, %s348
      %p350 = scmp.lt.s32.totalorder %s24, 1
      %s351 = scalar_select %p350, %s24, 1
      %s352 = smul.addr %s351, 18
      %s353 = smul.addr %s352, 4
      %s354 = scalar_lea.vmem %s0, %s353
      %s355 = smul.u32 8, %s25
      %p356 = scmp.lt.s32.totalorder %s24, 1
      %s357 = scalar_select %p356, %s24, 1
      %p358 = scmp.lt.s32.totalorder %s355, 7
      %s359 = scalar_select %p358, %s355, 7
      %s360 = smul.addr %s357, 8
      %s361 = sadd.s32 %s359, %s360
      %s362 = smul.addr %s361, 4
      %s363 = scalar_lea.vmem %s5, %s362
      %s364 = smul.u32 8, %s25
      %p365 = scmp.lt.s32.totalorder %s24, 1
      %s366 = scalar_select %p365, %s24, 1
      %p367 = scmp.lt.s32.totalorder %s25, 0
      %s368 = scalar_select %p367, %s25, 0
      %s369 = sadd.s32 %s368, %s366
      %s370 = smul.addr %s369, 2
      %s371 = scalar_lea.vmem %s6, %s370
      %s372 = smul.u32 8, %s25
      %p373 = scmp.lt.s32.totalorder %s24, 1
      %s374 = scalar_select %p373, %s24, 1
      %p375 = scmp.lt.s32.totalorder %s372, 7
      %s376 = scalar_select %p375, %s372, 7
      %s377 = smul.addr %s374, 8
      %s378 = sadd.s32 %s376, %s377
      %s379 = smul.addr %s378, 4
      %s380 = scalar_lea.vmem %s7, %s379
      %s381 = smul.u32 8, %s25
      %p382 = scmp.lt.s32.totalorder %s24, 1
      %s383 = scalar_select %p382, %s24, 1
      %p384 = scmp.lt.s32.totalorder %s25, 0
      %s385 = scalar_select %p384, %s25, 0
      %s386 = sadd.s32 %s385, %s383
      %s387 = smul.addr %s386, 2
      %s388 = scalar_lea.vmem %s8, %s387
      %p390 = scmp.eq.s32.totalorder %s25, 0
      // Predicated region
      $region41: #{fwd.6} parent=39 // pred_check
        %p391 = pneg %p390
      $region42: #{fwd.6} parent=39 // pred_check_branch
        %393 = sbr.rel (%p391) target = $region44
      $region43: #{fwd.6} parent=39 // pred_region
        %v394 = vld [vmem:[%s354] sm:$0xf]
        %v395 = vld [vmem:[%s354 + $0x4] sm:$0x1]
        %v396 = vld [vmem:[%s354 + $0x8] sm:$0xf]
        %v397 = vld [vmem:[%s354 + $0xc] sm:$0x1]
        %v398 = vld [vmem:[%s354 + $0x10] sm:$0xf]
        %v399 = vld [vmem:[%s354 + $0x14] sm:$0x1]
        %v400 = vld [vmem:[%s354 + $0x18] sm:$0xf]
        %v401 = vld [vmem:[%s354 + $0x1c] sm:$0x1]
        %v402 = vld [vmem:[%s354 + $0x20] sm:$0xf]
        %v403 = vld [vmem:[%s354 + $0x24] sm:$0x1]
        %v404 = vld [vmem:[%s354 + $0x28] sm:$0xf]
        %v405 = vld [vmem:[%s354 + $0x2c] sm:$0x1]
        %v406 = vld [vmem:[%s354 + $0x30] sm:$0xf]
        %v407 = vld [vmem:[%s354 + $0x34] sm:$0x1]
        %v408 = vld [vmem:[%s354 + $0x38] sm:$0xf]
        %v409 = vld [vmem:[%s354 + $0x3c] sm:$0x1]
        %v410 = vld [vmem:[%s354 + $0x40] sm:$0xf]
        %v411 = vld [vmem:[%s354 + $0x44] sm:$0x1]
        %412 = vst [vmem:[#allocation2] sm:$0xf] %v394
        %vm413 = vcmask 1040384
        %vm414 = vsmask.f32 256
        %vm415 = vmand %vm413, %vm414
        %v416 = vld [vmem:[#allocation2 + $0x4] sm:$0x1]
        %v417 = vsel %vm415, %v395, %v416
        %418 = vst [vmem:[#allocation2 + $0x4] sm:$0x1] %v417
        %419 = vst [vmem:[#allocation2 + $0x8] sm:$0xf] %v396
        %v420 = vld [vmem:[#allocation2 + $0xc] sm:$0x1]
        %v421 = vsel %vm415, %v397, %v420
        %422 = vst [vmem:[#allocation2 + $0xc] sm:$0x1] %v421
        %423 = vst [vmem:[#allocation2 + $0x10] sm:$0xf] %v398
        %v424 = vld [vmem:[#allocation2 + $0x14] sm:$0x1]
        %v425 = vsel %vm415, %v399, %v424
        %426 = vst [vmem:[#allocation2 + $0x14] sm:$0x1] %v425
        %427 = vst [vmem:[#allocation2 + $0x18] sm:$0xf] %v400
        %v428 = vld [vmem:[#allocation2 + $0x1c] sm:$0x1]
        %v429 = vsel %vm415, %v401, %v428
        %430 = vst [vmem:[#allocation2 + $0x1c] sm:$0x1] %v429
        %431 = vst [vmem:[#allocation2 + $0x20] sm:$0xf] %v402
        %v432 = vld [vmem:[#allocation2 + $0x24] sm:$0x1]
        %v433 = vsel %vm415, %v403, %v432
        %434 = vst [vmem:[#allocation2 + $0x24] sm:$0x1] %v433
        %435 = vst [vmem:[#allocation2 + $0x28] sm:$0xf] %v404
        %v436 = vld [vmem:[#allocation2 + $0x2c] sm:$0x1]
        %v437 = vsel %vm415, %v405, %v436
        %438 = vst [vmem:[#allocation2 + $0x2c] sm:$0x1] %v437
        %439 = vst [vmem:[#allocation2 + $0x30] sm:$0xf] %v406
        %v440 = vld [vmem:[#allocation2 + $0x34] sm:$0x1]
        %v441 = vsel %vm415, %v407, %v440
        %442 = vst [vmem:[#allocation2 + $0x34] sm:$0x1] %v441
        %443 = vst [vmem:[#allocation2 + $0x38] sm:$0xf] %v408
        %v444 = vld [vmem:[#allocation2 + $0x3c] sm:$0x1]
        %v445 = vsel %vm415, %v409, %v444
        %446 = vst [vmem:[#allocation2 + $0x3c] sm:$0x1] %v445
        %447 = vst [vmem:[#allocation2 + $0x40] sm:$0xf] %v410
        %v448 = vld [vmem:[#allocation2 + $0x44] sm:$0x1]
        %v449 = vsel %vm415, %v411, %v448
        %450 = vst [vmem:[#allocation2 + $0x44] sm:$0x1] %v449
      $region44: #{fwd.6} parent=39 // pred_fallthru
        _
      %s451 = smul.u32 %s25, 8
      %s452 = smul.u32 %s451, 2
      %s453 = smul.addr %s452, 4
      %s454 = scalar_lea.vmem [#allocation2], %s453
      %v455 = vld [vmem:[%s454] sm:$0xf]
      %v456 = vld [vmem:[%s454 + $0x8] sm:$0xf]
      %v457 = vld [vmem:[%s454 + $0x10] sm:$0xf]
      %v458 = vld [vmem:[%s454 + $0x18] sm:$0xf]
      %v459 = vld [vmem:[%s454 + $0x20] sm:$0xf]
      %v460 = vld [vmem:[%s454 + $0x28] sm:$0xf]
      %v461 = vld [vmem:[%s454 + $0x30] sm:$0xf]
      %v462 = vld [vmem:[%s454 + $0x38] sm:$0xf]
      %v471 = vunpack.c.l.b16 %v455
      %v472 = vunpack.c.l.b16 %v456
      %v473 = vunpack.c.l.b16 %v457
      %v474 = vunpack.c.l.b16 %v458
      %v475 = vunpack.c.l.b16 %v459
      %v476 = vunpack.c.l.b16 %v460
      %v477 = vunpack.c.l.b16 %v461
      %v478 = vunpack.c.l.b16 %v462
      %v479 = vpack.c.b16 %v472, %v471
      %v480 = vpack.c.b16 %v474, %v473
      %v481 = vpack.c.b16 %v476, %v475
      %v482 = vpack.c.b16 %v478, %v477
      %487 = vst [vmem:[#allocation3] sm:$0xff] %v479
      %488 = vst [vmem:[#allocation3 + $0x20] sm:$0xff] %v480
      %489 = vst [vmem:[#allocation3 + $0x40] sm:$0xff] %v481
      %490 = vst [vmem:[#allocation3 + $0x60] sm:$0xff] %v482
      %v491 = vld [vmem:[%s454] sm:$0xf]
      %v492 = vld [vmem:[%s454 + $0x4] sm:$0x1]
      %v493 = vld [vmem:[%s454 + $0x8] sm:$0xf]
      %v494 = vld [vmem:[%s454 + $0xc] sm:$0x1]
      %v495 = vld [vmem:[%s454 + $0x10] sm:$0xf]
      %v496 = vld [vmem:[%s454 + $0x14] sm:$0x1]
      %v497 = vld [vmem:[%s454 + $0x18] sm:$0xf]
      %v498 = vld [vmem:[%s454 + $0x1c] sm:$0x1]
      %v499 = vld [vmem:[%s454 + $0x20] sm:$0xf]
      %v500 = vld [vmem:[%s454 + $0x24] sm:$0x1]
      %v501 = vld [vmem:[%s454 + $0x28] sm:$0xf]
      %v502 = vld [vmem:[%s454 + $0x2c] sm:$0x1]
      %v503 = vld [vmem:[%s454 + $0x30] sm:$0xf]
      %v504 = vld [vmem:[%s454 + $0x34] sm:$0x1]
      %v505 = vld [vmem:[%s454 + $0x38] sm:$0xf]
      %v506 = vld [vmem:[%s454 + $0x3c] sm:$0x1]
      %vm507 = vsmask.f32 3328
      %vm508 = vsmask.f32 7440
      %vm509 = vmor %vm507, %vm508
      %v511 = vshrl.u32 %v491, 16
      %v513 = vrot.slane %v511, 4
      %v514 = vshll.u32 %v491, 16
      %v516 = vrot.slane %v514, 5
      %v517 = vor.u32 %v513, %v516
      %v518 = vrot.slane %v517, 4
      %v520 = vshll.u32 %v492, 16
      %v522 = vrot.slane %v520, 5
      %v523 = vsel %vm509, %v518, %v522
      %v525 = vshrl.u32 %v493, 16
      %v527 = vrot.slane %v525, 4
      %v528 = vshll.u32 %v493, 16
      %v530 = vrot.slane %v528, 5
      %v531 = vor.u32 %v527, %v530
      %v532 = vrot.slane %v531, 4
      %v534 = vshll.u32 %v494, 16
      %v536 = vrot.slane %v534, 5
      %v537 = vsel %vm509, %v532, %v536
      %v539 = vshrl.u32 %v495, 16
      %v541 = vrot.slane %v539, 4
      %v542 = vshll.u32 %v495, 16
      %v544 = vrot.slane %v542, 5
      %v545 = vor.u32 %v541, %v544
      %v546 = vrot.slane %v545, 4
      %v548 = vshll.u32 %v496, 16
      %v550 = vrot.slane %v548, 5
      %v551 = vsel %vm509, %v546, %v550
      %v553 = vshrl.u32 %v497, 16
      %v555 = vrot.slane %v553, 4
      %v556 = vshll.u32 %v497, 16
      %v558 = vrot.slane %v556, 5
      %v559 = vor.u32 %v555, %v558
      %v560 = vrot.slane %v559, 4
      %v562 = vshll.u32 %v498, 16
      %v564 = vrot.slane %v562, 5
      %v565 = vsel %vm509, %v560, %v564
      %v567 = vshrl.u32 %v499, 16
      %v569 = vrot.slane %v567, 4
      %v570 = vshll.u32 %v499, 16
      %v572 = vrot.slane %v570, 5
      %v573 = vor.u32 %v569, %v572
      %v574 = vrot.slane %v573, 4
      %v576 = vshll.u32 %v500, 16
      %v578 = vrot.slane %v576, 5
      %v579 = vsel %vm509, %v574, %v578
      %v581 = vshrl.u32 %v501, 16
      %v583 = vrot.slane %v581, 4
      %v584 = vshll.u32 %v501, 16
      %v586 = vrot.slane %v584, 5
      %v587 = vor.u32 %v583, %v586
      %v588 = vrot.slane %v587, 4
      %v590 = vshll.u32 %v502, 16
      %v592 = vrot.slane %v590, 5
      %v593 = vsel %vm509, %v588, %v592
      %v595 = vshrl.u32 %v503, 16
      %v597 = vrot.slane %v595, 4
      %v598 = vshll.u32 %v503, 16
      %v600 = vrot.slane %v598, 5
      %v601 = vor.u32 %v597, %v600
      %v602 = vrot.slane %v601, 4
      %v604 = vshll.u32 %v504, 16
      %v606 = vrot.slane %v604, 5
      %v607 = vsel %vm509, %v602, %v606
      %v609 = vshrl.u32 %v505, 16
      %v611 = vrot.slane %v609, 4
      %v612 = vshll.u32 %v505, 16
      %v614 = vrot.slane %v612, 5
      %v615 = vor.u32 %v611, %v614
      %v616 = vrot.slane %v615, 4
      %v618 = vshll.u32 %v506, 16
      %v620 = vrot.slane %v618, 5
      %v621 = vsel %vm509, %v616, %v620
      %v622 = vunpack.c.l.b16 %v523
      %v623 = vunpack.c.l.b16 %v537
      %v624 = vunpack.c.l.b16 %v551
      %v625 = vunpack.c.l.b16 %v565
      %v626 = vunpack.c.l.b16 %v579
      %v627 = vunpack.c.l.b16 %v593
      %v628 = vunpack.c.l.b16 %v607
      %v629 = vunpack.c.l.b16 %v621
      %v630 = vpack.c.b16 %v623, %v622
      %v631 = vpack.c.b16 %v625, %v624
      %v632 = vpack.c.b16 %v627, %v626
      %v633 = vpack.c.b16 %v629, %v628
      %638 = vst [vmem:[#allocation3 + $0x8] sm:$0xff] %v630
      %639 = vst [vmem:[#allocation3 + $0x28] sm:$0xff] %v631
      %640 = vst [vmem:[#allocation3 + $0x48] sm:$0xff] %v632
      %641 = vst [vmem:[#allocation3 + $0x68] sm:$0xff] %v633
      %s642 = sadd.s32 %s451, 1
      %s643 = smul.u32 %s642, 2
      %s644 = smul.addr %s643, 4
      %s645 = scalar_lea.vmem [#allocation2], %s644
      %v646 = vld [vmem:[%s645] sm:$0xf]
      %v647 = vld [vmem:[%s645 + $0x8] sm:$0xf]
      %v648 = vld [vmem:[%s645 + $0x10] sm:$0xf]
      %v649 = vld [vmem:[%s645 + $0x18] sm:$0xf]
      %v650 = vld [vmem:[%s645 + $0x20] sm:$0xf]
      %v651 = vld [vmem:[%s645 + $0x28] sm:$0xf]
      %v652 = vld [vmem:[%s645 + $0x30] sm:$0xf]
      %v653 = vld [vmem:[%s645 + $0x38] sm:$0xf]
      %v662 = vunpack.c.l.b16 %v646
      %v663 = vunpack.c.l.b16 %v647
      %v664 = vunpack.c.l.b16 %v648
      %v665 = vunpack.c.l.b16 %v649
      %v666 = vunpack.c.l.b16 %v650
      %v667 = vunpack.c.l.b16 %v651
      %v668 = vunpack.c.l.b16 %v652
      %v669 = vunpack.c.l.b16 %v653
      %v670 = vpack.c.b16 %v663, %v662
      %v671 = vpack.c.b16 %v665, %v664
      %v672 = vpack.c.b16 %v667, %v666
      %v673 = vpack.c.b16 %v669, %v668
      %678 = vst [vmem:[#allocation3 + $0x10] sm:$0xff] %v670
      %679 = vst [vmem:[#allocation3 + $0x30] sm:$0xff] %v671
      %680 = vst [vmem:[#allocation3 + $0x50] sm:$0xff] %v672
      %681 = vst [vmem:[#allocation3 + $0x70] sm:$0xff] %v673
      %v682 = vld [vmem:[%s645] sm:$0xf]
      %v683 = vld [vmem:[%s645 + $0x4] sm:$0x1]
      %v684 = vld [vmem:[%s645 + $0x8] sm:$0xf]
      %v685 = vld [vmem:[%s645 + $0xc] sm:$0x1]
      %v686 = vld [vmem:[%s645 + $0x10] sm:$0xf]
      %v687 = vld [vmem:[%s645 + $0x14] sm:$0x1]
      %v688 = vld [vmem:[%s645 + $0x18] sm:$0xf]
      %v689 = vld [vmem:[%s645 + $0x1c] sm:$0x1]
      %v690 = vld [vmem:[%s645 + $0x20] sm:$0xf]
      %v691 = vld [vmem:[%s645 + $0x24] sm:$0x1]
      %v692 = vld [vmem:[%s645 + $0x28] sm:$0xf]
      %v693 = vld [vmem:[%s645 + $0x2c] sm:$0x1]
      %v694 = vld [vmem:[%s645 + $0x30] sm:$0xf]
      %v695 = vld [vmem:[%s645 + $0x34] sm:$0x1]
      %v696 = vld [vmem:[%s645 + $0x38] sm:$0xf]
      %v697 = vld [vmem:[%s645 + $0x3c] sm:$0x1]
      %v699 = vshrl.u32 %v682, 16
      %v701 = vrot.slane %v699, 4
      %v702 = vshll.u32 %v682, 16
      %v704 = vrot.slane %v702, 5
      %v705 = vor.u32 %v701, %v704
      %v706 = vrot.slane %v705, 4
      %v708 = vshll.u32 %v683, 16
      %v710 = vrot.slane %v708, 5
      %v711 = vsel %vm509, %v706, %v710
      %v713 = vshrl.u32 %v684, 16
      %v715 = vrot.slane %v713, 4
      %v716 = vshll.u32 %v684, 16
      %v718 = vrot.slane %v716, 5
      %v719 = vor.u32 %v715, %v718
      %v720 = vrot.slane %v719, 4
      %v722 = vshll.u32 %v685, 16
      %v724 = vrot.slane %v722, 5
      %v725 = vsel %vm509, %v720, %v724
      %v727 = vshrl.u32 %v686, 16
      %v729 = vrot.slane %v727, 4
      %v730 = vshll.u32 %v686, 16
      %v732 = vrot.slane %v730, 5
      %v733 = vor.u32 %v729, %v732
      %v734 = vrot.slane %v733, 4
      %v736 = vshll.u32 %v687, 16
      %v738 = vrot.slane %v736, 5
      %v739 = vsel %vm509, %v734, %v738
      %v741 = vshrl.u32 %v688, 16
      %v743 = vrot.slane %v741, 4
      %v744 = vshll.u32 %v688, 16
      %v746 = vrot.slane %v744, 5
      %v747 = vor.u32 %v743, %v746
      %v748 = vrot.slane %v747, 4
      %v750 = vshll.u32 %v689, 16
      %v752 = vrot.slane %v750, 5
      %v753 = vsel %vm509, %v748, %v752
      %v755 = vshrl.u32 %v690, 16
      %v757 = vrot.slane %v755, 4
      %v758 = vshll.u32 %v690, 16
      %v760 = vrot.slane %v758, 5
      %v761 = vor.u32 %v757, %v760
      %v762 = vrot.slane %v761, 4
      %v764 = vshll.u32 %v691, 16
      %v766 = vrot.slane %v764, 5
      %v767 = vsel %vm509, %v762, %v766
      %v769 = vshrl.u32 %v692, 16
      %v771 = vrot.slane %v769, 4
      %v772 = vshll.u32 %v692, 16
      %v774 = vrot.slane %v772, 5
      %v775 = vor.u32 %v771, %v774
      %v776 = vrot.slane %v775, 4
      %v778 = vshll.u32 %v693, 16
      %v780 = vrot.slane %v778, 5
      %v781 = vsel %vm509, %v776, %v780
      %v783 = vshrl.u32 %v694, 16
      %v785 = vrot.slane %v783, 4
      %v786 = vshll.u32 %v694, 16
      %v788 = vrot.slane %v786, 5
      %v789 = vor.u32 %v785, %v788
      %v790 = vrot.slane %v789, 4
      %v792 = vshll.u32 %v695, 16
      %v794 = vrot.slane %v792, 5
      %v795 = vsel %vm509, %v790, %v794
      %v797 = vshrl.u32 %v696, 16
      %v799 = vrot.slane %v797, 4
      %v800 = vshll.u32 %v696, 16
      %v802 = vrot.slane %v800, 5
      %v803 = vor.u32 %v799, %v802
      %v804 = vrot.slane %v803, 4
      %v806 = vshll.u32 %v697, 16
      %v808 = vrot.slane %v806, 5
      %v809 = vsel %vm509, %v804, %v808
      %v810 = vunpack.c.l.b16 %v711
      %v811 = vunpack.c.l.b16 %v725
      %v812 = vunpack.c.l.b16 %v739
      %v813 = vunpack.c.l.b16 %v753
      %v814 = vunpack.c.l.b16 %v767
      %v815 = vunpack.c.l.b16 %v781
      %v816 = vunpack.c.l.b16 %v795
      %v817 = vunpack.c.l.b16 %v809
      %v818 = vpack.c.b16 %v811, %v810
      %v819 = vpack.c.b16 %v813, %v812
      %v820 = vpack.c.b16 %v815, %v814
      %v821 = vpack.c.b16 %v817, %v816
      %826 = vst [vmem:[#allocation3 + $0x18] sm:$0xff] %v818
      %827 = vst [vmem:[#allocation3 + $0x38] sm:$0xff] %v819
      %828 = vst [vmem:[#allocation3 + $0x58] sm:$0xff] %v820
      %829 = vst [vmem:[#allocation3 + $0x78] sm:$0xff] %v821
      %v830 = vld [vmem:[#allocation3] sm:$0xff]
      %v831 = vld [vmem:[#allocation3 + $0x8] sm:$0xff]
      %v832 = vld [vmem:[#allocation3 + $0x10] sm:$0xff]
      %v833 = vld [vmem:[#allocation3 + $0x18] sm:$0xff]
      %v834 = vld [vmem:[#allocation3 + $0x20] sm:$0xff]
      %v835 = vld [vmem:[#allocation3 + $0x28] sm:$0xff]
      %v836 = vld [vmem:[#allocation3 + $0x30] sm:$0xff]
      %v837 = vld [vmem:[#allocation3 + $0x38] sm:$0xff]
      %v838 = vld [vmem:[#allocation3 + $0x40] sm:$0xff]
      %v839 = vld [vmem:[#allocation3 + $0x48] sm:$0xff]
      %v840 = vld [vmem:[#allocation3 + $0x50] sm:$0xff]
      %v841 = vld [vmem:[#allocation3 + $0x58] sm:$0xff]
      %v842 = vld [vmem:[#allocation3 + $0x60] sm:$0xff]
      %v843 = vld [vmem:[#allocation3 + $0x68] sm:$0xff]
      %v844 = vld [vmem:[#allocation3 + $0x70] sm:$0xff]
      %v845 = vld [vmem:[#allocation3 + $0x78] sm:$0xff]
      %v846 = vld [vmem:[%s1] sm:$0xf]
      %v847 = vld [vmem:[%s1 + $0x4] sm:$0xf]
      %v848 = vld [vmem:[%s1 + $0x8] sm:$0xf]
      %v849 = vld [vmem:[%s1 + $0xc] sm:$0xf]
      %v850 = vld [vmem:[%s1 + $0x10] sm:$0xf]
      %v851 = vld [vmem:[%s1 + $0x14] sm:$0xf]
      %v852 = vld [vmem:[%s1 + $0x18] sm:$0xf]
      %v853 = vld [vmem:[%s1 + $0x1c] sm:$0xf]
      %v854 = vld [vmem:[%s1 + $0x20] sm:$0xf]
      %v855 = vld [vmem:[%s1 + $0x24] sm:$0xf]
      %v856 = vld [vmem:[%s1 + $0x28] sm:$0xf]
      %v857 = vld [vmem:[%s1 + $0x2c] sm:$0xf]
      %v858 = vld [vmem:[%s1 + $0x30] sm:$0xf]
      %v859 = vld [vmem:[%s1 + $0x34] sm:$0xf]
      %v860 = vld [vmem:[%s1 + $0x38] sm:$0xf]
      %v861 = vld [vmem:[%s1 + $0x3c] sm:$0xf]
      %v862 = vld [vmem:[%s1 + $0x40] sm:$0xf]
      %v863 = vld [vmem:[%s1 + $0x44] sm:$0xf]
      %v864 = vld [vmem:[%s1 + $0x48] sm:$0xf]
      %v865 = vld [vmem:[%s1 + $0x4c] sm:$0xf]
      %v866 = vld [vmem:[%s1 + $0x50] sm:$0xf]
      %v867 = vld [vmem:[%s1 + $0x54] sm:$0xf]
      %v868 = vld [vmem:[%s1 + $0x58] sm:$0xf]
      %v869 = vld [vmem:[%s1 + $0x5c] sm:$0xf]
      %v870 = vld [vmem:[%s1 + $0x60] sm:$0xf]
      %v871 = vld [vmem:[%s1 + $0x64] sm:$0xf]
      %v872 = vld [vmem:[%s1 + $0x68] sm:$0xf]
      %v873 = vld [vmem:[%s1 + $0x6c] sm:$0xf]
      %v874 = vld [vmem:[%s1 + $0x70] sm:$0xf]
      %v875 = vld [vmem:[%s1 + $0x74] sm:$0xf]
      %v876 = vld [vmem:[%s1 + $0x78] sm:$0xf]
      %v877 = vld [vmem:[%s1 + $0x7c] sm:$0xf]
      %v878 = vld [vmem:[%s1 + $0x80] sm:$0xf]
      %v879 = vld [vmem:[%s1 + $0x84] sm:$0xf]
      %v880 = vld [vmem:[%s1 + $0x88] sm:$0xf]
      %v881 = vld [vmem:[%s1 + $0x8c] sm:$0xf]
      %v882 = vld [vmem:[%s1 + $0x90] sm:$0xf]
      %v883 = vld [vmem:[%s1 + $0x94] sm:$0xf]
      %v884 = vld [vmem:[%s1 + $0x98] sm:$0xf]
      %v885 = vld [vmem:[%s1 + $0x9c] sm:$0xf]
      %v886 = vld [vmem:[%s1 + $0xa0] sm:$0xf]
      %v887 = vld [vmem:[%s1 + $0xa4] sm:$0xf]
      %v888 = vld [vmem:[%s1 + $0xa8] sm:$0xf]
      %v889 = vld [vmem:[%s1 + $0xac] sm:$0xf]
      %v890 = vld [vmem:[%s1 + $0xb0] sm:$0xf]
      %v891 = vld [vmem:[%s1 + $0xb4] sm:$0xf]
      %v892 = vld [vmem:[%s1 + $0xb8] sm:$0xf]
      %v893 = vld [vmem:[%s1 + $0xbc] sm:$0xf]
      %v894 = vld [vmem:[%s1 + $0xc0] sm:$0xf]
      %v895 = vld [vmem:[%s1 + $0xc4] sm:$0xf]
      %v896 = vld [vmem:[%s1 + $0xc8] sm:$0xf]
      %v897 = vld [vmem:[%s1 + $0xcc] sm:$0xf]
      %v898 = vld [vmem:[%s1 + $0xd0] sm:$0xf]
      %v899 = vld [vmem:[%s1 + $0xd4] sm:$0xf]
      %v900 = vld [vmem:[%s1 + $0xd8] sm:$0xf]
      %v901 = vld [vmem:[%s1 + $0xdc] sm:$0xf]
      %v902 = vld [vmem:[%s1 + $0xe0] sm:$0xf]
      %v903 = vld [vmem:[%s1 + $0xe4] sm:$0xf]
      %v904 = vld [vmem:[%s1 + $0xe8] sm:$0xf]
      %v905 = vld [vmem:[%s1 + $0xec] sm:$0xf]
      %v906 = vld [vmem:[%s1 + $0xf0] sm:$0xf]
      %v907 = vld [vmem:[%s1 + $0xf4] sm:$0xf]
      %v908 = vld [vmem:[%s1 + $0xf8] sm:$0xf]
      %v909 = vld [vmem:[%s1 + $0xfc] sm:$0xf]
      %v974 = vunpack.c.l.b16 %v846
      %v975 = vunpack.c.l.b16 %v847
      %v976 = vunpack.c.l.b16 %v848
      %v977 = vunpack.c.l.b16 %v849
      %v978 = vunpack.c.l.b16 %v850
      %v979 = vunpack.c.l.b16 %v851
      %v980 = vunpack.c.l.b16 %v852
      %v981 = vunpack.c.l.b16 %v853
      %v982 = vunpack.c.l.b16 %v854
      %v983 = vunpack.c.l.b16 %v855
      %v984 = vunpack.c.l.b16 %v856
      %v985 = vunpack.c.l.b16 %v857
      %v986 = vunpack.c.l.b16 %v858
      %v987 = vunpack.c.l.b16 %v859
      %v988 = vunpack.c.l.b16 %v860
      %v989 = vunpack.c.l.b16 %v861
      %v990 = vunpack.c.l.b16 %v862
      %v991 = vunpack.c.l.b16 %v863
      %v992 = vunpack.c.l.b16 %v864
      %v993 = vunpack.c.l.b16 %v865
      %v994 = vunpack.c.l.b16 %v866
      %v995 = vunpack.c.l.b16 %v867
      %v996 = vunpack.c.l.b16 %v868
      %v997 = vunpack.c.l.b16 %v869
      %v998 = vunpack.c.l.b16 %v870
      %v999 = vunpack.c.l.b16 %v871
      %v1000 = vunpack.c.l.b16 %v872
      %v1001 = vunpack.c.l.b16 %v873
      %v1002 = vunpack.c.l.b16 %v874
      %v1003 = vunpack.c.l.b16 %v875
      %v1004 = vunpack.c.l.b16 %v876
      %v1005 = vunpack.c.l.b16 %v877
      %v1006 = vunpack.c.l.b16 %v878
      %v1007 = vunpack.c.l.b16 %v879
      %v1008 = vunpack.c.l.b16 %v880
      %v1009 = vunpack.c.l.b16 %v881
      %v1010 = vunpack.c.l.b16 %v882
      %v1011 = vunpack.c.l.b16 %v883
      %v1012 = vunpack.c.l.b16 %v884
      %v1013 = vunpack.c.l.b16 %v885
      %v1014 = vunpack.c.l.b16 %v886
      %v1015 = vunpack.c.l.b16 %v887
      %v1016 = vunpack.c.l.b16 %v888
      %v1017 = vunpack.c.l.b16 %v889
      %v1018 = vunpack.c.l.b16 %v890
      %v1019 = vunpack.c.l.b16 %v891
      %v1020 = vunpack.c.l.b16 %v892
      %v1021 = vunpack.c.l.b16 %v893
      %v1022 = vunpack.c.l.b16 %v894
      %v1023 = vunpack.c.l.b16 %v895
      %v1024 = vunpack.c.l.b16 %v896
      %v1025 = vunpack.c.l.b16 %v897
      %v1026 = vunpack.c.l.b16 %v898
      %v1027 = vunpack.c.l.b16 %v899
      %v1028 = vunpack.c.l.b16 %v900
      %v1029 = vunpack.c.l.b16 %v901
      %v1030 = vunpack.c.l.b16 %v902
      %v1031 = vunpack.c.l.b16 %v903
      %v1032 = vunpack.c.l.b16 %v904
      %v1033 = vunpack.c.l.b16 %v905
      %v1034 = vunpack.c.l.b16 %v906
      %v1035 = vunpack.c.l.b16 %v907
      %v1036 = vunpack.c.l.b16 %v908
      %v1037 = vunpack.c.l.b16 %v909
      %v1038 = vpack.c.b16 %v975, %v974
      %v1039 = vpack.c.b16 %v977, %v976
      %v1040 = vpack.c.b16 %v979, %v978
      %v1041 = vpack.c.b16 %v981, %v980
      %v1042 = vpack.c.b16 %v983, %v982
      %v1043 = vpack.c.b16 %v985, %v984
      %v1044 = vpack.c.b16 %v987, %v986
      %v1045 = vpack.c.b16 %v989, %v988
      %v1046 = vpack.c.b16 %v991, %v990
      %v1047 = vpack.c.b16 %v993, %v992
      %v1048 = vpack.c.b16 %v995, %v994
      %v1049 = vpack.c.b16 %v997, %v996
      %v1050 = vpack.c.b16 %v999, %v998
      %v1051 = vpack.c.b16 %v1001, %v1000
      %v1052 = vpack.c.b16 %v1003, %v1002
      %v1053 = vpack.c.b16 %v1005, %v1004
      %v1054 = vpack.c.b16 %v1007, %v1006
      %v1055 = vpack.c.b16 %v1009, %v1008
      %v1056 = vpack.c.b16 %v1011, %v1010
      %v1057 = vpack.c.b16 %v1013, %v1012
      %v1058 = vpack.c.b16 %v1015, %v1014
      %v1059 = vpack.c.b16 %v1017, %v1016
      %v1060 = vpack.c.b16 %v1019, %v1018
      %v1061 = vpack.c.b16 %v1021, %v1020
      %v1062 = vpack.c.b16 %v1023, %v1022
      %v1063 = vpack.c.b16 %v1025, %v1024
      %v1064 = vpack.c.b16 %v1027, %v1026
      %v1065 = vpack.c.b16 %v1029, %v1028
      %v1066 = vpack.c.b16 %v1031, %v1030
      %v1067 = vpack.c.b16 %v1033, %v1032
      %v1068 = vpack.c.b16 %v1035, %v1034
      %v1069 = vpack.c.b16 %v1037, %v1036
      %1102 = vmatprep.subr.bf16.mxu0 0
      %1103 = vmatpush1.bf16.msra.mxu0 %v1038
      %1104 = vmatprep.subr.bf16.mxu0 0
      %1105 = vmatpush1.bf16.msra.mxu0 %v1039
      %1106 = vmatprep.subr.bf16.mxu0 0
      %1107 = vmatpush1.bf16.msra.mxu0 %v1040
      %1108 = vmatprep.subr.bf16.mxu0 0
      %1109 = vmatpush1.bf16.msra.mxu0 %v1041
      %1110 = vmatprep.subr.bf16.mxu0 0
      %1111 = vmatpush1.bf16.msra.mxu0 %v1042
      %1112 = vmatprep.subr.bf16.mxu0 0
      %1113 = vmatpush1.bf16.msra.mxu0 %v1043
      %1114 = vmatprep.subr.bf16.mxu0 0
      %1115 = vmatpush1.bf16.msra.mxu0 %v1044
      %1116 = vmatprep.subr.bf16.mxu0 0
      %1117 = vmatpush1.bf16.msra.mxu0 %v1045
      %1118 = vmatprep.subr.bf16.mxu0 0
      %1119 = vmatpush1.bf16.msra.mxu0 %v1046
      %1120 = vmatprep.subr.bf16.mxu0 0
      %1121 = vmatpush1.bf16.msra.mxu0 %v1047
      %1122 = vmatprep.subr.bf16.mxu0 0
      %1123 = vmatpush1.bf16.msra.mxu0 %v1048
      %1124 = vmatprep.subr.bf16.mxu0 0
      %1125 = vmatpush1.bf16.msra.mxu0 %v1049
      %1126 = vmatprep.subr.bf16.mxu0 0
      %1127 = vmatpush1.bf16.msra.mxu0 %v1050
      %1128 = vmatprep.subr.bf16.mxu0 0
      %1129 = vmatpush1.bf16.msra.mxu0 %v1051
      %1130 = vmatprep.subr.bf16.mxu0 0
      %1131 = vmatpush1.bf16.msra.mxu0 %v1052
      %1132 = vmatprep.subr.bf16.mxu0 0
      %1133 = vmatpush1.bf16.msra.mxu0 %v1053
      %1134 = vmatprep.mubr.bf16.mxu0 %v831
      %1135 = vmatmul.mubr.bf16.gmra.mrb[0].mxu0 %v830
      %v1136 = vpop.f32.mrb[0].mxu0
      %v1137 = vadd.f32 0.0, %v1136
      %v1138 = vpop.f32.mrb[0].mxu0
      %v1139 = vpop.f32.mrb[0].mxu0
      %v1140 = vadd.f32 0.0, %v1139
      %v1141 = vpop.f32.mrb[0].mxu0
      %1142 = vmatprep.mubr.bf16.mxu0 %v835
      %1143 = vmatmul.mubr.bf16.gmra.mrb[0].mxu0 %v834
      %v1144 = vpop.f32.mrb[0].mxu0
      %v1145 = vadd.f32 0.0, %v1144
      %v1146 = vpop.f32.mrb[0].mxu0
      %v1147 = vpop.f32.mrb[0].mxu0
      %v1148 = vadd.f32 0.0, %v1147
      %v1149 = vpop.f32.mrb[0].mxu0
      %1150 = vmatprep.mubr.bf16.mxu0 %v839
      %1151 = vmatmul.mubr.bf16.gmra.mrb[0].mxu0 %v838
      %v1152 = vpop.f32.mrb[0].mxu0
      %v1153 = vadd.f32 0.0, %v1152
      %v1154 = vpop.f32.mrb[0].mxu0
      %v1155 = vpop.f32.mrb[0].mxu0
      %v1156 = vadd.f32 0.0, %v1155
      %v1157 = vpop.f32.mrb[0].mxu0
      %1158 = vmatprep.mubr.bf16.mxu0 %v843
      %1159 = vmatmul.mubr.bf16.gmra.mrb[0].mxu0 %v842
      %v1160 = vpop.f32.mrb[0].mxu0
      %v1161 = vadd.f32 0.0, %v1160
      %v1162 = vpop.f32.mrb[0].mxu0
      %v1163 = vpop.f32.mrb[0].mxu0
      %v1164 = vadd.f32 0.0, %v1163
      %v1165 = vpop.f32.mrb[0].mxu0
      %1166 = vdwg.mxu0
      %1167 = vmatprep.subr.bf16.mxu0 0
      %1168 = vmatpush1.bf16.msra.mxu0 %v1054
      %1169 = vmatprep.subr.bf16.mxu0 0
      %1170 = vmatpush1.bf16.msra.mxu0 %v1055
      %1171 = vmatprep.subr.bf16.mxu0 0
      %1172 = vmatpush1.bf16.msra.mxu0 %v1056
      %1173 = vmatprep.subr.bf16.mxu0 0
      %1174 = vmatpush1.bf16.msra.mxu0 %v1057
      %1175 = vmatprep.subr.bf16.mxu0 0
      %1176 = vmatpush1.bf16.msra.mxu0 %v1058
      %1177 = vmatprep.subr.bf16.mxu0 0
      %1178 = vmatpush1.bf16.msra.mxu0 %v1059
      %1179 = vmatprep.subr.bf16.mxu0 0
      %1180 = vmatpush1.bf16.msra.mxu0 %v1060
      %1181 = vmatprep.subr.bf16.mxu0 0
      %1182 = vmatpush1.bf16.msra.mxu0 %v1061
      %1183 = vmatprep.subr.bf16.mxu0 0
      %1184 = vmatpush1.bf16.msra.mxu0 %v1062
      %1185 = vmatprep.subr.bf16.mxu0 0
      %1186 = vmatpush1.bf16.msra.mxu0 %v1063
      %1187 = vmatprep.subr.bf16.mxu0 0
      %1188 = vmatpush1.bf16.msra.mxu0 %v1064
      %1189 = vmatprep.subr.bf16.mxu0 0
      %1190 = vmatpush1.bf16.msra.mxu0 %v1065
      %1191 = vmatprep.subr.bf16.mxu0 0
      %1192 = vmatpush1.bf16.msra.mxu0 %v1066
      %1193 = vmatprep.subr.bf16.mxu0 0
      %1194 = vmatpush1.bf16.msra.mxu0 %v1067
      %1195 = vmatprep.subr.bf16.mxu0 0
      %1196 = vmatpush1.bf16.msra.mxu0 %v1068
      %1197 = vmatprep.subr.bf16.mxu0 0
      %1198 = vmatpush1.bf16.msra.mxu0 %v1069
      %1199 = vmatprep.mubr.bf16.mxu0 %v833
      %1200 = vmatmul.mubr.bf16.gmra.mrb[0].mxu0 %v832
      %v1201 = vpop.f32.mrb[0].mxu0
      %v1202 = vadd.f32 %v1137, %v1201
      %v1203 = vpop.f32.mrb[0].mxu0
      %v1204 = vpop.f32.mrb[0].mxu0
      %v1205 = vadd.f32 %v1140, %v1204
      %v1206 = vpop.f32.mrb[0].mxu0
      %1207 = vmatprep.mubr.bf16.mxu0 %v837
      %1208 = vmatmul.mubr.bf16.gmra.mrb[0].mxu0 %v836
      %v1209 = vpop.f32.mrb[0].mxu0
      %v1210 = vadd.f32 %v1145, %v1209
      %v1211 = vpop.f32.mrb[0].mxu0
      %v1212 = vpop.f32.mrb[0].mxu0
      %v1213 = vadd.f32 %v1148, %v1212
      %v1214 = vpop.f32.mrb[0].mxu0
      %1215 = vmatprep.mubr.bf16.mxu0 %v841
      %1216 = vmatmul.mubr.bf16.gmra.mrb[0].mxu0 %v840
      %v1217 = vpop.f32.mrb[0].mxu0
      %v1218 = vadd.f32 %v1153, %v1217
      %v1219 = vpop.f32.mrb[0].mxu0
      %v1220 = vpop.f32.mrb[0].mxu0
      %v1221 = vadd.f32 %v1156, %v1220
      %v1222 = vpop.f32.mrb[0].mxu0
      %1223 = vmatprep.mubr.bf16.mxu0 %v845
      %1224 = vmatmul.mubr.bf16.gmra.mrb[0].mxu0 %v844
      %v1225 = vpop.f32.mrb[0].mxu0
      %v1226 = vadd.f32 %v1161, %v1225
      %v1227 = vpop.f32.mrb[0].mxu0
      %v1228 = vpop.f32.mrb[0].mxu0
      %v1229 = vadd.f32 %v1164, %v1228
      %v1230 = vpop.f32.mrb[0].mxu0
      %1231 = vdwg.mxu0
      %vm1232 = vcmask 523264
      %v1233 = vsel %vm1232, %v1202, 0.0
      %v1234 = vsel %vm1232, %v1205, 0.0
      %v1235 = vadd.f32 %v1233, %v1234
      %v1236 = vsel %vm1232, %v1210, 0.0
      %v1237 = vadd.f32 %v1235, %v1236
      %v1238 = vsel %vm1232, %v1213, 0.0
      %v1239 = vadd.f32 %v1237, %v1238
      %v1240 = vsel %vm1232, %v1218, 0.0
      %v1241 = vadd.f32 %v1239, %v1240
      %v1242 = vsel %vm1232, %v1221, 0.0
      %v1243 = vadd.f32 %v1241, %v1242
      %v1244 = vsel %vm1232, %v1226, 0.0
      %v1245 = vadd.f32 %v1243, %v1244
      %v1246 = vsel %vm1232, %v1229, 0.0
      %v1247 = vadd.f32 %v1245, %v1246
      %v1248 = vrot.slane %v1247, 4
      %v1249 = vadd.f32 %v1247, %v1248
      %v1250 = vrot.slane %v1249, 2
      %v1251 = vadd.f32 %v1249, %v1250
      %v1252 = vrot.slane %v1251, 1
      %v1253 = vadd.f32 %v1251, %v1252
      %vm1254 = vcmask 516096
      %1255 = vst.msk [vmem:[%s371] sm:$0x1] %vm1254, %v1253
      %v1256 = vmul.f32 %v1202, %v1202
      %v1257 = vmul.f32 %v1205, %v1205
      %v1258 = vmul.f32 %v1210, %v1210
      %v1259 = vmul.f32 %v1213, %v1213
      %v1260 = vmul.f32 %v1218, %v1218
      %v1261 = vmul.f32 %v1221, %v1221
      %v1262 = vmul.f32 %v1226, %v1226
      %v1263 = vmul.f32 %v1229, %v1229
      %v1264 = vsel %vm1232, %v1256, 0.0
      %v1265 = vsel %vm1232, %v1257, 0.0
      %v1266 = vadd.f32 %v1264, %v1265
      %v1267 = vsel %vm1232, %v1258, 0.0
      %v1268 = vadd.f32 %v1266, %v1267
      %v1269 = vsel %vm1232, %v1259, 0.0
      %v1270 = vadd.f32 %v1268, %v1269
      %v1271 = vsel %vm1232, %v1260, 0.0
      %v1272 = vadd.f32 %v1270, %v1271
      %v1273 = vsel %vm1232, %v1261, 0.0
      %v1274 = vadd.f32 %v1272, %v1273
      %v1275 = vsel %vm1232, %v1262, 0.0
      %v1276 = vadd.f32 %v1274, %v1275
      %v1277 = vsel %vm1232, %v1263, 0.0
      %v1278 = vadd.f32 %v1276, %v1277
      %v1279 = vrot.slane %v1278, 4
      %v1280 = vadd.f32 %v1278, %v1279
      %v1281 = vrot.slane %v1280, 2
      %v1282 = vadd.f32 %v1280, %v1281
      %v1283 = vrot.slane %v1282, 1
      %v1284 = vadd.f32 %v1282, %v1283
      %1285 = vst.msk [vmem:[%s371 + $0x1] sm:$0x1] %vm1254, %v1284
      %v1286 = vld [vmem:[%s2] sm:$0x1]
      %v1288 = vlaneseq
      %v1289 = vshrl.u32 %v1288, 7
      %v1290 = vsub.s32 0, %v1289
      %v1291 = vrot.slane %v1286, %v1290
      %v1293 = vadd.f32 %v1202, %v1291
      %v1294 = vadd.f32 %v1205, %v1291
      %v1295 = vadd.f32 %v1210, %v1291
      %v1296 = vadd.f32 %v1213, %v1291
      %v1297 = vadd.f32 %v1218, %v1291
      %v1298 = vadd.f32 %v1221, %v1291
      %v1299 = vadd.f32 %v1226, %v1291
      %v1300 = vadd.f32 %v1229, %v1291
      %v1301 = vpack.c.bf16 %v1294, %v1293
      %v1302 = vpack.c.bf16 %v1296, %v1295
      %v1303 = vpack.c.bf16 %v1298, %v1297
      %v1304 = vpack.c.bf16 %v1300, %v1299
      %v1309 = vunpack.c.l.b16 %v1301
      %v1310 = vunpack.c.h.b16 %v1301
      %v1311 = vunpack.c.l.b16 %v1302
      %v1312 = vunpack.c.h.b16 %v1302
      %v1313 = vunpack.c.l.b16 %v1303
      %v1314 = vunpack.c.h.b16 %v1303
      %v1315 = vunpack.c.l.b16 %v1304
      %v1316 = vunpack.c.h.b16 %v1304
      %v1317 = vpack.c.b16 %v1309, %v1309
      %v1318 = vpack.c.b16 %v1310, %v1310
      %v1319 = vpack.c.b16 %v1311, %v1311
      %v1320 = vpack.c.b16 %v1312, %v1312
      %v1321 = vpack.c.b16 %v1313, %v1313
      %v1322 = vpack.c.b16 %v1314, %v1314
      %v1323 = vpack.c.b16 %v1315, %v1315
      %v1324 = vpack.c.b16 %v1316, %v1316
      %vm1333 = vcmask 519168
      %1334 = vst.msk [vmem:[%s363] sm:$0xf] %vm1333, %v1317
      %1335 = vst.msk [vmem:[%s363 + $0x4] sm:$0xf] %vm1333, %v1318
      %1336 = vst.msk [vmem:[%s363 + $0x8] sm:$0xf] %vm1333, %v1319
      %1337 = vst.msk [vmem:[%s363 + $0xc] sm:$0xf] %vm1333, %v1320
      %1338 = vst.msk [vmem:[%s363 + $0x10] sm:$0xf] %vm1333, %v1321
      %1339 = vst.msk [vmem:[%s363 + $0x14] sm:$0xf] %vm1333, %v1322
      %1340 = vst.msk [vmem:[%s363 + $0x18] sm:$0xf] %vm1333, %v1323
      %1341 = vst.msk [vmem:[%s363 + $0x1c] sm:$0xf] %vm1333, %v1324
      %v1342 = vld [vmem:[%s3] sm:$0xf]
      %v1343 = vld [vmem:[%s3 + $0x4] sm:$0xf]
      %v1344 = vld [vmem:[%s3 + $0x8] sm:$0xf]
      %v1345 = vld [vmem:[%s3 + $0xc] sm:$0xf]
      %1350 = vrot.lane.b32.xlu0 %v830, 32
      %v1351 = vpop.permute.xlu0 %1350
      %1352 = vrot.lane.b32.xlu0 %v834, 32
      %v1353 = vpop.permute.xlu0 %1352
      %1354 = vrot.lane.b32.xlu0 %v838, 32
      %v1355 = vpop.permute.xlu0 %1354
      %1356 = vrot.lane.b32.xlu0 %v842, 32
      %v1357 = vpop.permute.xlu0 %1356
      %v1362 = vunpack.c.l.b16 %v1342
      %v1363 = vunpack.c.l.b16 %v1343
      %v1364 = vunpack.c.l.b16 %v1344
      %v1365 = vunpack.c.l.b16 %v1345
      %v1366 = vpack.c.b16 %v1363, %v1362
      %v1367 = vpack.c.b16 %v1365, %v1364
      %vm1370 = vcmask 261120
      %v1372 = vsel %vm1370, %v1351, 0
      %v1375 = vsel %vm1370, %v1353, 0
      %v1378 = vsel %vm1370, %v1355, 0
      %v1381 = vsel %vm1370, %v1357, 0
      %1383 = vmatprep.subr.bf16.mxu0 0
      %1384 = vmatpush1.bf16.msra.mxu0 %v1366
      %1385 = vmatprep.subr.bf16.mxu0 0
      %1386 = vmatpush1.bf16.msra.mxu0 %v1367
      %1387 = vmatprep.subr.bf16.mxu0 0
      %1388 = vmatpush1.bf16.msra.mxu0 0
      %1389 = vmatprep.subr.bf16.mxu0 0
      %1390 = vmatpush1.bf16.msra.mxu0 0
      %1391 = vmatprep.subr.bf16.mxu0 0
      %1392 = vmatpush1.bf16.msra.mxu0 0
      %1393 = vmatprep.subr.bf16.mxu0 0
      %1394 = vmatpush1.bf16.msra.mxu0 0
      %1395 = vmatprep.subr.bf16.mxu0 0
      %1396 = vmatpush1.bf16.msra.mxu0 0
      %1397 = vmatprep.subr.bf16.mxu0 0
      %1398 = vmatpush1.bf16.msra.mxu0 0
      %1399 = vmatprep.subr.bf16.mxu0 0
      %1400 = vmatpush1.bf16.msra.mxu0 0
      %1401 = vmatprep.subr.bf16.mxu0 0
      %1402 = vmatpush1.bf16.msra.mxu0 0
      %1403 = vmatprep.subr.bf16.mxu0 0
      %1404 = vmatpush1.bf16.msra.mxu0 0
      %1405 = vmatprep.subr.bf16.mxu0 0
      %1406 = vmatpush1.bf16.msra.mxu0 0
      %1407 = vmatprep.subr.bf16.mxu0 0
      %1408 = vmatpush1.bf16.msra.mxu0 0
      %1409 = vmatprep.subr.bf16.mxu0 0
      %1410 = vmatpush1.bf16.msra.mxu0 0
      %1411 = vmatprep.subr.bf16.mxu0 0
      %1412 = vmatpush1.bf16.msra.mxu0 0
      %1413 = vmatprep.subr.bf16.mxu0 0
      %1414 = vmatpush1.bf16.msra.mxu0 0
      %1415 = vmatprep.mubr.bf16.mxu0 0
      %1416 = vmatmul.mubr.bf16.gmra.mrb[0].mxu0 %v1372
      %v1417 = vpop.f32.mrb[0].mxu0
      %v1418 = vadd.f32 0.0, %v1417
      %v1419 = vpop.f32.mrb[0].mxu0
      %v1420 = vpop.f32.mrb[0].mxu0
      %v1421 = vadd.f32 0.0, %v1420
      %v1422 = vpop.f32.mrb[0].mxu0
      %1423 = vmatprep.mubr.bf16.mxu0 0
      %1424 = vmatmul.mubr.bf16.gmra.mrb[0].mxu0 %v1375
      %v1425 = vpop.f32.mrb[0].mxu0
      %v1426 = vadd.f32 0.0, %v1425
      %v1427 = vpop.f32.mrb[0].mxu0
      %v1428 = vpop.f32.mrb[0].mxu0
      %v1429 = vadd.f32 0.0, %v1428
      %v1430 = vpop.f32.mrb[0].mxu0
      %1431 = vmatprep.mubr.bf16.mxu0 0
      %1432 = vmatmul.mubr.bf16.gmra.mrb[0].mxu0 %v1378
      %v1433 = vpop.f32.mrb[0].mxu0
      %v1434 = vadd.f32 0.0, %v1433
      %v1435 = vpop.f32.mrb[0].mxu0
      %v1436 = vpop.f32.mrb[0].mxu0
      %v1437 = vadd.f32 0.0, %v1436
      %v1438 = vpop.f32.mrb[0].mxu0
      %1439 = vmatprep.mubr.bf16.mxu0 0
      %1440 = vmatmul.mubr.bf16.gmra.mrb[0].mxu0 %v1381
      %v1441 = vpop.f32.mrb[0].mxu0
      %v1442 = vadd.f32 0.0, %v1441
      %v1443 = vpop.f32.mrb[0].mxu0
      %v1444 = vpop.f32.mrb[0].mxu0
      %v1445 = vadd.f32 0.0, %v1444
      %v1446 = vpop.f32.mrb[0].mxu0
      %1447 = vdwg.mxu0
      %v1448 = vsel %vm1232, %v1418, 0.0
      %v1449 = vsel %vm1232, %v1421, 0.0
      %v1450 = vadd.f32 %v1448, %v1449
      %v1451 = vsel %vm1232, %v1426, 0.0
      %v1452 = vadd.f32 %v1450, %v1451
      %v1453 = vsel %vm1232, %v1429, 0.0
      %v1454 = vadd.f32 %v1452, %v1453
      %v1455 = vsel %vm1232, %v1434, 0.0
      %v1456 = vadd.f32 %v1454, %v1455
      %v1457 = vsel %vm1232, %v1437, 0.0
      %v1458 = vadd.f32 %v1456, %v1457
      %v1459 = vsel %vm1232, %v1442, 0.0
      %v1460 = vadd.f32 %v1458, %v1459
      %v1461 = vsel %vm1232, %v1445, 0.0
      %v1462 = vadd.f32 %v1460, %v1461
      %v1463 = vrot.slane %v1462, 4
      %v1464 = vadd.f32 %v1462, %v1463
      %v1465 = vrot.slane %v1464, 2
      %v1466 = vadd.f32 %v1464, %v1465
      %v1467 = vrot.slane %v1466, 1
      %v1468 = vadd.f32 %v1466, %v1467
      %1469 = vst.msk [vmem:[%s388] sm:$0x1] %vm1254, %v1468
      %v1470 = vmul.f32 %v1418, %v1418
      %v1471 = vmul.f32 %v1421, %v1421
      %v1472 = vmul.f32 %v1426, %v1426
      %v1473 = vmul.f32 %v1429, %v1429
      %v1474 = vmul.f32 %v1434, %v1434
      %v1475 = vmul.f32 %v1437, %v1437
      %v1476 = vmul.f32 %v1442, %v1442
      %v1477 = vmul.f32 %v1445, %v1445
      %v1478 = vsel %vm1232, %v1470, 0.0
      %v1479 = vsel %vm1232, %v1471, 0.0
      %v1480 = vadd.f32 %v1478, %v1479
      %v1481 = vsel %vm1232, %v1472, 0.0
      %v1482 = vadd.f32 %v1480, %v1481
      %v1483 = vsel %vm1232, %v1473, 0.0
      %v1484 = vadd.f32 %v1482, %v1483
      %v1485 = vsel %vm1232, %v1474, 0.0
      %v1486 = vadd.f32 %v1484, %v1485
      %v1487 = vsel %vm1232, %v1475, 0.0
      %v1488 = vadd.f32 %v1486, %v1487
      %v1489 = vsel %vm1232, %v1476, 0.0
      %v1490 = vadd.f32 %v1488, %v1489
      %v1491 = vsel %vm1232, %v1477, 0.0
      %v1492 = vadd.f32 %v1490, %v1491
      %v1493 = vrot.slane %v1492, 4
      %v1494 = vadd.f32 %v1492, %v1493
      %v1495 = vrot.slane %v1494, 2
      %v1496 = vadd.f32 %v1494, %v1495
      %v1497 = vrot.slane %v1496, 1
      %v1498 = vadd.f32 %v1496, %v1497
      %1499 = vst.msk [vmem:[%s388 + $0x1] sm:$0x1] %vm1254, %v1498
      %v1500 = vld [vmem:[%s4] sm:$0x1]
      %v1502 = vlaneseq
      %v1503 = vshrl.u32 %v1502, 7
      %v1504 = vsub.s32 0, %v1503
      %v1505 = vrot.slane %v1500, %v1504
      %v1507 = vadd.f32 %v1418, %v1505
      %v1508 = vadd.f32 %v1421, %v1505
      %v1509 = vadd.f32 %v1426, %v1505
      %v1510 = vadd.f32 %v1429, %v1505
      %v1511 = vadd.f32 %v1434, %v1505
      %v1512 = vadd.f32 %v1437, %v1505
      %v1513 = vadd.f32 %v1442, %v1505
      %v1514 = vadd.f32 %v1445, %v1505
      %v1515 = vpack.c.bf16 %v1508, %v1507
      %v1516 = vpack.c.bf16 %v1510, %v1509
      %v1517 = vpack.c.bf16 %v1512, %v1511
      %v1518 = vpack.c.bf16 %v1514, %v1513
      %v1523 = vunpack.c.l.b16 %v1515
      %v1524 = vunpack.c.h.b16 %v1515
      %v1525 = vunpack.c.l.b16 %v1516
      %v1526 = vunpack.c.h.b16 %v1516
      %v1527 = vunpack.c.l.b16 %v1517
      %v1528 = vunpack.c.h.b16 %v1517
      %v1529 = vunpack.c.l.b16 %v1518
      %v1530 = vunpack.c.h.b16 %v1518
      %v1531 = vpack.c.b16 %v1523, %v1523
      %v1532 = vpack.c.b16 %v1524, %v1524
      %v1533 = vpack.c.b16 %v1525, %v1525
      %v1534 = vpack.c.b16 %v1526, %v1526
      %v1535 = vpack.c.b16 %v1527, %v1527
      %v1536 = vpack.c.b16 %v1528, %v1528
      %v1537 = vpack.c.b16 %v1529, %v1529
      %v1538 = vpack.c.b16 %v1530, %v1530
      %1547 = vst.msk [vmem:[%s380] sm:$0xf] %vm1333, %v1531
      %1548 = vst.msk [vmem:[%s380 + $0x4] sm:$0xf] %vm1333, %v1532
      %1549 = vst.msk [vmem:[%s380 + $0x8] sm:$0xf] %vm1333, %v1533
      %1550 = vst.msk [vmem:[%s380 + $0xc] sm:$0xf] %vm1333, %v1534
      %1551 = vst.msk [vmem:[%s380 + $0x10] sm:$0xf] %vm1333, %v1535
      %1552 = vst.msk [vmem:[%s380 + $0x14] sm:$0xf] %vm1333, %v1536
      %1553 = vst.msk [vmem:[%s380 + $0x18] sm:$0xf] %vm1333, %v1537
      %1554 = vst.msk [vmem:[%s380 + $0x1c] sm:$0xf] %vm1333, %v1538
      %s1555 = smul.u32 8, %s25
      %p1556 = scmp.lt.s32.totalorder %s24, 1
      %s1557 = scalar_select %p1556, %s24, 1
      %p1558 = scmp.lt.s32.totalorder %s1555, 7
      %s1559 = scalar_select %p1558, %s1555, 7
      %s1560 = smul.addr %s1557, 8
      %s1561 = sadd.s32 %s1559, %s1560
      %s1562 = smul.addr %s1561, 4
      %s1563 = scalar_lea.vmem %s5, %s1562
      %p1564 = scmp.lt.s32.totalorder %s24, 1
      %s1565 = scalar_select %p1564, %s24, 1
      %p1566 = scmp.lt.s32.totalorder %s25, 0
      %s1567 = scalar_select %p1566, %s25, 0
      %s1568 = sadd.s32 %s1567, %s1565
      %s1569 = smul.addr %s1568, 2
      %s1570 = scalar_lea.vmem %s6, %s1569
      %s1571 = smul.u32 8, %s25
      %p1572 = scmp.lt.s32.totalorder %s24, 1
      %s1573 = scalar_select %p1572, %s24, 1
      %p1574 = scmp.lt.s32.totalorder %s1571, 7
      %s1575 = scalar_select %p1574, %s1571, 7
      %s1576 = smul.addr %s1573, 8
      %s1577 = sadd.s32 %s1575, %s1576
      %s1578 = smul.addr %s1577, 4
      %s1579 = scalar_lea.vmem %s7, %s1578
      %p1580 = scmp.lt.s32.totalorder %s24, 1
      %s1581 = scalar_select %p1580, %s24, 1
      %p1582 = scmp.lt.s32.totalorder %s25, 0
      %s1583 = scalar_select %p1582, %s25, 0
      %s1584 = sadd.s32 %s1583, %s1581
      %s1585 = smul.addr %s1584, 2
      %s1586 = scalar_lea.vmem %s8, %s1585
      // Predicated region
      $region45: #{fwd.6} parent=39 // pred_check
        %p1587 = pneg %p162
      $region46: #{fwd.6} parent=39 // pred_check_branch
        %1589 = sbr.rel (%p1587) target = $region48
      $region47: #{fwd.6} parent=39 // pred_region
        %s1590 = smul.u32 8, %s25
      $region48: #{fwd.6} parent=39 // pred_fallthru
        _
      // Predicated region
      $region49: #{fwd.6} parent=39 // pred_check
        %p1591 = pneg %p190
      $region50: #{fwd.6} parent=39 // pred_check_branch
        %1593 = sbr.rel (%p1591) target = $region52
      $region51: #{fwd.6} parent=39 // pred_region
        _
      $region52: #{fwd.6} parent=39 // pred_fallthru
        _
      // Predicated region
      $region53: #{fwd.6} parent=39 // pred_check
        %p1594 = pneg %p218
      $region54: #{fwd.6} parent=39 // pred_check_branch
        %1596 = sbr.rel (%p1594) target = $region56
      $region55: #{fwd.6} parent=39 // pred_region
        %s1597 = smul.u32 8, %s25
      $region56: #{fwd.6} parent=39 // pred_fallthru
        _
      // Predicated region
      $region57: #{fwd.6} parent=39 // pred_check
        %p1598 = pneg %p246
      $region58: #{fwd.6} parent=39 // pred_check_branch
        %1600 = sbr.rel (%p1598) target = $region60
      $region59: #{fwd.6} parent=39 // pred_region
        _
      $region60: #{fwd.6} parent=39 // pred_fallthru
        _
    $region40: #{fwd.6} parent=5 // pred_fallthru
      _
    %p1601 = scmp.le.s32.totalorder 2, %s15
    // Predicated region
    $region61: #{fwd.6} parent=5 // pred_check
      %p1602 = pneg %p1601
    $region62: #{fwd.6} parent=5 // pred_check_branch
      %1604 = sbr.rel (%p1602) target = $region64
    $region63: #{fwd.6} parent=5 // pred_region
      %s1605 = ssub.s32 %s15, 2
      // Predicated region
      $region65: #{fwd.6} parent=63 // pred_check
        %p1606 = pneg %p168
      $region66: #{fwd.6} parent=63 // pred_check_branch
        %1608 = sbr.rel (%p1606) target = $region68
      $region67: #{fwd.6} parent=63 // pred_region
        %s1609 = smul.u32 8, %s27
        %p1610 = scmp.lt.s32.totalorder %s26, 1
        %s1611 = scalar_select %p1610, %s26, 1
        %p1612 = scmp.lt.s32.totalorder %s1609, 7
        %s1613 = scalar_select %p1612, %s1609, 7
        %s1614 = smul.addr %s1611, 8
        %s1615 = sadd.s32 %s1613, %s1614
        %s1616 = smul.addr %s1615, 4
        %s1617 = scalar_lea.vmem %s5, %s1616
      $region68: #{fwd.6} parent=63 // pred_fallthru
        _
      // Predicated region
      $region69: #{fwd.6} parent=63 // pred_check
        %p1618 = pneg %p196
      $region70: #{fwd.6} parent=63 // pred_check_branch
        %1620 = sbr.rel (%p1618) target = $region72
      $region71: #{fwd.6} parent=63 // pred_region
        %p1621 = scmp.lt.s32.totalorder %s26, 1
        %s1622 = scalar_select %p1621, %s26, 1
        %p1623 = scmp.lt.s32.totalorder %s27, 0
        %s1624 = scalar_select %p1623, %s27, 0
        %s1625 = sadd.s32 %s1624, %s1622
        %s1626 = smul.addr %s1625, 2
        %s1627 = scalar_lea.vmem %s6, %s1626
      $region72: #{fwd.6} parent=63 // pred_fallthru
        _
      // Predicated region
      $region73: #{fwd.6} parent=63 // pred_check
        %p1628 = pneg %p224
      $region74: #{fwd.6} parent=63 // pred_check_branch
        %1630 = sbr.rel (%p1628) target = $region76
      $region75: #{fwd.6} parent=63 // pred_region
        %s1631 = smul.u32 8, %s27
        %p1632 = scmp.lt.s32.totalorder %s26, 1
        %s1633 = scalar_select %p1632, %s26, 1
        %p1634 = scmp.lt.s32.totalorder %s1631, 7
        %s1635 = scalar_select %p1634, %s1631, 7
        %s1636 = smul.addr %s1633, 8
        %s1637 = sadd.s32 %s1635, %s1636
        %s1638 = smul.addr %s1637, 4
        %s1639 = scalar_lea.vmem %s7, %s1638
      $region76: #{fwd.6} parent=63 // pred_fallthru
        _
      // Predicated region
      $region77: #{fwd.6} parent=63 // pred_check
        %p1640 = pneg %p252
      $region78: #{fwd.6} parent=63 // pred_check_branch
        %1642 = sbr.rel (%p1640) target = $region80
      $region79: #{fwd.6} parent=63 // pred_region
        %p1643 = scmp.lt.s32.totalorder %s26, 1
        %s1644 = scalar_select %p1643, %s26, 1
        %p1645 = scmp.lt.s32.totalorder %s27, 0
        %s1646 = scalar_select %p1645, %s27, 0
        %s1647 = sadd.s32 %s1646, %s1644
        %s1648 = smul.addr %s1647, 2
        %s1649 = scalar_lea.vmem %s8, %s1648
      $region80: #{fwd.6} parent=63 // pred_fallthru
        _
    $region64: #{fwd.6} parent=5 // pred_fallthru
      _
  $region6: #{fwd.6} parent=0 // loop_footer
    %s19 = sadd.s32 1, %s15
  $region7: #{fwd.6} parent=0 // loop_footer_branch
    %14 = sbr.rel target = $region3
  $region8: #{fwd.6} parent=0 // loop_exit
    _

// kernel: fwd.7
$region0: #{fwd.7}
  #allocation0 [shape = 'u32[]', space=smem, size = 0x4, offset = 0x4, fixed_abs, tag = 'smem constant byte address 0x4 - core index']
  #allocation1 [shape = 'u32[144,128]{1,0:T(1,128)}', space=vmem, size = 0x12000, scoped, tag = 'internal scratch']
  #allocation2 [shape = 'bf16[10,10,64]{2,1,0:T(8,128)(2,1)}', space=vmem, size = 0xa000, scoped, tag = 'scratch operand']
  #allocation3 [shape = 'bf16[64,576]{1,0:T(16,128)(2,1)}', space=vmem, size = 0x14000, scoped, tag = 'scratch operand']
  %s0 = inlined_call_operand.vmem [shape: bf16[2,8,8,64], index: 0, kind: input, shape index: {}]
  %s1 = inlined_call_operand.vmem [shape: bf16[576,64], index: 1, kind: input, shape index: {}]
  %s2 = inlined_call_operand.vmem [shape: f32[1,64], index: 2, kind: input, shape index: {}]
  %s3 = inlined_call_operand.vmem [shape: f32[1,64], index: 3, kind: input, shape index: {}]
  %s4 = inlined_call_operand.vmem [shape: f32[1,64], index: 4, kind: input, shape index: {}]
  %s5 = inlined_call_operand.vmem [shape: bf16[2,64,64], index: 5, kind: output, shape index: {0}]
  %s6 = inlined_call_operand.vmem [shape: f32[2,1,2,64], index: 6, kind: output, shape index: {1}]
  %7 = xla_tuple %s5, %s6
  %s8 = sld [smem:[#allocation0]]
  $region65: #{fwd.7} parent=0
    _
  %s10 = ssub.s32 1, %s8
  %s11 = scalar_select 0, %s10, %s8
  loop: start=0, step=1, limit=4
  $region2: #{fwd.7} parent=0 // loop_pre_header
    _
  $region3: #{fwd.7} parent=0 // loop_header
    %s13 = sphi 0, %s17
    %p14 = scmp.ge.s32.totalorder %s13, 4
    %s20 = sphi 0, %s32
    %s21 = sphi 0, %s28
    %s22 = sphi 0, %s20
    %s23 = sphi 0, %s21
    %s24 = sphi 0, %s22
    %s25 = sphi 0, %s23
    %s35 = sphi 0, %s37
    %s38 = sphi 0, %s35
    %s39 = sphi 0, %s38
    %s55 = sphi 0, %s39
    %s59 = sphi 0, %s59
    %s61 = sphi 0, %s59
    %s62 = sphi 0, %s61
    %s76 = sphi 0, %s62
    %s80 = sphi 0, %s80
    %s82 = sphi 0, %s80
    %s83 = sphi 0, %s82
    %s97 = sphi 0, %s83
    %s101 = sphi 0, %s101
    %s103 = sphi 0, %s101
    %s104 = sphi 0, %s103
    %s118 = sphi 0, %s104
    %s122 = sphi 0, %s122
    %s124 = sphi 0, %s122
    %s125 = sphi 0, %s124
    %s139 = sphi 0, %s125
    %s147 = sphi 0, %s149
    %s150 = sphi 0, %s147
    %s151 = sphi 0, %s150
    %s167 = sphi 0, %s151
    %s175 = sphi 0, %s177
    %s178 = sphi 0, %s175
    %s179 = sphi 0, %s178
    %s195 = sphi 0, %s179
  $region4: #{fwd.7} parent=0 // loop_header_branch
    %16 = sbr.rel (%p14) target = $region8
  $region5: #{fwd.7} parent=0 // loop_body
    %s18 = ssub.s32 %s13, 1
    %s19 = ssub.s32 %s13, 2
    %s26 = sadd.s32 1, %s21
    %p27 = scmp.ge.s32.totalorder %s26, 1
    %s28 = scalar_select %p27, 0, %s26
    %s29 = sadd.s32 1, %s20
    %s30 = scalar_select %p27, %s29, %s20
    %p31 = scmp.ge.s32.totalorder %s30, 2
    %s32 = scalar_select %p31, 0, %s30
    %s33 = ssub.s32 %s20, %s32
    %p34 = scmp.eq.s32.totalorder %s33, 0
    %s36 = sadd.s32 %s35, 1
    %s37 = scalar_select %p34, %s35, %s36
    %p40 = pneg %p34
    %p41 = scmp.eq.s32.totalorder %s13, 1
    %p42 = por %p40, %p41
    %p43 = scmp.ne.s32.totalorder %s35, %s38
    %p44 = scmp.eq.s32.totalorder %s13, 0
    %p45 = por %p43, %p44
    %p46 = scmp.ne.s32.totalorder %s35, %s38
    %p47 = scmp.eq.s32.totalorder %s18, 1
    %p48 = por %p46, %p47
    %p49 = scmp.ne.s32.totalorder %s38, %s39
    %p50 = scmp.eq.s32.totalorder %s18, 0
    %p51 = por %p49, %p50
    %p52 = scmp.ne.s32.totalorder %s38, %s39
    %p53 = scmp.eq.s32.totalorder %s19, 1
    %p54 = por %p52, %p53
    %p56 = scmp.ne.s32.totalorder %s39, %s55
    %p57 = scmp.eq.s32.totalorder %s19, 0
    %p58 = por %p56, %p57
    %s60 = sadd.s32 %s59, 1
    %p63 = scmp.eq.s32.totalorder %s13, 1
    %p64 = scmp.ne.s32.totalorder %s59, %s61
    %p65 = scmp.eq.s32.totalorder %s13, 0
    %p66 = por %p64, %p65
    %p67 = scmp.ne.s32.totalorder %s59, %s61
    %p68 = scmp.eq.s32.totalorder %s18, 1
    %p69 = por %p67, %p68
    %p70 = scmp.ne.s32.totalorder %s61, %s62
    %p71 = scmp.eq.s32.totalorder %s18, 0
    %p72 = por %p70, %p71
    %p73 = scmp.ne.s32.totalorder %s61, %s62
    %p74 = scmp.eq.s32.totalorder %s19, 1
    %p75 = por %p73, %p74
    %p77 = scmp.ne.s32.totalorder %s62, %s76
    %p78 = scmp.eq.s32.totalorder %s19, 0
    %p79 = por %p77, %p78
    %s81 = sadd.s32 %s80, 1
    %p84 = scmp.eq.s32.totalorder %s13, 1
    %p85 = scmp.ne.s32.totalorder %s80, %s82
    %p86 = scmp.eq.s32.totalorder %s13, 0
    %p87 = por %p85, %p86
    %p88 = scmp.ne.s32.totalorder %s80, %s82
    %p89 = scmp.eq.s32.totalorder %s18, 1
    %p90 = por %p88, %p89
    %p91 = scmp.ne.s32.totalorder %s82, %s83
    %p92 = scmp.eq.s32.totalorder %s18, 0
    %p93 = por %p91, %p92
    %p94 = scmp.ne.s32.totalorder %s82, %s83
    %p95 = scmp.eq.s32.totalorder %s19, 1
    %p96 = por %p94, %p95
    %p98 = scmp.ne.s32.totalorder %s83, %s97
    %p99 = scmp.eq.s32.totalorder %s19, 0
    %p100 = por %p98, %p99
    %s102 = sadd.s32 %s101, 1
    %p105 = scmp.eq.s32.totalorder %s13, 1
    %p106 = scmp.ne.s32.totalorder %s101, %s103
    %p107 = scmp.eq.s32.totalorder %s13, 0
    %p108 = por %p106, %p107
    %p109 = scmp.ne.s32.totalorder %s101, %s103
    %p110 = scmp.eq.s32.totalorder %s18, 1
    %p111 = por %p109, %p110
    %p112 = scmp.ne.s32.totalorder %s103, %s104
    %p113 = scmp.eq.s32.totalorder %s18, 0
    %p114 = por %p112, %p113
    %p115 = scmp.ne.s32.totalorder %s103, %s104
    %p116 = scmp.eq.s32.totalorder %s19, 1
    %p117 = por %p115, %p116
    %p119 = scmp.ne.s32.totalorder %s104, %s118
    %p120 = scmp.eq.s32.totalorder %s19, 0
    %p121 = por %p119, %p120
    %s123 = sadd.s32 %s122, 1
    %p126 = scmp.eq.s32.totalorder %s13, 1
    %p127 = scmp.ne.s32.totalorder %s122, %s124
    %p128 = scmp.eq.s32.totalorder %s13, 0
    %p129 = por %p127, %p128
    %p130 = scmp.ne.s32.totalorder %s122, %s124
    %p131 = scmp.eq.s32.totalorder %s18, 1
    %p132 = por %p130, %p131
    %p133 = scmp.ne.s32.totalorder %s124, %s125
    %p134 = scmp.eq.s32.totalorder %s18, 0
    %p135 = por %p133, %p134
    %p136 = scmp.ne.s32.totalorder %s124, %s125
    %p137 = scmp.eq.s32.totalorder %s19, 1
    %p138 = por %p136, %p137
    %p140 = scmp.ne.s32.totalorder %s125, %s139
    %p141 = scmp.eq.s32.totalorder %s19, 0
    %p142 = por %p140, %p141
    %s143 = ssub.s32 %s20, %s32
    %s144 = ssub.s32 %s21, %s28
    %s145 = sor.u32 %s143, %s144
    %p146 = scmp.eq.s32.totalorder %s145, 0
    %s148 = sadd.s32 %s147, 1
    %s149 = scalar_select %p146, %s147, %s148
    %p152 = pneg %p146
    %p153 = scmp.eq.s32.totalorder %s13, 1
    %p154 = por %p152, %p153
    %p155 = scmp.ne.s32.totalorder %s147, %s150
    %p156 = scmp.eq.s32.totalorder %s13, 0
    %p157 = por %p155, %p156
    %p158 = scmp.ne.s32.totalorder %s147, %s150
    %p159 = scmp.eq.s32.totalorder %s18, 1
    %p160 = por %p158, %p159
    %p161 = scmp.ne.s32.totalorder %s150, %s151
    %p162 = scmp.eq.s32.totalorder %s18, 0
    %p163 = por %p161, %p162
    %p164 = scmp.ne.s32.totalorder %s150, %s151
    %p165 = scmp.eq.s32.totalorder %s19, 1
    %p166 = por %p164, %p165
    %p168 = scmp.ne.s32.totalorder %s151, %s167
    %p169 = scmp.eq.s32.totalorder %s19, 0
    %p170 = por %p168, %p169
    %s171 = ssub.s32 %s20, %s32
    %s172 = ssub.s32 %s21, %s28
    %s173 = sor.u32 %s171, %s172
    %p174 = scmp.eq.s32.totalorder %s173, 0
    %s176 = sadd.s32 %s175, 1
    %s177 = scalar_select %p174, %s175, %s176
    %p180 = pneg %p174
    %p181 = scmp.eq.s32.totalorder %s13, 1
    %p182 = por %p180, %p181
    %p183 = scmp.ne.s32.totalorder %s175, %s178
    %p184 = scmp.eq.s32.totalorder %s13, 0
    %p185 = por %p183, %p184
    %p186 = scmp.ne.s32.totalorder %s175, %s178
    %p187 = scmp.eq.s32.totalorder %s18, 1
    %p188 = por %p186, %p187
    %p189 = scmp.ne.s32.totalorder %s178, %s179
    %p190 = scmp.eq.s32.totalorder %s18, 0
    %p191 = por %p189, %p190
    %p192 = scmp.ne.s32.totalorder %s178, %s179
    %p193 = scmp.eq.s32.totalorder %s19, 1
    %p194 = por %p192, %p193
    %p196 = scmp.ne.s32.totalorder %s179, %s195
    %p197 = scmp.eq.s32.totalorder %s19, 0
    %p198 = por %p196, %p197
    %p199 = scmp.le.s32.totalorder 1, %s13
    %p200 = scmp.lt.s32.totalorder %s13, 3
    %p201 = pnand %p199, %p200
    %p202 = pneg %p201
    // Predicated region
    $region9: #{fwd.7} parent=5 // pred_check
      _
    $region10: #{fwd.7} parent=5 // pred_check_branch
      %204 = sbr.rel (%p201) target = $region12
    $region11: #{fwd.7} parent=5 // pred_region
      %s205 = ssub.s32 %s13, 1
      // Predicated region
      $region13: #{fwd.7} parent=11 // pred_check
        %p206 = pneg %p72
      $region14: #{fwd.7} parent=11 // pred_check_branch
        %208 = sbr.rel (%p206) target = $region16
      $region15: #{fwd.7} parent=11 // pred_region
        _
      $region16: #{fwd.7} parent=11 // pred_fallthru
        _
      // Predicated region
      $region17: #{fwd.7} parent=11 // pred_check
        %p209 = pneg %p93
      $region18: #{fwd.7} parent=11 // pred_check_branch
        %211 = sbr.rel (%p209) target = $region20
      $region19: #{fwd.7} parent=11 // pred_region
        _
      $region20: #{fwd.7} parent=11 // pred_fallthru
        _
      // Predicated region
      $region21: #{fwd.7} parent=11 // pred_check
        %p212 = pneg %p114
      $region22: #{fwd.7} parent=11 // pred_check_branch
        %214 = sbr.rel (%p212) target = $region24
      $region23: #{fwd.7} parent=11 // pred_region
        _
      $region24: #{fwd.7} parent=11 // pred_fallthru
        _
      // Predicated region
      $region25: #{fwd.7} parent=11 // pred_check
        %p215 = pneg %p135
      $region26: #{fwd.7} parent=11 // pred_check_branch
        %217 = sbr.rel (%p215) target = $region28
      $region27: #{fwd.7} parent=11 // pred_region
        _
      $region28: #{fwd.7} parent=11 // pred_fallthru
        _
    $region12: #{fwd.7} parent=5 // pred_fallthru
      _
    %p218 = scmp.lt.s32.totalorder %s13, 2
    // Predicated region
    $region29: #{fwd.7} parent=5 // pred_check
      %p219 = pneg %p218
    $region30: #{fwd.7} parent=5 // pred_check_branch
      %221 = sbr.rel (%p219) target = $region32
    $region31: #{fwd.7} parent=5 // pred_region
      // Predicated region
      $region33: #{fwd.7} parent=31 // pred_check
        %p222 = pneg %p45
      $region34: #{fwd.7} parent=31 // pred_check_branch
        %224 = sbr.rel (%p222) target = $region36
      $region35: #{fwd.7} parent=31 // pred_region
        %p225 = scmp.lt.s32.totalorder %s20, 1
        %s226 = scalar_select %p225, %s20, 1
        %s227 = smul.addr %s226, 8
        %s228 = smul.addr %s227, 4
        %s229 = scalar_lea.vmem %s0, %s228
      $region36: #{fwd.7} parent=31 // pred_fallthru
        _
    $region32: #{fwd.7} parent=5 // pred_fallthru
      _
    %p230 = scmp.le.s32.totalorder 1, %s13
    %p231 = scmp.lt.s32.totalorder %s13, 3
    %p232 = pnand %p230, %p231
    %p233 = pneg %p232
    // Predicated region
    $region37: #{fwd.7} parent=5 // pred_check
      _
    $region38: #{fwd.7} parent=5 // pred_check_branch
      %235 = sbr.rel (%p232) target = $region40
    $region39: #{fwd.7} parent=5 // pred_region
      %s236 = ssub.s32 %s13, 1
      %p237 = scmp.lt.s32.totalorder %s22, 1
      %s238 = scalar_select %p237, %s22, 1
      %s239 = smul.addr %s238, 8
      %s240 = smul.addr %s239, 4
      %s241 = scalar_lea.vmem %s0, %s240
      %p242 = pneg %p51
      %p243 = pneg %p48
      %p244 = pneg %p72
      %p245 = pneg %p69
      %p246 = pneg %p93
      %p247 = pneg %p90
      %p248 = pneg %p114
      %p249 = pneg %p111
      %p250 = pneg %p135
      %p251 = pneg %p132
      %p252 = pneg %p163
      %p253 = pneg %p160
      %s254 = smul.u32 8, %s23
      %p255 = scmp.lt.s32.totalorder %s22, 1
      %s256 = scalar_select %p255, %s22, 1
      %p257 = scmp.lt.s32.totalorder %s254, 7
      %s258 = scalar_select %p257, %s254, 7
      %s259 = smul.addr %s256, 8
      %s260 = sadd.s32 %s258, %s259
      %s261 = smul.addr %s260, 4
      %s262 = scalar_lea.vmem %s5, %s261
      %p263 = pneg %p191
      %p264 = pneg %p188
      %p265 = scmp.lt.s32.totalorder %s22, 1
      %s266 = scalar_select %p265, %s22, 1
      %p267 = scmp.lt.s32.totalorder %s23, 0
      %s268 = scalar_select %p267, %s23, 0
      %s269 = sadd.s32 %s268, %s266
      %s270 = smul.addr %s269, 2
      %s271 = scalar_lea.vmem %s6, %s270
      %p272 = scmp.lt.s32.totalorder %s22, 1
      %s273 = scalar_select %p272, %s22, 1
      %s274 = smul.addr %s273, 8
      %s275 = smul.addr %s274, 4
      %s276 = scalar_lea.vmem %s0, %s275
      %s277 = smul.u32 8, %s23
      %p278 = scmp.lt.s32.totalorder %s22, 1
      %s279 = scalar_select %p278, %s22, 1
      %p280 = scmp.lt.s32.totalorder %s277, 7
      %s281 = scalar_select %p280, %s277, 7
      %s282 = smul.addr %s279, 8
      %s283 = sadd.s32 %s281, %s282
      %s284 = smul.addr %s283, 4
      %s285 = scalar_lea.vmem %s5, %s284
      %s286 = smul.u32 8, %s23
      %p287 = scmp.lt.s32.totalorder %s22, 1
      %s288 = scalar_select %p287, %s22, 1
      %p289 = scmp.lt.s32.totalorder %s23, 0
      %s290 = scalar_select %p289, %s23, 0
      %s291 = sadd.s32 %s290, %s288
      %s292 = smul.addr %s291, 2
      %s293 = scalar_lea.vmem %s6, %s292
      %p295 = scmp.eq.s32.totalorder %s23, 0
      // Predicated region
      $region41: #{fwd.7} parent=39 // pred_check
        %p296 = pneg %p295
      $region42: #{fwd.7} parent=39 // pred_check_branch
        %298 = sbr.rel (%p296) target = $region44
      $region43: #{fwd.7} parent=39 // pred_region
        %v299 = vld [vmem:[%s276] sm:$0xf]
        %v300 = vld [vmem:[%s276 + $0x4] sm:$0xf]
        %v301 = vld [vmem:[%s276 + $0x8] sm:$0xf]
        %v302 = vld [vmem:[%s276 + $0xc] sm:$0xf]
        %v303 = vld [vmem:[%s276 + $0x10] sm:$0xf]
        %v304 = vld [vmem:[%s276 + $0x14] sm:$0xf]
        %v305 = vld [vmem:[%s276 + $0x18] sm:$0xf]
        %v306 = vld [vmem:[%s276 + $0x1c] sm:$0xf]
        %v307 = vunpack.c.l.bf16 %v299
        %v308 = vunpack.c.l.bf16 %v300
        %v309 = vunpack.c.l.bf16 %v301
        %v310 = vunpack.c.l.bf16 %v302
        %v311 = vunpack.c.l.bf16 %v303
        %v312 = vunpack.c.l.bf16 %v304
        %v313 = vunpack.c.l.bf16 %v305
        %v314 = vunpack.c.l.bf16 %v306
        %v315 = vld [vmem:[%s3] sm:$0x1]
        %v317 = vlaneseq
        %v318 = vshrl.u32 %v317, 7
        %v319 = vsub.s32 0, %v318
        %v320 = vrot.slane %v315, %v319
        %v322 = vmul.f32 %v307, %v320
        %v323 = vmul.f32 %v308, %v320
        %v324 = vmul.f32 %v309, %v320
        %v325 = vmul.f32 %v310, %v320
        %v326 = vmul.f32 %v311, %v320
        %v327 = vmul.f32 %v312, %v320
        %v328 = vmul.f32 %v313, %v320
        %v329 = vmul.f32 %v314, %v320
        %v330 = vld [vmem:[%s4] sm:$0x1]
        %v332 = vlaneseq
        %v333 = vshrl.u32 %v332, 7
        %v334 = vsub.s32 0, %v333
        %v335 = vrot.slane %v330, %v334
        %v337 = vadd.f32 %v322, %v335
        %v338 = vadd.f32 %v323, %v335
        %v339 = vadd.f32 %v324, %v335
        %v340 = vadd.f32 %v325, %v335
        %v341 = vadd.f32 %v326, %v335
        %v342 = vadd.f32 %v327, %v335
        %v343 = vadd.f32 %v328, %v335
        %v344 = vadd.f32 %v329, %v335
        %v345 = vmax.f32 %v337, 0.0
        %v346 = vmax.f32 %v338, 0.0
        %v347 = vmax.f32 %v339, 0.0
        %v348 = vmax.f32 %v340, 0.0
        %v349 = vmax.f32 %v341, 0.0
        %v350 = vmax.f32 %v342, 0.0
        %v351 = vmax.f32 %v343, 0.0
        %v352 = vmax.f32 %v344, 0.0
        %v353 = vpack.c.bf16 %v345, %v345
        %v354 = vpack.c.bf16 %v346, %v346
        %v355 = vpack.c.bf16 %v347, %v347
        %v356 = vpack.c.bf16 %v348, %v348
        %v357 = vpack.c.bf16 %v349, %v349
        %v358 = vpack.c.bf16 %v350, %v350
        %v359 = vpack.c.bf16 %v351, %v351
        %v360 = vpack.c.bf16 %v352, %v352
        %vm361 = vcmask 519168
        %362 = vst.msk [vmem:[#allocation2] sm:$0xf] %vm361, 0
        %vm363 = vcmask 516096
        %364 = vst.msk [vmem:[#allocation2 + $0x4] sm:$0x1] %vm363, 0
        %365 = vst.msk [vmem:[#allocation2 + $0x8] sm:$0xf] %vm361, 0
        %366 = vst.msk [vmem:[#allocation2 + $0xc] sm:$0x1] %vm363, 0
        %367 = vst.msk [vmem:[#allocation2 + $0x10] sm:$0xf] %vm361, 0
        %368 = vst.msk [vmem:[#allocation2 + $0x14] sm:$0x1] %vm363, 0
        %369 = vst.msk [vmem:[#allocation2 + $0x18] sm:$0xf] %vm361, 0
        %370 = vst.msk [vmem:[#allocation2 + $0x1c] sm:$0x1] %vm363, 0
        %371 = vst.msk [vmem:[#allocation2 + $0x20] sm:$0xf] %vm361, 0
        %372 = vst.msk [vmem:[#allocation2 + $0x24] sm:$0x1] %vm363, 0
        %373 = vst.msk [vmem:[#allocation2 + $0x28] sm:$0xf] %vm361, 0
        %374 = vst.msk [vmem:[#allocation2 + $0x2c] sm:$0x1] %vm363, 0
        %375 = vst.msk [vmem:[#allocation2 + $0x30] sm:$0xf] %vm361, 0
        %376 = vst.msk [vmem:[#allocation2 + $0x34] sm:$0x1] %vm363, 0
        %377 = vst.msk [vmem:[#allocation2 + $0x38] sm:$0xf] %vm361, 0
        %378 = vst.msk [vmem:[#allocation2 + $0x3c] sm:$0x1] %vm363, 0
        %379 = vst.msk [vmem:[#allocation2 + $0x40] sm:$0xf] %vm361, 0
        %380 = vst.msk [vmem:[#allocation2 + $0x44] sm:$0x1] %vm363, 0
        %381 = vst.msk [vmem:[#allocation2 + $0x48] sm:$0xf] %vm361, 0
        %382 = vst.msk [vmem:[#allocation2 + $0x4c] sm:$0x1] %vm363, 0
        %v391 = vunpack.c.l.b16 %v353
        %v392 = vunpack.c.l.b16 %v354
        %v393 = vunpack.c.l.b16 %v355
        %v394 = vunpack.c.l.b16 %v356
        %v395 = vunpack.c.l.b16 %v357
        %v396 = vunpack.c.l.b16 %v358
        %v397 = vunpack.c.l.b16 %v359
        %v398 = vunpack.c.l.b16 %v360
        %v399 = vpack.c.b16 %v391, %v391
        %v400 = vpack.c.b16 %v392, %v392
        %v401 = vpack.c.b16 %v393, %v393
        %v402 = vpack.c.b16 %v394, %v394
        %v403 = vpack.c.b16 %v395, %v395
        %v404 = vpack.c.b16 %v396, %v396
        %v405 = vpack.c.b16 %v397, %v397
        %v406 = vpack.c.b16 %v398, %v398
        %v408 = vshrl.u32 %v399, 16
        %v410 = vrot.slane %v408, 7
        %v411 = vshll.u32 %v399, 16
        %v413 = vor.u32 %v410, %v411
        %v414 = vrot.slane %v410, 4
        %v416 = vshrl.u32 %v400, 16
        %v418 = vrot.slane %v416, 7
        %v419 = vshll.u32 %v400, 16
        %v421 = vor.u32 %v418, %v419
        %v422 = vrot.slane %v418, 4
        %v424 = vshrl.u32 %v401, 16
        %v426 = vrot.slane %v424, 7
        %v427 = vshll.u32 %v401, 16
        %v429 = vor.u32 %v426, %v427
        %v430 = vrot.slane %v426, 4
        %v432 = vshrl.u32 %v402, 16
        %v434 = vrot.slane %v432, 7
        %v435 = vshll.u32 %v402, 16
        %v437 = vor.u32 %v434, %v435
        %v438 = vrot.slane %v434, 4
        %v440 = vshrl.u32 %v403, 16
        %v442 = vrot.slane %v440, 7
        %v443 = vshll.u32 %v403, 16
        %v445 = vor.u32 %v442, %v443
        %v446 = vrot.slane %v442, 4
        %v448 = vshrl.u32 %v404, 16
        %v450 = vrot.slane %v448, 7
        %v451 = vshll.u32 %v404, 16
        %v453 = vor.u32 %v450, %v451
        %v454 = vrot.slane %v450, 4
        %v456 = vshrl.u32 %v405, 16
        %v458 = vrot.slane %v456, 7
        %v459 = vshll.u32 %v405, 16
        %v461 = vor.u32 %v458, %v459
        %v462 = vrot.slane %v458, 4
        %v464 = vshrl.u32 %v406, 16
        %v466 = vrot.slane %v464, 7
        %v467 = vshll.u32 %v406, 16
        %v469 = vor.u32 %v466, %v467
        %v470 = vrot.slane %v466, 4
        %s487 = scalar_lea.vmem [#allocation2], 8
        %vm488 = vcmask 519168
        %vm489 = vsmask.f32 7938
        %vm490 = vmand %vm488, %vm489
        %v491 = vld [vmem:[%s487] sm:$0xf]
        %v492 = vsel %vm490, %v413, %v491
        %493 = vst [vmem:[%s487] sm:$0xf] %v492
        %vm494 = vcmask 516096
        %vm495 = vsmask.f32 256
        %vm496 = vmand %vm494, %vm495
        %v497 = vld [vmem:[%s487 + $0x4] sm:$0x1]
        %v498 = vsel %vm496, %v414, %v497
        %499 = vst [vmem:[%s487 + $0x4] sm:$0x1] %v498
        %v500 = vld [vmem:[%s487 + $0x8] sm:$0xf]
        %v501 = vsel %vm490, %v421, %v500
        %502 = vst [vmem:[%s487 + $0x8] sm:$0xf] %v501
        %v503 = vld [vmem:[%s487 + $0xc] sm:$0x1]
        %v504 = vsel %vm496, %v422, %v503
        %505 = vst [vmem:[%s487 + $0xc] sm:$0x1] %v504
        %v506 = vld [vmem:[%s487 + $0x10] sm:$0xf]
        %v507 = vsel %vm490, %v429, %v506
        %508 = vst [vmem:[%s487 + $0x10] sm:$0xf] %v507
        %v509 = vld [vmem:[%s487 + $0x14] sm:$0x1]
        %v510 = vsel %vm496, %v430, %v509
        %511 = vst [vmem:[%s487 + $0x14] sm:$0x1] %v510
        %v512 = vld [vmem:[%s487 + $0x18] sm:$0xf]
        %v513 = vsel %vm490, %v437, %v512
        %514 = vst [vmem:[%s487 + $0x18] sm:$0xf] %v513
        %v515 = vld [vmem:[%s487 + $0x1c] sm:$0x1]
        %v516 = vsel %vm496, %v438, %v515
        %517 = vst [vmem:[%s487 + $0x1c] sm:$0x1] %v516
        %v518 = vld [vmem:[%s487 + $0x20] sm:$0xf]
        %v519 = vsel %vm490, %v445, %v518
        %520 = vst [vmem:[%s487 + $0x20] sm:$0xf] %v519
        %v521 = vld [vmem:[%s487 + $0x24] sm:$0x1]
        %v522 = vsel %vm496, %v446, %v521
        %523 = vst [vmem:[%s487 + $0x24] sm:$0x1] %v522
        %v524 = vld [vmem:[%s487 + $0x28] sm:$0xf]
        %v525 = vsel %vm490, %v453, %v524
        %526 = vst [vmem:[%s487 + $0x28] sm:$0xf] %v525
        %v527 = vld [vmem:[%s487 + $0x2c] sm:$0x1]
        %v528 = vsel %vm496, %v454, %v527
        %529 = vst [vmem:[%s487 + $0x2c] sm:$0x1] %v528
        %v530 = vld [vmem:[%s487 + $0x30] sm:$0xf]
        %v531 = vsel %vm490, %v461, %v530
        %532 = vst [vmem:[%s487 + $0x30] sm:$0xf] %v531
        %v533 = vld [vmem:[%s487 + $0x34] sm:$0x1]
        %v534 = vsel %vm496, %v462, %v533
        %535 = vst [vmem:[%s487 + $0x34] sm:$0x1] %v534
        %v536 = vld [vmem:[%s487 + $0x38] sm:$0xf]
        %v537 = vsel %vm490, %v469, %v536
        %538 = vst [vmem:[%s487 + $0x38] sm:$0xf] %v537
        %v539 = vld [vmem:[%s487 + $0x3c] sm:$0x1]
        %v540 = vsel %vm496, %v470, %v539
        %541 = vst [vmem:[%s487 + $0x3c] sm:$0x1] %v540
      $region44: #{fwd.7} parent=39 // pred_fallthru
        _
      %s542 = smul.u32 %s23, 8
      %s543 = smul.u32 %s542, 2
      %s544 = smul.addr %s543, 4
      %s545 = scalar_lea.vmem [#allocation2], %s544
      %v546 = vld [vmem:[%s545] sm:$0xf]
      %v547 = vld [vmem:[%s545 + $0x8] sm:$0xf]
      %v548 = vld [vmem:[%s545 + $0x10] sm:$0xf]
      %v549 = vld [vmem:[%s545 + $0x18] sm:$0xf]
      %v550 = vld [vmem:[%s545 + $0x20] sm:$0xf]
      %v551 = vld [vmem:[%s545 + $0x28] sm:$0xf]
      %v552 = vld [vmem:[%s545 + $0x30] sm:$0xf]
      %v553 = vld [vmem:[%s545 + $0x38] sm:$0xf]
      %v562 = vunpack.c.l.b16 %v546
      %v563 = vunpack.c.l.b16 %v547
      %v564 = vunpack.c.l.b16 %v548
      %v565 = vunpack.c.l.b16 %v549
      %v566 = vunpack.c.l.b16 %v550
      %v567 = vunpack.c.l.b16 %v551
      %v568 = vunpack.c.l.b16 %v552
      %v569 = vunpack.c.l.b16 %v553
      %v570 = vpack.c.b16 %v563, %v562
      %v571 = vpack.c.b16 %v565, %v564
      %v572 = vpack.c.b16 %v567, %v566
      %v573 = vpack.c.b16 %v569, %v568
      %vm578 = vcmask 523264
      %579 = vst.msk [vmem:[#allocation3] sm:$0xff] %vm578, %v570
      %580 = vst.msk [vmem:[#allocation3 + $0x28] sm:$0xff] %vm578, %v571
      %581 = vst.msk [vmem:[#allocation3 + $0x50] sm:$0xff] %vm578, %v572
      %582 = vst.msk [vmem:[#allocation3 + $0x78] sm:$0xff] %vm578, %v573
      %v583 = vld [vmem:[%s545] sm:$0xf]
      %v584 = vld [vmem:[%s545 + $0x4] sm:$0x1]
      %v585 = vld [vmem:[%s545 + $0x8] sm:$0xf]
      %v586 = vld [vmem:[%s545 + $0xc] sm:$0x1]
      %v587 = vld [vmem:[%s545 + $0x10] sm:$0xf]
      %v588 = vld [vmem:[%s545 + $0x14] sm:$0x1]
      %v589 = vld [vmem:[%s545 + $0x18] sm:$0xf]
      %v590 = vld [vmem:[%s545 + $0x1c] sm:$0x1]
      %v591 = vld [vmem:[%s545 + $0x20] sm:$0xf]
      %v592 = vld [vmem:[%s545 + $0x24] sm:$0x1]
      %v593 = vld [vmem:[%s545 + $0x28] sm:$0xf]
      %v594 = vld [vmem:[%s545 + $0x2c] sm:$0x1]
      %v595 = vld [vmem:[%s545 + $0x30] sm:$0xf]
      %v596 = vld [vmem:[%s545 + $0x34] sm:$0x1]
      %v597 = vld [vmem:[%s545 + $0x38] sm:$0xf]
      %v598 = vld [vmem:[%s545 + $0x3c] sm:$0x1]
      %vm599 = vsmask.f32 3328
      %vm600 = vsmask.f32 7440
      %vm601 = vmor %vm599, %vm600
      %v603 = vshrl.u32 %v583, 16
      %v605 = vrot.slane %v603, 4
      %v606 = vshll.u32 %v583, 16
      %v608 = vrot.slane %v606, 5
      %v609 = vor.u32 %v605, %v608
      %v610 = vrot.slane %v609, 4
      %v612 = vshll.u32 %v584, 16
      %v614 = vrot.slane %v612, 5
      %v615 = vsel %vm601, %v610, %v614
      %v617 = vshrl.u32 %v585, 16
      %v619 = vrot.slane %v617, 4
      %v620 = vshll.u32 %v585, 16
      %v622 = vrot.slane %v620, 5
      %v623 = vor.u32 %v619, %v622
      %v624 = vrot.slane %v623, 4
      %v626 = vshll.u32 %v586, 16
      %v628 = vrot.slane %v626, 5
      %v629 = vsel %vm601, %v624, %v628
      %v631 = vshrl.u32 %v587, 16
      %v633 = vrot.slane %v631, 4
      %v634 = vshll.u32 %v587, 16
      %v636 = vrot.slane %v634, 5
      %v637 = vor.u32 %v633, %v636
      %v638 = vrot.slane %v637, 4
      %v640 = vshll.u32 %v588, 16
      %v642 = vrot.slane %v640, 5
      %v643 = vsel %vm601, %v638, %v642
      %v645 = vshrl.u32 %v589, 16
      %v647 = vrot.slane %v645, 4
      %v648 = vshll.u32 %v589, 16
      %v650 = vrot.slane %v648, 5
      %v651 = vor.u32 %v647, %v650
      %v652 = vrot.slane %v651, 4
      %v654 = vshll.u32 %v590, 16
      %v656 = vrot.slane %v654, 5
      %v657 = vsel %vm601, %v652, %v656
      %v659 = vshrl.u32 %v591, 16
      %v661 = vrot.slane %v659, 4
      %v662 = vshll.u32 %v591, 16
      %v664 = vrot.slane %v662, 5
      %v665 = vor.u32 %v661, %v664
      %v666 = vrot.slane %v665, 4
      %v668 = vshll.u32 %v592, 16
      %v670 = vrot.slane %v668, 5
      %v671 = vsel %vm601, %v666, %v670
      %v673 = vshrl.u32 %v593, 16
      %v675 = vrot.slane %v673, 4
      %v676 = vshll.u32 %v593, 16
      %v678 = vrot.slane %v676, 5
      %v679 = vor.u32 %v675, %v678
      %v680 = vrot.slane %v679, 4
      %v682 = vshll.u32 %v594, 16
      %v684 = vrot.slane %v682, 5
      %v685 = vsel %vm601, %v680, %v684
      %v687 = vshrl.u32 %v595, 16
      %v689 = vrot.slane %v687, 4
      %v690 = vshll.u32 %v595, 16
      %v692 = vrot.slane %v690, 5
      %v693 = vor.u32 %v689, %v692
      %v694 = vrot.slane %v693, 4
      %v696 = vshll.u32 %v596, 16
      %v698 = vrot.slane %v696, 5
      %v699 = vsel %vm601, %v694, %v698
      %v701 = vshrl.u32 %v597, 16
      %v703 = vrot.slane %v701, 4
      %v704 = vshll.u32 %v597, 16
      %v706 = vrot.slane %v704, 5
      %v707 = vor.u32 %v703, %v706
      %v708 = vrot.slane %v707, 4
      %v710 = vshll.u32 %v598, 16
      %v712 = vrot.slane %v710, 5
      %v713 = vsel %vm601, %v708, %v712
      %v714 = vunpack.c.l.b16 %v615
      %v715 = vunpack.c.l.b16 %v629
      %v716 = vunpack.c.l.b16 %v643
      %v717 = vunpack.c.l.b16 %v657
      %v718 = vunpack.c.l.b16 %v671
      %v719 = vunpack.c.l.b16 %v685
      %v720 = vunpack.c.l.b16 %v699
      %v721 = vunpack.c.l.b16 %v713
      %v722 = vpack.c.b16 %v715, %v714
      %v723 = vpack.c.b16 %v717, %v716
      %v724 = vpack.c.b16 %v719, %v718
      %v725 = vpack.c.b16 %v721, %v720
      %726 = vrot.lane.b32.xlu0 %v722, 64
      %v727 = vpop.permute.xlu0 %726
      %728 = vrot.lane.b32.xlu0 %v723, 64
      %v729 = vpop.permute.xlu0 %728
      %730 = vrot.lane.b32.xlu0 %v724, 64
      %v731 = vpop.permute.xlu0 %730
      %732 = vrot.lane.b32.xlu0 %v725, 64
      %v733 = vpop.permute.xlu0 %732
      %vm738 = vcmask 1048064
      %739 = vst.msk [vmem:[#allocation3] sm:$0xff] %vm738, %v727
      %740 = vst.msk [vmem:[#allocation3 + $0x28] sm:$0xff] %vm738, %v729
      %741 = vst.msk [vmem:[#allocation3 + $0x50] sm:$0xff] %vm738, %v731
      %742 = vst.msk [vmem:[#allocation3 + $0x78] sm:$0xff] %vm738, %v733
      %v743 = vld [vmem:[%s545] sm:$0xe]
      %v744 = vld [vmem:[%s545 + $0x4] sm:$0x1]
      %v745 = vld [vmem:[%s545 + $0x8] sm:$0xe]
      %v746 = vld [vmem:[%s545 + $0xc] sm:$0x1]
      %v747 = vld [vmem:[%s545 + $0x10] sm:$0xe]
      %v748 = vld [vmem:[%s545 + $0x14] sm:$0x1]
      %v749 = vld [vmem:[%s545 + $0x18] sm:$0xe]
      %v750 = vld [vmem:[%s545 + $0x1c] sm:$0x1]
      %v751 = vld [vmem:[%s545 + $0x20] sm:$0xe]
      %v752 = vld [vmem:[%s545 + $0x24] sm:$0x1]
      %v753 = vld [vmem:[%s545 + $0x28] sm:$0xe]
      %v754 = vld [vmem:[%s545 + $0x2c] sm:$0x1]
      %v755 = vld [vmem:[%s545 + $0x30] sm:$0xe]
      %v756 = vld [vmem:[%s545 + $0x34] sm:$0x1]
      %v757 = vld [vmem:[%s545 + $0x38] sm:$0xe]
      %v758 = vld [vmem:[%s545 + $0x3c] sm:$0x1]
      %vm775 = vcmask 1042432
      %vm776 = vcmask 1046532
      %vm777 = vmor %vm775, %vm776
      %v778 = vrot.slane %v743, 5
      %v779 = vrot.slane %v778, 4
      %v780 = vrot.slane %v744, 5
      %v781 = vsel %vm777, %v779, %v780
      %v782 = vrot.slane %v745, 5
      %v783 = vrot.slane %v782, 4
      %v784 = vrot.slane %v746, 5
      %v785 = vsel %vm777, %v783, %v784
      %v786 = vrot.slane %v747, 5
      %v787 = vrot.slane %v786, 4
      %v788 = vrot.slane %v748, 5
      %v789 = vsel %vm777, %v787, %v788
      %v790 = vrot.slane %v749, 5
      %v791 = vrot.slane %v790, 4
      %v792 = vrot.slane %v750, 5
      %v793 = vsel %vm777, %v791, %v792
      %v794 = vrot.slane %v751, 5
      %v795 = vrot.slane %v794, 4
      %v796 = vrot.slane %v752, 5
      %v797 = vsel %vm777, %v795, %v796
      %v798 = vrot.slane %v753, 5
      %v799 = vrot.slane %v798, 4
      %v800 = vrot.slane %v754, 5
      %v801 = vsel %vm777, %v799, %v800
      %v802 = vrot.slane %v755, 5
      %v803 = vrot.slane %v802, 4
      %v804 = vrot.slane %v756, 5
      %v805 = vsel %vm777, %v803, %v804
      %v806 = vrot.slane %v757, 5
      %v807 = vrot.slane %v806, 4
      %v808 = vrot.slane %v758, 5
      %v809 = vsel %vm777, %v807, %v808
      %v810 = vunpack.c.l.b16 %v781
      %v811 = vunpack.c.l.b16 %v785
      %v812 = vunpack.c.l.b16 %v789
      %v813 = vunpack.c.l.b16 %v793
      %v814 = vunpack.c.l.b16 %v797
      %v815 = vunpack.c.l.b16 %v801
      %v816 = vunpack.c.l.b16 %v805
      %v817 = vunpack.c.l.b16 %v809
      %v818 = vpack.c.b16 %v811, %v810
      %v819 = vpack.c.b16 %v813, %v812
      %v820 = vpack.c.b16 %v815, %v814
      %v821 = vpack.c.b16 %v817, %v816
      %826 = vst.msk [vmem:[#allocation3 + $0x8] sm:$0xff] %vm578, %v818
      %827 = vst.msk [vmem:[#allocation3 + $0x30] sm:$0xff] %vm578, %v819
      %828 = vst.msk [vmem:[#allocation3 + $0x58] sm:$0xff] %vm578, %v820
      %829 = vst.msk [vmem:[#allocation3 + $0x80] sm:$0xff] %vm578, %v821
      %s830 = sadd.s32 %s542, 1
      %s831 = smul.u32 %s830, 2
      %s832 = smul.addr %s831, 4
      %s833 = scalar_lea.vmem [#allocation2], %s832
      %v834 = vld [vmem:[%s833] sm:$0xf]
      %v835 = vld [vmem:[%s833 + $0x8] sm:$0xf]
      %v836 = vld [vmem:[%s833 + $0x10] sm:$0xf]
      %v837 = vld [vmem:[%s833 + $0x18] sm:$0xf]
      %v838 = vld [vmem:[%s833 + $0x20] sm:$0xf]
      %v839 = vld [vmem:[%s833 + $0x28] sm:$0xf]
      %v840 = vld [vmem:[%s833 + $0x30] sm:$0xf]
      %v841 = vld [vmem:[%s833 + $0x38] sm:$0xf]
      %v850 = vunpack.c.l.b16 %v834
      %v851 = vunpack.c.l.b16 %v835
      %v852 = vunpack.c.l.b16 %v836
      %v853 = vunpack.c.l.b16 %v837
      %v854 = vunpack.c.l.b16 %v838
      %v855 = vunpack.c.l.b16 %v839
      %v856 = vunpack.c.l.b16 %v840
      %v857 = vunpack.c.l.b16 %v841
      %v858 = vpack.c.b16 %v851, %v850
      %v859 = vpack.c.b16 %v853, %v852
      %v860 = vpack.c.b16 %v855, %v854
      %v861 = vpack.c.b16 %v857, %v856
      %862 = vrot.lane.b32.xlu0 %v858, 64
      %v863 = vpop.permute.xlu0 %862
      %864 = vrot.lane.b32.xlu0 %v859, 64
      %v865 = vpop.permute.xlu0 %864
      %866 = vrot.lane.b32.xlu0 %v860, 64
      %v867 = vpop.permute.xlu0 %866
      %868 = vrot.lane.b32.xlu0 %v861, 64
      %v869 = vpop.permute.xlu0 %868
      %874 = vst.msk [vmem:[#allocation3 + $0x8] sm:$0xff] %vm738, %v863
      %875 = vst.msk [vmem:[#allocation3 + $0x30] sm:$0xff] %vm738, %v865
      %876 = vst.msk [vmem:[#allocation3 + $0x58] sm:$0xff] %vm738, %v867
      %877 = vst.msk [vmem:[#allocation3 + $0x80] sm:$0xff] %vm738, %v869
      %v878 = vld [vmem:[%s833] sm:$0xf]
      %v879 = vld [vmem:[%s833 + $0x4] sm:$0x1]
      %v880 = vld [vmem:[%s833 + $0x8] sm:$0xf]
      %v881 = vld [vmem:[%s833 + $0xc] sm:$0x1]
      %v882 = vld [vmem:[%s833 + $0x10] sm:$0xf]
      %v883 = vld [vmem:[%s833 + $0x14] sm:$0x1]
      %v884 = vld [vmem:[%s833 + $0x18] sm:$0xf]
      %v885 = vld [vmem:[%s833 + $0x1c] sm:$0x1]
      %v886 = vld [vmem:[%s833 + $0x20] sm:$0xf]
      %v887 = vld [vmem:[%s833 + $0x24] sm:$0x1]
      %v888 = vld [vmem:[%s833 + $0x28] sm:$0xf]
      %v889 = vld [vmem:[%s833 + $0x2c] sm:$0x1]
      %v890 = vld [vmem:[%s833 + $0x30] sm:$0xf]
      %v891 = vld [vmem:[%s833 + $0x34] sm:$0x1]
      %v892 = vld [vmem:[%s833 + $0x38] sm:$0xf]
      %v893 = vld [vmem:[%s833 + $0x3c] sm:$0x1]
      %v895 = vshrl.u32 %v878, 16
      %v897 = vrot.slane %v895, 4
      %v898 = vshll.u32 %v878, 16
      %v900 = vrot.slane %v898, 5
      %v901 = vor.u32 %v897, %v900
      %v902 = vrot.slane %v901, 4
      %v904 = vshll.u32 %v879, 16
      %v906 = vrot.slane %v904, 5
      %v907 = vsel %vm601, %v902, %v906
      %v909 = vshrl.u32 %v880, 16
      %v911 = vrot.slane %v909, 4
      %v912 = vshll.u32 %v880, 16
      %v914 = vrot.slane %v912, 5
      %v915 = vor.u32 %v911, %v914
      %v916 = vrot.slane %v915, 4
      %v918 = vshll.u32 %v881, 16
      %v920 = vrot.slane %v918, 5
      %v921 = vsel %vm601, %v916, %v920
      %v923 = vshrl.u32 %v882, 16
      %v925 = vrot.slane %v923, 4
      %v926 = vshll.u32 %v882, 16
      %v928 = vrot.slane %v926, 5
      %v929 = vor.u32 %v925, %v928
      %v930 = vrot.slane %v929, 4
      %v932 = vshll.u32 %v883, 16
      %v934 = vrot.slane %v932, 5
      %v935 = vsel %vm601, %v930, %v934
      %v937 = vshrl.u32 %v884, 16
      %v939 = vrot.slane %v937, 4
      %v940 = vshll.u32 %v884, 16
      %v942 = vrot.slane %v940, 5
      %v943 = vor.u32 %v939, %v942
      %v944 = vrot.slane %v943, 4
      %v946 = vshll.u32 %v885, 16
      %v948 = vrot.slane %v946, 5
      %v949 = vsel %vm601, %v944, %v948
      %v951 = vshrl.u32 %v886, 16
      %v953 = vrot.slane %v951, 4
      %v954 = vshll.u32 %v886, 16
      %v956 = vrot.slane %v954, 5
      %v957 = vor.u32 %v953, %v956
      %v958 = vrot.slane %v957, 4
      %v960 = vshll.u32 %v887, 16
      %v962 = vrot.slane %v960, 5
      %v963 = vsel %vm601, %v958, %v962
      %v965 = vshrl.u32 %v888, 16
      %v967 = vrot.slane %v965, 4
      %v968 = vshll.u32 %v888, 16
      %v970 = vrot.slane %v968, 5
      %v971 = vor.u32 %v967, %v970
      %v972 = vrot.slane %v971, 4
      %v974 = vshll.u32 %v889, 16
      %v976 = vrot.slane %v974, 5
      %v977 = vsel %vm601, %v972, %v976
      %v979 = vshrl.u32 %v890, 16
      %v981 = vrot.slane %v979, 4
      %v982 = vshll.u32 %v890, 16
      %v984 = vrot.slane %v982, 5
      %v985 = vor.u32 %v981, %v984
      %v986 = vrot.slane %v985, 4
      %v988 = vshll.u32 %v891, 16
      %v990 = vrot.slane %v988, 5
      %v991 = vsel %vm601, %v986, %v990
      %v993 = vshrl.u32 %v892, 16
      %v995 = vrot.slane %v993, 4
      %v996 = vshll.u32 %v892, 16
      %v998 = vrot.slane %v996, 5
      %v999 = vor.u32 %v995, %v998
      %v1000 = vrot.slane %v999, 4
      %v1002 = vshll.u32 %v893, 16
      %v1004 = vrot.slane %v1002, 5
      %v1005 = vsel %vm601, %v1000, %v1004
      %v1006 = vunpack.c.l.b16 %v907
      %v1007 = vunpack.c.l.b16 %v921
      %v1008 = vunpack.c.l.b16 %v935
      %v1009 = vunpack.c.l.b16 %v949
      %v1010 = vunpack.c.l.b16 %v963
      %v1011 = vunpack.c.l.b16 %v977
      %v1012 = vunpack.c.l.b16 %v991
      %v1013 = vunpack.c.l.b16 %v1005
      %v1014 = vpack.c.b16 %v1007, %v1006
      %v1015 = vpack.c.b16 %v1009, %v1008
      %v1016 = vpack.c.b16 %v1011, %v1010
      %v1017 = vpack.c.b16 %v1013, %v1012
      %1022 = vst.msk [vmem:[#allocation3 + $0x10] sm:$0xff] %vm578, %v1014
      %1023 = vst.msk [vmem:[#allocation3 + $0x38] sm:$0xff] %vm578, %v1015
      %1024 = vst.msk [vmem:[#allocation3 + $0x60] sm:$0xff] %vm578, %v1016
      %1025 = vst.msk [vmem:[#allocation3 + $0x88] sm:$0xff] %vm578, %v1017
      %v1026 = vld [vmem:[%s833] sm:$0xe]
      %v1027 = vld [vmem:[%s833 + $0x4] sm:$0x1]
      %v1028 = vld [vmem:[%s833 + $0x8] sm:$0xe]
      %v1029 = vld [vmem:[%s833 + $0xc] sm:$0x1]
      %v1030 = vld [vmem:[%s833 + $0x10] sm:$0xe]
      %v1031 = vld [vmem:[%s833 + $0x14] sm:$0x1]
      %v1032 = vld [vmem:[%s833 + $0x18] sm:$0xe]
      %v1033 = vld [vmem:[%s833 + $0x1c] sm:$0x1]
      %v1034 = vld [vmem:[%s833 + $0x20] sm:$0xe]
      %v1035 = vld [vmem:[%s833 + $0x24] sm:$0x1]
      %v1036 = vld [vmem:[%s833 + $0x28] sm:$0xe]
      %v1037 = vld [vmem:[%s833 + $0x2c] sm:$0x1]
      %v1038 = vld [vmem:[%s833 + $0x30] sm:$0xe]
      %v1039 = vld [vmem:[%s833 + $0x34] sm:$0x1]
      %v1040 = vld [vmem:[%s833 + $0x38] sm:$0xe]
      %v1041 = vld [vmem:[%s833 + $0x3c] sm:$0x1]
      %v1058 = vrot.slane %v1026, 5
      %v1059 = vrot.slane %v1058, 4
      %v1060 = vrot.slane %v1027, 5
      %v1061 = vsel %vm777, %v1059, %v1060
      %v1062 = vrot.slane %v1028, 5
      %v1063 = vrot.slane %v1062, 4
      %v1064 = vrot.slane %v1029, 5
      %v1065 = vsel %vm777, %v1063, %v1064
      %v1066 = vrot.slane %v1030, 5
      %v1067 = vrot.slane %v1066, 4
      %v1068 = vrot.slane %v1031, 5
      %v1069 = vsel %vm777, %v1067, %v1068
      %v1070 = vrot.slane %v1032, 5
      %v1071 = vrot.slane %v1070, 4
      %v1072 = vrot.slane %v1033, 5
      %v1073 = vsel %vm777, %v1071, %v1072
      %v1074 = vrot.slane %v1034, 5
      %v1075 = vrot.slane %v1074, 4
      %v1076 = vrot.slane %v1035, 5
      %v1077 = vsel %vm777, %v1075, %v1076
      %v1078 = vrot.slane %v1036, 5
      %v1079 = vrot.slane %v1078, 4
      %v1080 = vrot.slane %v1037, 5
      %v1081 = vsel %vm777, %v1079, %v1080
      %v1082 = vrot.slane %v1038, 5
      %v1083 = vrot.slane %v1082, 4
      %v1084 = vrot.slane %v1039, 5
      %v1085 = vsel %vm777, %v1083, %v1084
      %v1086 = vrot.slane %v1040, 5
      %v1087 = vrot.slane %v1086, 4
      %v1088 = vrot.slane %v1041, 5
      %v1089 = vsel %vm777, %v1087, %v1088
      %v1090 = vunpack.c.l.b16 %v1061
      %v1091 = vunpack.c.l.b16 %v1065
      %v1092 = vunpack.c.l.b16 %v1069
      %v1093 = vunpack.c.l.b16 %v1073
      %v1094 = vunpack.c.l.b16 %v1077
      %v1095 = vunpack.c.l.b16 %v1081
      %v1096 = vunpack.c.l.b16 %v1085
      %v1097 = vunpack.c.l.b16 %v1089
      %v1098 = vpack.c.b16 %v1091, %v1090
      %v1099 = vpack.c.b16 %v1093, %v1092
      %v1100 = vpack.c.b16 %v1095, %v1094
      %v1101 = vpack.c.b16 %v1097, %v1096
      %1102 = vrot.lane.b32.xlu0 %v1098, 64
      %v1103 = vpop.permute.xlu0 %1102
      %1104 = vrot.lane.b32.xlu0 %v1099, 64
      %v1105 = vpop.permute.xlu0 %1104
      %1106 = vrot.lane.b32.xlu0 %v1100, 64
      %v1107 = vpop.permute.xlu0 %1106
      %1108 = vrot.lane.b32.xlu0 %v1101, 64
      %v1109 = vpop.permute.xlu0 %1108
      %1114 = vst.msk [vmem:[#allocation3 + $0x10] sm:$0xff] %vm738, %v1103
      %1115 = vst.msk [vmem:[#allocation3 + $0x38] sm:$0xff] %vm738, %v1105
      %1116 = vst.msk [vmem:[#allocation3 + $0x60] sm:$0xff] %vm738, %v1107
      %1117 = vst.msk [vmem:[#allocation3 + $0x88] sm:$0xff] %vm738, %v1109
      %s1118 = sadd.s32 %s542, 2
      %s1119 = smul.u32 %s1118, 2
      %s1120 = smul.addr %s1119, 4
      %s1121 = scalar_lea.vmem [#allocation2], %s1120
      %v1122 = vld [vmem:[%s1121] sm:$0xf]
      %v1123 = vld [vmem:[%s1121 + $0x8] sm:$0xf]
      %v1124 = vld [vmem:[%s1121 + $0x10] sm:$0xf]
      %v1125 = vld [vmem:[%s1121 + $0x18] sm:$0xf]
      %v1126 = vld [vmem:[%s1121 + $0x20] sm:$0xf]
      %v1127 = vld [vmem:[%s1121 + $0x28] sm:$0xf]
      %v1128 = vld [vmem:[%s1121 + $0x30] sm:$0xf]
      %v1129 = vld [vmem:[%s1121 + $0x38] sm:$0xf]
      %v1138 = vunpack.c.l.b16 %v1122
      %v1139 = vunpack.c.l.b16 %v1123
      %v1140 = vunpack.c.l.b16 %v1124
      %v1141 = vunpack.c.l.b16 %v1125
      %v1142 = vunpack.c.l.b16 %v1126
      %v1143 = vunpack.c.l.b16 %v1127
      %v1144 = vunpack.c.l.b16 %v1128
      %v1145 = vunpack.c.l.b16 %v1129
      %v1146 = vpack.c.b16 %v1139, %v1138
      %v1147 = vpack.c.b16 %v1141, %v1140
      %v1148 = vpack.c.b16 %v1143, %v1142
      %v1149 = vpack.c.b16 %v1145, %v1144
      %1154 = vst.msk [vmem:[#allocation3 + $0x18] sm:$0xff] %vm578, %v1146
      %1155 = vst.msk [vmem:[#allocation3 + $0x40] sm:$0xff] %vm578, %v1147
      %1156 = vst.msk [vmem:[#allocation3 + $0x68] sm:$0xff] %vm578, %v1148
      %1157 = vst.msk [vmem:[#allocation3 + $0x90] sm:$0xff] %vm578, %v1149
      %v1158 = vld [vmem:[%s1121] sm:$0xf]
      %v1159 = vld [vmem:[%s1121 + $0x4] sm:$0x1]
      %v1160 = vld [vmem:[%s1121 + $0x8] sm:$0xf]
      %v1161 = vld [vmem:[%s1121 + $0xc] sm:$0x1]
      %v1162 = vld [vmem:[%s1121 + $0x10] sm:$0xf]
      %v1163 = vld [vmem:[%s1121 + $0x14] sm:$0x1]
      %v1164 = vld [vmem:[%s1121 + $0x18] sm:$0xf]
      %v1165 = vld [vmem:[%s1121 + $0x1c] sm:$0x1]
      %v1166 = vld [vmem:[%s1121 + $0x20] sm:$0xf]
      %v1167 = vld [vmem:[%s1121 + $0x24] sm:$0x1]
      %v1168 = vld [vmem:[%s1121 + $0x28] sm:$0xf]
      %v1169 = vld [vmem:[%s1121 + $0x2c] sm:$0x1]
      %v1170 = vld [vmem:[%s1121 + $0x30] sm:$0xf]
      %v1171 = vld [vmem:[%s1121 + $0x34] sm:$0x1]
      %v1172 = vld [vmem:[%s1121 + $0x38] sm:$0xf]
      %v1173 = vld [vmem:[%s1121 + $0x3c] sm:$0x1]
      %v1175 = vshrl.u32 %v1158, 16
      %v1177 = vrot.slane %v1175, 4
      %v1178 = vshll.u32 %v1158, 16
      %v1180 = vrot.slane %v1178, 5
      %v1181 = vor.u32 %v1177, %v1180
      %v1182 = vrot.slane %v1181, 4
      %v1184 = vshll.u32 %v1159, 16
      %v1186 = vrot.slane %v1184, 5
      %v1187 = vsel %vm601, %v1182, %v1186
      %v1189 = vshrl.u32 %v1160, 16
      %v1191 = vrot.slane %v1189, 4
      %v1192 = vshll.u32 %v1160, 16
      %v1194 = vrot.slane %v1192, 5
      %v1195 = vor.u32 %v1191, %v1194
      %v1196 = vrot.slane %v1195, 4
      %v1198 = vshll.u32 %v1161, 16
      %v1200 = vrot.slane %v1198, 5
      %v1201 = vsel %vm601, %v1196, %v1200
      %v1203 = vshrl.u32 %v1162, 16
      %v1205 = vrot.slane %v1203, 4
      %v1206 = vshll.u32 %v1162, 16
      %v1208 = vrot.slane %v1206, 5
      %v1209 = vor.u32 %v1205, %v1208
      %v1210 = vrot.slane %v1209, 4
      %v1212 = vshll.u32 %v1163, 16
      %v1214 = vrot.slane %v1212, 5
      %v1215 = vsel %vm601, %v1210, %v1214
      %v1217 = vshrl.u32 %v1164, 16
      %v1219 = vrot.slane %v1217, 4
      %v1220 = vshll.u32 %v1164, 16
      %v1222 = vrot.slane %v1220, 5
      %v1223 = vor.u32 %v1219, %v1222
      %v1224 = vrot.slane %v1223, 4
      %v1226 = vshll.u32 %v1165, 16
      %v1228 = vrot.slane %v1226, 5
      %v1229 = vsel %vm601, %v1224, %v1228
      %v1231 = vshrl.u32 %v1166, 16
      %v1233 = vrot.slane %v1231, 4
      %v1234 = vshll.u32 %v1166, 16
      %v1236 = vrot.slane %v1234, 5
      %v1237 = vor.u32 %v1233, %v1236
      %v1238 = vrot.slane %v1237, 4
      %v1240 = vshll.u32 %v1167, 16
      %v1242 = vrot.slane %v1240, 5
      %v1243 = vsel %vm601, %v1238, %v1242
      %v1245 = vshrl.u32 %v1168, 16
      %v1247 = vrot.slane %v1245, 4
      %v1248 = vshll.u32 %v1168, 16
      %v1250 = vrot.slane %v1248, 5
      %v1251 = vor.u32 %v1247, %v1250
      %v1252 = vrot.slane %v1251, 4
      %v1254 = vshll.u32 %v1169, 16
      %v1256 = vrot.slane %v1254, 5
      %v1257 = vsel %vm601, %v1252, %v1256
      %v1259 = vshrl.u32 %v1170, 16
      %v1261 = vrot.slane %v1259, 4
      %v1262 = vshll.u32 %v1170, 16
      %v1264 = vrot.slane %v1262, 5
      %v1265 = vor.u32 %v1261, %v1264
      %v1266 = vrot.slane %v1265, 4
      %v1268 = vshll.u32 %v1171, 16
      %v1270 = vrot.slane %v1268, 5
      %v1271 = vsel %vm601, %v1266, %v1270
      %v1273 = vshrl.u32 %v1172, 16
      %v1275 = vrot.slane %v1273, 4
      %v1276 = vshll.u32 %v1172, 16
      %v1278 = vrot.slane %v1276, 5
      %v1279 = vor.u32 %v1275, %v1278
      %v1280 = vrot.slane %v1279, 4
      %v1282 = vshll.u32 %v1173, 16
      %v1284 = vrot.slane %v1282, 5
      %v1285 = vsel %vm601, %v1280, %v1284
      %v1286 = vunpack.c.l.b16 %v1187
      %v1287 = vunpack.c.l.b16 %v1201
      %v1288 = vunpack.c.l.b16 %v1215
      %v1289 = vunpack.c.l.b16 %v1229
      %v1290 = vunpack.c.l.b16 %v1243
      %v1291 = vunpack.c.l.b16 %v1257
      %v1292 = vunpack.c.l.b16 %v1271
      %v1293 = vunpack.c.l.b16 %v1285
      %v1294 = vpack.c.b16 %v1287, %v1286
      %v1295 = vpack.c.b16 %v1289, %v1288
      %v1296 = vpack.c.b16 %v1291, %v1290
      %v1297 = vpack.c.b16 %v1293, %v1292
      %1298 = vrot.lane.b32.xlu0 %v1294, 64
      %v1299 = vpop.permute.xlu0 %1298
      %1300 = vrot.lane.b32.xlu0 %v1295, 64
      %v1301 = vpop.permute.xlu0 %1300
      %1302 = vrot.lane.b32.xlu0 %v1296, 64
      %v1303 = vpop.permute.xlu0 %1302
      %1304 = vrot.lane.b32.xlu0 %v1297, 64
      %v1305 = vpop.permute.xlu0 %1304
      %1310 = vst.msk [vmem:[#allocation3 + $0x18] sm:$0xff] %vm738, %v1299
      %1311 = vst.msk [vmem:[#allocation3 + $0x40] sm:$0xff] %vm738, %v1301
      %1312 = vst.msk [vmem:[#allocation3 + $0x68] sm:$0xff] %vm738, %v1303
      %1313 = vst.msk [vmem:[#allocation3 + $0x90] sm:$0xff] %vm738, %v1305
      %v1314 = vld [vmem:[%s1121] sm:$0xe]
      %v1315 = vld [vmem:[%s1121 + $0x4] sm:$0x1]
      %v1316 = vld [vmem:[%s1121 + $0x8] sm:$0xe]
      %v1317 = vld [vmem:[%s1121 + $0xc] sm:$0x1]
      %v1318 = vld [vmem:[%s1121 + $0x10] sm:$0xe]
      %v1319 = vld [vmem:[%s1121 + $0x14] sm:$0x1]
      %v1320 = vld [vmem:[%s1121 + $0x18] sm:$0xe]
      %v1321 = vld [vmem:[%s1121 + $0x1c] sm:$0x1]
      %v1322 = vld [vmem:[%s1121 + $0x20] sm:$0xe]
      %v1323 = vld [vmem:[%s1121 + $0x24] sm:$0x1]
      %v1324 = vld [vmem:[%s1121 + $0x28] sm:$0xe]
      %v1325 = vld [vmem:[%s1121 + $0x2c] sm:$0x1]
      %v1326 = vld [vmem:[%s1121 + $0x30] sm:$0xe]
      %v1327 = vld [vmem:[%s1121 + $0x34] sm:$0x1]
      %v1328 = vld [vmem:[%s1121 + $0x38] sm:$0xe]
      %v1329 = vld [vmem:[%s1121 + $0x3c] sm:$0x1]
      %v1346 = vrot.slane %v1314, 5
      %v1347 = vrot.slane %v1346, 4
      %v1348 = vrot.slane %v1315, 5
      %v1349 = vsel %vm777, %v1347, %v1348
      %v1350 = vrot.slane %v1316, 5
      %v1351 = vrot.slane %v1350, 4
      %v1352 = vrot.slane %v1317, 5
      %v1353 = vsel %vm777, %v1351, %v1352
      %v1354 = vrot.slane %v1318, 5
      %v1355 = vrot.slane %v1354, 4
      %v1356 = vrot.slane %v1319, 5
      %v1357 = vsel %vm777, %v1355, %v1356
      %v1358 = vrot.slane %v1320, 5
      %v1359 = vrot.slane %v1358, 4
      %v1360 = vrot.slane %v1321, 5
      %v1361 = vsel %vm777, %v1359, %v1360
      %v1362 = vrot.slane %v1322, 5
      %v1363 = vrot.slane %v1362, 4
      %v1364 = vrot.slane %v1323, 5
      %v1365 = vsel %vm777, %v1363, %v1364
      %v1366 = vrot.slane %v1324, 5
      %v1367 = vrot.slane %v1366, 4
      %v1368 = vrot.slane %v1325, 5
      %v1369 = vsel %vm777, %v1367, %v1368
      %v1370 = vrot.slane %v1326, 5
      %v1371 = vrot.slane %v1370, 4
      %v1372 = vrot.slane %v1327, 5
      %v1373 = vsel %vm777, %v1371, %v1372
      %v1374 = vrot.slane %v1328, 5
      %v1375 = vrot.slane %v1374, 4
      %v1376 = vrot.slane %v1329, 5
      %v1377 = vsel %vm777, %v1375, %v1376
      %v1378 = vunpack.c.l.b16 %v1349
      %v1379 = vunpack.c.l.b16 %v1353
      %v1380 = vunpack.c.l.b16 %v1357
      %v1381 = vunpack.c.l.b16 %v1361
      %v1382 = vunpack.c.l.b16 %v1365
      %v1383 = vunpack.c.l.b16 %v1369
      %v1384 = vunpack.c.l.b16 %v1373
      %v1385 = vunpack.c.l.b16 %v1377
      %v1386 = vpack.c.b16 %v1379, %v1378
      %v1387 = vpack.c.b16 %v1381, %v1380
      %v1388 = vpack.c.b16 %v1383, %v1382
      %v1389 = vpack.c.b16 %v1385, %v1384
      %1394 = vst.msk [vmem:[#allocation3 + $0x20] sm:$0xff] %vm578, %v1386
      %1395 = vst.msk [vmem:[#allocation3 + $0x48] sm:$0xff] %vm578, %v1387
      %1396 = vst.msk [vmem:[#allocation3 + $0x70] sm:$0xff] %vm578, %v1388
      %1397 = vst.msk [vmem:[#allocation3 + $0x98] sm:$0xff] %vm578, %v1389
      %v1398 = vld [vmem:[#allocation3] sm:$0xff]
      %v1399 = vld [vmem:[#allocation3 + $0x8] sm:$0xff]
      %v1400 = vld [vmem:[#allocation3 + $0x10] sm:$0xff]
      %v1401 = vld [vmem:[#allocation3 + $0x18] sm:$0xff]
      %v1402 = vld [vmem:[#allocation3 + $0x20] sm:$0xff]
      %v1403 = vld [vmem:[#allocation3 + $0x28] sm:$0xff]
      %v1404 = vld [vmem:[#allocation3 + $0x30] sm:$0xff]
      %v1405 = vld [vmem:[#allocation3 + $0x38] sm:$0xff]
      %v1406 = vld [vmem:[#allocation3 + $0x40] sm:$0xff]
      %v1407 = vld [vmem:[#allocation3 + $0x48] sm:$0xff]
      %v1408 = vld [vmem:[#allocation3 + $0x50] sm:$0xff]
      %v1409 = vld [vmem:[#allocation3 + $0x58] sm:$0xff]
      %v1410 = vld [vmem:[#allocation3 + $0x60] sm:$0xff]
      %v1411 = vld [vmem:[#allocation3 + $0x68] sm:$0xff]
      %v1412 = vld [vmem:[#allocation3 + $0x70] sm:$0xff]
      %v1413 = vld [vmem:[#allocation3 + $0x78] sm:$0xff]
      %v1414 = vld [vmem:[#allocation3 + $0x80] sm:$0xff]
      %v1415 = vld [vmem:[#allocation3 + $0x88] sm:$0xff]
      %v1416 = vld [vmem:[#allocation3 + $0x90] sm:$0xff]
      %v1417 = vld [vmem:[#allocation3 + $0x98] sm:$0xff]
      %v1418 = vld [vmem:[%s1] sm:$0xf]
      %v1419 = vld [vmem:[%s1 + $0x4] sm:$0xf]
      %v1420 = vld [vmem:[%s1 + $0x8] sm:$0xf]
      %v1421 = vld [vmem:[%s1 + $0xc] sm:$0xf]
      %v1422 = vld [vmem:[%s1 + $0x10] sm:$0xf]
      %v1423 = vld [vmem:[%s1 + $0x14] sm:$0xf]
      %v1424 = vld [vmem:[%s1 + $0x18] sm:$0xf]
      %v1425 = vld [vmem:[%s1 + $0x1c] sm:$0xf]
      %v1426 = vld [vmem:[%s1 + $0x20] sm:$0xf]
      %v1427 = vld [vmem:[%s1 + $0x24] sm:$0xf]
      %v1428 = vld [vmem:[%s1 + $0x28] sm:$0xf]
      %v1429 = vld [vmem:[%s1 + $0x2c] sm:$0xf]
      %v1430 = vld [vmem:[%s1 + $0x30] sm:$0xf]
      %v1431 = vld [vmem:[%s1 + $0x34] sm:$0xf]
      %v1432 = vld [vmem:[%s1 + $0x38] sm:$0xf]
      %v1433 = vld [vmem:[%s1 + $0x3c] sm:$0xf]
      %v1434 = vld [vmem:[%s1 + $0x40] sm:$0xf]
      %v1435 = vld [vmem:[%s1 + $0x44] sm:$0xf]
      %v1436 = vld [vmem:[%s1 + $0x48] sm:$0xf]
      %v1437 = vld [vmem:[%s1 + $0x4c] sm:$0xf]
      %v1438 = vld [vmem:[%s1 + $0x50] sm:$0xf]
      %v1439 = vld [vmem:[%s1 + $0x54] sm:$0xf]
      %v1440 = vld [vmem:[%s1 + $0x58] sm:$0xf]
      %v1441 = vld [vmem:[%s1 + $0x5c] sm:$0xf]
      %v1442 = vld [vmem:[%s1 + $0x60] sm:$0xf]
      %v1443 = vld [vmem:[%s1 + $0x64] sm:$0xf]
      %v1444 = vld [vmem:[%s1 + $0x68] sm:$0xf]
      %v1445 = vld [vmem:[%s1 + $0x6c] sm:$0xf]
      %v1446 = vld [vmem:[%s1 + $0x70] sm:$0xf]
      %v1447 = vld [vmem:[%s1 + $0x74] sm:$0xf]
      %v1448 = vld [vmem:[%s1 + $0x78] sm:$0xf]
      %v1449 = vld [vmem:[%s1 + $0x7c] sm:$0xf]
      %v1450 = vld [vmem:[%s1 + $0x80] sm:$0xf]
      %v1451 = vld [vmem:[%s1 + $0x84] sm:$0xf]
      %v1452 = vld [vmem:[%s1 + $0x88] sm:$0xf]
      %v1453 = vld [vmem:[%s1 + $0x8c] sm:$0xf]
      %v1454 = vld [vmem:[%s1 + $0x90] sm:$0xf]
      %v1455 = vld [vmem:[%s1 + $0x94] sm:$0xf]
      %v1456 = vld [vmem:[%s1 + $0x98] sm:$0xf]
      %v1457 = vld [vmem:[%s1 + $0x9c] sm:$0xf]
      %v1458 = vld [vmem:[%s1 + $0xa0] sm:$0xf]
      %v1459 = vld [vmem:[%s1 + $0xa4] sm:$0xf]
      %v1460 = vld [vmem:[%s1 + $0xa8] sm:$0xf]
      %v1461 = vld [vmem:[%s1 + $0xac] sm:$0xf]
      %v1462 = vld [vmem:[%s1 + $0xb0] sm:$0xf]
      %v1463 = vld [vmem:[%s1 + $0xb4] sm:$0xf]
      %v1464 = vld [vmem:[%s1 + $0xb8] sm:$0xf]
      %v1465 = vld [vmem:[%s1 + $0xbc] sm:$0xf]
      %v1466 = vld [vmem:[%s1 + $0xc0] sm:$0xf]
      %v1467 = vld [vmem:[%s1 + $0xc4] sm:$0xf]
      %v1468 = vld [vmem:[%s1 + $0xc8] sm:$0xf]
      %v1469 = vld [vmem:[%s1 + $0xcc] sm:$0xf]
      %v1470 = vld [vmem:[%s1 + $0xd0] sm:$0xf]
      %v1471 = vld [vmem:[%s1 + $0xd4] sm:$0xf]
      %v1472 = vld [vmem:[%s1 + $0xd8] sm:$0xf]
      %v1473 = vld [vmem:[%s1 + $0xdc] sm:$0xf]
      %v1474 = vld [vmem:[%s1 + $0xe0] sm:$0xf]
      %v1475 = vld [vmem:[%s1 + $0xe4] sm:$0xf]
      %v1476 = vld [vmem:[%s1 + $0xe8] sm:$0xf]
      %v1477 = vld [vmem:[%s1 + $0xec] sm:$0xf]
      %v1478 = vld [vmem:[%s1 + $0xf0] sm:$0xf]
      %v1479 = vld [vmem:[%s1 + $0xf4] sm:$0xf]
      %v1480 = vld [vmem:[%s1 + $0xf8] sm:$0xf]
      %v1481 = vld [vmem:[%s1 + $0xfc] sm:$0xf]
      %v1482 = vld [vmem:[%s1 + $0x100] sm:$0xf]
      %v1483 = vld [vmem:[%s1 + $0x104] sm:$0xf]
      %v1484 = vld [vmem:[%s1 + $0x108] sm:$0xf]
      %v1485 = vld [vmem:[%s1 + $0x10c] sm:$0xf]
      %v1486 = vld [vmem:[%s1 + $0x110] sm:$0xf]
      %v1487 = vld [vmem:[%s1 + $0x114] sm:$0xf]
      %v1488 = vld [vmem:[%s1 + $0x118] sm:$0xf]
      %v1489 = vld [vmem:[%s1 + $0x11c] sm:$0xf]
      %v1562 = vunpack.c.l.b16 %v1418
      %v1563 = vunpack.c.l.b16 %v1419
      %v1564 = vunpack.c.l.b16 %v1420
      %v1565 = vunpack.c.l.b16 %v1421
      %v1566 = vunpack.c.l.b16 %v1422
      %v1567 = vunpack.c.l.b16 %v1423
      %v1568 = vunpack.c.l.b16 %v1424
      %v1569 = vunpack.c.l.b16 %v1425
      %v1570 = vunpack.c.l.b16 %v1426
      %v1571 = vunpack.c.l.b16 %v1427
      %v1572 = vunpack.c.l.b16 %v1428
      %v1573 = vunpack.c.l.b16 %v1429
      %v1574 = vunpack.c.l.b16 %v1430
      %v1575 = vunpack.c.l.b16 %v1431
      %v1576 = vunpack.c.l.b16 %v1432
      %v1577 = vunpack.c.l.b16 %v1433
      %v1578 = vunpack.c.l.b16 %v1434
      %v1579 = vunpack.c.l.b16 %v1435
      %v1580 = vunpack.c.l.b16 %v1436
      %v1581 = vunpack.c.l.b16 %v1437
      %v1582 = vunpack.c.l.b16 %v1438
      %v1583 = vunpack.c.l.b16 %v1439
      %v1584 = vunpack.c.l.b16 %v1440
      %v1585 = vunpack.c.l.b16 %v1441
      %v1586 = vunpack.c.l.b16 %v1442
      %v1587 = vunpack.c.l.b16 %v1443
      %v1588 = vunpack.c.l.b16 %v1444
      %v1589 = vunpack.c.l.b16 %v1445
      %v1590 = vunpack.c.l.b16 %v1446
      %v1591 = vunpack.c.l.b16 %v1447
      %v1592 = vunpack.c.l.b16 %v1448
      %v1593 = vunpack.c.l.b16 %v1449
      %v1594 = vunpack.c.l.b16 %v1450
      %v1595 = vunpack.c.l.b16 %v1451
      %v1596 = vunpack.c.l.b16 %v1452
      %v1597 = vunpack.c.l.b16 %v1453
      %v1598 = vunpack.c.l.b16 %v1454
      %v1599 = vunpack.c.l.b16 %v1455
      %v1600 = vunpack.c.l.b16 %v1456
      %v1601 = vunpack.c.l.b16 %v1457
      %v1602 = vunpack.c.l.b16 %v1458
      %v1603 = vunpack.c.l.b16 %v1459
      %v1604 = vunpack.c.l.b16 %v1460
      %v1605 = vunpack.c.l.b16 %v1461
      %v1606 = vunpack.c.l.b16 %v1462
      %v1607 = vunpack.c.l.b16 %v1463
      %v1608 = vunpack.c.l.b16 %v1464
      %v1609 = vunpack.c.l.b16 %v1465
      %v1610 = vunpack.c.l.b16 %v1466
      %v1611 = vunpack.c.l.b16 %v1467
      %v1612 = vunpack.c.l.b16 %v1468
      %v1613 = vunpack.c.l.b16 %v1469
      %v1614 = vunpack.c.l.b16 %v1470
      %v1615 = vunpack.c.l.b16 %v1471
      %v1616 = vunpack.c.l.b16 %v1472
      %v1617 = vunpack.c.l.b16 %v1473
      %v1618 = vunpack.c.l.b16 %v1474
      %v1619 = vunpack.c.l.b16 %v1475
      %v1620 = vunpack.c.l.b16 %v1476
      %v1621 = vunpack.c.l.b16 %v1477
      %v1622 = vunpack.c.l.b16 %v1478
      %v1623 = vunpack.c.l.b16 %v1479
      %v1624 = vunpack.c.l.b16 %v1480
      %v1625 = vunpack.c.l.b16 %v1481
      %v1626 = vunpack.c.l.b16 %v1482
      %v1627 = vunpack.c.l.b16 %v1483
      %v1628 = vunpack.c.l.b16 %v1484
      %v1629 = vunpack.c.l.b16 %v1485
      %v1630 = vunpack.c.l.b16 %v1486
      %v1631 = vunpack.c.l.b16 %v1487
      %v1632 = vunpack.c.l.b16 %v1488
      %v1633 = vunpack.c.l.b16 %v1489
      %v1634 = vpack.c.b16 %v1563, %v1562
      %v1635 = vpack.c.b16 %v1565, %v1564
      %v1636 = vpack.c.b16 %v1567, %v1566
      %v1637 = vpack.c.b16 %v1569, %v1568
      %v1638 = vpack.c.b16 %v1571, %v1570
      %v1639 = vpack.c.b16 %v1573, %v1572
      %v1640 = vpack.c.b16 %v1575, %v1574
      %v1641 = vpack.c.b16 %v1577, %v1576
      %v1642 = vpack.c.b16 %v1579, %v1578
      %v1643 = vpack.c.b16 %v1581, %v1580
      %v1644 = vpack.c.b16 %v1583, %v1582
      %v1645 = vpack.c.b16 %v1585, %v1584
      %v1646 = vpack.c.b16 %v1587, %v1586
      %v1647 = vpack.c.b16 %v1589, %v1588
      %v1648 = vpack.c.b16 %v1591, %v1590
      %v1649 = vpack.c.b16 %v1593, %v1592
      %v1650 = vpack.c.b16 %v1595, %v1594
      %v1651 = vpack.c.b16 %v1597, %v1596
      %v1652 = vpack.c.b16 %v1599, %v1598
      %v1653 = vpack.c.b16 %v1601, %v1600
      %v1654 = vpack.c.b16 %v1603, %v1602
      %v1655 = vpack.c.b16 %v1605, %v1604
      %v1656 = vpack.c.b16 %v1607, %v1606
      %v1657 = vpack.c.b16 %v1609, %v1608
      %v1658 = vpack.c.b16 %v1611, %v1610
      %v1659 = vpack.c.b16 %v1613, %v1612
      %v1660 = vpack.c.b16 %v1615, %v1614
      %v1661 = vpack.c.b16 %v1617, %v1616
      %v1662 = vpack.c.b16 %v1619, %v1618
      %v1663 = vpack.c.b16 %v1621, %v1620
      %v1664 = vpack.c.b16 %v1623, %v1622
      %v1665 = vpack.c.b16 %v1625, %v1624
      %v1666 = vpack.c.b16 %v1627, %v1626
      %v1667 = vpack.c.b16 %v1629, %v1628
      %v1668 = vpack.c.b16 %v1631, %v1630
      %v1669 = vpack.c.b16 %v1633, %v1632
      %v1707 = vsel %vm578, %v1402, 0
      %v1710 = vsel %vm578, %v1407, 0
      %v1713 = vsel %vm578, %v1412, 0
      %v1716 = vsel %vm578, %v1417, 0
      %1718 = vmatprep.subr.bf16.mxu0 0
      %1719 = vmatpush1.bf16.msra.mxu0 %v1634
      %1720 = vmatprep.subr.bf16.mxu0 0
      %1721 = vmatpush1.bf16.msra.mxu0 %v1635
      %1722 = vmatprep.subr.bf16.mxu0 0
      %1723 = vmatpush1.bf16.msra.mxu0 %v1636
      %1724 = vmatprep.subr.bf16.mxu0 0
      %1725 = vmatpush1.bf16.msra.mxu0 %v1637
      %1726 = vmatprep.subr.bf16.mxu0 0
      %1727 = vmatpush1.bf16.msra.mxu0 %v1638
      %1728 = vmatprep.subr.bf16.mxu0 0
      %1729 = vmatpush1.bf16.msra.mxu0 %v1639
      %1730 = vmatprep.subr.bf16.mxu0 0
      %1731 = vmatpush1.bf16.msra.mxu0 %v1640
      %1732 = vmatprep.subr.bf16.mxu0 0
      %1733 = vmatpush1.bf16.msra.mxu0 %v1641
      %1734 = vmatprep.subr.bf16.mxu0 0
      %1735 = vmatpush1.bf16.msra.mxu0 %v1642
      %1736 = vmatprep.subr.bf16.mxu0 0
      %1737 = vmatpush1.bf16.msra.mxu0 %v1643
      %1738 = vmatprep.subr.bf16.mxu0 0
      %1739 = vmatpush1.bf16.msra.mxu0 %v1644
      %1740 = vmatprep.subr.bf16.mxu0 0
      %1741 = vmatpush1.bf16.msra.mxu0 %v1645
      %1742 = vmatprep.subr.bf16.mxu0 0
      %1743 = vmatpush1.bf16.msra.mxu0 %v1646
      %1744 = vmatprep.subr.bf16.mxu0 0
      %1745 = vmatpush1.bf16.msra.mxu0 %v1647
      %1746 = vmatprep.subr.bf16.mxu0 0
      %1747 = vmatpush1.bf16.msra.mxu0 %v1648
      %1748 = vmatprep.subr.bf16.mxu0 0
      %1749 = vmatpush1.bf16.msra.mxu0 %v1649
      %1750 = vmatprep.mubr.bf16.mxu0 %v1399
      %1751 = vmatmul.mubr.bf16.gmra.mrb[0].mxu0 %v1398
      %v1752 = vpop.f32.mrb[0].mxu0
      %v1753 = vadd.f32 0.0, %v1752
      %v1754 = vpop.f32.mrb[0].mxu0
      %v1755 = vpop.f32.mrb[0].mxu0
      %v1756 = vadd.f32 0.0, %v1755
      %v1757 = vpop.f32.mrb[0].mxu0
      %1758 = vmatprep.mubr.bf16.mxu0 %v1404
      %1759 = vmatmul.mubr.bf16.gmra.mrb[0].mxu0 %v1403
      %v1760 = vpop.f32.mrb[0].mxu0
      %v1761 = vadd.f32 0.0, %v1760
      %v1762 = vpop.f32.mrb[0].mxu0
      %v1763 = vpop.f32.mrb[0].mxu0
      %v1764 = vadd.f32 0.0, %v1763
      %v1765 = vpop.f32.mrb[0].mxu0
      %1766 = vmatprep.mubr.bf16.mxu0 %v1409
      %1767 = vmatmul.mubr.bf16.gmra.mrb[0].mxu0 %v1408
      %v1768 = vpop.f32.mrb[0].mxu0
      %v1769 = vadd.f32 0.0, %v1768
      %v1770 = vpop.f32.mrb[0].mxu0
      %v1771 = vpop.f32.mrb[0].mxu0
      %v1772 = vadd.f32 0.0, %v1771
      %v1773 = vpop.f32.mrb[0].mxu0
      %1774 = vmatprep.mubr.bf16.mxu0 %v1414
      %1775 = vmatmul.mubr.bf16.gmra.mrb[0].mxu0 %v1413
      %v1776 = vpop.f32.mrb[0].mxu0
      %v1777 = vadd.f32 0.0, %v1776
      %v1778 = vpop.f32.mrb[0].mxu0
      %v1779 = vpop.f32.mrb[0].mxu0
      %v1780 = vadd.f32 0.0, %v1779
      %v1781 = vpop.f32.mrb[0].mxu0
      %1782 = vdwg.mxu0
      %1783 = vmatprep.subr.bf16.mxu0 0
      %1784 = vmatpush1.bf16.msra.mxu0 %v1650
      %1785 = vmatprep.subr.bf16.mxu0 0
      %1786 = vmatpush1.bf16.msra.mxu0 %v1651
      %1787 = vmatprep.subr.bf16.mxu0 0
      %1788 = vmatpush1.bf16.msra.mxu0 %v1652
      %1789 = vmatprep.subr.bf16.mxu0 0
      %1790 = vmatpush1.bf16.msra.mxu0 %v1653
      %1791 = vmatprep.subr.bf16.mxu0 0
      %1792 = vmatpush1.bf16.msra.mxu0 %v1654
      %1793 = vmatprep.subr.bf16.mxu0 0
      %1794 = vmatpush1.bf16.msra.mxu0 %v1655
      %1795 = vmatprep.subr.bf16.mxu0 0
      %1796 = vmatpush1.bf16.msra.mxu0 %v1656
      %1797 = vmatprep.subr.bf16.mxu0 0
      %1798 = vmatpush1.bf16.msra.mxu0 %v1657
      %1799 = vmatprep.subr.bf16.mxu0 0
      %1800 = vmatpush1.bf16.msra.mxu0 %v1658
      %1801 = vmatprep.subr.bf16.mxu0 0
      %1802 = vmatpush1.bf16.msra.mxu0 %v1659
      %1803 = vmatprep.subr.bf16.mxu0 0
      %1804 = vmatpush1.bf16.msra.mxu0 %v1660
      %1805 = vmatprep.subr.bf16.mxu0 0
      %1806 = vmatpush1.bf16.msra.mxu0 %v1661
      %1807 = vmatprep.subr.bf16.mxu0 0
      %1808 = vmatpush1.bf16.msra.mxu0 %v1662
      %1809 = vmatprep.subr.bf16.mxu0 0
      %1810 = vmatpush1.bf16.msra.mxu0 %v1663
      %1811 = vmatprep.subr.bf16.mxu0 0
      %1812 = vmatpush1.bf16.msra.mxu0 %v1664
      %1813 = vmatprep.subr.bf16.mxu0 0
      %1814 = vmatpush1.bf16.msra.mxu0 %v1665
      %1815 = vmatprep.mubr.bf16.mxu0 %v1401
      %1816 = vmatmul.mubr.bf16.gmra.mrb[0].mxu0 %v1400
      %v1817 = vpop.f32.mrb[0].mxu0
      %v1818 = vadd.f32 %v1753, %v1817
      %v1819 = vpop.f32.mrb[0].mxu0
      %v1820 = vpop.f32.mrb[0].mxu0
      %v1821 = vadd.f32 %v1756, %v1820
      %v1822 = vpop.f32.mrb[0].mxu0
      %1823 = vmatprep.mubr.bf16.mxu0 %v1406
      %1824 = vmatmul.mubr.bf16.gmra.mrb[0].mxu0 %v1405
      %v1825 = vpop.f32.mrb[0].mxu0
      %v1826 = vadd.f32 %v1761, %v1825
      %v1827 = vpop.f32.mrb[0].mxu0
      %v1828 = vpop.f32.mrb[0].mxu0
      %v1829 = vadd.f32 %v1764, %v1828
      %v1830 = vpop.f32.mrb[0].mxu0
      %1831 = vmatprep.mubr.bf16.mxu0 %v1411
      %1832 = vmatmul.mubr.bf16.gmra.mrb[0].mxu0 %v1410
      %v1833 = vpop.f32.mrb[0].mxu0
      %v1834 = vadd.f32 %v1769, %v1833
      %v1835 = vpop.f32.mrb[0].mxu0
      %v1836 = vpop.f32.mrb[0].mxu0
      %v1837 = vadd.f32 %v1772, %v1836
      %v1838 = vpop.f32.mrb[0].mxu0
      %1839 = vmatprep.mubr.bf16.mxu0 %v1416
      %1840 = vmatmul.mubr.bf16.gmra.mrb[0].mxu0 %v1415
      %v1841 = vpop.f32.mrb[0].mxu0
      %v1842 = vadd.f32 %v1777, %v1841
      %v1843 = vpop.f32.mrb[0].mxu0
      %v1844 = vpop.f32.mrb[0].mxu0
      %v1845 = vadd.f32 %v1780, %v1844
      %v1846 = vpop.f32.mrb[0].mxu0
      %1847 = vdwg.mxu0
      %1848 = vmatprep.subr.bf16.mxu0 0
      %1849 = vmatpush1.bf16.msra.mxu0 %v1666
      %1850 = vmatprep.subr.bf16.mxu0 0
      %1851 = vmatpush1.bf16.msra.mxu0 %v1667
      %1852 = vmatprep.subr.bf16.mxu0 0
      %1853 = vmatpush1.bf16.msra.mxu0 %v1668
      %1854 = vmatprep.subr.bf16.mxu0 0
      %1855 = vmatpush1.bf16.msra.mxu0 %v1669
      %1856 = vmatprep.subr.bf16.mxu0 0
      %1857 = vmatpush1.bf16.msra.mxu0 0
      %1858 = vmatprep.subr.bf16.mxu0 0
      %1859 = vmatpush1.bf16.msra.mxu0 0
      %1860 = vmatprep.subr.bf16.mxu0 0
      %1861 = vmatpush1.bf16.msra.mxu0 0
      %1862 = vmatprep.subr.bf16.mxu0 0
      %1863 = vmatpush1.bf16.msra.mxu0 0
      %1864 = vmatprep.subr.bf16.mxu0 0
      %1865 = vmatpush1.bf16.msra.mxu0 0
      %1866 = vmatprep.subr.bf16.mxu0 0
      %1867 = vmatpush1.bf16.msra.mxu0 0
      %1868 = vmatprep.subr.bf16.mxu0 0
      %1869 = vmatpush1.bf16.msra.mxu0 0
      %1870 = vmatprep.subr.bf16.mxu0 0
      %1871 = vmatpush1.bf16.msra.mxu0 0
      %1872 = vmatprep.subr.bf16.mxu0 0
      %1873 = vmatpush1.bf16.msra.mxu0 0
      %1874 = vmatprep.subr.bf16.mxu0 0
      %1875 = vmatpush1.bf16.msra.mxu0 0
      %1876 = vmatprep.subr.bf16.mxu0 0
      %1877 = vmatpush1.bf16.msra.mxu0 0
      %1878 = vmatprep.subr.bf16.mxu0 0
      %1879 = vmatpush1.bf16.msra.mxu0 0
      %1880 = vmatprep.mubr.bf16.mxu0 0
      %1881 = vmatmul.mubr.bf16.gmra.mrb[0].mxu0 %v1707
      %v1882 = vpop.f32.mrb[0].mxu0
      %v1883 = vadd.f32 %v1818, %v1882
      %v1884 = vpop.f32.mrb[0].mxu0
      %v1885 = vpop.f32.mrb[0].mxu0
      %v1886 = vadd.f32 %v1821, %v1885
      %v1887 = vpop.f32.mrb[0].mxu0
      %1888 = vmatprep.mubr.bf16.mxu0 0
      %1889 = vmatmul.mubr.bf16.gmra.mrb[0].mxu0 %v1710
      %v1890 = vpop.f32.mrb[0].mxu0
      %v1891 = vadd.f32 %v1826, %v1890
      %v1892 = vpop.f32.mrb[0].mxu0
      %v1893 = vpop.f32.mrb[0].mxu0
      %v1894 = vadd.f32 %v1829, %v1893
      %v1895 = vpop.f32.mrb[0].mxu0
      %1896 = vmatprep.mubr.bf16.mxu0 0
      %1897 = vmatmul.mubr.bf16.gmra.mrb[0].mxu0 %v1713
      %v1898 = vpop.f32.mrb[0].mxu0
      %v1899 = vadd.f32 %v1834, %v1898
      %v1900 = vpop.f32.mrb[0].mxu0
      %v1901 = vpop.f32.mrb[0].mxu0
      %v1902 = vadd.f32 %v1837, %v1901
      %v1903 = vpop.f32.mrb[0].mxu0
      %1904 = vmatprep.mubr.bf16.mxu0 0
      %1905 = vmatmul.mubr.bf16.gmra.mrb[0].mxu0 %v1716
      %v1906 = vpop.f32.mrb[0].mxu0
      %v1907 = vadd.f32 %v1842, %v1906
      %v1908 = vpop.f32.mrb[0].mxu0
      %v1909 = vpop.f32.mrb[0].mxu0
      %v1910 = vadd.f32 %v1845, %v1909
      %v1911 = vpop.f32.mrb[0].mxu0
      %1912 = vdwg.mxu0
      %v1913 = vsel %vm578, %v1883, 0.0
      %v1914 = vsel %vm578, %v1886, 0.0
      %v1915 = vadd.f32 %v1913, %v1914
      %v1916 = vsel %vm578, %v1891, 0.0
      %v1917 = vadd.f32 %v1915, %v1916
      %v1918 = vsel %vm578, %v1894, 0.0
      %v1919 = vadd.f32 %v1917, %v1918
      %v1920 = vsel %vm578, %v1899, 0.0
      %v1921 = vadd.f32 %v1919, %v1920
      %v1922 = vsel %vm578, %v1902, 0.0
      %v1923 = vadd.f32 %v1921, %v1922
      %v1924 = vsel %vm578, %v1907, 0.0
      %v1925 = vadd.f32 %v1923, %v1924
      %v1926 = vsel %vm578, %v1910, 0.0
      %v1927 = vadd.f32 %v1925, %v1926
      %v1928 = vrot.slane %v1927, 4
      %v1929 = vadd.f32 %v1927, %v1928
      %v1930 = vrot.slane %v1929, 2
      %v1931 = vadd.f32 %v1929, %v1930
      %v1932 = vrot.slane %v1931, 1
      %v1933 = vadd.f32 %v1931, %v1932
      %vm1934 = vcmask 516096
      %1935 = vst.msk [vmem:[%s293] sm:$0x1] %vm1934, %v1933
      %v1936 = vmul.f32 %v1883, %v1883
      %v1937 = vmul.f32 %v1886, %v1886
      %v1938 = vmul.f32 %v1891, %v1891
      %v1939 = vmul.f32 %v1894, %v1894
      %v1940 = vmul.f32 %v1899, %v1899
      %v1941 = vmul.f32 %v1902, %v1902
      %v1942 = vmul.f32 %v1907, %v1907
      %v1943 = vmul.f32 %v1910, %v1910
      %v1944 = vsel %vm578, %v1936, 0.0
      %v1945 = vsel %vm578, %v1937, 0.0
      %v1946 = vadd.f32 %v1944, %v1945
      %v1947 = vsel %vm578, %v1938, 0.0
      %v1948 = vadd.f32 %v1946, %v1947
      %v1949 = vsel %vm578, %v1939, 0.0
      %v1950 = vadd.f32 %v1948, %v1949
      %v1951 = vsel %vm578, %v1940, 0.0
      %v1952 = vadd.f32 %v1950, %v1951
      %v1953 = vsel %vm578, %v1941, 0.0
      %v1954 = vadd.f32 %v1952, %v1953
      %v1955 = vsel %vm578, %v1942, 0.0
      %v1956 = vadd.f32 %v1954, %v1955
      %v1957 = vsel %vm578, %v1943, 0.0
      %v1958 = vadd.f32 %v1956, %v1957
      %v1959 = vrot.slane %v1958, 4
      %v1960 = vadd.f32 %v1958, %v1959
      %v1961 = vrot.slane %v1960, 2
      %v1962 = vadd.f32 %v1960, %v1961
      %v1963 = vrot.slane %v1962, 1
      %v1964 = vadd.f32 %v1962, %v1963
      %1965 = vst.msk [vmem:[%s293 + $0x1] sm:$0x1] %vm1934, %v1964
      %v1966 = vld [vmem:[%s2] sm:$0x1]
      %v1968 = vlaneseq
      %v1969 = vshrl.u32 %v1968, 7
      %v1970 = vsub.s32 0, %v1969
      %v1971 = vrot.slane %v1966, %v1970
      %v1973 = vadd.f32 %v1883, %v1971
      %v1974 = vadd.f32 %v1886, %v1971
      %v1975 = vadd.f32 %v1891, %v1971
      %v1976 = vadd.f32 %v1894, %v1971
      %v1977 = vadd.f32 %v1899, %v1971
      %v1978 = vadd.f32 %v1902, %v1971
      %v1979 = vadd.f32 %v1907, %v1971
      %v1980 = vadd.f32 %v1910, %v1971
      %v1981 = vpack.c.bf16 %v1974, %v1973
      %v1982 = vpack.c.bf16 %v1976, %v1975
      %v1983 = vpack.c.bf16 %v1978, %v1977
      %v1984 = vpack.c.bf16 %v1980, %v1979
      %v1989 = vunpack.c.l.b16 %v1981
      %v1990 = vunpack.c.h.b16 %v1981
      %v1991 = vunpack.c.l.b16 %v1982
      %v1992 = vunpack.c.h.b16 %v1982
      %v1993 = vunpack.c.l.b16 %v1983
      %v1994 = vunpack.c.h.b16 %v1983
      %v1995 = vunpack.c.l.b16 %v1984
      %v1996 = vunpack.c.h.b16 %v1984
      %v1997 = vpack.c.b16 %v1989, %v1989
      %v1998 = vpack.c.b16 %v1990, %v1990
      %v1999 = vpack.c.b16 %v1991, %v1991
      %v2000 = vpack.c.b16 %v1992, %v1992
      %v2001 = vpack.c.b16 %v1993, %v1993
      %v2002 = vpack.c.b16 %v1994, %v1994
      %v2003 = vpack.c.b16 %v1995, %v1995
      %v2004 = vpack.c.b16 %v1996, %v1996
      %vm2013 = vcmask 519168
      %2014 = vst.msk [vmem:[%s285] sm:$0xf] %vm2013, %v1997
      %2015 = vst.msk [vmem:[%s285 + $0x4] sm:$0xf] %vm2013, %v1998
      %2016 = vst.msk [vmem:[%s285 + $0x8] sm:$0xf] %vm2013, %v1999
      %2017 = vst.msk [vmem:[%s285 + $0xc] sm:$0xf] %vm2013, %v2000
      %2018 = vst.msk [vmem:[%s285 + $0x10] sm:$0xf] %vm2013, %v2001
      %2019 = vst.msk [vmem:[%s285 + $0x14] sm:$0xf] %vm2013, %v2002
      %2020 = vst.msk [vmem:[%s285 + $0x18] sm:$0xf] %vm2013, %v2003
      %2021 = vst.msk [vmem:[%s285 + $0x1c] sm:$0xf] %vm2013, %v2004
      %s2022 = smul.u32 8, %s23
      %p2023 = scmp.lt.s32.totalorder %s22, 1
      %s2024 = scalar_select %p2023, %s22, 1
      %p2025 = scmp.lt.s32.totalorder %s2022, 7
      %s2026 = scalar_select %p2025, %s2022, 7
      %s2027 = smul.addr %s2024, 8
      %s2028 = sadd.s32 %s2026, %s2027
      %s2029 = smul.addr %s2028, 4
      %s2030 = scalar_lea.vmem %s5, %s2029
      %p2031 = scmp.lt.s32.totalorder %s22, 1
      %s2032 = scalar_select %p2031, %s22, 1
      %p2033 = scmp.lt.s32.totalorder %s23, 0
      %s2034 = scalar_select %p2033, %s23, 0
      %s2035 = sadd.s32 %s2034, %s2032
      %s2036 = smul.addr %s2035, 2
      %s2037 = scalar_lea.vmem %s6, %s2036
      // Predicated region
      $region45: #{fwd.7} parent=39 // pred_check
        %p2038 = pneg %p160
      $region46: #{fwd.7} parent=39 // pred_check_branch
        %2040 = sbr.rel (%p2038) target = $region48
      $region47: #{fwd.7} parent=39 // pred_region
        %s2041 = smul.u32 8, %s23
      $region48: #{fwd.7} parent=39 // pred_fallthru
        _
      // Predicated region
      $region49: #{fwd.7} parent=39 // pred_check
        %p2042 = pneg %p188
      $region50: #{fwd.7} parent=39 // pred_check_branch
        %2044 = sbr.rel (%p2042) target = $region52
      $region51: #{fwd.7} parent=39 // pred_region
        _
      $region52: #{fwd.7} parent=39 // pred_fallthru
        _
    $region40: #{fwd.7} parent=5 // pred_fallthru
      _
    %p2045 = scmp.le.s32.totalorder 2, %s13
    // Predicated region
    $region53: #{fwd.7} parent=5 // pred_check
      %p2046 = pneg %p2045
    $region54: #{fwd.7} parent=5 // pred_check_branch
      %2048 = sbr.rel (%p2046) target = $region56
    $region55: #{fwd.7} parent=5 // pred_region
      %s2049 = ssub.s32 %s13, 2
      // Predicated region
      $region57: #{fwd.7} parent=55 // pred_check
        %p2050 = pneg %p166
      $region58: #{fwd.7} parent=55 // pred_check_branch
        %2052 = sbr.rel (%p2050) target = $region60
      $region59: #{fwd.7} parent=55 // pred_region
        %s2053 = smul.u32 8, %s25
        %p2054 = scmp.lt.s32.totalorder %s24, 1
        %s2055 = scalar_select %p2054, %s24, 1
        %p2056 = scmp.lt.s32.totalorder %s2053, 7
        %s2057 = scalar_select %p2056, %s2053, 7
        %s2058 = smul.addr %s2055, 8
        %s2059 = sadd.s32 %s2057, %s2058
        %s2060 = smul.addr %s2059, 4
        %s2061 = scalar_lea.vmem %s5, %s2060
      $region60: #{fwd.7} parent=55 // pred_fallthru
        _
      // Predicated region
      $region61: #{fwd.7} parent=55 // pred_check
        %p2062 = pneg %p194
      $region62: #{fwd.7} parent=55 // pred_check_branch
        %2064 = sbr.rel (%p2062) target = $region64
      $region63: #{fwd.7} parent=55 // pred_region
        %p2065 = scmp.lt.s32.totalorder %s24, 1
        %s2066 = scalar_select %p2065, %s24, 1
        %p2067 = scmp.lt.s32.totalorder %s25, 0
        %s2068 = scalar_select %p2067, %s25, 0
        %s2069 = sadd.s32 %s2068, %s2066
        %s2070 = smul.addr %s2069, 2
        %s2071 = scalar_lea.vmem %s6, %s2070
      $region64: #{fwd.7} parent=55 // pred_fallthru
        _
    $region56: #{fwd.7} parent=5 // pred_fallthru
      _
  $region6: #{fwd.7} parent=0 // loop_footer
    %s17 = sadd.s32 1, %s13
  $region7: #{fwd.7} parent=0 // loop_footer_branch
    %12 = sbr.rel target = $region3
  $region8: #{fwd.7} parent=0 // loop_exit
    _

// kernel: fwd.11
$region0: #{fwd.11}
  #allocation0 [shape = 'u32[]', space=smem, size = 0x4, offset = 0x4, fixed_abs, tag = 'smem constant byte address 0x4 - core index']
  #allocation1 [shape = 'u32[144,128]{1,0:T(1,128)}', space=vmem, size = 0x12000, scoped, tag = 'internal scratch']
  %s0 = inlined_call_operand.vmem [shape: bf16[64,128], index: 0, kind: input, shape index: {}]
  %s1 = inlined_call_operand.vmem [shape: f32[64,128], index: 1, kind: input, shape index: {}]
  %s2 = inlined_call_operand.vmem [shape: f32[1,128], index: 2, kind: input, shape index: {}]
  %s3 = inlined_call_operand.vmem [shape: f32[1,128], index: 3, kind: input, shape index: {}]
  %s4 = inlined_call_operand.vmem [shape: f32[1,128], index: 4, kind: input, shape index: {}]
  %s5 = inlined_call_operand.vmem [shape: f32[1,128], index: 5, kind: input, shape index: {}]
  %s6 = inlined_call_operand.vmem [shape: f32[64,128], index: 6, kind: output, shape index: {}]
  %s7 = sld [smem:[#allocation0]]
  $region57: #{fwd.11} parent=0
    _
  %s9 = ssub.s32 1, %s7
  %s10 = scalar_select 0, %s9, %s7
  loop: start=0, step=1, limit=4
  $region2: #{fwd.11} parent=0 // loop_pre_header
    _
  $region3: #{fwd.11} parent=0 // loop_header
    %s12 = sphi 0, %s16
    %p13 = scmp.ge.s32.totalorder %s12, 4
    %s22 = sphi 0, %s24
    %s25 = sphi 0, %s22
    %s26 = sphi 0, %s25
    %s42 = sphi 0, %s26
    %s48 = sphi 0, %s50
    %s51 = sphi 0, %s48
    %s52 = sphi 0, %s51
    %s68 = sphi 0, %s52
    %s72 = sphi 0, %s72
    %s74 = sphi 0, %s72
    %s75 = sphi 0, %s74
    %s89 = sphi 0, %s75
    %s93 = sphi 0, %s93
    %s95 = sphi 0, %s93
    %s96 = sphi 0, %s95
    %s110 = sphi 0, %s96
    %s114 = sphi 0, %s114
    %s116 = sphi 0, %s114
    %s117 = sphi 0, %s116
    %s131 = sphi 0, %s117
    %s135 = sphi 0, %s135
    %s137 = sphi 0, %s135
    %s138 = sphi 0, %s137
    %s152 = sphi 0, %s138
    %s158 = sphi 0, %s160
    %s161 = sphi 0, %s158
    %s162 = sphi 0, %s161
    %s178 = sphi 0, %s162
  $region4: #{fwd.11} parent=0 // loop_header_branch
    %15 = sbr.rel (%p13) target = $region8
  $region5: #{fwd.11} parent=0 // loop_body
    %s17 = ssub.s32 %s12, 1
    %s18 = ssub.s32 %s12, 2
    %s19 = sadd.s32 %s12, 1
    %s20 = ssub.s32 %s12, %s19
    %p21 = scmp.eq.s32.totalorder %s20, 0
    %s23 = sadd.s32 %s22, 1
    %s24 = scalar_select %p21, %s22, %s23
    %p27 = pneg %p21
    %p28 = scmp.eq.s32.totalorder %s12, 1
    %p29 = por %p27, %p28
    %p30 = scmp.ne.s32.totalorder %s22, %s25
    %p31 = scmp.eq.s32.totalorder %s12, 0
    %p32 = por %p30, %p31
    %p33 = scmp.ne.s32.totalorder %s22, %s25
    %p34 = scmp.eq.s32.totalorder %s17, 1
    %p35 = por %p33, %p34
    %p36 = scmp.ne.s32.totalorder %s25, %s26
    %p37 = scmp.eq.s32.totalorder %s17, 0
    %p38 = por %p36, %p37
    %p39 = scmp.ne.s32.totalorder %s25, %s26
    %p40 = scmp.eq.s32.totalorder %s18, 1
    %p41 = por %p39, %p40
    %p43 = scmp.ne.s32.totalorder %s26, %s42
    %p44 = scmp.eq.s32.totalorder %s18, 0
    %p45 = por %p43, %p44
    %s46 = ssub.s32 %s12, %s19
    %p47 = scmp.eq.s32.totalorder %s46, 0
    %s49 = sadd.s32 %s48, 1
    %s50 = scalar_select %p47, %s48, %s49
    %p53 = pneg %p47
    %p54 = scmp.eq.s32.totalorder %s12, 1
    %p55 = por %p53, %p54
    %p56 = scmp.ne.s32.totalorder %s48, %s51
    %p57 = scmp.eq.s32.totalorder %s12, 0
    %p58 = por %p56, %p57
    %p59 = scmp.ne.s32.totalorder %s48, %s51
    %p60 = scmp.eq.s32.totalorder %s17, 1
    %p61 = por %p59, %p60
    %p62 = scmp.ne.s32.totalorder %s51, %s52
    %p63 = scmp.eq.s32.totalorder %s17, 0
    %p64 = por %p62, %p63
    %p65 = scmp.ne.s32.totalorder %s51, %s52
    %p66 = scmp.eq.s32.totalorder %s18, 1
    %p67 = por %p65, %p66
    %p69 = scmp.ne.s32.totalorder %s52, %s68
    %p70 = scmp.eq.s32.totalorder %s18, 0
    %p71 = por %p69, %p70
    %s73 = sadd.s32 %s72, 1
    %p76 = scmp.eq.s32.totalorder %s12, 1
    %p77 = scmp.ne.s32.totalorder %s72, %s74
    %p78 = scmp.eq.s32.totalorder %s12, 0
    %p79 = por %p77, %p78
    %p80 = scmp.ne.s32.totalorder %s72, %s74
    %p81 = scmp.eq.s32.totalorder %s17, 1
    %p82 = por %p80, %p81
    %p83 = scmp.ne.s32.totalorder %s74, %s75
    %p84 = scmp.eq.s32.totalorder %s17, 0
    %p85 = por %p83, %p84
    %p86 = scmp.ne.s32.totalorder %s74, %s75
    %p87 = scmp.eq.s32.totalorder %s18, 1
    %p88 = por %p86, %p87
    %p90 = scmp.ne.s32.totalorder %s75, %s89
    %p91 = scmp.eq.s32.totalorder %s18, 0
    %p92 = por %p90, %p91
    %s94 = sadd.s32 %s93, 1
    %p97 = scmp.eq.s32.totalorder %s12, 1
    %p98 = scmp.ne.s32.totalorder %s93, %s95
    %p99 = scmp.eq.s32.totalorder %s12, 0
    %p100 = por %p98, %p99
    %p101 = scmp.ne.s32.totalorder %s93, %s95
    %p102 = scmp.eq.s32.totalorder %s17, 1
    %p103 = por %p101, %p102
    %p104 = scmp.ne.s32.totalorder %s95, %s96
    %p105 = scmp.eq.s32.totalorder %s17, 0
    %p106 = por %p104, %p105
    %p107 = scmp.ne.s32.totalorder %s95, %s96
    %p108 = scmp.eq.s32.totalorder %s18, 1
    %p109 = por %p107, %p108
    %p111 = scmp.ne.s32.totalorder %s96, %s110
    %p112 = scmp.eq.s32.totalorder %s18, 0
    %p113 = por %p111, %p112
    %s115 = sadd.s32 %s114, 1
    %p118 = scmp.eq.s32.totalorder %s12, 1
    %p119 = scmp.ne.s32.totalorder %s114, %s116
    %p120 = scmp.eq.s32.totalorder %s12, 0
    %p121 = por %p119, %p120
    %p122 = scmp.ne.s32.totalorder %s114, %s116
    %p123 = scmp.eq.s32.totalorder %s17, 1
    %p124 = por %p122, %p123
    %p125 = scmp.ne.s32.totalorder %s116, %s117
    %p126 = scmp.eq.s32.totalorder %s17, 0
    %p127 = por %p125, %p126
    %p128 = scmp.ne.s32.totalorder %s116, %s117
    %p129 = scmp.eq.s32.totalorder %s18, 1
    %p130 = por %p128, %p129
    %p132 = scmp.ne.s32.totalorder %s117, %s131
    %p133 = scmp.eq.s32.totalorder %s18, 0
    %p134 = por %p132, %p133
    %s136 = sadd.s32 %s135, 1
    %p139 = scmp.eq.s32.totalorder %s12, 1
    %p140 = scmp.ne.s32.totalorder %s135, %s137
    %p141 = scmp.eq.s32.totalorder %s12, 0
    %p142 = por %p140, %p141
    %p143 = scmp.ne.s32.totalorder %s135, %s137
    %p144 = scmp.eq.s32.totalorder %s17, 1
    %p145 = por %p143, %p144
    %p146 = scmp.ne.s32.totalorder %s137, %s138
    %p147 = scmp.eq.s32.totalorder %s17, 0
    %p148 = por %p146, %p147
    %p149 = scmp.ne.s32.totalorder %s137, %s138
    %p150 = scmp.eq.s32.totalorder %s18, 1
    %p151 = por %p149, %p150
    %p153 = scmp.ne.s32.totalorder %s138, %s152
    %p154 = scmp.eq.s32.totalorder %s18, 0
    %p155 = por %p153, %p154
    %s156 = ssub.s32 %s12, %s19
    %p157 = scmp.eq.s32.totalorder %s156, 0
    %s159 = sadd.s32 %s158, 1
    %s160 = scalar_select %p157, %s158, %s159
    %p163 = pneg %p157
    %p164 = scmp.eq.s32.totalorder %s12, 1
    %p165 = por %p163, %p164
    %p166 = scmp.ne.s32.totalorder %s158, %s161
    %p167 = scmp.eq.s32.totalorder %s12, 0
    %p168 = por %p166, %p167
    %p169 = scmp.ne.s32.totalorder %s158, %s161
    %p170 = scmp.eq.s32.totalorder %s17, 1
    %p171 = por %p169, %p170
    %p172 = scmp.ne.s32.totalorder %s161, %s162
    %p173 = scmp.eq.s32.totalorder %s17, 0
    %p174 = por %p172, %p173
    %p175 = scmp.ne.s32.totalorder %s161, %s162
    %p176 = scmp.eq.s32.totalorder %s18, 1
    %p177 = por %p175, %p176
    %p179 = scmp.ne.s32.totalorder %s162, %s178
    %p180 = scmp.eq.s32.totalorder %s18, 0
    %p181 = por %p179, %p180
    %p182 = scmp.le.s32.totalorder 1, %s12
    %p183 = scmp.lt.s32.totalorder %s12, 3
    %p184 = pnand %p182, %p183
    %p185 = pneg %p184
    // Predicated region
    $region9: #{fwd.11} parent=5 // pred_check
      _
    $region10: #{fwd.11} parent=5 // pred_check_branch
      %187 = sbr.rel (%p184) target = $region12
    $region11: #{fwd.11} parent=5 // pred_region
      %s188 = ssub.s32 %s12, 1
      // Predicated region
      $region13: #{fwd.11} parent=11 // pred_check
        %p189 = pneg %p85
      $region14: #{fwd.11} parent=11 // pred_check_branch
        %191 = sbr.rel (%p189) target = $region16
      $region15: #{fwd.11} parent=11 // pred_region
        _
      $region16: #{fwd.11} parent=11 // pred_fallthru
        _
      // Predicated region
      $region17: #{fwd.11} parent=11 // pred_check
        %p192 = pneg %p106
      $region18: #{fwd.11} parent=11 // pred_check_branch
        %194 = sbr.rel (%p192) target = $region20
      $region19: #{fwd.11} parent=11 // pred_region
        _
      $region20: #{fwd.11} parent=11 // pred_fallthru
        _
      // Predicated region
      $region21: #{fwd.11} parent=11 // pred_check
        %p195 = pneg %p127
      $region22: #{fwd.11} parent=11 // pred_check_branch
        %197 = sbr.rel (%p195) target = $region24
      $region23: #{fwd.11} parent=11 // pred_region
        _
      $region24: #{fwd.11} parent=11 // pred_fallthru
        _
      // Predicated region
      $region25: #{fwd.11} parent=11 // pred_check
        %p198 = pneg %p148
      $region26: #{fwd.11} parent=11 // pred_check_branch
        %200 = sbr.rel (%p198) target = $region28
      $region27: #{fwd.11} parent=11 // pred_region
        _
      $region28: #{fwd.11} parent=11 // pred_fallthru
        _
    $region12: #{fwd.11} parent=5 // pred_fallthru
      _
    %p201 = scmp.lt.s32.totalorder %s12, 2
    // Predicated region
    $region29: #{fwd.11} parent=5 // pred_check
      %p202 = pneg %p201
    $region30: #{fwd.11} parent=5 // pred_check_branch
      %204 = sbr.rel (%p202) target = $region32
    $region31: #{fwd.11} parent=5 // pred_region
      // Predicated region
      $region33: #{fwd.11} parent=31 // pred_check
        %p205 = pneg %p32
      $region34: #{fwd.11} parent=31 // pred_check_branch
        %207 = sbr.rel (%p205) target = $region36
      $region35: #{fwd.11} parent=31 // pred_region
        %s208 = smul.u32 4, %s12
        %p209 = scmp.lt.s32.totalorder %s208, 7
        %s210 = scalar_select %p209, %s208, 7
        %s211 = smul.addr %s210, 4
        %s212 = scalar_lea.vmem %s0, %s211
        %s213 = smul.u32 4, %s12
      $region36: #{fwd.11} parent=31 // pred_fallthru
        _
      // Predicated region
      $region37: #{fwd.11} parent=31 // pred_check
        %p214 = pneg %p58
      $region38: #{fwd.11} parent=31 // pred_check_branch
        %216 = sbr.rel (%p214) target = $region40
      $region39: #{fwd.11} parent=31 // pred_region
        %s217 = smul.u32 4, %s12
        %p218 = scmp.lt.s32.totalorder %s217, 7
        %s219 = scalar_select %p218, %s217, 7
        %s220 = smul.addr %s219, 8
        %s221 = scalar_lea.vmem %s1, %s220
        %s222 = smul.u32 4, %s12
      $region40: #{fwd.11} parent=31 // pred_fallthru
        _
    $region32: #{fwd.11} parent=5 // pred_fallthru
      _
    %p223 = scmp.le.s32.totalorder 1, %s12
    %p224 = scmp.lt.s32.totalorder %s12, 3
    %p225 = pnand %p223, %p224
    %p226 = pneg %p225
    // Predicated region
    $region41: #{fwd.11} parent=5 // pred_check
      _
    $region42: #{fwd.11} parent=5 // pred_check_branch
      %228 = sbr.rel (%p225) target = $region44
    $region43: #{fwd.11} parent=5 // pred_region
      %s229 = ssub.s32 %s12, 1
      %s230 = smul.u32 4, %s17
      %p231 = scmp.lt.s32.totalorder %s230, 7
      %s232 = scalar_select %p231, %s230, 7
      %s233 = smul.addr %s232, 4
      %s234 = scalar_lea.vmem %s0, %s233
      %p235 = pneg %p38
      %p236 = pneg %p35
      %s237 = smul.u32 4, %s17
      %p238 = scmp.lt.s32.totalorder %s237, 7
      %s239 = scalar_select %p238, %s237, 7
      %s240 = smul.addr %s239, 8
      %s241 = scalar_lea.vmem %s1, %s240
      %p242 = pneg %p64
      %p243 = pneg %p61
      %p244 = pneg %p85
      %p245 = pneg %p82
      %p246 = pneg %p106
      %p247 = pneg %p103
      %p248 = pneg %p127
      %p249 = pneg %p124
      %p250 = pneg %p148
      %p251 = pneg %p145
      %p252 = pneg %p174
      %p253 = pneg %p171
      %s254 = smul.u32 4, %s17
      %p255 = scmp.lt.s32.totalorder %s254, 7
      %s256 = scalar_select %p255, %s254, 7
      %s257 = smul.addr %s256, 8
      %s258 = scalar_lea.vmem %s6, %s257
      %s259 = smul.u32 4, %s17
      %p260 = scmp.lt.s32.totalorder %s259, 7
      %s261 = scalar_select %p260, %s259, 7
      %s262 = smul.addr %s261, 4
      %s263 = scalar_lea.vmem %s0, %s262
      %s264 = smul.u32 4, %s17
      %s265 = smul.u32 4, %s17
      %p266 = scmp.lt.s32.totalorder %s265, 7
      %s267 = scalar_select %p266, %s265, 7
      %s268 = smul.addr %s267, 8
      %s269 = scalar_lea.vmem %s1, %s268
      %s270 = smul.u32 4, %s17
      %s271 = smul.u32 4, %s17
      %p272 = scmp.lt.s32.totalorder %s271, 7
      %s273 = scalar_select %p272, %s271, 7
      %s274 = smul.addr %s273, 8
      %s275 = scalar_lea.vmem %s6, %s274
      %s276 = smul.u32 4, %s17
      %v277 = vld [vmem:[%s263] sm:$0xf]
      %v278 = vld [vmem:[%s263 + $0x4] sm:$0xf]
      %v279 = vld [vmem:[%s263 + $0x8] sm:$0xf]
      %v280 = vld [vmem:[%s263 + $0xc] sm:$0xf]
      %v281 = vunpack.c.l.bf16 %v277
      %v282 = vunpack.c.l.bf16 %v278
      %v283 = vunpack.c.l.bf16 %v279
      %v284 = vunpack.c.l.bf16 %v280
      %v285 = vld [vmem:[%s2] sm:$0x1]
      %v287 = vlaneseq
      %v288 = vshrl.u32 %v287, 7
      %v289 = vsub.s32 0, %v288
      %v290 = vrot.slane %v285, %v289
      %v292 = vmul.f32 %v281, %v290
      %v293 = vmul.f32 %v282, %v290
      %v294 = vmul.f32 %v283, %v290
      %v295 = vmul.f32 %v284, %v290
      %v296 = vld [vmem:[%s3] sm:$0x1]
      %v298 = vlaneseq
      %v299 = vshrl.u32 %v298, 7
      %v300 = vsub.s32 0, %v299
      %v301 = vrot.slane %v296, %v300
      %v303 = vadd.f32 %v292, %v301
      %v304 = vadd.f32 %v293, %v301
      %v305 = vadd.f32 %v294, %v301
      %v306 = vadd.f32 %v295, %v301
      %v307 = vmax.f32 %v303, 0.0
      %v308 = vmax.f32 %v304, 0.0
      %v309 = vmax.f32 %v305, 0.0
      %v310 = vmax.f32 %v306, 0.0
      %v311 = vld [vmem:[%s269] sm:$0xff]
      %v312 = vld [vmem:[%s269 + $0x8] sm:$0xff]
      %v313 = vld [vmem:[%s269 + $0x10] sm:$0xff]
      %v314 = vld [vmem:[%s269 + $0x18] sm:$0xff]
      %v315 = vld [vmem:[%s4] sm:$0x1]
      %v317 = vlaneseq
      %v318 = vshrl.u32 %v317, 7
      %v319 = vsub.s32 0, %v318
      %v320 = vrot.slane %v315, %v319
      %v322 = vmul.f32 %v311, %v320
      %v323 = vmul.f32 %v312, %v320
      %v324 = vmul.f32 %v313, %v320
      %v325 = vmul.f32 %v314, %v320
      %v326 = vld [vmem:[%s5] sm:$0x1]
      %v328 = vlaneseq
      %v329 = vshrl.u32 %v328, 7
      %v330 = vsub.s32 0, %v329
      %v331 = vrot.slane %v326, %v330
      %v333 = vadd.f32 %v322, %v331
      %v334 = vadd.f32 %v323, %v331
      %v335 = vadd.f32 %v324, %v331
      %v336 = vadd.f32 %v325, %v331
      %v337 = vadd.f32 %v307, %v333
      %v338 = vadd.f32 %v308, %v334
      %v339 = vadd.f32 %v309, %v335
      %v340 = vadd.f32 %v310, %v336
      %v341 = vmax.f32 %v337, 0.0
      %v342 = vmax.f32 %v338, 0.0
      %v343 = vmax.f32 %v339, 0.0
      %v344 = vmax.f32 %v340, 0.0
      %345 = vst [vmem:[%s275] sm:$0xff] %v341
      %346 = vst [vmem:[%s275 + $0x8] sm:$0xff] %v342
      %347 = vst [vmem:[%s275 + $0x10] sm:$0xff] %v343
      %348 = vst [vmem:[%s275 + $0x18] sm:$0xff] %v344
      %s349 = smul.u32 4, %s17
      %p350 = scmp.lt.s32.totalorder %s349, 7
      %s351 = scalar_select %p350, %s349, 7
      %s352 = smul.addr %s351, 8
      %s353 = scalar_lea.vmem %s6, %s352
      // Predicated region
      $region45: #{fwd.11} parent=43 // pred_check
        %p354 = pneg %p171
      $region46: #{fwd.11} parent=43 // pred_check_branch
        %356 = sbr.rel (%p354) target = $region48
      $region47: #{fwd.11} parent=43 // pred_region
        %s357 = smul.u32 4, %s17
      $region48: #{fwd.11} parent=43 // pred_fallthru
        _
    $region44: #{fwd.11} parent=5 // pred_fallthru
      _
    %p358 = scmp.le.s32.totalorder 2, %s12
    // Predicated region
    $region49: #{fwd.11} parent=5 // pred_check
      %p359 = pneg %p358
    $region50: #{fwd.11} parent=5 // pred_check_branch
      %361 = sbr.rel (%p359) target = $region52
    $region51: #{fwd.11} parent=5 // pred_region
      %s362 = ssub.s32 %s12, 2
      // Predicated region
      $region53: #{fwd.11} parent=51 // pred_check
        %p363 = pneg %p177
      $region54: #{fwd.11} parent=51 // pred_check_branch
        %365 = sbr.rel (%p363) target = $region56
      $region55: #{fwd.11} parent=51 // pred_region
        %s366 = smul.u32 4, %s18
        %p367 = scmp.lt.s32.totalorder %s366, 7
        %s368 = scalar_select %p367, %s366, 7
        %s369 = smul.addr %s368, 8
        %s370 = scalar_lea.vmem %s6, %s369
      $region56: #{fwd.11} parent=51 // pred_fallthru
        _
    $region52: #{fwd.11} parent=5 // pred_fallthru
      _
  $region6: #{fwd.11} parent=0 // loop_footer
    %s16 = sadd.s32 1, %s12
  $region7: #{fwd.11} parent=0 // loop_footer_branch
    %11 = sbr.rel target = $region3
  $region8: #{fwd.11} parent=0 // loop_exit
    _

// kernel: fwd.9
$region0: #{fwd.9}
  #allocation0 [shape = 'u32[]', space=smem, size = 0x4, offset = 0x4, fixed_abs, tag = 'smem constant byte address 0x4 - core index']
  #allocation1 [shape = 'u32[144,128]{1,0:T(1,128)}', space=vmem, size = 0x12000, scoped, tag = 'internal scratch']
  #allocation2 [shape = 'bf16[10,10,64]{2,1,0:T(8,128)(2,1)}', space=vmem, size = 0xa000, scoped, tag = 'scratch operand']
  #allocation3 [shape = 'bf16[64,576]{1,0:T(16,128)(2,1)}', space=vmem, size = 0x14000, scoped, tag = 'scratch operand']
  %s0 = inlined_call_operand.vmem [shape: f32[2,8,8,64], index: 0, kind: input, shape index: {}]
  %s1 = inlined_call_operand.vmem [shape: bf16[576,64], index: 1, kind: input, shape index: {}]
  %s2 = inlined_call_operand.vmem [shape: f32[1,64], index: 2, kind: input, shape index: {}]
  %s3 = inlined_call_operand.vmem [shape: bf16[2,64,64], index: 3, kind: output, shape index: {0}]
  %s4 = inlined_call_operand.vmem [shape: f32[2,1,2,64], index: 4, kind: output, shape index: {1}]
  %5 = xla_tuple %s3, %s4
  %s6 = sld [smem:[#allocation0]]
  $region57: #{fwd.9} parent=0
    _
  %s8 = ssub.s32 1, %s6
  %s9 = scalar_select 0, %s8, %s6
  loop: start=0, step=1, limit=4
  $region2: #{fwd.9} parent=0 // loop_pre_header
    _
  $region3: #{fwd.9} parent=0 // loop_header
    %s11 = sphi 0, %s15
    %p12 = scmp.ge.s32.totalorder %s11, 4
    %s18 = sphi 0, %s30
    %s19 = sphi 0, %s26
    %s20 = sphi 0, %s18
    %s21 = sphi 0, %s19
    %s22 = sphi 0, %s20
    %s23 = sphi 0, %s21
    %s33 = sphi 0, %s35
    %s36 = sphi 0, %s33
    %s37 = sphi 0, %s36
    %s53 = sphi 0, %s37
    %s57 = sphi 0, %s57
    %s59 = sphi 0, %s57
    %s60 = sphi 0, %s59
    %s74 = sphi 0, %s60
    %s78 = sphi 0, %s78
    %s80 = sphi 0, %s78
    %s81 = sphi 0, %s80
    %s95 = sphi 0, %s81
    %s103 = sphi 0, %s105
    %s106 = sphi 0, %s103
    %s107 = sphi 0, %s106
    %s123 = sphi 0, %s107
    %s131 = sphi 0, %s133
    %s134 = sphi 0, %s131
    %s135 = sphi 0, %s134
    %s151 = sphi 0, %s135
  $region4: #{fwd.9} parent=0 // loop_header_branch
    %14 = sbr.rel (%p12) target = $region8
  $region5: #{fwd.9} parent=0 // loop_body
    %s16 = ssub.s32 %s11, 1
    %s17 = ssub.s32 %s11, 2
    %s24 = sadd.s32 1, %s19
    %p25 = scmp.ge.s32.totalorder %s24, 1
    %s26 = scalar_select %p25, 0, %s24
    %s27 = sadd.s32 1, %s18
    %s28 = scalar_select %p25, %s27, %s18
    %p29 = scmp.ge.s32.totalorder %s28, 2
    %s30 = scalar_select %p29, 0, %s28
    %s31 = ssub.s32 %s18, %s30
    %p32 = scmp.eq.s32.totalorder %s31, 0
    %s34 = sadd.s32 %s33, 1
    %s35 = scalar_select %p32, %s33, %s34
    %p38 = pneg %p32
    %p39 = scmp.eq.s32.totalorder %s11, 1
    %p40 = por %p38, %p39
    %p41 = scmp.ne.s32.totalorder %s33, %s36
    %p42 = scmp.eq.s32.totalorder %s11, 0
    %p43 = por %p41, %p42
    %p44 = scmp.ne.s32.totalorder %s33, %s36
    %p45 = scmp.eq.s32.totalorder %s16, 1
    %p46 = por %p44, %p45
    %p47 = scmp.ne.s32.totalorder %s36, %s37
    %p48 = scmp.eq.s32.totalorder %s16, 0
    %p49 = por %p47, %p48
    %p50 = scmp.ne.s32.totalorder %s36, %s37
    %p51 = scmp.eq.s32.totalorder %s17, 1
    %p52 = por %p50, %p51
    %p54 = scmp.ne.s32.totalorder %s37, %s53
    %p55 = scmp.eq.s32.totalorder %s17, 0
    %p56 = por %p54, %p55
    %s58 = sadd.s32 %s57, 1
    %p61 = scmp.eq.s32.totalorder %s11, 1
    %p62 = scmp.ne.s32.totalorder %s57, %s59
    %p63 = scmp.eq.s32.totalorder %s11, 0
    %p64 = por %p62, %p63
    %p65 = scmp.ne.s32.totalorder %s57, %s59
    %p66 = scmp.eq.s32.totalorder %s16, 1
    %p67 = por %p65, %p66
    %p68 = scmp.ne.s32.totalorder %s59, %s60
    %p69 = scmp.eq.s32.totalorder %s16, 0
    %p70 = por %p68, %p69
    %p71 = scmp.ne.s32.totalorder %s59, %s60
    %p72 = scmp.eq.s32.totalorder %s17, 1
    %p73 = por %p71, %p72
    %p75 = scmp.ne.s32.totalorder %s60, %s74
    %p76 = scmp.eq.s32.totalorder %s17, 0
    %p77 = por %p75, %p76
    %s79 = sadd.s32 %s78, 1
    %p82 = scmp.eq.s32.totalorder %s11, 1
    %p83 = scmp.ne.s32.totalorder %s78, %s80
    %p84 = scmp.eq.s32.totalorder %s11, 0
    %p85 = por %p83, %p84
    %p86 = scmp.ne.s32.totalorder %s78, %s80
    %p87 = scmp.eq.s32.totalorder %s16, 1
    %p88 = por %p86, %p87
    %p89 = scmp.ne.s32.totalorder %s80, %s81
    %p90 = scmp.eq.s32.totalorder %s16, 0
    %p91 = por %p89, %p90
    %p92 = scmp.ne.s32.totalorder %s80, %s81
    %p93 = scmp.eq.s32.totalorder %s17, 1
    %p94 = por %p92, %p93
    %p96 = scmp.ne.s32.totalorder %s81, %s95
    %p97 = scmp.eq.s32.totalorder %s17, 0
    %p98 = por %p96, %p97
    %s99 = ssub.s32 %s18, %s30
    %s100 = ssub.s32 %s19, %s26
    %s101 = sor.u32 %s99, %s100
    %p102 = scmp.eq.s32.totalorder %s101, 0
    %s104 = sadd.s32 %s103, 1
    %s105 = scalar_select %p102, %s103, %s104
    %p108 = pneg %p102
    %p109 = scmp.eq.s32.totalorder %s11, 1
    %p110 = por %p108, %p109
    %p111 = scmp.ne.s32.totalorder %s103, %s106
    %p112 = scmp.eq.s32.totalorder %s11, 0
    %p113 = por %p111, %p112
    %p114 = scmp.ne.s32.totalorder %s103, %s106
    %p115 = scmp.eq.s32.totalorder %s16, 1
    %p116 = por %p114, %p115
    %p117 = scmp.ne.s32.totalorder %s106, %s107
    %p118 = scmp.eq.s32.totalorder %s16, 0
    %p119 = por %p117, %p118
    %p120 = scmp.ne.s32.totalorder %s106, %s107
    %p121 = scmp.eq.s32.totalorder %s17, 1
    %p122 = por %p120, %p121
    %p124 = scmp.ne.s32.totalorder %s107, %s123
    %p125 = scmp.eq.s32.totalorder %s17, 0
    %p126 = por %p124, %p125
    %s127 = ssub.s32 %s18, %s30
    %s128 = ssub.s32 %s19, %s26
    %s129 = sor.u32 %s127, %s128
    %p130 = scmp.eq.s32.totalorder %s129, 0
    %s132 = sadd.s32 %s131, 1
    %s133 = scalar_select %p130, %s131, %s132
    %p136 = pneg %p130
    %p137 = scmp.eq.s32.totalorder %s11, 1
    %p138 = por %p136, %p137
    %p139 = scmp.ne.s32.totalorder %s131, %s134
    %p140 = scmp.eq.s32.totalorder %s11, 0
    %p141 = por %p139, %p140
    %p142 = scmp.ne.s32.totalorder %s131, %s134
    %p143 = scmp.eq.s32.totalorder %s16, 1
    %p144 = por %p142, %p143
    %p145 = scmp.ne.s32.totalorder %s134, %s135
    %p146 = scmp.eq.s32.totalorder %s16, 0
    %p147 = por %p145, %p146
    %p148 = scmp.ne.s32.totalorder %s134, %s135
    %p149 = scmp.eq.s32.totalorder %s17, 1
    %p150 = por %p148, %p149
    %p152 = scmp.ne.s32.totalorder %s135, %s151
    %p153 = scmp.eq.s32.totalorder %s17, 0
    %p154 = por %p152, %p153
    %p155 = scmp.le.s32.totalorder 1, %s11
    %p156 = scmp.lt.s32.totalorder %s11, 3
    %p157 = pnand %p155, %p156
    %p158 = pneg %p157
    // Predicated region
    $region9: #{fwd.9} parent=5 // pred_check
      _
    $region10: #{fwd.9} parent=5 // pred_check_branch
      %160 = sbr.rel (%p157) target = $region12
    $region11: #{fwd.9} parent=5 // pred_region
      %s161 = ssub.s32 %s11, 1
      // Predicated region
      $region13: #{fwd.9} parent=11 // pred_check
        %p162 = pneg %p70
      $region14: #{fwd.9} parent=11 // pred_check_branch
        %164 = sbr.rel (%p162) target = $region16
      $region15: #{fwd.9} parent=11 // pred_region
        _
      $region16: #{fwd.9} parent=11 // pred_fallthru
        _
      // Predicated region
      $region17: #{fwd.9} parent=11 // pred_check
        %p165 = pneg %p91
      $region18: #{fwd.9} parent=11 // pred_check_branch
        %167 = sbr.rel (%p165) target = $region20
      $region19: #{fwd.9} parent=11 // pred_region
        _
      $region20: #{fwd.9} parent=11 // pred_fallthru
        _
    $region12: #{fwd.9} parent=5 // pred_fallthru
      _
    %p168 = scmp.lt.s32.totalorder %s11, 2
    // Predicated region
    $region21: #{fwd.9} parent=5 // pred_check
      %p169 = pneg %p168
    $region22: #{fwd.9} parent=5 // pred_check_branch
      %171 = sbr.rel (%p169) target = $region24
    $region23: #{fwd.9} parent=5 // pred_region
      // Predicated region
      $region25: #{fwd.9} parent=23 // pred_check
        %p172 = pneg %p43
      $region26: #{fwd.9} parent=23 // pred_check_branch
        %174 = sbr.rel (%p172) target = $region28
      $region27: #{fwd.9} parent=23 // pred_region
        %p175 = scmp.lt.s32.totalorder %s18, 1
        %s176 = scalar_select %p175, %s18, 1
        %s177 = smul.addr %s176, 8
        %s178 = smul.addr %s177, 8
        %s179 = scalar_lea.vmem %s0, %s178
      $region28: #{fwd.9} parent=23 // pred_fallthru
        _
    $region24: #{fwd.9} parent=5 // pred_fallthru
      _
    %p180 = scmp.le.s32.totalorder 1, %s11
    %p181 = scmp.lt.s32.totalorder %s11, 3
    %p182 = pnand %p180, %p181
    %p183 = pneg %p182
    // Predicated region
    $region29: #{fwd.9} parent=5 // pred_check
      _
    $region30: #{fwd.9} parent=5 // pred_check_branch
      %185 = sbr.rel (%p182) target = $region32
    $region31: #{fwd.9} parent=5 // pred_region
      %s186 = ssub.s32 %s11, 1
      %p187 = scmp.lt.s32.totalorder %s20, 1
      %s188 = scalar_select %p187, %s20, 1
      %s189 = smul.addr %s188, 8
      %s190 = smul.addr %s189, 8
      %s191 = scalar_lea.vmem %s0, %s190
      %p192 = pneg %p49
      %p193 = pneg %p46
      %p194 = pneg %p70
      %p195 = pneg %p67
      %p196 = pneg %p91
      %p197 = pneg %p88
      %p198 = pneg %p119
      %p199 = pneg %p116
      %s200 = smul.u32 8, %s21
      %p201 = scmp.lt.s32.totalorder %s20, 1
      %s202 = scalar_select %p201, %s20, 1
      %p203 = scmp.lt.s32.totalorder %s200, 7
      %s204 = scalar_select %p203, %s200, 7
      %s205 = smul.addr %s202, 8
      %s206 = sadd.s32 %s204, %s205
      %s207 = smul.addr %s206, 4
      %s208 = scalar_lea.vmem %s3, %s207
      %p209 = pneg %p147
      %p210 = pneg %p144
      %p211 = scmp.lt.s32.totalorder %s20, 1
      %s212 = scalar_select %p211, %s20, 1
      %p213 = scmp.lt.s32.totalorder %s21, 0
      %s214 = scalar_select %p213, %s21, 0
      %s215 = sadd.s32 %s214, %s212
      %s216 = smul.addr %s215, 2
      %s217 = scalar_lea.vmem %s4, %s216
      %p218 = scmp.lt.s32.totalorder %s20, 1
      %s219 = scalar_select %p218, %s20, 1
      %s220 = smul.addr %s219, 8
      %s221 = smul.addr %s220, 8
      %s222 = scalar_lea.vmem %s0, %s221
      %s223 = smul.u32 8, %s21
      %p224 = scmp.lt.s32.totalorder %s20, 1
      %s225 = scalar_select %p224, %s20, 1
      %p226 = scmp.lt.s32.totalorder %s223, 7
      %s227 = scalar_select %p226, %s223, 7
      %s228 = smul.addr %s225, 8
      %s229 = sadd.s32 %s227, %s228
      %s230 = smul.addr %s229, 4
      %s231 = scalar_lea.vmem %s3, %s230
      %s232 = smul.u32 8, %s21
      %p233 = scmp.lt.s32.totalorder %s20, 1
      %s234 = scalar_select %p233, %s20, 1
      %p235 = scmp.lt.s32.totalorder %s21, 0
      %s236 = scalar_select %p235, %s21, 0
      %s237 = sadd.s32 %s236, %s234
      %s238 = smul.addr %s237, 2
      %s239 = scalar_lea.vmem %s4, %s238
      %p241 = scmp.eq.s32.totalorder %s21, 0
      // Predicated region
      $region33: #{fwd.9} parent=31 // pred_check
        %p242 = pneg %p241
      $region34: #{fwd.9} parent=31 // pred_check_branch
        %244 = sbr.rel (%p242) target = $region36
      $region35: #{fwd.9} parent=31 // pred_region
        %v245 = vld [vmem:[%s222] sm:$0xff]
        %v246 = vld [vmem:[%s222 + $0x8] sm:$0xff]
        %v247 = vld [vmem:[%s222 + $0x10] sm:$0xff]
        %v248 = vld [vmem:[%s222 + $0x18] sm:$0xff]
        %v249 = vld [vmem:[%s222 + $0x20] sm:$0xff]
        %v250 = vld [vmem:[%s222 + $0x28] sm:$0xff]
        %v251 = vld [vmem:[%s222 + $0x30] sm:$0xff]
        %v252 = vld [vmem:[%s222 + $0x38] sm:$0xff]
        %v253 = vpack.c.bf16 %v245, %v245
        %v254 = vpack.c.bf16 %v246, %v246
        %v255 = vpack.c.bf16 %v247, %v247
        %v256 = vpack.c.bf16 %v248, %v248
        %v257 = vpack.c.bf16 %v249, %v249
        %v258 = vpack.c.bf16 %v250, %v250
        %v259 = vpack.c.bf16 %v251, %v251
        %v260 = vpack.c.bf16 %v252, %v252
        %vm261 = vcmask 519168
        %262 = vst.msk [vmem:[#allocation2] sm:$0xf] %vm261, 0
        %vm263 = vcmask 516096
        %264 = vst.msk [vmem:[#allocation2 + $0x4] sm:$0x1] %vm263, 0
        %265 = vst.msk [vmem:[#allocation2 + $0x8] sm:$0xf] %vm261, 0
        %266 = vst.msk [vmem:[#allocation2 + $0xc] sm:$0x1] %vm263, 0
        %267 = vst.msk [vmem:[#allocation2 + $0x10] sm:$0xf] %vm261, 0
        %268 = vst.msk [vmem:[#allocation2 + $0x14] sm:$0x1] %vm263, 0
        %269 = vst.msk [vmem:[#allocation2 + $0x18] sm:$0xf] %vm261, 0
        %270 = vst.msk [vmem:[#allocation2 + $0x1c] sm:$0x1] %vm263, 0
        %271 = vst.msk [vmem:[#allocation2 + $0x20] sm:$0xf] %vm261, 0
        %272 = vst.msk [vmem:[#allocation2 + $0x24] sm:$0x1] %vm263, 0
        %273 = vst.msk [vmem:[#allocation2 + $0x28] sm:$0xf] %vm261, 0
        %274 = vst.msk [vmem:[#allocation2 + $0x2c] sm:$0x1] %vm263, 0
        %275 = vst.msk [vmem:[#allocation2 + $0x30] sm:$0xf] %vm261, 0
        %276 = vst.msk [vmem:[#allocation2 + $0x34] sm:$0x1] %vm263, 0
        %277 = vst.msk [vmem:[#allocation2 + $0x38] sm:$0xf] %vm261, 0
        %278 = vst.msk [vmem:[#allocation2 + $0x3c] sm:$0x1] %vm263, 0
        %279 = vst.msk [vmem:[#allocation2 + $0x40] sm:$0xf] %vm261, 0
        %280 = vst.msk [vmem:[#allocation2 + $0x44] sm:$0x1] %vm263, 0
        %281 = vst.msk [vmem:[#allocation2 + $0x48] sm:$0xf] %vm261, 0
        %282 = vst.msk [vmem:[#allocation2 + $0x4c] sm:$0x1] %vm263, 0
        %v291 = vunpack.c.l.b16 %v253
        %v292 = vunpack.c.l.b16 %v254
        %v293 = vunpack.c.l.b16 %v255
        %v294 = vunpack.c.l.b16 %v256
        %v295 = vunpack.c.l.b16 %v257
        %v296 = vunpack.c.l.b16 %v258
        %v297 = vunpack.c.l.b16 %v259
        %v298 = vunpack.c.l.b16 %v260
        %v299 = vpack.c.b16 %v291, %v291
        %v300 = vpack.c.b16 %v292, %v292
        %v301 = vpack.c.b16 %v293, %v293
        %v302 = vpack.c.b16 %v294, %v294
        %v303 = vpack.c.b16 %v295, %v295
        %v304 = vpack.c.b16 %v296, %v296
        %v305 = vpack.c.b16 %v297, %v297
        %v306 = vpack.c.b16 %v298, %v298
        %v308 = vshrl.u32 %v299, 16
        %v310 = vrot.slane %v308, 7
        %v311 = vshll.u32 %v299, 16
        %v313 = vor.u32 %v310, %v311
        %v314 = vrot.slane %v310, 4
        %v316 = vshrl.u32 %v300, 16
        %v318 = vrot.slane %v316, 7
        %v319 = vshll.u32 %v300, 16
        %v321 = vor.u32 %v318, %v319
        %v322 = vrot.slane %v318, 4
        %v324 = vshrl.u32 %v301, 16
        %v326 = vrot.slane %v324, 7
        %v327 = vshll.u32 %v301, 16
        %v329 = vor.u32 %v326, %v327
        %v330 = vrot.slane %v326, 4
        %v332 = vshrl.u32 %v302, 16
        %v334 = vrot.slane %v332, 7
        %v335 = vshll.u32 %v302, 16
        %v337 = vor.u32 %v334, %v335
        %v338 = vrot.slane %v334, 4
        %v340 = vshrl.u32 %v303, 16
        %v342 = vrot.slane %v340, 7
        %v343 = vshll.u32 %v303, 16
        %v345 = vor.u32 %v342, %v343
        %v346 = vrot.slane %v342, 4
        %v348 = vshrl.u32 %v304, 16
        %v350 = vrot.slane %v348, 7
        %v351 = vshll.u32 %v304, 16
        %v353 = vor.u32 %v350, %v351
        %v354 = vrot.slane %v350, 4
        %v356 = vshrl.u32 %v305, 16
        %v358 = vrot.slane %v356, 7
        %v359 = vshll.u32 %v305, 16
        %v361 = vor.u32 %v358, %v359
        %v362 = vrot.slane %v358, 4
        %v364 = vshrl.u32 %v306, 16
        %v366 = vrot.slane %v364, 7
        %v367 = vshll.u32 %v306, 16
        %v369 = vor.u32 %v366, %v367
        %v370 = vrot.slane %v366, 4
        %s387 = scalar_lea.vmem [#allocation2], 8
        %vm388 = vcmask 519168
        %vm389 = vsmask.f32 7938
        %vm390 = vmand %vm388, %vm389
        %v391 = vld [vmem:[%s387] sm:$0xf]
        %v392 = vsel %vm390, %v313, %v391
        %393 = vst [vmem:[%s387] sm:$0xf] %v392
        %vm394 = vcmask 516096
        %vm395 = vsmask.f32 256
        %vm396 = vmand %vm394, %vm395
        %v397 = vld [vmem:[%s387 + $0x4] sm:$0x1]
        %v398 = vsel %vm396, %v314, %v397
        %399 = vst [vmem:[%s387 + $0x4] sm:$0x1] %v398
        %v400 = vld [vmem:[%s387 + $0x8] sm:$0xf]
        %v401 = vsel %vm390, %v321, %v400
        %402 = vst [vmem:[%s387 + $0x8] sm:$0xf] %v401
        %v403 = vld [vmem:[%s387 + $0xc] sm:$0x1]
        %v404 = vsel %vm396, %v322, %v403
        %405 = vst [vmem:[%s387 + $0xc] sm:$0x1] %v404
        %v406 = vld [vmem:[%s387 + $0x10] sm:$0xf]
        %v407 = vsel %vm390, %v329, %v406
        %408 = vst [vmem:[%s387 + $0x10] sm:$0xf] %v407
        %v409 = vld [vmem:[%s387 + $0x14] sm:$0x1]
        %v410 = vsel %vm396, %v330, %v409
        %411 = vst [vmem:[%s387 + $0x14] sm:$0x1] %v410
        %v412 = vld [vmem:[%s387 + $0x18] sm:$0xf]
        %v413 = vsel %vm390, %v337, %v412
        %414 = vst [vmem:[%s387 + $0x18] sm:$0xf] %v413
        %v415 = vld [vmem:[%s387 + $0x1c] sm:$0x1]
        %v416 = vsel %vm396, %v338, %v415
        %417 = vst [vmem:[%s387 + $0x1c] sm:$0x1] %v416
        %v418 = vld [vmem:[%s387 + $0x20] sm:$0xf]
        %v419 = vsel %vm390, %v345, %v418
        %420 = vst [vmem:[%s387 + $0x20] sm:$0xf] %v419
        %v421 = vld [vmem:[%s387 + $0x24] sm:$0x1]
        %v422 = vsel %vm396, %v346, %v421
        %423 = vst [vmem:[%s387 + $0x24] sm:$0x1] %v422
        %v424 = vld [vmem:[%s387 + $0x28] sm:$0xf]
        %v425 = vsel %vm390, %v353, %v424
        %426 = vst [vmem:[%s387 + $0x28] sm:$0xf] %v425
        %v427 = vld [vmem:[%s387 + $0x2c] sm:$0x1]
        %v428 = vsel %vm396, %v354, %v427
        %429 = vst [vmem:[%s387 + $0x2c] sm:$0x1] %v428
        %v430 = vld [vmem:[%s387 + $0x30] sm:$0xf]
        %v431 = vsel %vm390, %v361, %v430
        %432 = vst [vmem:[%s387 + $0x30] sm:$0xf] %v431
        %v433 = vld [vmem:[%s387 + $0x34] sm:$0x1]
        %v434 = vsel %vm396, %v362, %v433
        %435 = vst [vmem:[%s387 + $0x34] sm:$0x1] %v434
        %v436 = vld [vmem:[%s387 + $0x38] sm:$0xf]
        %v437 = vsel %vm390, %v369, %v436
        %438 = vst [vmem:[%s387 + $0x38] sm:$0xf] %v437
        %v439 = vld [vmem:[%s387 + $0x3c] sm:$0x1]
        %v440 = vsel %vm396, %v370, %v439
        %441 = vst [vmem:[%s387 + $0x3c] sm:$0x1] %v440
      $region36: #{fwd.9} parent=31 // pred_fallthru
        _
      %s442 = smul.u32 %s21, 8
      %s443 = smul.u32 %s442, 2
      %s444 = smul.addr %s443, 4
      %s445 = scalar_lea.vmem [#allocation2], %s444
      %v446 = vld [vmem:[%s445] sm:$0xf]
      %v447 = vld [vmem:[%s445 + $0x8] sm:$0xf]
      %v448 = vld [vmem:[%s445 + $0x10] sm:$0xf]
      %v449 = vld [vmem:[%s445 + $0x18] sm:$0xf]
      %v450 = vld [vmem:[%s445 + $0x20] sm:$0xf]
      %v451 = vld [vmem:[%s445 + $0x28] sm:$0xf]
      %v452 = vld [vmem:[%s445 + $0x30] sm:$0xf]
      %v453 = vld [vmem:[%s445 + $0x38] sm:$0xf]
      %v462 = vunpack.c.l.b16 %v446
      %v463 = vunpack.c.l.b16 %v447
      %v464 = vunpack.c.l.b16 %v448
      %v465 = vunpack.c.l.b16 %v449
      %v466 = vunpack.c.l.b16 %v450
      %v467 = vunpack.c.l.b16 %v451
      %v468 = vunpack.c.l.b16 %v452
      %v469 = vunpack.c.l.b16 %v453
      %v470 = vpack.c.b16 %v463, %v462
      %v471 = vpack.c.b16 %v465, %v464
      %v472 = vpack.c.b16 %v467, %v466
      %v473 = vpack.c.b16 %v469, %v468
      %vm478 = vcmask 523264
      %479 = vst.msk [vmem:[#allocation3] sm:$0xff] %vm478, %v470
      %480 = vst.msk [vmem:[#allocation3 + $0x28] sm:$0xff] %vm478, %v471
      %481 = vst.msk [vmem:[#allocation3 + $0x50] sm:$0xff] %vm478, %v472
      %482 = vst.msk [vmem:[#allocation3 + $0x78] sm:$0xff] %vm478, %v473
      %v483 = vld [vmem:[%s445] sm:$0xf]
      %v484 = vld [vmem:[%s445 + $0x4] sm:$0x1]
      %v485 = vld [vmem:[%s445 + $0x8] sm:$0xf]
      %v486 = vld [vmem:[%s445 + $0xc] sm:$0x1]
      %v487 = vld [vmem:[%s445 + $0x10] sm:$0xf]
      %v488 = vld [vmem:[%s445 + $0x14] sm:$0x1]
      %v489 = vld [vmem:[%s445 + $0x18] sm:$0xf]
      %v490 = vld [vmem:[%s445 + $0x1c] sm:$0x1]
      %v491 = vld [vmem:[%s445 + $0x20] sm:$0xf]
      %v492 = vld [vmem:[%s445 + $0x24] sm:$0x1]
      %v493 = vld [vmem:[%s445 + $0x28] sm:$0xf]
      %v494 = vld [vmem:[%s445 + $0x2c] sm:$0x1]
      %v495 = vld [vmem:[%s445 + $0x30] sm:$0xf]
      %v496 = vld [vmem:[%s445 + $0x34] sm:$0x1]
      %v497 = vld [vmem:[%s445 + $0x38] sm:$0xf]
      %v498 = vld [vmem:[%s445 + $0x3c] sm:$0x1]
      %vm499 = vsmask.f32 3328
      %vm500 = vsmask.f32 7440
      %vm501 = vmor %vm499, %vm500
      %v503 = vshrl.u32 %v483, 16
      %v505 = vrot.slane %v503, 4
      %v506 = vshll.u32 %v483, 16
      %v508 = vrot.slane %v506, 5
      %v509 = vor.u32 %v505, %v508
      %v510 = vrot.slane %v509, 4
      %v512 = vshll.u32 %v484, 16
      %v514 = vrot.slane %v512, 5
      %v515 = vsel %vm501, %v510, %v514
      %v517 = vshrl.u32 %v485, 16
      %v519 = vrot.slane %v517, 4
      %v520 = vshll.u32 %v485, 16
      %v522 = vrot.slane %v520, 5
      %v523 = vor.u32 %v519, %v522
      %v524 = vrot.slane %v523, 4
      %v526 = vshll.u32 %v486, 16
      %v528 = vrot.slane %v526, 5
      %v529 = vsel %vm501, %v524, %v528
      %v531 = vshrl.u32 %v487, 16
      %v533 = vrot.slane %v531, 4
      %v534 = vshll.u32 %v487, 16
      %v536 = vrot.slane %v534, 5
      %v537 = vor.u32 %v533, %v536
      %v538 = vrot.slane %v537, 4
      %v540 = vshll.u32 %v488, 16
      %v542 = vrot.slane %v540, 5
      %v543 = vsel %vm501, %v538, %v542
      %v545 = vshrl.u32 %v489, 16
      %v547 = vrot.slane %v545, 4
      %v548 = vshll.u32 %v489, 16
      %v550 = vrot.slane %v548, 5
      %v551 = vor.u32 %v547, %v550
      %v552 = vrot.slane %v551, 4
      %v554 = vshll.u32 %v490, 16
      %v556 = vrot.slane %v554, 5
      %v557 = vsel %vm501, %v552, %v556
      %v559 = vshrl.u32 %v491, 16
      %v561 = vrot.slane %v559, 4
      %v562 = vshll.u32 %v491, 16
      %v564 = vrot.slane %v562, 5
      %v565 = vor.u32 %v561, %v564
      %v566 = vrot.slane %v565, 4
      %v568 = vshll.u32 %v492, 16
      %v570 = vrot.slane %v568, 5
      %v571 = vsel %vm501, %v566, %v570
      %v573 = vshrl.u32 %v493, 16
      %v575 = vrot.slane %v573, 4
      %v576 = vshll.u32 %v493, 16
      %v578 = vrot.slane %v576, 5
      %v579 = vor.u32 %v575, %v578
      %v580 = vrot.slane %v579, 4
      %v582 = vshll.u32 %v494, 16
      %v584 = vrot.slane %v582, 5
      %v585 = vsel %vm501, %v580, %v584
      %v587 = vshrl.u32 %v495, 16
      %v589 = vrot.slane %v587, 4
      %v590 = vshll.u32 %v495, 16
      %v592 = vrot.slane %v590, 5
      %v593 = vor.u32 %v589, %v592
      %v594 = vrot.slane %v593, 4
      %v596 = vshll.u32 %v496, 16
      %v598 = vrot.slane %v596, 5
      %v599 = vsel %vm501, %v594, %v598
      %v601 = vshrl.u32 %v497, 16
      %v603 = vrot.slane %v601, 4
      %v604 = vshll.u32 %v497, 16
      %v606 = vrot.slane %v604, 5
      %v607 = vor.u32 %v603, %v606
      %v608 = vrot.slane %v607, 4
      %v610 = vshll.u32 %v498, 16
      %v612 = vrot.slane %v610, 5
      %v613 = vsel %vm501, %v608, %v612
      %v614 = vunpack.c.l.b16 %v515
      %v615 = vunpack.c.l.b16 %v529
      %v616 = vunpack.c.l.b16 %v543
      %v617 = vunpack.c.l.b16 %v557
      %v618 = vunpack.c.l.b16 %v571
      %v619 = vunpack.c.l.b16 %v585
      %v620 = vunpack.c.l.b16 %v599
      %v621 = vunpack.c.l.b16 %v613
      %v622 = vpack.c.b16 %v615, %v614
      %v623 = vpack.c.b16 %v617, %v616
      %v624 = vpack.c.b16 %v619, %v618
      %v625 = vpack.c.b16 %v621, %v620
      %626 = vrot.lane.b32.xlu0 %v622, 64
      %v627 = vpop.permute.xlu0 %626
      %628 = vrot.lane.b32.xlu0 %v623, 64
      %v629 = vpop.permute.xlu0 %628
      %630 = vrot.lane.b32.xlu0 %v624, 64
      %v631 = vpop.permute.xlu0 %630
      %632 = vrot.lane.b32.xlu0 %v625, 64
      %v633 = vpop.permute.xlu0 %632
      %vm638 = vcmask 1048064
      %639 = vst.msk [vmem:[#allocation3] sm:$0xff] %vm638, %v627
      %640 = vst.msk [vmem:[#allocation3 + $0x28] sm:$0xff] %vm638, %v629
      %641 = vst.msk [vmem:[#allocation3 + $0x50] sm:$0xff] %vm638, %v631
      %642 = vst.msk [vmem:[#allocation3 + $0x78] sm:$0xff] %vm638, %v633
      %v643 = vld [vmem:[%s445] sm:$0xe]
      %v644 = vld [vmem:[%s445 + $0x4] sm:$0x1]
      %v645 = vld [vmem:[%s445 + $0x8] sm:$0xe]
      %v646 = vld [vmem:[%s445 + $0xc] sm:$0x1]
      %v647 = vld [vmem:[%s445 + $0x10] sm:$0xe]
      %v648 = vld [vmem:[%s445 + $0x14] sm:$0x1]
      %v649 = vld [vmem:[%s445 + $0x18] sm:$0xe]
      %v650 = vld [vmem:[%s445 + $0x1c] sm:$0x1]
      %v651 = vld [vmem:[%s445 + $0x20] sm:$0xe]
      %v652 = vld [vmem:[%s445 + $0x24] sm:$0x1]
      %v653 = vld [vmem:[%s445 + $0x28] sm:$0xe]
      %v654 = vld [vmem:[%s445 + $0x2c] sm:$0x1]
      %v655 = vld [vmem:[%s445 + $0x30] sm:$0xe]
      %v656 = vld [vmem:[%s445 + $0x34] sm:$0x1]
      %v657 = vld [vmem:[%s445 + $0x38] sm:$0xe]
      %v658 = vld [vmem:[%s445 + $0x3c] sm:$0x1]
      %vm675 = vcmask 1042432
      %vm676 = vcmask 1046532
      %vm677 = vmor %vm675, %vm676
      %v678 = vrot.slane %v643, 5
      %v679 = vrot.slane %v678, 4
      %v680 = vrot.slane %v644, 5
      %v681 = vsel %vm677, %v679, %v680
      %v682 = vrot.slane %v645, 5
      %v683 = vrot.slane %v682, 4
      %v684 = vrot.slane %v646, 5
      %v685 = vsel %vm677, %v683, %v684
      %v686 = vrot.slane %v647, 5
      %v687 = vrot.slane %v686, 4
      %v688 = vrot.slane %v648, 5
      %v689 = vsel %vm677, %v687, %v688
      %v690 = vrot.slane %v649, 5
      %v691 = vrot.slane %v690, 4
      %v692 = vrot.slane %v650, 5
      %v693 = vsel %vm677, %v691, %v692
      %v694 = vrot.slane %v651, 5
      %v695 = vrot.slane %v694, 4
      %v696 = vrot.slane %v652, 5
      %v697 = vsel %vm677, %v695, %v696
      %v698 = vrot.slane %v653, 5
      %v699 = vrot.slane %v698, 4
      %v700 = vrot.slane %v654, 5
      %v701 = vsel %vm677, %v699, %v700
      %v702 = vrot.slane %v655, 5
      %v703 = vrot.slane %v702, 4
      %v704 = vrot.slane %v656, 5
      %v705 = vsel %vm677, %v703, %v704
      %v706 = vrot.slane %v657, 5
      %v707 = vrot.slane %v706, 4
      %v708 = vrot.slane %v658, 5
      %v709 = vsel %vm677, %v707, %v708
      %v710 = vunpack.c.l.b16 %v681
      %v711 = vunpack.c.l.b16 %v685
      %v712 = vunpack.c.l.b16 %v689
      %v713 = vunpack.c.l.b16 %v693
      %v714 = vunpack.c.l.b16 %v697
      %v715 = vunpack.c.l.b16 %v701
      %v716 = vunpack.c.l.b16 %v705
      %v717 = vunpack.c.l.b16 %v709
      %v718 = vpack.c.b16 %v711, %v710
      %v719 = vpack.c.b16 %v713, %v712
      %v720 = vpack.c.b16 %v715, %v714
      %v721 = vpack.c.b16 %v717, %v716
      %726 = vst.msk [vmem:[#allocation3 + $0x8] sm:$0xff] %vm478, %v718
      %727 = vst.msk [vmem:[#allocation3 + $0x30] sm:$0xff] %vm478, %v719
      %728 = vst.msk [vmem:[#allocation3 + $0x58] sm:$0xff] %vm478, %v720
      %729 = vst.msk [vmem:[#allocation3 + $0x80] sm:$0xff] %vm478, %v721
      %s730 = sadd.s32 %s442, 1
      %s731 = smul.u32 %s730, 2
      %s732 = smul.addr %s731, 4
      %s733 = scalar_lea.vmem [#allocation2], %s732
      %v734 = vld [vmem:[%s733] sm:$0xf]
      %v735 = vld [vmem:[%s733 + $0x8] sm:$0xf]
      %v736 = vld [vmem:[%s733 + $0x10] sm:$0xf]
      %v737 = vld [vmem:[%s733 + $0x18] sm:$0xf]
      %v738 = vld [vmem:[%s733 + $0x20] sm:$0xf]
      %v739 = vld [vmem:[%s733 + $0x28] sm:$0xf]
      %v740 = vld [vmem:[%s733 + $0x30] sm:$0xf]
      %v741 = vld [vmem:[%s733 + $0x38] sm:$0xf]
      %v750 = vunpack.c.l.b16 %v734
      %v751 = vunpack.c.l.b16 %v735
      %v752 = vunpack.c.l.b16 %v736
      %v753 = vunpack.c.l.b16 %v737
      %v754 = vunpack.c.l.b16 %v738
      %v755 = vunpack.c.l.b16 %v739
      %v756 = vunpack.c.l.b16 %v740
      %v757 = vunpack.c.l.b16 %v741
      %v758 = vpack.c.b16 %v751, %v750
      %v759 = vpack.c.b16 %v753, %v752
      %v760 = vpack.c.b16 %v755, %v754
      %v761 = vpack.c.b16 %v757, %v756
      %762 = vrot.lane.b32.xlu0 %v758, 64
      %v763 = vpop.permute.xlu0 %762
      %764 = vrot.lane.b32.xlu0 %v759, 64
      %v765 = vpop.permute.xlu0 %764
      %766 = vrot.lane.b32.xlu0 %v760, 64
      %v767 = vpop.permute.xlu0 %766
      %768 = vrot.lane.b32.xlu0 %v761, 64
      %v769 = vpop.permute.xlu0 %768
      %774 = vst.msk [vmem:[#allocation3 + $0x8] sm:$0xff] %vm638, %v763
      %775 = vst.msk [vmem:[#allocation3 + $0x30] sm:$0xff] %vm638, %v765
      %776 = vst.msk [vmem:[#allocation3 + $0x58] sm:$0xff] %vm638, %v767
      %777 = vst.msk [vmem:[#allocation3 + $0x80] sm:$0xff] %vm638, %v769
      %v778 = vld [vmem:[%s733] sm:$0xf]
      %v779 = vld [vmem:[%s733 + $0x4] sm:$0x1]
      %v780 = vld [vmem:[%s733 + $0x8] sm:$0xf]
      %v781 = vld [vmem:[%s733 + $0xc] sm:$0x1]
      %v782 = vld [vmem:[%s733 + $0x10] sm:$0xf]
      %v783 = vld [vmem:[%s733 + $0x14] sm:$0x1]
      %v784 = vld [vmem:[%s733 + $0x18] sm:$0xf]
      %v785 = vld [vmem:[%s733 + $0x1c] sm:$0x1]
      %v786 = vld [vmem:[%s733 + $0x20] sm:$0xf]
      %v787 = vld [vmem:[%s733 + $0x24] sm:$0x1]
      %v788 = vld [vmem:[%s733 + $0x28] sm:$0xf]
      %v789 = vld [vmem:[%s733 + $0x2c] sm:$0x1]
      %v790 = vld [vmem:[%s733 + $0x30] sm:$0xf]
      %v791 = vld [vmem:[%s733 + $0x34] sm:$0x1]
      %v792 = vld [vmem:[%s733 + $0x38] sm:$0xf]
      %v793 = vld [vmem:[%s733 + $0x3c] sm:$0x1]
      %v795 = vshrl.u32 %v778, 16
      %v797 = vrot.slane %v795, 4
      %v798 = vshll.u32 %v778, 16
      %v800 = vrot.slane %v798, 5
      %v801 = vor.u32 %v797, %v800
      %v802 = vrot.slane %v801, 4
      %v804 = vshll.u32 %v779, 16
      %v806 = vrot.slane %v804, 5
      %v807 = vsel %vm501, %v802, %v806
      %v809 = vshrl.u32 %v780, 16
      %v811 = vrot.slane %v809, 4
      %v812 = vshll.u32 %v780, 16
      %v814 = vrot.slane %v812, 5
      %v815 = vor.u32 %v811, %v814
      %v816 = vrot.slane %v815, 4
      %v818 = vshll.u32 %v781, 16
      %v820 = vrot.slane %v818, 5
      %v821 = vsel %vm501, %v816, %v820
      %v823 = vshrl.u32 %v782, 16
      %v825 = vrot.slane %v823, 4
      %v826 = vshll.u32 %v782, 16
      %v828 = vrot.slane %v826, 5
      %v829 = vor.u32 %v825, %v828
      %v830 = vrot.slane %v829, 4
      %v832 = vshll.u32 %v783, 16
      %v834 = vrot.slane %v832, 5
      %v835 = vsel %vm501, %v830, %v834
      %v837 = vshrl.u32 %v784, 16
      %v839 = vrot.slane %v837, 4
      %v840 = vshll.u32 %v784, 16
      %v842 = vrot.slane %v840, 5
      %v843 = vor.u32 %v839, %v842
      %v844 = vrot.slane %v843, 4
      %v846 = vshll.u32 %v785, 16
      %v848 = vrot.slane %v846, 5
      %v849 = vsel %vm501, %v844, %v848
      %v851 = vshrl.u32 %v786, 16
      %v853 = vrot.slane %v851, 4
      %v854 = vshll.u32 %v786, 16
      %v856 = vrot.slane %v854, 5
      %v857 = vor.u32 %v853, %v856
      %v858 = vrot.slane %v857, 4
      %v860 = vshll.u32 %v787, 16
      %v862 = vrot.slane %v860, 5
      %v863 = vsel %vm501, %v858, %v862
      %v865 = vshrl.u32 %v788, 16
      %v867 = vrot.slane %v865, 4
      %v868 = vshll.u32 %v788, 16
      %v870 = vrot.slane %v868, 5
      %v871 = vor.u32 %v867, %v870
      %v872 = vrot.slane %v871, 4
      %v874 = vshll.u32 %v789, 16
      %v876 = vrot.slane %v874, 5
      %v877 = vsel %vm501, %v872, %v876
      %v879 = vshrl.u32 %v790, 16
      %v881 = vrot.slane %v879, 4
      %v882 = vshll.u32 %v790, 16
      %v884 = vrot.slane %v882, 5
      %v885 = vor.u32 %v881, %v884
      %v886 = vrot.slane %v885, 4
      %v888 = vshll.u32 %v791, 16
      %v890 = vrot.slane %v888, 5
      %v891 = vsel %vm501, %v886, %v890
      %v893 = vshrl.u32 %v792, 16
      %v895 = vrot.slane %v893, 4
      %v896 = vshll.u32 %v792, 16
      %v898 = vrot.slane %v896, 5
      %v899 = vor.u32 %v895, %v898
      %v900 = vrot.slane %v899, 4
      %v902 = vshll.u32 %v793, 16
      %v904 = vrot.slane %v902, 5
      %v905 = vsel %vm501, %v900, %v904
      %v906 = vunpack.c.l.b16 %v807
      %v907 = vunpack.c.l.b16 %v821
      %v908 = vunpack.c.l.b16 %v835
      %v909 = vunpack.c.l.b16 %v849
      %v910 = vunpack.c.l.b16 %v863
      %v911 = vunpack.c.l.b16 %v877
      %v912 = vunpack.c.l.b16 %v891
      %v913 = vunpack.c.l.b16 %v905
      %v914 = vpack.c.b16 %v907, %v906
      %v915 = vpack.c.b16 %v909, %v908
      %v916 = vpack.c.b16 %v911, %v910
      %v917 = vpack.c.b16 %v913, %v912
      %922 = vst.msk [vmem:[#allocation3 + $0x10] sm:$0xff] %vm478, %v914
      %923 = vst.msk [vmem:[#allocation3 + $0x38] sm:$0xff] %vm478, %v915
      %924 = vst.msk [vmem:[#allocation3 + $0x60] sm:$0xff] %vm478, %v916
      %925 = vst.msk [vmem:[#allocation3 + $0x88] sm:$0xff] %vm478, %v917
      %v926 = vld [vmem:[%s733] sm:$0xe]
      %v927 = vld [vmem:[%s733 + $0x4] sm:$0x1]
      %v928 = vld [vmem:[%s733 + $0x8] sm:$0xe]
      %v929 = vld [vmem:[%s733 + $0xc] sm:$0x1]
      %v930 = vld [vmem:[%s733 + $0x10] sm:$0xe]
      %v931 = vld [vmem:[%s733 + $0x14] sm:$0x1]
      %v932 = vld [vmem:[%s733 + $0x18] sm:$0xe]
      %v933 = vld [vmem:[%s733 + $0x1c] sm:$0x1]
      %v934 = vld [vmem:[%s733 + $0x20] sm:$0xe]
      %v935 = vld [vmem:[%s733 + $0x24] sm:$0x1]
      %v936 = vld [vmem:[%s733 + $0x28] sm:$0xe]
      %v937 = vld [vmem:[%s733 + $0x2c] sm:$0x1]
      %v938 = vld [vmem:[%s733 + $0x30] sm:$0xe]
      %v939 = vld [vmem:[%s733 + $0x34] sm:$0x1]
      %v940 = vld [vmem:[%s733 + $0x38] sm:$0xe]
      %v941 = vld [vmem:[%s733 + $0x3c] sm:$0x1]
      %v958 = vrot.slane %v926, 5
      %v959 = vrot.slane %v958, 4
      %v960 = vrot.slane %v927, 5
      %v961 = vsel %vm677, %v959, %v960
      %v962 = vrot.slane %v928, 5
      %v963 = vrot.slane %v962, 4
      %v964 = vrot.slane %v929, 5
      %v965 = vsel %vm677, %v963, %v964
      %v966 = vrot.slane %v930, 5
      %v967 = vrot.slane %v966, 4
      %v968 = vrot.slane %v931, 5
      %v969 = vsel %vm677, %v967, %v968
      %v970 = vrot.slane %v932, 5
      %v971 = vrot.slane %v970, 4
      %v972 = vrot.slane %v933, 5
      %v973 = vsel %vm677, %v971, %v972
      %v974 = vrot.slane %v934, 5
      %v975 = vrot.slane %v974, 4
      %v976 = vrot.slane %v935, 5
      %v977 = vsel %vm677, %v975, %v976
      %v978 = vrot.slane %v936, 5
      %v979 = vrot.slane %v978, 4
      %v980 = vrot.slane %v937, 5
      %v981 = vsel %vm677, %v979, %v980
      %v982 = vrot.slane %v938, 5
      %v983 = vrot.slane %v982, 4
      %v984 = vrot.slane %v939, 5
      %v985 = vsel %vm677, %v983, %v984
      %v986 = vrot.slane %v940, 5
      %v987 = vrot.slane %v986, 4
      %v988 = vrot.slane %v941, 5
      %v989 = vsel %vm677, %v987, %v988
      %v990 = vunpack.c.l.b16 %v961
      %v991 = vunpack.c.l.b16 %v965
      %v992 = vunpack.c.l.b16 %v969
      %v993 = vunpack.c.l.b16 %v973
      %v994 = vunpack.c.l.b16 %v977
      %v995 = vunpack.c.l.b16 %v981
      %v996 = vunpack.c.l.b16 %v985
      %v997 = vunpack.c.l.b16 %v989
      %v998 = vpack.c.b16 %v991, %v990
      %v999 = vpack.c.b16 %v993, %v992
      %v1000 = vpack.c.b16 %v995, %v994
      %v1001 = vpack.c.b16 %v997, %v996
      %1002 = vrot.lane.b32.xlu0 %v998, 64
      %v1003 = vpop.permute.xlu0 %1002
      %1004 = vrot.lane.b32.xlu0 %v999, 64
      %v1005 = vpop.permute.xlu0 %1004
      %1006 = vrot.lane.b32.xlu0 %v1000, 64
      %v1007 = vpop.permute.xlu0 %1006
      %1008 = vrot.lane.b32.xlu0 %v1001, 64
      %v1009 = vpop.permute.xlu0 %1008
      %1014 = vst.msk [vmem:[#allocation3 + $0x10] sm:$0xff] %vm638, %v1003
      %1015 = vst.msk [vmem:[#allocation3 + $0x38] sm:$0xff] %vm638, %v1005
      %1016 = vst.msk [vmem:[#allocation3 + $0x60] sm:$0xff] %vm638, %v1007
      %1017 = vst.msk [vmem:[#allocation3 + $0x88] sm:$0xff] %vm638, %v1009
      %s1018 = sadd.s32 %s442, 2
      %s1019 = smul.u32 %s1018, 2
      %s1020 = smul.addr %s1019, 4
      %s1021 = scalar_lea.vmem [#allocation2], %s1020
      %v1022 = vld [vmem:[%s1021] sm:$0xf]
      %v1023 = vld [vmem:[%s1021 + $0x8] sm:$0xf]
      %v1024 = vld [vmem:[%s1021 + $0x10] sm:$0xf]
      %v1025 = vld [vmem:[%s1021 + $0x18] sm:$0xf]
      %v1026 = vld [vmem:[%s1021 + $0x20] sm:$0xf]
      %v1027 = vld [vmem:[%s1021 + $0x28] sm:$0xf]
      %v1028 = vld [vmem:[%s1021 + $0x30] sm:$0xf]
      %v1029 = vld [vmem:[%s1021 + $0x38] sm:$0xf]
      %v1038 = vunpack.c.l.b16 %v1022
      %v1039 = vunpack.c.l.b16 %v1023
      %v1040 = vunpack.c.l.b16 %v1024
      %v1041 = vunpack.c.l.b16 %v1025
      %v1042 = vunpack.c.l.b16 %v1026
      %v1043 = vunpack.c.l.b16 %v1027
      %v1044 = vunpack.c.l.b16 %v1028
      %v1045 = vunpack.c.l.b16 %v1029
      %v1046 = vpack.c.b16 %v1039, %v1038
      %v1047 = vpack.c.b16 %v1041, %v1040
      %v1048 = vpack.c.b16 %v1043, %v1042
      %v1049 = vpack.c.b16 %v1045, %v1044
      %1054 = vst.msk [vmem:[#allocation3 + $0x18] sm:$0xff] %vm478, %v1046
      %1055 = vst.msk [vmem:[#allocation3 + $0x40] sm:$0xff] %vm478, %v1047
      %1056 = vst.msk [vmem:[#allocation3 + $0x68] sm:$0xff] %vm478, %v1048
      %1057 = vst.msk [vmem:[#allocation3 + $0x90] sm:$0xff] %vm478, %v1049
      %v1058 = vld [vmem:[%s1021] sm:$0xf]
      %v1059 = vld [vmem:[%s1021 + $0x4] sm:$0x1]
      %v1060 = vld [vmem:[%s1021 + $0x8] sm:$0xf]
      %v1061 = vld [vmem:[%s1021 + $0xc] sm:$0x1]
      %v1062 = vld [vmem:[%s1021 + $0x10] sm:$0xf]
      %v1063 = vld [vmem:[%s1021 + $0x14] sm:$0x1]
      %v1064 = vld [vmem:[%s1021 + $0x18] sm:$0xf]
      %v1065 = vld [vmem:[%s1021 + $0x1c] sm:$0x1]
      %v1066 = vld [vmem:[%s1021 + $0x20] sm:$0xf]
      %v1067 = vld [vmem:[%s1021 + $0x24] sm:$0x1]
      %v1068 = vld [vmem:[%s1021 + $0x28] sm:$0xf]
      %v1069 = vld [vmem:[%s1021 + $0x2c] sm:$0x1]
      %v1070 = vld [vmem:[%s1021 + $0x30] sm:$0xf]
      %v1071 = vld [vmem:[%s1021 + $0x34] sm:$0x1]
      %v1072 = vld [vmem:[%s1021 + $0x38] sm:$0xf]
      %v1073 = vld [vmem:[%s1021 + $0x3c] sm:$0x1]
      %v1075 = vshrl.u32 %v1058, 16
      %v1077 = vrot.slane %v1075, 4
      %v1078 = vshll.u32 %v1058, 16
      %v1080 = vrot.slane %v1078, 5
      %v1081 = vor.u32 %v1077, %v1080
      %v1082 = vrot.slane %v1081, 4
      %v1084 = vshll.u32 %v1059, 16
      %v1086 = vrot.slane %v1084, 5
      %v1087 = vsel %vm501, %v1082, %v1086
      %v1089 = vshrl.u32 %v1060, 16
      %v1091 = vrot.slane %v1089, 4
      %v1092 = vshll.u32 %v1060, 16
      %v1094 = vrot.slane %v1092, 5
      %v1095 = vor.u32 %v1091, %v1094
      %v1096 = vrot.slane %v1095, 4
      %v1098 = vshll.u32 %v1061, 16
      %v1100 = vrot.slane %v1098, 5
      %v1101 = vsel %vm501, %v1096, %v1100
      %v1103 = vshrl.u32 %v1062, 16
      %v1105 = vrot.slane %v1103, 4
      %v1106 = vshll.u32 %v1062, 16
      %v1108 = vrot.slane %v1106, 5
      %v1109 = vor.u32 %v1105, %v1108
      %v1110 = vrot.slane %v1109, 4
      %v1112 = vshll.u32 %v1063, 16
      %v1114 = vrot.slane %v1112, 5
      %v1115 = vsel %vm501, %v1110, %v1114
      %v1117 = vshrl.u32 %v1064, 16
      %v1119 = vrot.slane %v1117, 4
      %v1120 = vshll.u32 %v1064, 16
      %v1122 = vrot.slane %v1120, 5
      %v1123 = vor.u32 %v1119, %v1122
      %v1124 = vrot.slane %v1123, 4
      %v1126 = vshll.u32 %v1065, 16
      %v1128 = vrot.slane %v1126, 5
      %v1129 = vsel %vm501, %v1124, %v1128
      %v1131 = vshrl.u32 %v1066, 16
      %v1133 = vrot.slane %v1131, 4
      %v1134 = vshll.u32 %v1066, 16
      %v1136 = vrot.slane %v1134, 5
      %v1137 = vor.u32 %v1133, %v1136
      %v1138 = vrot.slane %v1137, 4
      %v1140 = vshll.u32 %v1067, 16
      %v1142 = vrot.slane %v1140, 5
      %v1143 = vsel %vm501, %v1138, %v1142
      %v1145 = vshrl.u32 %v1068, 16
      %v1147 = vrot.slane %v1145, 4
      %v1148 = vshll.u32 %v1068, 16
      %v1150 = vrot.slane %v1148, 5
      %v1151 = vor.u32 %v1147, %v1150
      %v1152 = vrot.slane %v1151, 4
      %v1154 = vshll.u32 %v1069, 16
      %v1156 = vrot.slane %v1154, 5
      %v1157 = vsel %vm501, %v1152, %v1156
      %v1159 = vshrl.u32 %v1070, 16
      %v1161 = vrot.slane %v1159, 4
      %v1162 = vshll.u32 %v1070, 16
      %v1164 = vrot.slane %v1162, 5
      %v1165 = vor.u32 %v1161, %v1164
      %v1166 = vrot.slane %v1165, 4
      %v1168 = vshll.u32 %v1071, 16
      %v1170 = vrot.slane %v1168, 5
      %v1171 = vsel %vm501, %v1166, %v1170
      %v1173 = vshrl.u32 %v1072, 16
      %v1175 = vrot.slane %v1173, 4
      %v1176 = vshll.u32 %v1072, 16
      %v1178 = vrot.slane %v1176, 5
      %v1179 = vor.u32 %v1175, %v1178
      %v1180 = vrot.slane %v1179, 4
      %v1182 = vshll.u32 %v1073, 16
      %v1184 = vrot.slane %v1182, 5
      %v1185 = vsel %vm501, %v1180, %v1184
      %v1186 = vunpack.c.l.b16 %v1087
      %v1187 = vunpack.c.l.b16 %v1101
      %v1188 = vunpack.c.l.b16 %v1115
      %v1189 = vunpack.c.l.b16 %v1129
      %v1190 = vunpack.c.l.b16 %v1143
      %v1191 = vunpack.c.l.b16 %v1157
      %v1192 = vunpack.c.l.b16 %v1171
      %v1193 = vunpack.c.l.b16 %v1185
      %v1194 = vpack.c.b16 %v1187, %v1186
      %v1195 = vpack.c.b16 %v1189, %v1188
      %v1196 = vpack.c.b16 %v1191, %v1190
      %v1197 = vpack.c.b16 %v1193, %v1192
      %1198 = vrot.lane.b32.xlu0 %v1194, 64
      %v1199 = vpop.permute.xlu0 %1198
      %1200 = vrot.lane.b32.xlu0 %v1195, 64
      %v1201 = vpop.permute.xlu0 %1200
      %1202 = vrot.lane.b32.xlu0 %v1196, 64
      %v1203 = vpop.permute.xlu0 %1202
      %1204 = vrot.lane.b32.xlu0 %v1197, 64
      %v1205 = vpop.permute.xlu0 %1204
      %1210 = vst.msk [vmem:[#allocation3 + $0x18] sm:$0xff] %vm638, %v1199
      %1211 = vst.msk [vmem:[#allocation3 + $0x40] sm:$0xff] %vm638, %v1201
      %1212 = vst.msk [vmem:[#allocation3 + $0x68] sm:$0xff] %vm638, %v1203
      %1213 = vst.msk [vmem:[#allocation3 + $0x90] sm:$0xff] %vm638, %v1205
      %v1214 = vld [vmem:[%s1021] sm:$0xe]
      %v1215 = vld [vmem:[%s1021 + $0x4] sm:$0x1]
      %v1216 = vld [vmem:[%s1021 + $0x8] sm:$0xe]
      %v1217 = vld [vmem:[%s1021 + $0xc] sm:$0x1]
      %v1218 = vld [vmem:[%s1021 + $0x10] sm:$0xe]
      %v1219 = vld [vmem:[%s1021 + $0x14] sm:$0x1]
      %v1220 = vld [vmem:[%s1021 + $0x18] sm:$0xe]
      %v1221 = vld [vmem:[%s1021 + $0x1c] sm:$0x1]
      %v1222 = vld [vmem:[%s1021 + $0x20] sm:$0xe]
      %v1223 = vld [vmem:[%s1021 + $0x24] sm:$0x1]
      %v1224 = vld [vmem:[%s1021 + $0x28] sm:$0xe]
      %v1225 = vld [vmem:[%s1021 + $0x2c] sm:$0x1]
      %v1226 = vld [vmem:[%s1021 + $0x30] sm:$0xe]
      %v1227 = vld [vmem:[%s1021 + $0x34] sm:$0x1]
      %v1228 = vld [vmem:[%s1021 + $0x38] sm:$0xe]
      %v1229 = vld [vmem:[%s1021 + $0x3c] sm:$0x1]
      %v1246 = vrot.slane %v1214, 5
      %v1247 = vrot.slane %v1246, 4
      %v1248 = vrot.slane %v1215, 5
      %v1249 = vsel %vm677, %v1247, %v1248
      %v1250 = vrot.slane %v1216, 5
      %v1251 = vrot.slane %v1250, 4
      %v1252 = vrot.slane %v1217, 5
      %v1253 = vsel %vm677, %v1251, %v1252
      %v1254 = vrot.slane %v1218, 5
      %v1255 = vrot.slane %v1254, 4
      %v1256 = vrot.slane %v1219, 5
      %v1257 = vsel %vm677, %v1255, %v1256
      %v1258 = vrot.slane %v1220, 5
      %v1259 = vrot.slane %v1258, 4
      %v1260 = vrot.slane %v1221, 5
      %v1261 = vsel %vm677, %v1259, %v1260
      %v1262 = vrot.slane %v1222, 5
      %v1263 = vrot.slane %v1262, 4
      %v1264 = vrot.slane %v1223, 5
      %v1265 = vsel %vm677, %v1263, %v1264
      %v1266 = vrot.slane %v1224, 5
      %v1267 = vrot.slane %v1266, 4
      %v1268 = vrot.slane %v1225, 5
      %v1269 = vsel %vm677, %v1267, %v1268
      %v1270 = vrot.slane %v1226, 5
      %v1271 = vrot.slane %v1270, 4
      %v1272 = vrot.slane %v1227, 5
      %v1273 = vsel %vm677, %v1271, %v1272
      %v1274 = vrot.slane %v1228, 5
      %v1275 = vrot.slane %v1274, 4
      %v1276 = vrot.slane %v1229, 5
      %v1277 = vsel %vm677, %v1275, %v1276
      %v1278 = vunpack.c.l.b16 %v1249
      %v1279 = vunpack.c.l.b16 %v1253
      %v1280 = vunpack.c.l.b16 %v1257
      %v1281 = vunpack.c.l.b16 %v1261
      %v1282 = vunpack.c.l.b16 %v1265
      %v1283 = vunpack.c.l.b16 %v1269
      %v1284 = vunpack.c.l.b16 %v1273
      %v1285 = vunpack.c.l.b16 %v1277
      %v1286 = vpack.c.b16 %v1279, %v1278
      %v1287 = vpack.c.b16 %v1281, %v1280
      %v1288 = vpack.c.b16 %v1283, %v1282
      %v1289 = vpack.c.b16 %v1285, %v1284
      %1294 = vst.msk [vmem:[#allocation3 + $0x20] sm:$0xff] %vm478, %v1286
      %1295 = vst.msk [vmem:[#allocation3 + $0x48] sm:$0xff] %vm478, %v1287
      %1296 = vst.msk [vmem:[#allocation3 + $0x70] sm:$0xff] %vm478, %v1288
      %1297 = vst.msk [vmem:[#allocation3 + $0x98] sm:$0xff] %vm478, %v1289
      %v1298 = vld [vmem:[#allocation3] sm:$0xff]
      %v1299 = vld [vmem:[#allocation3 + $0x8] sm:$0xff]
      %v1300 = vld [vmem:[#allocation3 + $0x10] sm:$0xff]
      %v1301 = vld [vmem:[#allocation3 + $0x18] sm:$0xff]
      %v1302 = vld [vmem:[#allocation3 + $0x20] sm:$0xff]
      %v1303 = vld [vmem:[#allocation3 + $0x28] sm:$0xff]
      %v1304 = vld [vmem:[#allocation3 + $0x30] sm:$0xff]
      %v1305 = vld [vmem:[#allocation3 + $0x38] sm:$0xff]
      %v1306 = vld [vmem:[#allocation3 + $0x40] sm:$0xff]
      %v1307 = vld [vmem:[#allocation3 + $0x48] sm:$0xff]
      %v1308 = vld [vmem:[#allocation3 + $0x50] sm:$0xff]
      %v1309 = vld [vmem:[#allocation3 + $0x58] sm:$0xff]
      %v1310 = vld [vmem:[#allocation3 + $0x60] sm:$0xff]
      %v1311 = vld [vmem:[#allocation3 + $0x68] sm:$0xff]
      %v1312 = vld [vmem:[#allocation3 + $0x70] sm:$0xff]
      %v1313 = vld [vmem:[#allocation3 + $0x78] sm:$0xff]
      %v1314 = vld [vmem:[#allocation3 + $0x80] sm:$0xff]
      %v1315 = vld [vmem:[#allocation3 + $0x88] sm:$0xff]
      %v1316 = vld [vmem:[#allocation3 + $0x90] sm:$0xff]
      %v1317 = vld [vmem:[#allocation3 + $0x98] sm:$0xff]
      %v1318 = vld [vmem:[%s1] sm:$0xf]
      %v1319 = vld [vmem:[%s1 + $0x4] sm:$0xf]
      %v1320 = vld [vmem:[%s1 + $0x8] sm:$0xf]
      %v1321 = vld [vmem:[%s1 + $0xc] sm:$0xf]
      %v1322 = vld [vmem:[%s1 + $0x10] sm:$0xf]
      %v1323 = vld [vmem:[%s1 + $0x14] sm:$0xf]
      %v1324 = vld [vmem:[%s1 + $0x18] sm:$0xf]
      %v1325 = vld [vmem:[%s1 + $0x1c] sm:$0xf]
      %v1326 = vld [vmem:[%s1 + $0x20] sm:$0xf]
      %v1327 = vld [vmem:[%s1 + $0x24] sm:$0xf]
      %v1328 = vld [vmem:[%s1 + $0x28] sm:$0xf]
      %v1329 = vld [vmem:[%s1 + $0x2c] sm:$0xf]
      %v1330 = vld [vmem:[%s1 + $0x30] sm:$0xf]
      %v1331 = vld [vmem:[%s1 + $0x34] sm:$0xf]
      %v1332 = vld [vmem:[%s1 + $0x38] sm:$0xf]
      %v1333 = vld [vmem:[%s1 + $0x3c] sm:$0xf]
      %v1334 = vld [vmem:[%s1 + $0x40] sm:$0xf]
      %v1335 = vld [vmem:[%s1 + $0x44] sm:$0xf]
      %v1336 = vld [vmem:[%s1 + $0x48] sm:$0xf]
      %v1337 = vld [vmem:[%s1 + $0x4c] sm:$0xf]
      %v1338 = vld [vmem:[%s1 + $0x50] sm:$0xf]
      %v1339 = vld [vmem:[%s1 + $0x54] sm:$0xf]
      %v1340 = vld [vmem:[%s1 + $0x58] sm:$0xf]
      %v1341 = vld [vmem:[%s1 + $0x5c] sm:$0xf]
      %v1342 = vld [vmem:[%s1 + $0x60] sm:$0xf]
      %v1343 = vld [vmem:[%s1 + $0x64] sm:$0xf]
      %v1344 = vld [vmem:[%s1 + $0x68] sm:$0xf]
      %v1345 = vld [vmem:[%s1 + $0x6c] sm:$0xf]
      %v1346 = vld [vmem:[%s1 + $0x70] sm:$0xf]
      %v1347 = vld [vmem:[%s1 + $0x74] sm:$0xf]
      %v1348 = vld [vmem:[%s1 + $0x78] sm:$0xf]
      %v1349 = vld [vmem:[%s1 + $0x7c] sm:$0xf]
      %v1350 = vld [vmem:[%s1 + $0x80] sm:$0xf]
      %v1351 = vld [vmem:[%s1 + $0x84] sm:$0xf]
      %v1352 = vld [vmem:[%s1 + $0x88] sm:$0xf]
      %v1353 = vld [vmem:[%s1 + $0x8c] sm:$0xf]
      %v1354 = vld [vmem:[%s1 + $0x90] sm:$0xf]
      %v1355 = vld [vmem:[%s1 + $0x94] sm:$0xf]
      %v1356 = vld [vmem:[%s1 + $0x98] sm:$0xf]
      %v1357 = vld [vmem:[%s1 + $0x9c] sm:$0xf]
      %v1358 = vld [vmem:[%s1 + $0xa0] sm:$0xf]
      %v1359 = vld [vmem:[%s1 + $0xa4] sm:$0xf]
      %v1360 = vld [vmem:[%s1 + $0xa8] sm:$0xf]
      %v1361 = vld [vmem:[%s1 + $0xac] sm:$0xf]
      %v1362 = vld [vmem:[%s1 + $0xb0] sm:$0xf]
      %v1363 = vld [vmem:[%s1 + $0xb4] sm:$0xf]
      %v1364 = vld [vmem:[%s1 + $0xb8] sm:$0xf]
      %v1365 = vld [vmem:[%s1 + $0xbc] sm:$0xf]
      %v1366 = vld [vmem:[%s1 + $0xc0] sm:$0xf]
      %v1367 = vld [vmem:[%s1 + $0xc4] sm:$0xf]
      %v1368 = vld [vmem:[%s1 + $0xc8] sm:$0xf]
      %v1369 = vld [vmem:[%s1 + $0xcc] sm:$0xf]
      %v1370 = vld [vmem:[%s1 + $0xd0] sm:$0xf]
      %v1371 = vld [vmem:[%s1 + $0xd4] sm:$0xf]
      %v1372 = vld [vmem:[%s1 + $0xd8] sm:$0xf]
      %v1373 = vld [vmem:[%s1 + $0xdc] sm:$0xf]
      %v1374 = vld [vmem:[%s1 + $0xe0] sm:$0xf]
      %v1375 = vld [vmem:[%s1 + $0xe4] sm:$0xf]
      %v1376 = vld [vmem:[%s1 + $0xe8] sm:$0xf]
      %v1377 = vld [vmem:[%s1 + $0xec] sm:$0xf]
      %v1378 = vld [vmem:[%s1 + $0xf0] sm:$0xf]
      %v1379 = vld [vmem:[%s1 + $0xf4] sm:$0xf]
      %v1380 = vld [vmem:[%s1 + $0xf8] sm:$0xf]
      %v1381 = vld [vmem:[%s1 + $0xfc] sm:$0xf]
      %v1382 = vld [vmem:[%s1 + $0x100] sm:$0xf]
      %v1383 = vld [vmem:[%s1 + $0x104] sm:$0xf]
      %v1384 = vld [vmem:[%s1 + $0x108] sm:$0xf]
      %v1385 = vld [vmem:[%s1 + $0x10c] sm:$0xf]
      %v1386 = vld [vmem:[%s1 + $0x110] sm:$0xf]
      %v1387 = vld [vmem:[%s1 + $0x114] sm:$0xf]
      %v1388 = vld [vmem:[%s1 + $0x118] sm:$0xf]
      %v1389 = vld [vmem:[%s1 + $0x11c] sm:$0xf]
      %v1462 = vunpack.c.l.b16 %v1318
      %v1463 = vunpack.c.l.b16 %v1319
      %v1464 = vunpack.c.l.b16 %v1320
      %v1465 = vunpack.c.l.b16 %v1321
      %v1466 = vunpack.c.l.b16 %v1322
      %v1467 = vunpack.c.l.b16 %v1323
      %v1468 = vunpack.c.l.b16 %v1324
      %v1469 = vunpack.c.l.b16 %v1325
      %v1470 = vunpack.c.l.b16 %v1326
      %v1471 = vunpack.c.l.b16 %v1327
      %v1472 = vunpack.c.l.b16 %v1328
      %v1473 = vunpack.c.l.b16 %v1329
      %v1474 = vunpack.c.l.b16 %v1330
      %v1475 = vunpack.c.l.b16 %v1331
      %v1476 = vunpack.c.l.b16 %v1332
      %v1477 = vunpack.c.l.b16 %v1333
      %v1478 = vunpack.c.l.b16 %v1334
      %v1479 = vunpack.c.l.b16 %v1335
      %v1480 = vunpack.c.l.b16 %v1336
      %v1481 = vunpack.c.l.b16 %v1337
      %v1482 = vunpack.c.l.b16 %v1338
      %v1483 = vunpack.c.l.b16 %v1339
      %v1484 = vunpack.c.l.b16 %v1340
      %v1485 = vunpack.c.l.b16 %v1341
      %v1486 = vunpack.c.l.b16 %v1342
      %v1487 = vunpack.c.l.b16 %v1343
      %v1488 = vunpack.c.l.b16 %v1344
      %v1489 = vunpack.c.l.b16 %v1345
      %v1490 = vunpack.c.l.b16 %v1346
      %v1491 = vunpack.c.l.b16 %v1347
      %v1492 = vunpack.c.l.b16 %v1348
      %v1493 = vunpack.c.l.b16 %v1349
      %v1494 = vunpack.c.l.b16 %v1350
      %v1495 = vunpack.c.l.b16 %v1351
      %v1496 = vunpack.c.l.b16 %v1352
      %v1497 = vunpack.c.l.b16 %v1353
      %v1498 = vunpack.c.l.b16 %v1354
      %v1499 = vunpack.c.l.b16 %v1355
      %v1500 = vunpack.c.l.b16 %v1356
      %v1501 = vunpack.c.l.b16 %v1357
      %v1502 = vunpack.c.l.b16 %v1358
      %v1503 = vunpack.c.l.b16 %v1359
      %v1504 = vunpack.c.l.b16 %v1360
      %v1505 = vunpack.c.l.b16 %v1361
      %v1506 = vunpack.c.l.b16 %v1362
      %v1507 = vunpack.c.l.b16 %v1363
      %v1508 = vunpack.c.l.b16 %v1364
      %v1509 = vunpack.c.l.b16 %v1365
      %v1510 = vunpack.c.l.b16 %v1366
      %v1511 = vunpack.c.l.b16 %v1367
      %v1512 = vunpack.c.l.b16 %v1368
      %v1513 = vunpack.c.l.b16 %v1369
      %v1514 = vunpack.c.l.b16 %v1370
      %v1515 = vunpack.c.l.b16 %v1371
      %v1516 = vunpack.c.l.b16 %v1372
      %v1517 = vunpack.c.l.b16 %v1373
      %v1518 = vunpack.c.l.b16 %v1374
      %v1519 = vunpack.c.l.b16 %v1375
      %v1520 = vunpack.c.l.b16 %v1376
      %v1521 = vunpack.c.l.b16 %v1377
      %v1522 = vunpack.c.l.b16 %v1378
      %v1523 = vunpack.c.l.b16 %v1379
      %v1524 = vunpack.c.l.b16 %v1380
      %v1525 = vunpack.c.l.b16 %v1381
      %v1526 = vunpack.c.l.b16 %v1382
      %v1527 = vunpack.c.l.b16 %v1383
      %v1528 = vunpack.c.l.b16 %v1384
      %v1529 = vunpack.c.l.b16 %v1385
      %v1530 = vunpack.c.l.b16 %v1386
      %v1531 = vunpack.c.l.b16 %v1387
      %v1532 = vunpack.c.l.b16 %v1388
      %v1533 = vunpack.c.l.b16 %v1389
      %v1534 = vpack.c.b16 %v1463, %v1462
      %v1535 = vpack.c.b16 %v1465, %v1464
      %v1536 = vpack.c.b16 %v1467, %v1466
      %v1537 = vpack.c.b16 %v1469, %v1468
      %v1538 = vpack.c.b16 %v1471, %v1470
      %v1539 = vpack.c.b16 %v1473, %v1472
      %v1540 = vpack.c.b16 %v1475, %v1474
      %v1541 = vpack.c.b16 %v1477, %v1476
      %v1542 = vpack.c.b16 %v1479, %v1478
      %v1543 = vpack.c.b16 %v1481, %v1480
      %v1544 = vpack.c.b16 %v1483, %v1482
      %v1545 = vpack.c.b16 %v1485, %v1484
      %v1546 = vpack.c.b16 %v1487, %v1486
      %v1547 = vpack.c.b16 %v1489, %v1488
      %v1548 = vpack.c.b16 %v1491, %v1490
      %v1549 = vpack.c.b16 %v1493, %v1492
      %v1550 = vpack.c.b16 %v1495, %v1494
      %v1551 = vpack.c.b16 %v1497, %v1496
      %v1552 = vpack.c.b16 %v1499, %v1498
      %v1553 = vpack.c.b16 %v1501, %v1500
      %v1554 = vpack.c.b16 %v1503, %v1502
      %v1555 = vpack.c.b16 %v1505, %v1504
      %v1556 = vpack.c.b16 %v1507, %v1506
      %v1557 = vpack.c.b16 %v1509, %v1508
      %v1558 = vpack.c.b16 %v1511, %v1510
      %v1559 = vpack.c.b16 %v1513, %v1512
      %v1560 = vpack.c.b16 %v1515, %v1514
      %v1561 = vpack.c.b16 %v1517, %v1516
      %v1562 = vpack.c.b16 %v1519, %v1518
      %v1563 = vpack.c.b16 %v1521, %v1520
      %v1564 = vpack.c.b16 %v1523, %v1522
      %v1565 = vpack.c.b16 %v1525, %v1524
      %v1566 = vpack.c.b16 %v1527, %v1526
      %v1567 = vpack.c.b16 %v1529, %v1528
      %v1568 = vpack.c.b16 %v1531, %v1530
      %v1569 = vpack.c.b16 %v1533, %v1532
      %v1607 = vsel %vm478, %v1302, 0
      %v1610 = vsel %vm478, %v1307, 0
      %v1613 = vsel %vm478, %v1312, 0
      %v1616 = vsel %vm478, %v1317, 0
      %1618 = vmatprep.subr.bf16.mxu0 0
      %1619 = vmatpush1.bf16.msra.mxu0 %v1534
      %1620 = vmatprep.subr.bf16.mxu0 0
      %1621 = vmatpush1.bf16.msra.mxu0 %v1535
      %1622 = vmatprep.subr.bf16.mxu0 0
      %1623 = vmatpush1.bf16.msra.mxu0 %v1536
      %1624 = vmatprep.subr.bf16.mxu0 0
      %1625 = vmatpush1.bf16.msra.mxu0 %v1537
      %1626 = vmatprep.subr.bf16.mxu0 0
      %1627 = vmatpush1.bf16.msra.mxu0 %v1538
      %1628 = vmatprep.subr.bf16.mxu0 0
      %1629 = vmatpush1.bf16.msra.mxu0 %v1539
      %1630 = vmatprep.subr.bf16.mxu0 0
      %1631 = vmatpush1.bf16.msra.mxu0 %v1540
      %1632 = vmatprep.subr.bf16.mxu0 0
      %1633 = vmatpush1.bf16.msra.mxu0 %v1541
      %1634 = vmatprep.subr.bf16.mxu0 0
      %1635 = vmatpush1.bf16.msra.mxu0 %v1542
      %1636 = vmatprep.subr.bf16.mxu0 0
      %1637 = vmatpush1.bf16.msra.mxu0 %v1543
      %1638 = vmatprep.subr.bf16.mxu0 0
      %1639 = vmatpush1.bf16.msra.mxu0 %v1544
      %1640 = vmatprep.subr.bf16.mxu0 0
      %1641 = vmatpush1.bf16.msra.mxu0 %v1545
      %1642 = vmatprep.subr.bf16.mxu0 0
      %1643 = vmatpush1.bf16.msra.mxu0 %v1546
      %1644 = vmatprep.subr.bf16.mxu0 0
      %1645 = vmatpush1.bf16.msra.mxu0 %v1547
      %1646 = vmatprep.subr.bf16.mxu0 0
      %1647 = vmatpush1.bf16.msra.mxu0 %v1548
      %1648 = vmatprep.subr.bf16.mxu0 0
      %1649 = vmatpush1.bf16.msra.mxu0 %v1549
      %1650 = vmatprep.mubr.bf16.mxu0 %v1299
      %1651 = vmatmul.mubr.bf16.gmra.mrb[0].mxu0 %v1298
      %v1652 = vpop.f32.mrb[0].mxu0
      %v1653 = vadd.f32 0.0, %v1652
      %v1654 = vpop.f32.mrb[0].mxu0
      %v1655 = vpop.f32.mrb[0].mxu0
      %v1656 = vadd.f32 0.0, %v1655
      %v1657 = vpop.f32.mrb[0].mxu0
      %1658 = vmatprep.mubr.bf16.mxu0 %v1304
      %1659 = vmatmul.mubr.bf16.gmra.mrb[0].mxu0 %v1303
      %v1660 = vpop.f32.mrb[0].mxu0
      %v1661 = vadd.f32 0.0, %v1660
      %v1662 = vpop.f32.mrb[0].mxu0
      %v1663 = vpop.f32.mrb[0].mxu0
      %v1664 = vadd.f32 0.0, %v1663
      %v1665 = vpop.f32.mrb[0].mxu0
      %1666 = vmatprep.mubr.bf16.mxu0 %v1309
      %1667 = vmatmul.mubr.bf16.gmra.mrb[0].mxu0 %v1308
      %v1668 = vpop.f32.mrb[0].mxu0
      %v1669 = vadd.f32 0.0, %v1668
      %v1670 = vpop.f32.mrb[0].mxu0
      %v1671 = vpop.f32.mrb[0].mxu0
      %v1672 = vadd.f32 0.0, %v1671
      %v1673 = vpop.f32.mrb[0].mxu0
      %1674 = vmatprep.mubr.bf16.mxu0 %v1314
      %1675 = vmatmul.mubr.bf16.gmra.mrb[0].mxu0 %v1313
      %v1676 = vpop.f32.mrb[0].mxu0
      %v1677 = vadd.f32 0.0, %v1676
      %v1678 = vpop.f32.mrb[0].mxu0
      %v1679 = vpop.f32.mrb[0].mxu0
      %v1680 = vadd.f32 0.0, %v1679
      %v1681 = vpop.f32.mrb[0].mxu0
      %1682 = vdwg.mxu0
      %1683 = vmatprep.subr.bf16.mxu0 0
      %1684 = vmatpush1.bf16.msra.mxu0 %v1550
      %1685 = vmatprep.subr.bf16.mxu0 0
      %1686 = vmatpush1.bf16.msra.mxu0 %v1551
      %1687 = vmatprep.subr.bf16.mxu0 0
      %1688 = vmatpush1.bf16.msra.mxu0 %v1552
      %1689 = vmatprep.subr.bf16.mxu0 0
      %1690 = vmatpush1.bf16.msra.mxu0 %v1553
      %1691 = vmatprep.subr.bf16.mxu0 0
      %1692 = vmatpush1.bf16.msra.mxu0 %v1554
      %1693 = vmatprep.subr.bf16.mxu0 0
      %1694 = vmatpush1.bf16.msra.mxu0 %v1555
      %1695 = vmatprep.subr.bf16.mxu0 0
      %1696 = vmatpush1.bf16.msra.mxu0 %v1556
      %1697 = vmatprep.subr.bf16.mxu0 0
      %1698 = vmatpush1.bf16.msra.mxu0 %v1557
      %1699 = vmatprep.subr.bf16.mxu0 0
      %1700 = vmatpush1.bf16.msra.mxu0 %v1558
      %1701 = vmatprep.subr.bf16.mxu0 0
      %1702 = vmatpush1.bf16.msra.mxu0 %v1559
      %1703 = vmatprep.subr.bf16.mxu0 0
      %1704 = vmatpush1.bf16.msra.mxu0 %v1560
      %1705 = vmatprep.subr.bf16.mxu0 0
      %1706 = vmatpush1.bf16.msra.mxu0 %v1561
      %1707 = vmatprep.subr.bf16.mxu0 0
      %1708 = vmatpush1.bf16.msra.mxu0 %v1562
      %1709 = vmatprep.subr.bf16.mxu0 0
      %1710 = vmatpush1.bf16.msra.mxu0 %v1563
      %1711 = vmatprep.subr.bf16.mxu0 0
      %1712 = vmatpush1.bf16.msra.mxu0 %v1564
      %1713 = vmatprep.subr.bf16.mxu0 0
      %1714 = vmatpush1.bf16.msra.mxu0 %v1565
      %1715 = vmatprep.mubr.bf16.mxu0 %v1301
      %1716 = vmatmul.mubr.bf16.gmra.mrb[0].mxu0 %v1300
      %v1717 = vpop.f32.mrb[0].mxu0
      %v1718 = vadd.f32 %v1653, %v1717
      %v1719 = vpop.f32.mrb[0].mxu0
      %v1720 = vpop.f32.mrb[0].mxu0
      %v1721 = vadd.f32 %v1656, %v1720
      %v1722 = vpop.f32.mrb[0].mxu0
      %1723 = vmatprep.mubr.bf16.mxu0 %v1306
      %1724 = vmatmul.mubr.bf16.gmra.mrb[0].mxu0 %v1305
      %v1725 = vpop.f32.mrb[0].mxu0
      %v1726 = vadd.f32 %v1661, %v1725
      %v1727 = vpop.f32.mrb[0].mxu0
      %v1728 = vpop.f32.mrb[0].mxu0
      %v1729 = vadd.f32 %v1664, %v1728
      %v1730 = vpop.f32.mrb[0].mxu0
      %1731 = vmatprep.mubr.bf16.mxu0 %v1311
      %1732 = vmatmul.mubr.bf16.gmra.mrb[0].mxu0 %v1310
      %v1733 = vpop.f32.mrb[0].mxu0
      %v1734 = vadd.f32 %v1669, %v1733
      %v1735 = vpop.f32.mrb[0].mxu0
      %v1736 = vpop.f32.mrb[0].mxu0
      %v1737 = vadd.f32 %v1672, %v1736
      %v1738 = vpop.f32.mrb[0].mxu0
      %1739 = vmatprep.mubr.bf16.mxu0 %v1316
      %1740 = vmatmul.mubr.bf16.gmra.mrb[0].mxu0 %v1315
      %v1741 = vpop.f32.mrb[0].mxu0
      %v1742 = vadd.f32 %v1677, %v1741
      %v1743 = vpop.f32.mrb[0].mxu0
      %v1744 = vpop.f32.mrb[0].mxu0
      %v1745 = vadd.f32 %v1680, %v1744
      %v1746 = vpop.f32.mrb[0].mxu0
      %1747 = vdwg.mxu0
      %1748 = vmatprep.subr.bf16.mxu0 0
      %1749 = vmatpush1.bf16.msra.mxu0 %v1566
      %1750 = vmatprep.subr.bf16.mxu0 0
      %1751 = vmatpush1.bf16.msra.mxu0 %v1567
      %1752 = vmatprep.subr.bf16.mxu0 0
      %1753 = vmatpush1.bf16.msra.mxu0 %v1568
      %1754 = vmatprep.subr.bf16.mxu0 0
      %1755 = vmatpush1.bf16.msra.mxu0 %v1569
      %1756 = vmatprep.subr.bf16.mxu0 0
      %1757 = vmatpush1.bf16.msra.mxu0 0
      %1758 = vmatprep.subr.bf16.mxu0 0
      %1759 = vmatpush1.bf16.msra.mxu0 0
      %1760 = vmatprep.subr.bf16.mxu0 0
      %1761 = vmatpush1.bf16.msra.mxu0 0
      %1762 = vmatprep.subr.bf16.mxu0 0
      %1763 = vmatpush1.bf16.msra.mxu0 0
      %1764 = vmatprep.subr.bf16.mxu0 0
      %1765 = vmatpush1.bf16.msra.mxu0 0
      %1766 = vmatprep.subr.bf16.mxu0 0
      %1767 = vmatpush1.bf16.msra.mxu0 0
      %1768 = vmatprep.subr.bf16.mxu0 0
      %1769 = vmatpush1.bf16.msra.mxu0 0
      %1770 = vmatprep.subr.bf16.mxu0 0
      %1771 = vmatpush1.bf16.msra.mxu0 0
      %1772 = vmatprep.subr.bf16.mxu0 0
      %1773 = vmatpush1.bf16.msra.mxu0 0
      %1774 = vmatprep.subr.bf16.mxu0 0
      %1775 = vmatpush1.bf16.msra.mxu0 0
      %1776 = vmatprep.subr.bf16.mxu0 0
      %1777 = vmatpush1.bf16.msra.mxu0 0
      %1778 = vmatprep.subr.bf16.mxu0 0
      %1779 = vmatpush1.bf16.msra.mxu0 0
      %1780 = vmatprep.mubr.bf16.mxu0 0
      %1781 = vmatmul.mubr.bf16.gmra.mrb[0].mxu0 %v1607
      %v1782 = vpop.f32.mrb[0].mxu0
      %v1783 = vadd.f32 %v1718, %v1782
      %v1784 = vpop.f32.mrb[0].mxu0
      %v1785 = vpop.f32.mrb[0].mxu0
      %v1786 = vadd.f32 %v1721, %v1785
      %v1787 = vpop.f32.mrb[0].mxu0
      %1788 = vmatprep.mubr.bf16.mxu0 0
      %1789 = vmatmul.mubr.bf16.gmra.mrb[0].mxu0 %v1610
      %v1790 = vpop.f32.mrb[0].mxu0
      %v1791 = vadd.f32 %v1726, %v1790
      %v1792 = vpop.f32.mrb[0].mxu0
      %v1793 = vpop.f32.mrb[0].mxu0
      %v1794 = vadd.f32 %v1729, %v1793
      %v1795 = vpop.f32.mrb[0].mxu0
      %1796 = vmatprep.mubr.bf16.mxu0 0
      %1797 = vmatmul.mubr.bf16.gmra.mrb[0].mxu0 %v1613
      %v1798 = vpop.f32.mrb[0].mxu0
      %v1799 = vadd.f32 %v1734, %v1798
      %v1800 = vpop.f32.mrb[0].mxu0
      %v1801 = vpop.f32.mrb[0].mxu0
      %v1802 = vadd.f32 %v1737, %v1801
      %v1803 = vpop.f32.mrb[0].mxu0
      %1804 = vmatprep.mubr.bf16.mxu0 0
      %1805 = vmatmul.mubr.bf16.gmra.mrb[0].mxu0 %v1616
      %v1806 = vpop.f32.mrb[0].mxu0
      %v1807 = vadd.f32 %v1742, %v1806
      %v1808 = vpop.f32.mrb[0].mxu0
      %v1809 = vpop.f32.mrb[0].mxu0
      %v1810 = vadd.f32 %v1745, %v1809
      %v1811 = vpop.f32.mrb[0].mxu0
      %1812 = vdwg.mxu0
      %v1813 = vsel %vm478, %v1783, 0.0
      %v1814 = vsel %vm478, %v1786, 0.0
      %v1815 = vadd.f32 %v1813, %v1814
      %v1816 = vsel %vm478, %v1791, 0.0
      %v1817 = vadd.f32 %v1815, %v1816
      %v1818 = vsel %vm478, %v1794, 0.0
      %v1819 = vadd.f32 %v1817, %v1818
      %v1820 = vsel %vm478, %v1799, 0.0
      %v1821 = vadd.f32 %v1819, %v1820
      %v1822 = vsel %vm478, %v1802, 0.0
      %v1823 = vadd.f32 %v1821, %v1822
      %v1824 = vsel %vm478, %v1807, 0.0
      %v1825 = vadd.f32 %v1823, %v1824
      %v1826 = vsel %vm478, %v1810, 0.0
      %v1827 = vadd.f32 %v1825, %v1826
      %v1828 = vrot.slane %v1827, 4
      %v1829 = vadd.f32 %v1827, %v1828
      %v1830 = vrot.slane %v1829, 2
      %v1831 = vadd.f32 %v1829, %v1830
      %v1832 = vrot.slane %v1831, 1
      %v1833 = vadd.f32 %v1831, %v1832
      %vm1834 = vcmask 516096
      %1835 = vst.msk [vmem:[%s239] sm:$0x1] %vm1834, %v1833
      %v1836 = vmul.f32 %v1783, %v1783
      %v1837 = vmul.f32 %v1786, %v1786
      %v1838 = vmul.f32 %v1791, %v1791
      %v1839 = vmul.f32 %v1794, %v1794
      %v1840 = vmul.f32 %v1799, %v1799
      %v1841 = vmul.f32 %v1802, %v1802
      %v1842 = vmul.f32 %v1807, %v1807
      %v1843 = vmul.f32 %v1810, %v1810
      %v1844 = vsel %vm478, %v1836, 0.0
      %v1845 = vsel %vm478, %v1837, 0.0
      %v1846 = vadd.f32 %v1844, %v1845
      %v1847 = vsel %vm478, %v1838, 0.0
      %v1848 = vadd.f32 %v1846, %v1847
      %v1849 = vsel %vm478, %v1839, 0.0
      %v1850 = vadd.f32 %v1848, %v1849
      %v1851 = vsel %vm478, %v1840, 0.0
      %v1852 = vadd.f32 %v1850, %v1851
      %v1853 = vsel %vm478, %v1841, 0.0
      %v1854 = vadd.f32 %v1852, %v1853
      %v1855 = vsel %vm478, %v1842, 0.0
      %v1856 = vadd.f32 %v1854, %v1855
      %v1857 = vsel %vm478, %v1843, 0.0
      %v1858 = vadd.f32 %v1856, %v1857
      %v1859 = vrot.slane %v1858, 4
      %v1860 = vadd.f32 %v1858, %v1859
      %v1861 = vrot.slane %v1860, 2
      %v1862 = vadd.f32 %v1860, %v1861
      %v1863 = vrot.slane %v1862, 1
      %v1864 = vadd.f32 %v1862, %v1863
      %1865 = vst.msk [vmem:[%s239 + $0x1] sm:$0x1] %vm1834, %v1864
      %v1866 = vld [vmem:[%s2] sm:$0x1]
      %v1868 = vlaneseq
      %v1869 = vshrl.u32 %v1868, 7
      %v1870 = vsub.s32 0, %v1869
      %v1871 = vrot.slane %v1866, %v1870
      %v1873 = vadd.f32 %v1783, %v1871
      %v1874 = vadd.f32 %v1786, %v1871
      %v1875 = vadd.f32 %v1791, %v1871
      %v1876 = vadd.f32 %v1794, %v1871
      %v1877 = vadd.f32 %v1799, %v1871
      %v1878 = vadd.f32 %v1802, %v1871
      %v1879 = vadd.f32 %v1807, %v1871
      %v1880 = vadd.f32 %v1810, %v1871
      %v1881 = vpack.c.bf16 %v1874, %v1873
      %v1882 = vpack.c.bf16 %v1876, %v1875
      %v1883 = vpack.c.bf16 %v1878, %v1877
      %v1884 = vpack.c.bf16 %v1880, %v1879
      %v1889 = vunpack.c.l.b16 %v1881
      %v1890 = vunpack.c.h.b16 %v1881
      %v1891 = vunpack.c.l.b16 %v1882
      %v1892 = vunpack.c.h.b16 %v1882
      %v1893 = vunpack.c.l.b16 %v1883
      %v1894 = vunpack.c.h.b16 %v1883
      %v1895 = vunpack.c.l.b16 %v1884
      %v1896 = vunpack.c.h.b16 %v1884
      %v1897 = vpack.c.b16 %v1889, %v1889
      %v1898 = vpack.c.b16 %v1890, %v1890
      %v1899 = vpack.c.b16 %v1891, %v1891
      %v1900 = vpack.c.b16 %v1892, %v1892
      %v1901 = vpack.c.b16 %v1893, %v1893
      %v1902 = vpack.c.b16 %v1894, %v1894
      %v1903 = vpack.c.b16 %v1895, %v1895
      %v1904 = vpack.c.b16 %v1896, %v1896
      %vm1913 = vcmask 519168
      %1914 = vst.msk [vmem:[%s231] sm:$0xf] %vm1913, %v1897
      %1915 = vst.msk [vmem:[%s231 + $0x4] sm:$0xf] %vm1913, %v1898
      %1916 = vst.msk [vmem:[%s231 + $0x8] sm:$0xf] %vm1913, %v1899
      %1917 = vst.msk [vmem:[%s231 + $0xc] sm:$0xf] %vm1913, %v1900
      %1918 = vst.msk [vmem:[%s231 + $0x10] sm:$0xf] %vm1913, %v1901
      %1919 = vst.msk [vmem:[%s231 + $0x14] sm:$0xf] %vm1913, %v1902
      %1920 = vst.msk [vmem:[%s231 + $0x18] sm:$0xf] %vm1913, %v1903
      %1921 = vst.msk [vmem:[%s231 + $0x1c] sm:$0xf] %vm1913, %v1904
      %s1922 = smul.u32 8, %s21
      %p1923 = scmp.lt.s32.totalorder %s20, 1
      %s1924 = scalar_select %p1923, %s20, 1
      %p1925 = scmp.lt.s32.totalorder %s1922, 7
      %s1926 = scalar_select %p1925, %s1922, 7
      %s1927 = smul.addr %s1924, 8
      %s1928 = sadd.s32 %s1926, %s1927
      %s1929 = smul.addr %s1928, 4
      %s1930 = scalar_lea.vmem %s3, %s1929
      %p1931 = scmp.lt.s32.totalorder %s20, 1
      %s1932 = scalar_select %p1931, %s20, 1
      %p1933 = scmp.lt.s32.totalorder %s21, 0
      %s1934 = scalar_select %p1933, %s21, 0
      %s1935 = sadd.s32 %s1934, %s1932
      %s1936 = smul.addr %s1935, 2
      %s1937 = scalar_lea.vmem %s4, %s1936
      // Predicated region
      $region37: #{fwd.9} parent=31 // pred_check
        %p1938 = pneg %p116
      $region38: #{fwd.9} parent=31 // pred_check_branch
        %1940 = sbr.rel (%p1938) target = $region40
      $region39: #{fwd.9} parent=31 // pred_region
        %s1941 = smul.u32 8, %s21
      $region40: #{fwd.9} parent=31 // pred_fallthru
        _
      // Predicated region
      $region41: #{fwd.9} parent=31 // pred_check
        %p1942 = pneg %p144
      $region42: #{fwd.9} parent=31 // pred_check_branch
        %1944 = sbr.rel (%p1942) target = $region44
      $region43: #{fwd.9} parent=31 // pred_region
        _
      $region44: #{fwd.9} parent=31 // pred_fallthru
        _
    $region32: #{fwd.9} parent=5 // pred_fallthru
      _
    %p1945 = scmp.le.s32.totalorder 2, %s11
    // Predicated region
    $region45: #{fwd.9} parent=5 // pred_check
      %p1946 = pneg %p1945
    $region46: #{fwd.9} parent=5 // pred_check_branch
      %1948 = sbr.rel (%p1946) target = $region48
    $region47: #{fwd.9} parent=5 // pred_region
      %s1949 = ssub.s32 %s11, 2
      // Predicated region
      $region49: #{fwd.9} parent=47 // pred_check
        %p1950 = pneg %p122
      $region50: #{fwd.9} parent=47 // pred_check_branch
        %1952 = sbr.rel (%p1950) target = $region52
      $region51: #{fwd.9} parent=47 // pred_region
        %s1953 = smul.u32 8, %s23
        %p1954 = scmp.lt.s32.totalorder %s22, 1
        %s1955 = scalar_select %p1954, %s22, 1
        %p1956 = scmp.lt.s32.totalorder %s1953, 7
        %s1957 = scalar_select %p1956, %s1953, 7
        %s1958 = smul.addr %s1955, 8
        %s1959 = sadd.s32 %s1957, %s1958
        %s1960 = smul.addr %s1959, 4
        %s1961 = scalar_lea.vmem %s3, %s1960
      $region52: #{fwd.9} parent=47 // pred_fallthru
        _
      // Predicated region
      $region53: #{fwd.9} parent=47 // pred_check
        %p1962 = pneg %p150
      $region54: #{fwd.9} parent=47 // pred_check_branch
        %1964 = sbr.rel (%p1962) target = $region56
      $region55: #{fwd.9} parent=47 // pred_region
        %p1965 = scmp.lt.s32.totalorder %s22, 1
        %s1966 = scalar_select %p1965, %s22, 1
        %p1967 = scmp.lt.s32.totalorder %s23, 0
        %s1968 = scalar_select %p1967, %s23, 0
        %s1969 = sadd.s32 %s1968, %s1966
        %s1970 = smul.addr %s1969, 2
        %s1971 = scalar_lea.vmem %s4, %s1970
      $region56: #{fwd.9} parent=47 // pred_fallthru
        _
    $region48: #{fwd.9} parent=5 // pred_fallthru
      _
  $region6: #{fwd.9} parent=0 // loop_footer
    %s15 = sadd.s32 1, %s11
  $region7: #{fwd.9} parent=0 // loop_footer_branch
    %10 = sbr.rel target = $region3
  $region8: #{fwd.9} parent=0 // loop_exit
    _

</llo_original>
